<compile_context>
chip_gen: v7x
topology: tpu7x:2x2x1
jax: 0.10.0
libtpu: 0.0.40
codegen_flags: <defaults>
</compile_context>

<pallas_src>
import math

import jax
import jax.numpy as jnp
from jax import lax
from jax.experimental import pallas as pl
from jax.experimental.pallas import tpu as pltpu

LEAKY_SLOPE = 0.01                    # torch.nn.LeakyReLU default
FEATURE_OUTPUT = 7 * 7 * 64           # hard-coded in the module => 84x84 input
FC_WIDTH = 512
CONV_CFG = [                          # (kernel, stride, out_channels per net)
    (8, 4, 32),
    (4, 2, 64),
    (3, 1, 64),
]
CONV_CIN = (1, 32, 64)


# ----------------------------------------------------------------------------
# Kernel 1: fused conv1 of both networks: y = leaky_relu(x @ [Wp|Wt] + b)
# ----------------------------------------------------------------------------
def _mm_bias_lrelu_kernel(x_ref, w_ref, b_ref, o_ref):
    y = jnp.dot(x_ref[...].astype(w_ref.dtype), w_ref[...],
                preferred_element_type=jnp.float32) + b_ref[...]
    o_ref[...] = jnp.where(y > 0, y, LEAKY_SLOPE * y)


def conv1_fused(patches, w, b):
    M, K = patches.shape
    N = w.shape[1]
    return pl.pallas_call(
        _mm_bias_lrelu_kernel,
        out_shape=jax.ShapeDtypeStruct((M, N), jnp.float32),
        grid=(1,),
        in_specs=[pl.BlockSpec((M, K), lambda i: (0, 0)),
                  pl.BlockSpec((K, N), lambda i: (0, 0)),
                  pl.BlockSpec((1, N), lambda i: (0, 0))],
        out_specs=pl.BlockSpec((M, N), lambda i: (0, 0)),
    )(patches, w, b)


# ----------------------------------------------------------------------------
# Kernel 2: conv2/conv3 of BOTH networks in one call.  The two 64-channel
# results are concatenated along lanes -> a single lane-dense (M, 128) store.
# ----------------------------------------------------------------------------
def _dual_conv_kernel(xp_ref, xt_ref, wp_ref, wt_ref, bp_ref, bt_ref, o_ref):
    yp = jnp.dot(xp_ref[...].astype(wp_ref.dtype), wp_ref[...],
                 preferred_element_type=jnp.float32) + bp_ref[...]
    yt = jnp.dot(xt_ref[...].astype(wt_ref.dtype), wt_ref[...],
                 preferred_element_type=jnp.float32) + bt_ref[...]
    y = jnp.concatenate([yp, yt], axis=-1)          # (M, 128)
    o_ref[...] = jnp.where(y > 0, y, LEAKY_SLOPE * y)


def dual_conv(xp, xt, wp, wt, bp, bt):
    M, K = xp.shape
    N = wp.shape[1]
    return pl.pallas_call(
        _dual_conv_kernel,
        out_shape=jax.ShapeDtypeStruct((M, 2 * N), jnp.float32),
        grid=(1,),
        in_specs=[pl.BlockSpec((M, K), lambda i: (0, 0)),
                  pl.BlockSpec((M, K), lambda i: (0, 0)),
                  pl.BlockSpec((K, N), lambda i: (0, 0)),
                  pl.BlockSpec((K, N), lambda i: (0, 0)),
                  pl.BlockSpec((1, N), lambda i: (0, 0)),
                  pl.BlockSpec((1, N), lambda i: (0, 0))],
        out_specs=pl.BlockSpec((M, 2 * N), lambda i: (0, 0)),
    )(xp, xt, wp, wt, bp, bt)


# ----------------------------------------------------------------------------
# Kernel 3: all FC layers of both networks in one call.
#   grid=(2,) "parallel":  program 0 = predictor (fc1->ReLU->fc2->ReLU->fc3),
#                          program 1 = target    (single fc).
#   fc1_w/fc1_b/h/out are branch-indexed so each program (each TC on v7x)
#   only DMAs its own big 3136x512 weight.
# ----------------------------------------------------------------------------
def _heads_kernel(h_ref, w1_ref, b1_ref, w2_ref, b2_ref, w3_ref, b3_ref, o_ref):
    h = h_ref[0]                                               # (B, 3136) f32
    y = jnp.dot(h.astype(w1_ref.dtype), w1_ref[0],
                preferred_element_type=jnp.float32) + b1_ref[0]  # (B, 512)

    @pl.when(pl.program_id(0) == 0)
    def _():
        z = jnp.maximum(y, 0.0)
        z = jnp.dot(z.astype(w2_ref.dtype), w2_ref[...],
                    preferred_element_type=jnp.float32) + b2_ref[...]
        z = jnp.maximum(z, 0.0)
        z = jnp.dot(z.astype(w3_ref.dtype), w3_ref[...],
                    preferred_element_type=jnp.float32) + b3_ref[...]
        o_ref[0] = z

    @pl.when(pl.program_id(0) == 1)
    def _():
        o_ref[0] = y                                           # no activation


def fused_heads(h_pred, h_targ, params):
    B, F = h_pred.shape
    h = jnp.stack([h_pred, h_targ], axis=0)                    # (2, B, F)
    flops = 4 * B * F * FC_WIDTH + 4 * B * FC_WIDTH * FC_WIDTH
    bytes_accessed = (params["fc1_w"].size * 2 + params["fc2_w"].size * 2
                      + params["fc3_w"].size * 2 + h.size * 4
                      + 2 * B * FC_WIDTH * 4)
    out = pl.pallas_call(
        _heads_kernel,
        out_shape=jax.ShapeDtypeStruct((2, B, FC_WIDTH), jnp.float32),
        grid=(2,),
        in_specs=[
            pl.BlockSpec((1, B, F), lambda i: (i, 0, 0)),
            pl.BlockSpec((1, F, FC_WIDTH), lambda i: (i, 0, 0)),
            pl.BlockSpec((1, 1, FC_WIDTH), lambda i: (i, 0, 0)),
            pl.BlockSpec((FC_WIDTH, FC_WIDTH), lambda i: (0, 0)),
            pl.BlockSpec((1, FC_WIDTH), lambda i: (0, 0)),
            pl.BlockSpec((FC_WIDTH, FC_WIDTH), lambda i: (0, 0)),
            pl.BlockSpec((1, FC_WIDTH), lambda i: (0, 0)),
        ],
        out_specs=pl.BlockSpec((1, B, FC_WIDTH), lambda i: (i, 0, 0)),
        compiler_params=pltpu.CompilerParams(
            dimension_semantics=("parallel",)),
        cost_estimate=pl.CostEstimate(flops=int(flops), transcendentals=0,
                                      bytes_accessed=int(bytes_accessed)),
    )(h, params["fc1_w"], params["fc1_b"], params["fc2_w"], params["fc2_b"],
      params["fc3_w"], params["fc3_b"])
    return out[0], out[1]                    # predict_feature, target_feature


# ----------------------------------------------------------------------------
# Glue: im2col via a single XLA patch-extraction op (NHWC).
# ----------------------------------------------------------------------------
def extract_patches(x_nhwc, k, s):
    """(B,H,W,C) NHWC -> ((B*oh*ow, C*k*k), oh, ow)."""
    B, H, W, C = x_nhwc.shape
    oh = (H - k) // s + 1
    ow = (W - k) // s + 1
    p = lax.conv_general_dilated_patches(
        x_nhwc, filter_shape=(k, k), window_strides=(s, s), padding="VALID",
        dimension_numbers=("NHWC", "HWIO", "NHWC"))
    # TODO(synk): patch extraction stays as XLA glue; in-kernel strided pl.ds
    # reads would avoid materializing patches in HBM for large batches.
    return p.reshape(B * oh * ow, C * k * k), oh, ow


def conv_stack(x_nhwc, params):
    B = x_nhwc.shape[0]

    # Layer 1: shared input -> one fused matmul for both networks.
    k, s, c1 = CONV_CFG[0]
    p1, oh, ow = extract_patches(x_nhwc, k, s)
    y1 = conv1_fused(p1, params["conv1_w"], params["conv1_b"])  # (M, 2*c1)
    h_pred = y1[:, :c1].reshape(B, oh, ow, c1)
    h_targ = y1[:, c1:].reshape(B, oh, ow, c1)

    # Layers 2 & 3: one dual-branch kernel per layer.
    for li, (k, s, cout) in zip((2, 3), CONV_CFG[1:]):
        pp, oh, ow = extract_patches(h_pred, k, s)
        pt, _, _ = extract_patches(h_targ, k, s)
        y = dual_conv(pp, pt,
                      params[f"conv{li}_wp"], params[f"conv{li}_wt"],
                      params[f"conv{li}_bp"], params[f"conv{li}_bt"])
        h_pred = y[:, :cout].reshape(B, oh, ow, cout)
        h_targ = y[:, cout:].reshape(B, oh, ow, cout)

    # Flatten (NHWC ordering; equivalent to torch's flatten up to a fixed
    # permutation of the random orthogonal fc1 rows).
    return h_pred.reshape(B, -1), h_targ.reshape(B, -1)


# ----------------------------------------------------------------------------
# Parameter initialization: orthogonal(gain=sqrt(2)), zero bias.
# Only arrays go into the params pytree (no Python ints -> safe under jit).
# ----------------------------------------------------------------------------
def init_params(key):
    gain = math.sqrt(2.0)
    keys = iter(jax.random.split(key, 10))

    def orth(shape):
        return jax.nn.initializers.orthogonal(scale=gain)(
            next(keys), shape, jnp.float32)

    params = {}

    # conv1: predictor & target weights concatenated along output channels.
    k, _, c1 = CONV_CFG[0]
    w1p = orth((CONV_CIN[0] * k * k, c1))
    w1t = orth((CONV_CIN[0] * k * k, c1))
    params["conv1_w"] = jnp.concatenate([w1p, w1t], 1).astype(jnp.bfloat16)
    params["conv1_b"] = jnp.zeros((1, 2 * c1), jnp.float32)

    for li, cin, (k, _, cout) in zip((2, 3), CONV_CIN[1:], CONV_CFG[1:]):
        params[f"conv{li}_wp"] = orth((cin * k * k, cout)).astype(jnp.bfloat16)
        params[f"conv{li}_wt"] = orth((cin * k * k, cout)).astype(jnp.bfloat16)
        params[f"conv{li}_bp"] = jnp.zeros((1, cout), jnp.float32)
        params[f"conv{li}_bt"] = jnp.zeros((1, cout), jnp.float32)

    # fc1_w[0] = predictor Linear(3136,512), fc1_w[1] = target Linear(3136,512)
    fc1p = orth((FEATURE_OUTPUT, FC_WIDTH))
    fct = orth((FEATURE_OUTPUT, FC_WIDTH))
    params["fc1_w"] = jnp.stack([fc1p, fct], axis=0).astype(jnp.bfloat16)
    params["fc1_b"] = jnp.zeros((2, 1, FC_WIDTH), jnp.float32)
    params["fc2_w"] = orth((FC_WIDTH, FC_WIDTH)).astype(jnp.bfloat16)
    params["fc2_b"] = jnp.zeros((1, FC_WIDTH), jnp.float32)
    params["fc3_w"] = orth((FC_WIDTH, FC_WIDTH)).astype(jnp.bfloat16)
    params["fc3_b"] = jnp.zeros((1, FC_WIDTH), jnp.float32)
    return params


# ----------------------------------------------------------------------------
# Forward pass (matches RNDModel.forward: returns (predict, target) features)
# ----------------------------------------------------------------------------
@jax.jit
def rnd_forward(next_obs, params):
    """next_obs: (B, 1, 84, 84) NCHW, as in the PyTorch module."""
    x = jnp.transpose(next_obs, (0, 2, 3, 1))        # single NCHW -> NHWC op
    h_pred, h_targ = conv_stack(x, params)
    predict_feature, target_feature = fused_heads(h_pred, h_targ, params)
    return predict_feature, target_feature


if __name__ == "__main__":
    key = jax.random.PRNGKey(0)
    k_x, k_p = jax.random.split(key)

    # feature_output = 7*7*64 is hardcoded in the module => input must be 84x84.
    B = 2
    x = jax.random.normal(k_x, (B, 1, 84, 84), jnp.float32)
    params = init_params(k_p)

    predict_feature, target_feature = rnd_forward(x, params)
    jax.block_until_ready((predict_feature, target_feature))

    assert predict_feature.shape == (B, 512), predict_feature.shape
    assert target_feature.shape == (B, 512), target_feature.shape
    assert bool(jnp.all(jnp.isfinite(predict_feature)))
    assert bool(jnp.all(jnp.isfinite(target_feature)))
    print("KERNEL_OK")
</pallas_src>

<mosaic_0001>
module attributes {stable_mosaic.version = 11 : i64} {
  func.func @_mm_bias_lrelu_kernel(%arg0: i32, %arg1: memref<800x64xf32, #tpu.memory_space<vmem>>, %arg2: memref<64x64xbf16, #tpu.memory_space<vmem>>, %arg3: memref<1x64xf32, #tpu.memory_space<vmem>>, %arg4: memref<800x64xf32, #tpu.memory_space<vmem>>) attributes {dimension_semantics = [#tpu.dimension_semantics<arbitrary>], iteration_bounds = array<i64: 1>, scalar_prefetch = 0 : i64, scratch_operands = 0 : i64, tpu.core_type = #tpu.core_type<tc>, window_params = [{pipeline_mode = #tpu.pipeline_mode<synchronous>, transform_indices = @transform_0, window_bounds = array<i64: 800, 64>}, {pipeline_mode = #tpu.pipeline_mode<synchronous>, transform_indices = @transform_1, window_bounds = array<i64: 64, 64>}, {pipeline_mode = #tpu.pipeline_mode<synchronous>, transform_indices = @transform_2, window_bounds = array<i64: 1, 64>}, {pipeline_mode = #tpu.pipeline_mode<synchronous>, transform_indices = @transform_3, window_bounds = array<i64: 800, 64>}]} {
    %c0 = arith.constant 0 : index
    %c0_0 = arith.constant 0 : index
    %0 = vector.load %arg1[%c0, %c0_0] : memref<800x64xf32, #tpu.memory_space<vmem>>, vector<800x64xf32>
    %1 = arith.truncf %0 : vector<800x64xf32> to vector<800x64xbf16>
    %c0_1 = arith.constant 0 : index
    %c0_2 = arith.constant 0 : index
    %2 = vector.load %arg2[%c0_1, %c0_2] : memref<64x64xbf16, #tpu.memory_space<vmem>>, vector<64x64xbf16>
    %cst = arith.constant dense<0.000000e+00> : vector<800x64xf32>
    %3 = tpu.matmul %1, %2, %cst {dimension_numbers = #tpu.dot_dimension_numbers<[1], [0], [0], [1], [0, 0, 1, 1], [], []>} : vector<800x64xbf16>, vector<64x64xbf16>, vector<800x64xf32> -> vector<800x64xf32>
    %c0_3 = arith.constant 0 : index
    %c0_4 = arith.constant 0 : index
    %4 = vector.load %arg3[%c0_3, %c0_4] : memref<1x64xf32, #tpu.memory_space<vmem>>, vector<1x64xf32>
    %5 = vector.broadcast %4 : vector<1x64xf32> to vector<800x64xf32>
    %6 = arith.addf %3, %5 : vector<800x64xf32>
    %cst_5 = arith.constant 0.000000e+00 : f32
    %7 = vector.broadcast %cst_5 : f32 to vector<800x64xf32>
    %8 = arith.cmpf ogt, %6, %7 : vector<800x64xf32>
    %cst_6 = arith.constant 0.00999999977 : f32
    %9 = vector.broadcast %cst_6 : f32 to vector<800x64xf32>
    %10 = arith.mulf %9, %6 : vector<800x64xf32>
    %11 = arith.select %8, %6, %10 : vector<800x64xi1>, vector<800x64xf32>
    %c0_7 = arith.constant 0 : index
    %c0_8 = arith.constant 0 : index
    %12 = vector.load %arg4[%c0_7, %c0_8] : memref<800x64xf32, #tpu.memory_space<vmem>>, vector<800x64xf32>
    tpu.vector_store %arg4[%c0_7, %c0_8], %11 {strides = array<i32>} : memref<800x64xf32, #tpu.memory_space<vmem>>, vector<800x64xf32>,
    return
  }
  func.func @transform_0(%arg0: i32) -> (i32, i32) {
    %c0_i32 = arith.constant 0 : i32
    %c0_i32_0 = arith.constant 0 : i32
    %c0_i32_1 = arith.constant 0 : i32
    return %c0_i32, %c0_i32_0 : i32, i32
  }
  func.func @transform_1(%arg0: i32) -> (i32, i32) {
    %c0_i32 = arith.constant 0 : i32
    %c0_i32_0 = arith.constant 0 : i32
    %c0_i32_1 = arith.constant 0 : i32
    return %c0_i32, %c0_i32_0 : i32, i32
  }
  func.func @transform_2(%arg0: i32) -> (i32, i32) {
    %c0_i32 = arith.constant 0 : i32
    %c0_i32_0 = arith.constant 0 : i32
    %c0_i32_1 = arith.constant 0 : i32
    return %c0_i32, %c0_i32_0 : i32, i32
  }
  func.func @transform_3(%arg0: i32) -> (i32, i32) {
    %c0_i32 = arith.constant 0 : i32
    %c0_i32_0 = arith.constant 0 : i32
    %c0_i32_1 = arith.constant 0 : i32
    return %c0_i32, %c0_i32_0 : i32, i32
  }
}

module attributes {stable_mosaic.version = 11 : i64} {
  func.func @_dual_conv_kernel(%arg0: i32, %arg1: memref<162x512xf32, #tpu.memory_space<vmem>>, %arg2: memref<162x512xf32, #tpu.memory_space<vmem>>, %arg3: memref<512x64xbf16, #tpu.memory_space<vmem>>, %arg4: memref<512x64xbf16, #tpu.memory_space<vmem>>, %arg5: memref<1x64xf32, #tpu.memory_space<vmem>>, %arg6: memref<1x64xf32, #tpu.memory_space<vmem>>, %arg7: memref<162x128xf32, #tpu.memory_space<vmem>>) attributes {dimension_semantics = [#tpu.dimension_semantics<arbitrary>], iteration_bounds = array<i64: 1>, scalar_prefetch = 0 : i64, scratch_operands = 0 : i64, tpu.core_type = #tpu.core_type<tc>, window_params = [{pipeline_mode = #tpu.pipeline_mode<synchronous>, transform_indices = @transform_0, window_bounds = array<i64: 162, 512>}, {pipeline_mode = #tpu.pipeline_mode<synchronous>, transform_indices = @transform_1, window_bounds = array<i64: 162, 512>}, {pipeline_mode = #tpu.pipeline_mode<synchronous>, transform_indices = @transform_2, window_bounds = array<i64: 512, 64>}, {pipeline_mode = #tpu.pipeline_mode<synchronous>, transform_indices = @transform_3, window_bounds = array<i64: 512, 64>}, {pipeline_mode = #tpu.pipeline_mode<synchronous>, transform_indices = @transform_4, window_bounds = array<i64: 1, 64>}, {pipeline_mode = #tpu.pipeline_mode<synchronous>, transform_indices = @transform_5, window_bounds = array<i64: 1, 64>}, {pipeline_mode = #tpu.pipeline_mode<synchronous>, transform_indices = @transform_6, window_bounds = array<i64: 162, 128>}]} {
    %c0 = arith.constant 0 : index
    %c0_0 = arith.constant 0 : index
    %0 = vector.load %arg1[%c0, %c0_0] : memref<162x512xf32, #tpu.memory_space<vmem>>, vector<162x512xf32>
    %1 = arith.truncf %0 : vector<162x512xf32> to vector<162x512xbf16>
    %c0_1 = arith.constant 0 : index
    %c0_2 = arith.constant 0 : index
    %2 = vector.load %arg3[%c0_1, %c0_2] : memref<512x64xbf16, #tpu.memory_space<vmem>>, vector<512x64xbf16>
    %cst = arith.constant dense<0.000000e+00> : vector<162x64xf32>
    %3 = tpu.matmul %1, %2, %cst {dimension_numbers = #tpu.dot_dimension_numbers<[1], [0], [0], [1], [0, 0, 1, 1], [], []>} : vector<162x512xbf16>, vector<512x64xbf16>, vector<162x64xf32> -> vector<162x64xf32>
    %c0_3 = arith.constant 0 : index
    %c0_4 = arith.constant 0 : index
    %4 = vector.load %arg5[%c0_3, %c0_4] : memref<1x64xf32, #tpu.memory_space<vmem>>, vector<1x64xf32>
    %5 = vector.broadcast %4 : vector<1x64xf32> to vector<162x64xf32>
    %6 = arith.addf %3, %5 : vector<162x64xf32>
    %c0_5 = arith.constant 0 : index
    %c0_6 = arith.constant 0 : index
    %7 = vector.load %arg2[%c0_5, %c0_6] : memref<162x512xf32, #tpu.memory_space<vmem>>, vector<162x512xf32>
    %8 = arith.truncf %7 : vector<162x512xf32> to vector<162x512xbf16>
    %c0_7 = arith.constant 0 : index
    %c0_8 = arith.constant 0 : index
    %9 = vector.load %arg4[%c0_7, %c0_8] : memref<512x64xbf16, #tpu.memory_space<vmem>>, vector<512x64xbf16>
    %cst_9 = arith.constant dense<0.000000e+00> : vector<162x64xf32>
    %10 = tpu.matmul %8, %9, %cst_9 {dimension_numbers = #tpu.dot_dimension_numbers<[1], [0], [0], [1], [0, 0, 1, 1], [], []>} : vector<162x512xbf16>, vector<512x64xbf16>, vector<162x64xf32> -> vector<162x64xf32>
    %c0_10 = arith.constant 0 : index
    %c0_11 = arith.constant 0 : index
    %11 = vector.load %arg6[%c0_10, %c0_11] : memref<1x64xf32, #tpu.memory_space<vmem>>, vector<1x64xf32>
    %12 = vector.broadcast %11 : vector<1x64xf32> to vector<162x64xf32>
    %13 = arith.addf %10, %12 : vector<162x64xf32>
    %14 = tpu.concatenate %6, %13 in 1 : vector<162x64xf32>, vector<162x64xf32> -> vector<162x128xf32>
    %cst_12 = arith.constant 0.000000e+00 : f32
    %15 = vector.broadcast %cst_12 : f32 to vector<162x128xf32>
    %16 = arith.cmpf ogt, %14, %15 : vector<162x128xf32>
    %cst_13 = arith.constant 0.00999999977 : f32
    %17 = vector.broadcast %cst_13 : f32 to vector<162x128xf32>
    %18 = arith.mulf %17, %14 : vector<162x128xf32>
    %19 = arith.select %16, %14, %18 : vector<162x128xi1>, vector<162x128xf32>
    %c0_14 = arith.constant 0 : index
    %c0_15 = arith.constant 0 : index
    %20 = vector.load %arg7[%c0_14, %c0_15] : memref<162x128xf32, #tpu.memory_space<vmem>>, vector<162x128xf32>
    tpu.vector_store %arg7[%c0_14, %c0_15], %19 {strides = array<i32>} : memref<162x128xf32, #tpu.memory_space<vmem>>, vector<162x128xf32>,
    return
  }
  func.func @transform_0(%arg0: i32) -> (i32, i32) {
    %c0_i32 = arith.constant 0 : i32
    %c0_i32_0 = arith.constant 0 : i32
    %c0_i32_1 = arith.constant 0 : i32
    return %c0_i32, %c0_i32_0 : i32, i32
  }
  func.func @transform_1(%arg0: i32) -> (i32, i32) {
    %c0_i32 = arith.constant 0 : i32
    %c0_i32_0 = arith.constant 0 : i32
    %c0_i32_1 = arith.constant 0 : i32
    return %c0_i32, %c0_i32_0 : i32, i32
  }
  func.func @transform_2(%arg0: i32) -> (i32, i32) {
    %c0_i32 = arith.constant 0 : i32
    %c0_i32_0 = arith.constant 0 : i32
    %c0_i32_1 = arith.constant 0 : i32
    return %c0_i32, %c0_i32_0 : i32, i32
  }
  func.func @transform_3(%arg0: i32) -> (i32, i32) {
    %c0_i32 = arith.constant 0 : i32
    %c0_i32_0 = arith.constant 0 : i32
    %c0_i32_1 = arith.constant 0 : i32
    return %c0_i32, %c0_i32_0 : i32, i32
  }
  func.func @transform_4(%arg0: i32) -> (i32, i32) {
    %c0_i32 = arith.constant 0 : i32
    %c0_i32_0 = arith.constant 0 : i32
    %c0_i32_1 = arith.constant 0 : i32
    return %c0_i32, %c0_i32_0 : i32, i32
  }
  func.func @transform_5(%arg0: i32) -> (i32, i32) {
    %c0_i32 = arith.constant 0 : i32
    %c0_i32_0 = arith.constant 0 : i32
    %c0_i32_1 = arith.constant 0 : i32
    return %c0_i32, %c0_i32_0 : i32, i32
  }
  func.func @transform_6(%arg0: i32) -> (i32, i32) {
    %c0_i32 = arith.constant 0 : i32
    %c0_i32_0 = arith.constant 0 : i32
    %c0_i32_1 = arith.constant 0 : i32
    return %c0_i32, %c0_i32_0 : i32, i32
  }
}

module attributes {stable_mosaic.version = 11 : i64} {
  func.func @_dual_conv_kernel(%arg0: i32, %arg1: memref<98x576xf32, #tpu.memory_space<vmem>>, %arg2: memref<98x576xf32, #tpu.memory_space<vmem>>, %arg3: memref<576x64xbf16, #tpu.memory_space<vmem>>, %arg4: memref<576x64xbf16, #tpu.memory_space<vmem>>, %arg5: memref<1x64xf32, #tpu.memory_space<vmem>>, %arg6: memref<1x64xf32, #tpu.memory_space<vmem>>, %arg7: memref<98x128xf32, #tpu.memory_space<vmem>>) attributes {dimension_semantics = [#tpu.dimension_semantics<arbitrary>], iteration_bounds = array<i64: 1>, scalar_prefetch = 0 : i64, scratch_operands = 0 : i64, tpu.core_type = #tpu.core_type<tc>, window_params = [{pipeline_mode = #tpu.pipeline_mode<synchronous>, transform_indices = @transform_0, window_bounds = array<i64: 98, 576>}, {pipeline_mode = #tpu.pipeline_mode<synchronous>, transform_indices = @transform_1, window_bounds = array<i64: 98, 576>}, {pipeline_mode = #tpu.pipeline_mode<synchronous>, transform_indices = @transform_2, window_bounds = array<i64: 576, 64>}, {pipeline_mode = #tpu.pipeline_mode<synchronous>, transform_indices = @transform_3, window_bounds = array<i64: 576, 64>}, {pipeline_mode = #tpu.pipeline_mode<synchronous>, transform_indices = @transform_4, window_bounds = array<i64: 1, 64>}, {pipeline_mode = #tpu.pipeline_mode<synchronous>, transform_indices = @transform_5, window_bounds = array<i64: 1, 64>}, {pipeline_mode = #tpu.pipeline_mode<synchronous>, transform_indices = @transform_6, window_bounds = array<i64: 98, 128>}]} {
    %c0 = arith.constant 0 : index
    %c0_0 = arith.constant 0 : index
    %0 = vector.load %arg1[%c0, %c0_0] : memref<98x576xf32, #tpu.memory_space<vmem>>, vector<98x576xf32>
    %1 = arith.truncf %0 : vector<98x576xf32> to vector<98x576xbf16>
    %c0_1 = arith.constant 0 : index
    %c0_2 = arith.constant 0 : index
    %2 = vector.load %arg3[%c0_1, %c0_2] : memref<576x64xbf16, #tpu.memory_space<vmem>>, vector<576x64xbf16>
    %cst = arith.constant dense<0.000000e+00> : vector<98x64xf32>
    %3 = tpu.matmul %1, %2, %cst {dimension_numbers = #tpu.dot_dimension_numbers<[1], [0], [0], [1], [0, 0, 1, 1], [], []>} : vector<98x576xbf16>, vector<576x64xbf16>, vector<98x64xf32> -> vector<98x64xf32>
    %c0_3 = arith.constant 0 : index
    %c0_4 = arith.constant 0 : index
    %4 = vector.load %arg5[%c0_3, %c0_4] : memref<1x64xf32, #tpu.memory_space<vmem>>, vector<1x64xf32>
    %5 = vector.broadcast %4 : vector<1x64xf32> to vector<98x64xf32>
    %6 = arith.addf %3, %5 : vector<98x64xf32>
    %c0_5 = arith.constant 0 : index
    %c0_6 = arith.constant 0 : index
    %7 = vector.load %arg2[%c0_5, %c0_6] : memref<98x576xf32, #tpu.memory_space<vmem>>, vector<98x576xf32>
    %8 = arith.truncf %7 : vector<98x576xf32> to vector<98x576xbf16>
    %c0_7 = arith.constant 0 : index
    %c0_8 = arith.constant 0 : index
    %9 = vector.load %arg4[%c0_7, %c0_8] : memref<576x64xbf16, #tpu.memory_space<vmem>>, vector<576x64xbf16>
    %cst_9 = arith.constant dense<0.000000e+00> : vector<98x64xf32>
    %10 = tpu.matmul %8, %9, %cst_9 {dimension_numbers = #tpu.dot_dimension_numbers<[1], [0], [0], [1], [0, 0, 1, 1], [], []>} : vector<98x576xbf16>, vector<576x64xbf16>, vector<98x64xf32> -> vector<98x64xf32>
    %c0_10 = arith.constant 0 : index
    %c0_11 = arith.constant 0 : index
    %11 = vector.load %arg6[%c0_10, %c0_11] : memref<1x64xf32, #tpu.memory_space<vmem>>, vector<1x64xf32>
    %12 = vector.broadcast %11 : vector<1x64xf32> to vector<98x64xf32>
    %13 = arith.addf %10, %12 : vector<98x64xf32>
    %14 = tpu.concatenate %6, %13 in 1 : vector<98x64xf32>, vector<98x64xf32> -> vector<98x128xf32>
    %cst_12 = arith.constant 0.000000e+00 : f32
    %15 = vector.broadcast %cst_12 : f32 to vector<98x128xf32>
    %16 = arith.cmpf ogt, %14, %15 : vector<98x128xf32>
    %cst_13 = arith.constant 0.00999999977 : f32
    %17 = vector.broadcast %cst_13 : f32 to vector<98x128xf32>
    %18 = arith.mulf %17, %14 : vector<98x128xf32>
    %19 = arith.select %16, %14, %18 : vector<98x128xi1>, vector<98x128xf32>
    %c0_14 = arith.constant 0 : index
    %c0_15 = arith.constant 0 : index
    %20 = vector.load %arg7[%c0_14, %c0_15] : memref<98x128xf32, #tpu.memory_space<vmem>>, vector<98x128xf32>
    tpu.vector_store %arg7[%c0_14, %c0_15], %19 {strides = array<i32>} : memref<98x128xf32, #tpu.memory_space<vmem>>, vector<98x128xf32>,
    return
  }
  func.func @transform_0(%arg0: i32) -> (i32, i32) {
    %c0_i32 = arith.constant 0 : i32
    %c0_i32_0 = arith.constant 0 : i32
    %c0_i32_1 = arith.constant 0 : i32
    return %c0_i32, %c0_i32_0 : i32, i32
  }
  func.func @transform_1(%arg0: i32) -> (i32, i32) {
    %c0_i32 = arith.constant 0 : i32
    %c0_i32_0 = arith.constant 0 : i32
    %c0_i32_1 = arith.constant 0 : i32
    return %c0_i32, %c0_i32_0 : i32, i32
  }
  func.func @transform_2(%arg0: i32) -> (i32, i32) {
    %c0_i32 = arith.constant 0 : i32
    %c0_i32_0 = arith.constant 0 : i32
    %c0_i32_1 = arith.constant 0 : i32
    return %c0_i32, %c0_i32_0 : i32, i32
  }
  func.func @transform_3(%arg0: i32) -> (i32, i32) {
    %c0_i32 = arith.constant 0 : i32
    %c0_i32_0 = arith.constant 0 : i32
    %c0_i32_1 = arith.constant 0 : i32
    return %c0_i32, %c0_i32_0 : i32, i32
  }
  func.func @transform_4(%arg0: i32) -> (i32, i32) {
    %c0_i32 = arith.constant 0 : i32
    %c0_i32_0 = arith.constant 0 : i32
    %c0_i32_1 = arith.constant 0 : i32
    return %c0_i32, %c0_i32_0 : i32, i32
  }
  func.func @transform_5(%arg0: i32) -> (i32, i32) {
    %c0_i32 = arith.constant 0 : i32
    %c0_i32_0 = arith.constant 0 : i32
    %c0_i32_1 = arith.constant 0 : i32
    return %c0_i32, %c0_i32_0 : i32, i32
  }
  func.func @transform_6(%arg0: i32) -> (i32, i32) {
    %c0_i32 = arith.constant 0 : i32
    %c0_i32_0 = arith.constant 0 : i32
    %c0_i32_1 = arith.constant 0 : i32
    return %c0_i32, %c0_i32_0 : i32, i32
  }
}

module attributes {stable_mosaic.version = 11 : i64} {
  func.func @_heads_kernel(%arg0: i32, %arg1: memref<1x2x3136xf32, #tpu.memory_space<vmem>>, %arg2: memref<1x3136x512xbf16, #tpu.memory_space<vmem>>, %arg3: memref<1x1x512xf32, #tpu.memory_space<vmem>>, %arg4: memref<512x512xbf16, #tpu.memory_space<vmem>>, %arg5: memref<1x512xf32, #tpu.memory_space<vmem>>, %arg6: memref<512x512xbf16, #tpu.memory_space<vmem>>, %arg7: memref<1x512xf32, #tpu.memory_space<vmem>>, %arg8: memref<1x2x512xf32, #tpu.memory_space<vmem>>) attributes {dimension_semantics = [#tpu.dimension_semantics<parallel>], iteration_bounds = array<i64: 2>, scalar_prefetch = 0 : i64, scratch_operands = 0 : i64, tpu.core_type = #tpu.core_type<tc>, window_params = [{transform_indices = @transform_0, window_bounds = array<i64: 1, 2, 3136>}, {transform_indices = @transform_1, window_bounds = array<i64: 1, 3136, 512>}, {transform_indices = @transform_2, window_bounds = array<i64: 1, 1, 512>}, {pipeline_mode = #tpu.pipeline_mode<synchronous>, transform_indices = @transform_3, window_bounds = array<i64: 512, 512>}, {pipeline_mode = #tpu.pipeline_mode<synchronous>, transform_indices = @transform_4, window_bounds = array<i64: 1, 512>}, {pipeline_mode = #tpu.pipeline_mode<synchronous>, transform_indices = @transform_5, window_bounds = array<i64: 512, 512>}, {pipeline_mode = #tpu.pipeline_mode<synchronous>, transform_indices = @transform_6, window_bounds = array<i64: 1, 512>}, {transform_indices = @transform_7, window_bounds = array<i64: 1, 2, 512>}]} {
    %c0 = arith.constant 0 : index
    %c0_0 = arith.constant 0 : index
    %c0_1 = arith.constant 0 : index
    %0 = vector.load %arg1[%c0, %c0_0, %c0_1] : memref<1x2x3136xf32, #tpu.memory_space<vmem>>, vector<1x2x3136xf32>
    %1 = vector.shape_cast %0 : vector<1x2x3136xf32> to vector<2x3136xf32>
    %2 = arith.truncf %1 : vector<2x3136xf32> to vector<2x3136xbf16>
    %c0_2 = arith.constant 0 : index
    %c0_3 = arith.constant 0 : index
    %c0_4 = arith.constant 0 : index
    %3 = vector.load %arg2[%c0_2, %c0_3, %c0_4] : memref<1x3136x512xbf16, #tpu.memory_space<vmem>>, vector<1x3136x512xbf16>
    %4 = vector.shape_cast %3 : vector<1x3136x512xbf16> to vector<3136x512xbf16>
    %cst = arith.constant dense<0.000000e+00> : vector<2x512xf32>
    %5 = tpu.matmul %2, %4, %cst {dimension_numbers = #tpu.dot_dimension_numbers<[1], [0], [0], [1], [0, 0, 1, 1], [], []>} : vector<2x3136xbf16>, vector<3136x512xbf16>, vector<2x512xf32> -> vector<2x512xf32>
    %c0_5 = arith.constant 0 : index
    %c0_6 = arith.constant 0 : index
    %c0_7 = arith.constant 0 : index
    %6 = vector.load %arg3[%c0_5, %c0_6, %c0_7] : memref<1x1x512xf32, #tpu.memory_space<vmem>>, vector<1x1x512xf32>
    %7 = vector.shape_cast %6 : vector<1x1x512xf32> to vector<1x512xf32>
    %8 = vector.broadcast %7 : vector<1x512xf32> to vector<2x512xf32>
    %9 = arith.addf %5, %8 : vector<2x512xf32>
    %c0_i32 = arith.constant 0 : i32
    %10 = arith.cmpi eq, %arg0, %c0_i32 : i32
    %11 = arith.extui %10 : i1 to i32
    %c0_i32_8 = arith.constant 0 : i32
    %12 = arith.cmpi ne, %11, %c0_i32_8 : i32
    scf.if %12 {
      %cst_10 = arith.constant 0.000000e+00 : f32
      %16 = vector.broadcast %cst_10 : f32 to vector<2x512xf32>
      %17 = arith.maximumf %9, %16 : vector<2x512xf32>
      %18 = arith.truncf %17 : vector<2x512xf32> to vector<2x512xbf16>
      %c0_11 = arith.constant 0 : index
      %c0_12 = arith.constant 0 : index
      %19 = vector.load %arg4[%c0_11, %c0_12] : memref<512x512xbf16, #tpu.memory_space<vmem>>, vector<512x512xbf16>
      %cst_13 = arith.constant dense<0.000000e+00> : vector<2x512xf32>
      %20 = tpu.matmul %18, %19, %cst_13 {dimension_numbers = #tpu.dot_dimension_numbers<[1], [0], [0], [1], [0, 0, 1, 1], [], []>} : vector<2x512xbf16>, vector<512x512xbf16>, vector<2x512xf32> -> vector<2x512xf32>
      %c0_14 = arith.constant 0 : index
      %c0_15 = arith.constant 0 : index
      %21 = vector.load %arg5[%c0_14, %c0_15] : memref<1x512xf32, #tpu.memory_space<vmem>>, vector<1x512xf32>
      %22 = vector.broadcast %21 : vector<1x512xf32> to vector<2x512xf32>
      %23 = arith.addf %20, %22 : vector<2x512xf32>
      %cst_16 = arith.constant 0.000000e+00 : f32
      %24 = vector.broadcast %cst_16 : f32 to vector<2x512xf32>
      %25 = arith.maximumf %23, %24 : vector<2x512xf32>
      %26 = arith.truncf %25 : vector<2x512xf32> to vector<2x512xbf16>
      %c0_17 = arith.constant 0 : index
      %c0_18 = arith.constant 0 : index
      %27 = vector.load %arg6[%c0_17, %c0_18] : memref<512x512xbf16, #tpu.memory_space<vmem>>, vector<512x512xbf16>
      %cst_19 = arith.constant dense<0.000000e+00> : vector<2x512xf32>
      %28 = tpu.matmul %26, %27, %cst_19 {dimension_numbers = #tpu.dot_dimension_numbers<[1], [0], [0], [1], [0, 0, 1, 1], [], []>} : vector<2x512xbf16>, vector<512x512xbf16>, vector<2x512xf32> -> vector<2x512xf32>
      %c0_20 = arith.constant 0 : index
      %c0_21 = arith.constant 0 : index
      %29 = vector.load %arg7[%c0_20, %c0_21] : memref<1x512xf32, #tpu.memory_space<vmem>>, vector<1x512xf32>
      %30 = vector.broadcast %29 : vector<1x512xf32> to vector<2x512xf32>
      %31 = arith.addf %28, %30 : vector<2x512xf32>
      %c0_22 = arith.constant 0 : index
      %c0_23 = arith.constant 0 : index
      %c0_24 = arith.constant 0 : index
      %32 = vector.load %arg8[%c0_22, %c0_23, %c0_24] : memref<1x2x512xf32, #tpu.memory_space<vmem>>, vector<1x2x512xf32>
      %33 = vector.shape_cast %32 : vector<1x2x512xf32> to vector<2x512xf32>
      %34 = vector.shape_cast %31 : vector<2x512xf32> to vector<1x2x512xf32>
      tpu.vector_store %arg8[%c0_22, %c0_23, %c0_24], %34 {strides = array<i32>} : memref<1x2x512xf32, #tpu.memory_space<vmem>>, vector<1x2x512xf32>,
    } else {
    }
    %c1_i32 = arith.constant 1 : i32
    %13 = arith.cmpi eq, %arg0, %c1_i32 : i32
    %14 = arith.extui %13 : i1 to i32
    %c0_i32_9 = arith.constant 0 : i32
    %15 = arith.cmpi ne, %14, %c0_i32_9 : i32
    scf.if %15 {
      %c0_10 = arith.constant 0 : index
      %c0_11 = arith.constant 0 : index
      %c0_12 = arith.constant 0 : index
      %16 = vector.load %arg8[%c0_10, %c0_11, %c0_12] : memref<1x2x512xf32, #tpu.memory_space<vmem>>, vector<1x2x512xf32>
      %17 = vector.shape_cast %16 : vector<1x2x512xf32> to vector<2x512xf32>
      %18 = vector.shape_cast %9 : vector<2x512xf32> to vector<1x2x512xf32>
      tpu.vector_store %arg8[%c0_10, %c0_11, %c0_12], %18 {strides = array<i32>} : memref<1x2x512xf32, #tpu.memory_space<vmem>>, vector<1x2x512xf32>,
    } else {
    }
    return
  }
  func.func @transform_0(%arg0: i32) -> (i32, i32, i32) {
    %c0_i32 = arith.constant 0 : i32
    %c0_i32_0 = arith.constant 0 : i32
    %c0_i32_1 = arith.constant 0 : i32
    return %arg0, %c0_i32, %c0_i32_0 : i32, i32, i32
  }
  func.func @transform_1(%arg0: i32) -> (i32, i32, i32) {
    %c0_i32 = arith.constant 0 : i32
    %c0_i32_0 = arith.constant 0 : i32
    %c0_i32_1 = arith.constant 0 : i32
    return %arg0, %c0_i32, %c0_i32_0 : i32, i32, i32
  }
  func.func @transform_2(%arg0: i32) -> (i32, i32, i32) {
    %c0_i32 = arith.constant 0 : i32
    %c0_i32_0 = arith.constant 0 : i32
    %c0_i32_1 = arith.constant 0 : i32
    return %arg0, %c0_i32, %c0_i32_0 : i32, i32, i32
  }
  func.func @transform_3(%arg0: i32) -> (i32, i32) {
    %c0_i32 = arith.constant 0 : i32
    %c0_i32_0 = arith.constant 0 : i32
    %c0_i32_1 = arith.constant 0 : i32
    return %c0_i32, %c0_i32_0 : i32, i32
  }
  func.func @transform_4(%arg0: i32) -> (i32, i32) {
    %c0_i32 = arith.constant 0 : i32
    %c0_i32_0 = arith.constant 0 : i32
    %c0_i32_1 = arith.constant 0 : i32
    return %c0_i32, %c0_i32_0 : i32, i32
  }
  func.func @transform_5(%arg0: i32) -> (i32, i32) {
    %c0_i32 = arith.constant 0 : i32
    %c0_i32_0 = arith.constant 0 : i32
    %c0_i32_1 = arith.constant 0 : i32
    return %c0_i32, %c0_i32_0 : i32, i32
  }
  func.func @transform_6(%arg0: i32) -> (i32, i32) {
    %c0_i32 = arith.constant 0 : i32
    %c0_i32_0 = arith.constant 0 : i32
    %c0_i32_1 = arith.constant 0 : i32
    return %c0_i32, %c0_i32_0 : i32, i32
  }
  func.func @transform_7(%arg0: i32) -> (i32, i32, i32) {
    %c0_i32 = arith.constant 0 : i32
    %c0_i32_0 = arith.constant 0 : i32
    %c0_i32_1 = arith.constant 0 : i32
    return %arg0, %c0_i32, %c0_i32_0 : i32, i32, i32
  }
}

</mosaic_0001>

<llo_original>
// kernel: rnd_forward.4
$region0: #{rnd_forward.4}
  #allocation0 [shape = 'u32[]', space=smem, size = 0x4, offset = 0x4, fixed_abs, tag = 'smem constant byte address 0x4 - core index']
  #allocation1 [shape = 'u32[144,128]{1,0:T(1,128)}', space=vmem, size = 0x12000, scoped, tag = 'internal scratch']
  %s0 = inlined_call_operand.vmem [shape: f32[800,64], index: 0, kind: input, shape index: {}]
  %s1 = inlined_call_operand.vmem [shape: bf16[64,64], index: 1, kind: input, shape index: {}]
  %s2 = inlined_call_operand.vmem [shape: f32[1,64], index: 2, kind: input, shape index: {}]
  %s3 = inlined_call_operand.vmem [shape: f32[800,64], index: 3, kind: output, shape index: {}]
  %s4 = sld [smem:[#allocation0]]
  $region22: #{rnd_forward.4} parent=0
    _
  %s6 = ssub.s32 1, %s4
  %s7 = scalar_select 0, %s6, %s4
  // Predicated region
  $region2: #{rnd_forward.4} parent=0 // pred_check
    _
  $region3: #{rnd_forward.4} parent=0 // pred_check_branch
    %9 = sbr.rel (0) target = $region5
  $region4: #{rnd_forward.4} parent=0 // pred_region
    _
  $region5: #{rnd_forward.4} parent=0 // pred_fallthru
    _
  // Predicated region
  $region6: #{rnd_forward.4} parent=0 // pred_check
    _
  $region7: #{rnd_forward.4} parent=0 // pred_check_branch
    %11 = sbr.rel (0) target = $region9
  $region8: #{rnd_forward.4} parent=0 // pred_region
    _
  $region9: #{rnd_forward.4} parent=0 // pred_fallthru
    _
  // Predicated region
  $region10: #{rnd_forward.4} parent=0 // pred_check
    _
  $region11: #{rnd_forward.4} parent=0 // pred_check_branch
    %13 = sbr.rel (0) target = $region13
  $region12: #{rnd_forward.4} parent=0 // pred_region
    _
  $region13: #{rnd_forward.4} parent=0 // pred_fallthru
    _
  %v15 = vld [vmem:[%s0] sm:$0xff]
  %v16 = vld [vmem:[%s0 + $0x8] sm:$0xff]
  %v17 = vld [vmem:[%s0 + $0x10] sm:$0xff]
  %v18 = vld [vmem:[%s0 + $0x18] sm:$0xff]
  %v19 = vld [vmem:[%s0 + $0x20] sm:$0xff]
  %v20 = vld [vmem:[%s0 + $0x28] sm:$0xff]
  %v21 = vld [vmem:[%s0 + $0x30] sm:$0xff]
  %v22 = vld [vmem:[%s0 + $0x38] sm:$0xff]
  %v23 = vld [vmem:[%s0 + $0x40] sm:$0xff]
  %v24 = vld [vmem:[%s0 + $0x48] sm:$0xff]
  %v25 = vld [vmem:[%s0 + $0x50] sm:$0xff]
  %v26 = vld [vmem:[%s0 + $0x58] sm:$0xff]
  %v27 = vld [vmem:[%s0 + $0x60] sm:$0xff]
  %v28 = vld [vmem:[%s0 + $0x68] sm:$0xff]
  %v29 = vld [vmem:[%s0 + $0x70] sm:$0xff]
  %v30 = vld [vmem:[%s0 + $0x78] sm:$0xff]
  %v31 = vld [vmem:[%s0 + $0x80] sm:$0xff]
  %v32 = vld [vmem:[%s0 + $0x88] sm:$0xff]
  %v33 = vld [vmem:[%s0 + $0x90] sm:$0xff]
  %v34 = vld [vmem:[%s0 + $0x98] sm:$0xff]
  %v35 = vld [vmem:[%s0 + $0xa0] sm:$0xff]
  %v36 = vld [vmem:[%s0 + $0xa8] sm:$0xff]
  %v37 = vld [vmem:[%s0 + $0xb0] sm:$0xff]
  %v38 = vld [vmem:[%s0 + $0xb8] sm:$0xff]
  %v39 = vld [vmem:[%s0 + $0xc0] sm:$0xff]
  %v40 = vld [vmem:[%s0 + $0xc8] sm:$0xff]
  %v41 = vld [vmem:[%s0 + $0xd0] sm:$0xff]
  %v42 = vld [vmem:[%s0 + $0xd8] sm:$0xff]
  %v43 = vld [vmem:[%s0 + $0xe0] sm:$0xff]
  %v44 = vld [vmem:[%s0 + $0xe8] sm:$0xff]
  %v45 = vld [vmem:[%s0 + $0xf0] sm:$0xff]
  %v46 = vld [vmem:[%s0 + $0xf8] sm:$0xff]
  %v47 = vld [vmem:[%s0 + $0x100] sm:$0xff]
  %v48 = vld [vmem:[%s0 + $0x108] sm:$0xff]
  %v49 = vld [vmem:[%s0 + $0x110] sm:$0xff]
  %v50 = vld [vmem:[%s0 + $0x118] sm:$0xff]
  %v51 = vld [vmem:[%s0 + $0x120] sm:$0xff]
  %v52 = vld [vmem:[%s0 + $0x128] sm:$0xff]
  %v53 = vld [vmem:[%s0 + $0x130] sm:$0xff]
  %v54 = vld [vmem:[%s0 + $0x138] sm:$0xff]
  %v55 = vld [vmem:[%s0 + $0x140] sm:$0xff]
  %v56 = vld [vmem:[%s0 + $0x148] sm:$0xff]
  %v57 = vld [vmem:[%s0 + $0x150] sm:$0xff]
  %v58 = vld [vmem:[%s0 + $0x158] sm:$0xff]
  %v59 = vld [vmem:[%s0 + $0x160] sm:$0xff]
  %v60 = vld [vmem:[%s0 + $0x168] sm:$0xff]
  %v61 = vld [vmem:[%s0 + $0x170] sm:$0xff]
  %v62 = vld [vmem:[%s0 + $0x178] sm:$0xff]
  %v63 = vld [vmem:[%s0 + $0x180] sm:$0xff]
  %v64 = vld [vmem:[%s0 + $0x188] sm:$0xff]
  %v65 = vld [vmem:[%s0 + $0x190] sm:$0xff]
  %v66 = vld [vmem:[%s0 + $0x198] sm:$0xff]
  %v67 = vld [vmem:[%s0 + $0x1a0] sm:$0xff]
  %v68 = vld [vmem:[%s0 + $0x1a8] sm:$0xff]
  %v69 = vld [vmem:[%s0 + $0x1b0] sm:$0xff]
  %v70 = vld [vmem:[%s0 + $0x1b8] sm:$0xff]
  %v71 = vld [vmem:[%s0 + $0x1c0] sm:$0xff]
  %v72 = vld [vmem:[%s0 + $0x1c8] sm:$0xff]
  %v73 = vld [vmem:[%s0 + $0x1d0] sm:$0xff]
  %v74 = vld [vmem:[%s0 + $0x1d8] sm:$0xff]
  %v75 = vld [vmem:[%s0 + $0x1e0] sm:$0xff]
  %v76 = vld [vmem:[%s0 + $0x1e8] sm:$0xff]
  %v77 = vld [vmem:[%s0 + $0x1f0] sm:$0xff]
  %v78 = vld [vmem:[%s0 + $0x1f8] sm:$0xff]
  %v79 = vld [vmem:[%s0 + $0x200] sm:$0xff]
  %v80 = vld [vmem:[%s0 + $0x208] sm:$0xff]
  %v81 = vld [vmem:[%s0 + $0x210] sm:$0xff]
  %v82 = vld [vmem:[%s0 + $0x218] sm:$0xff]
  %v83 = vld [vmem:[%s0 + $0x220] sm:$0xff]
  %v84 = vld [vmem:[%s0 + $0x228] sm:$0xff]
  %v85 = vld [vmem:[%s0 + $0x230] sm:$0xff]
  %v86 = vld [vmem:[%s0 + $0x238] sm:$0xff]
  %v87 = vld [vmem:[%s0 + $0x240] sm:$0xff]
  %v88 = vld [vmem:[%s0 + $0x248] sm:$0xff]
  %v89 = vld [vmem:[%s0 + $0x250] sm:$0xff]
  %v90 = vld [vmem:[%s0 + $0x258] sm:$0xff]
  %v91 = vld [vmem:[%s0 + $0x260] sm:$0xff]
  %v92 = vld [vmem:[%s0 + $0x268] sm:$0xff]
  %v93 = vld [vmem:[%s0 + $0x270] sm:$0xff]
  %v94 = vld [vmem:[%s0 + $0x278] sm:$0xff]
  %v95 = vld [vmem:[%s0 + $0x280] sm:$0xff]
  %v96 = vld [vmem:[%s0 + $0x288] sm:$0xff]
  %v97 = vld [vmem:[%s0 + $0x290] sm:$0xff]
  %v98 = vld [vmem:[%s0 + $0x298] sm:$0xff]
  %v99 = vld [vmem:[%s0 + $0x2a0] sm:$0xff]
  %v100 = vld [vmem:[%s0 + $0x2a8] sm:$0xff]
  %v101 = vld [vmem:[%s0 + $0x2b0] sm:$0xff]
  %v102 = vld [vmem:[%s0 + $0x2b8] sm:$0xff]
  %v103 = vld [vmem:[%s0 + $0x2c0] sm:$0xff]
  %v104 = vld [vmem:[%s0 + $0x2c8] sm:$0xff]
  %v105 = vld [vmem:[%s0 + $0x2d0] sm:$0xff]
  %v106 = vld [vmem:[%s0 + $0x2d8] sm:$0xff]
  %v107 = vld [vmem:[%s0 + $0x2e0] sm:$0xff]
  %v108 = vld [vmem:[%s0 + $0x2e8] sm:$0xff]
  %v109 = vld [vmem:[%s0 + $0x2f0] sm:$0xff]
  %v110 = vld [vmem:[%s0 + $0x2f8] sm:$0xff]
  %v111 = vld [vmem:[%s0 + $0x300] sm:$0xff]
  %v112 = vld [vmem:[%s0 + $0x308] sm:$0xff]
  %v113 = vld [vmem:[%s0 + $0x310] sm:$0xff]
  %v114 = vld [vmem:[%s0 + $0x318] sm:$0xff]
  %v115 = vpack.c.bf16 %v16, %v15
  %v116 = vpack.c.bf16 %v18, %v17
  %v117 = vpack.c.bf16 %v20, %v19
  %v118 = vpack.c.bf16 %v22, %v21
  %v119 = vpack.c.bf16 %v24, %v23
  %v120 = vpack.c.bf16 %v26, %v25
  %v121 = vpack.c.bf16 %v28, %v27
  %v122 = vpack.c.bf16 %v30, %v29
  %v123 = vpack.c.bf16 %v32, %v31
  %v124 = vpack.c.bf16 %v34, %v33
  %v125 = vpack.c.bf16 %v36, %v35
  %v126 = vpack.c.bf16 %v38, %v37
  %v127 = vpack.c.bf16 %v40, %v39
  %v128 = vpack.c.bf16 %v42, %v41
  %v129 = vpack.c.bf16 %v44, %v43
  %v130 = vpack.c.bf16 %v46, %v45
  %v131 = vpack.c.bf16 %v48, %v47
  %v132 = vpack.c.bf16 %v50, %v49
  %v133 = vpack.c.bf16 %v52, %v51
  %v134 = vpack.c.bf16 %v54, %v53
  %v135 = vpack.c.bf16 %v56, %v55
  %v136 = vpack.c.bf16 %v58, %v57
  %v137 = vpack.c.bf16 %v60, %v59
  %v138 = vpack.c.bf16 %v62, %v61
  %v139 = vpack.c.bf16 %v64, %v63
  %v140 = vpack.c.bf16 %v66, %v65
  %v141 = vpack.c.bf16 %v68, %v67
  %v142 = vpack.c.bf16 %v70, %v69
  %v143 = vpack.c.bf16 %v72, %v71
  %v144 = vpack.c.bf16 %v74, %v73
  %v145 = vpack.c.bf16 %v76, %v75
  %v146 = vpack.c.bf16 %v78, %v77
  %v147 = vpack.c.bf16 %v80, %v79
  %v148 = vpack.c.bf16 %v82, %v81
  %v149 = vpack.c.bf16 %v84, %v83
  %v150 = vpack.c.bf16 %v86, %v85
  %v151 = vpack.c.bf16 %v88, %v87
  %v152 = vpack.c.bf16 %v90, %v89
  %v153 = vpack.c.bf16 %v92, %v91
  %v154 = vpack.c.bf16 %v94, %v93
  %v155 = vpack.c.bf16 %v96, %v95
  %v156 = vpack.c.bf16 %v98, %v97
  %v157 = vpack.c.bf16 %v100, %v99
  %v158 = vpack.c.bf16 %v102, %v101
  %v159 = vpack.c.bf16 %v104, %v103
  %v160 = vpack.c.bf16 %v106, %v105
  %v161 = vpack.c.bf16 %v108, %v107
  %v162 = vpack.c.bf16 %v110, %v109
  %v163 = vpack.c.bf16 %v112, %v111
  %v164 = vpack.c.bf16 %v114, %v113
  %v165 = vld [vmem:[%s1] sm:$0xf]
  %v166 = vld [vmem:[%s1 + $0x4] sm:$0xf]
  %v167 = vld [vmem:[%s1 + $0x8] sm:$0xf]
  %v168 = vld [vmem:[%s1 + $0xc] sm:$0xf]
  %v169 = vld [vmem:[%s1 + $0x10] sm:$0xf]
  %v170 = vld [vmem:[%s1 + $0x14] sm:$0xf]
  %v171 = vld [vmem:[%s1 + $0x18] sm:$0xf]
  %v172 = vld [vmem:[%s1 + $0x1c] sm:$0xf]
  %v173 = vld [vmem:[%s2] sm:$0x1]
  %v175 = vlaneseq
  %v176 = vshrl.u32 %v175, 7
  %v177 = vsub.s32 0, %v176
  %v178 = vrot.slane %v173, %v177
  %v188 = vunpack.c.l.b16 %v165
  %v189 = vunpack.c.l.b16 %v166
  %v190 = vunpack.c.l.b16 %v167
  %v191 = vunpack.c.l.b16 %v168
  %v192 = vunpack.c.l.b16 %v169
  %v193 = vunpack.c.l.b16 %v170
  %v194 = vunpack.c.l.b16 %v171
  %v195 = vunpack.c.l.b16 %v172
  %v196 = vpack.c.b16 %v189, %v188
  %v197 = vpack.c.b16 %v191, %v190
  %v198 = vpack.c.b16 %v193, %v192
  %v199 = vpack.c.b16 %v195, %v194
  %vm204 = vcmask 523264
  %v206 = vsel %vm204, %v115, 0
  %v209 = vsel %vm204, %v116, 0
  %v212 = vsel %vm204, %v117, 0
  %v215 = vsel %vm204, %v118, 0
  %v218 = vsel %vm204, %v119, 0
  %v221 = vsel %vm204, %v120, 0
  %v224 = vsel %vm204, %v121, 0
  %v227 = vsel %vm204, %v122, 0
  %v230 = vsel %vm204, %v123, 0
  %v233 = vsel %vm204, %v124, 0
  %v236 = vsel %vm204, %v125, 0
  %v239 = vsel %vm204, %v126, 0
  %v242 = vsel %vm204, %v127, 0
  %v245 = vsel %vm204, %v128, 0
  %v248 = vsel %vm204, %v129, 0
  %v251 = vsel %vm204, %v130, 0
  %v254 = vsel %vm204, %v131, 0
  %v257 = vsel %vm204, %v132, 0
  %v260 = vsel %vm204, %v133, 0
  %v263 = vsel %vm204, %v134, 0
  %v266 = vsel %vm204, %v135, 0
  %v269 = vsel %vm204, %v136, 0
  %v272 = vsel %vm204, %v137, 0
  %v275 = vsel %vm204, %v138, 0
  %v278 = vsel %vm204, %v139, 0
  %v281 = vsel %vm204, %v140, 0
  %v284 = vsel %vm204, %v141, 0
  %v287 = vsel %vm204, %v142, 0
  %v290 = vsel %vm204, %v143, 0
  %v293 = vsel %vm204, %v144, 0
  %v296 = vsel %vm204, %v145, 0
  %v299 = vsel %vm204, %v146, 0
  %v302 = vsel %vm204, %v147, 0
  %v305 = vsel %vm204, %v148, 0
  %v308 = vsel %vm204, %v149, 0
  %v311 = vsel %vm204, %v150, 0
  %v314 = vsel %vm204, %v151, 0
  %v317 = vsel %vm204, %v152, 0
  %v320 = vsel %vm204, %v153, 0
  %v323 = vsel %vm204, %v154, 0
  %v326 = vsel %vm204, %v155, 0
  %v329 = vsel %vm204, %v156, 0
  %v332 = vsel %vm204, %v157, 0
  %v335 = vsel %vm204, %v158, 0
  %v338 = vsel %vm204, %v159, 0
  %v341 = vsel %vm204, %v160, 0
  %v344 = vsel %vm204, %v161, 0
  %v347 = vsel %vm204, %v162, 0
  %v350 = vsel %vm204, %v163, 0
  %v353 = vsel %vm204, %v164, 0
  %355 = vmatprep.subr.bf16.mxu0 0
  %356 = vmatpush1.bf16.msra.mxu0 %v196
  %357 = vmatprep.subr.bf16.mxu0 0
  %358 = vmatpush1.bf16.msra.mxu0 %v197
  %359 = vmatprep.subr.bf16.mxu0 0
  %360 = vmatpush1.bf16.msra.mxu0 %v198
  %361 = vmatprep.subr.bf16.mxu0 0
  %362 = vmatpush1.bf16.msra.mxu0 %v199
  %363 = vmatprep.subr.bf16.mxu0 0
  %364 = vmatpush1.bf16.msra.mxu0 0
  %365 = vmatprep.subr.bf16.mxu0 0
  %366 = vmatpush1.bf16.msra.mxu0 0
  %367 = vmatprep.subr.bf16.mxu0 0
  %368 = vmatpush1.bf16.msra.mxu0 0
  %369 = vmatprep.subr.bf16.mxu0 0
  %370 = vmatpush1.bf16.msra.mxu0 0
  %371 = vmatprep.subr.bf16.mxu0 0
  %372 = vmatpush1.bf16.msra.mxu0 0
  %373 = vmatprep.subr.bf16.mxu0 0
  %374 = vmatpush1.bf16.msra.mxu0 0
  %375 = vmatprep.subr.bf16.mxu0 0
  %376 = vmatpush1.bf16.msra.mxu0 0
  %377 = vmatprep.subr.bf16.mxu0 0
  %378 = vmatpush1.bf16.msra.mxu0 0
  %379 = vmatprep.subr.bf16.mxu0 0
  %380 = vmatpush1.bf16.msra.mxu0 0
  %381 = vmatprep.subr.bf16.mxu0 0
  %382 = vmatpush1.bf16.msra.mxu0 0
  %383 = vmatprep.subr.bf16.mxu0 0
  %384 = vmatpush1.bf16.msra.mxu0 0
  %385 = vmatprep.subr.bf16.mxu0 0
  %386 = vmatpush1.bf16.msra.mxu0 0
  %387 = vmatprep.mubr.bf16.mxu0 0
  %388 = vmatmul.mubr.bf16.gmra.mrb[0].mxu0 %v206
  %v389 = vpop.f32.mrb[0].mxu0
  %v390 = vadd.f32 %v178, %v389
  %v391 = vpop.f32.mrb[0].mxu0
  %v392 = vpop.f32.mrb[0].mxu0
  %v393 = vadd.f32 %v178, %v392
  %v394 = vpop.f32.mrb[0].mxu0
  %395 = vmatprep.mubr.bf16.mxu0 0
  %396 = vmatmul.mubr.bf16.gmra.mrb[0].mxu0 %v209
  %v397 = vpop.f32.mrb[0].mxu0
  %v398 = vadd.f32 %v178, %v397
  %v399 = vpop.f32.mrb[0].mxu0
  %v400 = vpop.f32.mrb[0].mxu0
  %v401 = vadd.f32 %v178, %v400
  %v402 = vpop.f32.mrb[0].mxu0
  %403 = vmatprep.mubr.bf16.mxu0 0
  %404 = vmatmul.mubr.bf16.gmra.mrb[0].mxu0 %v212
  %v405 = vpop.f32.mrb[0].mxu0
  %v406 = vadd.f32 %v178, %v405
  %v407 = vpop.f32.mrb[0].mxu0
  %v408 = vpop.f32.mrb[0].mxu0
  %v409 = vadd.f32 %v178, %v408
  %v410 = vpop.f32.mrb[0].mxu0
  %411 = vmatprep.mubr.bf16.mxu0 0
  %412 = vmatmul.mubr.bf16.gmra.mrb[0].mxu0 %v215
  %v413 = vpop.f32.mrb[0].mxu0
  %v414 = vadd.f32 %v178, %v413
  %v415 = vpop.f32.mrb[0].mxu0
  %v416 = vpop.f32.mrb[0].mxu0
  %v417 = vadd.f32 %v178, %v416
  %v418 = vpop.f32.mrb[0].mxu0
  %419 = vmatprep.mubr.bf16.mxu0 0
  %420 = vmatmul.mubr.bf16.gmra.mrb[0].mxu0 %v218
  %v421 = vpop.f32.mrb[0].mxu0
  %v422 = vadd.f32 %v178, %v421
  %v423 = vpop.f32.mrb[0].mxu0
  %v424 = vpop.f32.mrb[0].mxu0
  %v425 = vadd.f32 %v178, %v424
  %v426 = vpop.f32.mrb[0].mxu0
  %427 = vmatprep.mubr.bf16.mxu0 0
  %428 = vmatmul.mubr.bf16.gmra.mrb[0].mxu0 %v221
  %v429 = vpop.f32.mrb[0].mxu0
  %v430 = vadd.f32 %v178, %v429
  %v431 = vpop.f32.mrb[0].mxu0
  %v432 = vpop.f32.mrb[0].mxu0
  %v433 = vadd.f32 %v178, %v432
  %v434 = vpop.f32.mrb[0].mxu0
  %435 = vmatprep.mubr.bf16.mxu0 0
  %436 = vmatmul.mubr.bf16.gmra.mrb[0].mxu0 %v224
  %v437 = vpop.f32.mrb[0].mxu0
  %v438 = vadd.f32 %v178, %v437
  %v439 = vpop.f32.mrb[0].mxu0
  %v440 = vpop.f32.mrb[0].mxu0
  %v441 = vadd.f32 %v178, %v440
  %v442 = vpop.f32.mrb[0].mxu0
  %443 = vmatprep.mubr.bf16.mxu0 0
  %444 = vmatmul.mubr.bf16.gmra.mrb[0].mxu0 %v227
  %v445 = vpop.f32.mrb[0].mxu0
  %v446 = vadd.f32 %v178, %v445
  %v447 = vpop.f32.mrb[0].mxu0
  %v448 = vpop.f32.mrb[0].mxu0
  %v449 = vadd.f32 %v178, %v448
  %v450 = vpop.f32.mrb[0].mxu0
  %451 = vmatprep.mubr.bf16.mxu0 0
  %452 = vmatmul.mubr.bf16.gmra.mrb[0].mxu0 %v230
  %v453 = vpop.f32.mrb[0].mxu0
  %v454 = vadd.f32 %v178, %v453
  %v455 = vpop.f32.mrb[0].mxu0
  %v456 = vpop.f32.mrb[0].mxu0
  %v457 = vadd.f32 %v178, %v456
  %v458 = vpop.f32.mrb[0].mxu0
  %459 = vmatprep.mubr.bf16.mxu0 0
  %460 = vmatmul.mubr.bf16.gmra.mrb[0].mxu0 %v233
  %v461 = vpop.f32.mrb[0].mxu0
  %v462 = vadd.f32 %v178, %v461
  %v463 = vpop.f32.mrb[0].mxu0
  %v464 = vpop.f32.mrb[0].mxu0
  %v465 = vadd.f32 %v178, %v464
  %v466 = vpop.f32.mrb[0].mxu0
  %467 = vmatprep.mubr.bf16.mxu0 0
  %468 = vmatmul.mubr.bf16.gmra.mrb[0].mxu0 %v236
  %v469 = vpop.f32.mrb[0].mxu0
  %v470 = vadd.f32 %v178, %v469
  %v471 = vpop.f32.mrb[0].mxu0
  %v472 = vpop.f32.mrb[0].mxu0
  %v473 = vadd.f32 %v178, %v472
  %v474 = vpop.f32.mrb[0].mxu0
  %475 = vmatprep.mubr.bf16.mxu0 0
  %476 = vmatmul.mubr.bf16.gmra.mrb[0].mxu0 %v239
  %v477 = vpop.f32.mrb[0].mxu0
  %v478 = vadd.f32 %v178, %v477
  %v479 = vpop.f32.mrb[0].mxu0
  %v480 = vpop.f32.mrb[0].mxu0
  %v481 = vadd.f32 %v178, %v480
  %v482 = vpop.f32.mrb[0].mxu0
  %483 = vmatprep.mubr.bf16.mxu0 0
  %484 = vmatmul.mubr.bf16.gmra.mrb[0].mxu0 %v242
  %v485 = vpop.f32.mrb[0].mxu0
  %v486 = vadd.f32 %v178, %v485
  %v487 = vpop.f32.mrb[0].mxu0
  %v488 = vpop.f32.mrb[0].mxu0
  %v489 = vadd.f32 %v178, %v488
  %v490 = vpop.f32.mrb[0].mxu0
  %491 = vmatprep.mubr.bf16.mxu0 0
  %492 = vmatmul.mubr.bf16.gmra.mrb[0].mxu0 %v245
  %v493 = vpop.f32.mrb[0].mxu0
  %v494 = vadd.f32 %v178, %v493
  %v495 = vpop.f32.mrb[0].mxu0
  %v496 = vpop.f32.mrb[0].mxu0
  %v497 = vadd.f32 %v178, %v496
  %v498 = vpop.f32.mrb[0].mxu0
  %499 = vmatprep.mubr.bf16.mxu0 0
  %500 = vmatmul.mubr.bf16.gmra.mrb[0].mxu0 %v248
  %v501 = vpop.f32.mrb[0].mxu0
  %v502 = vadd.f32 %v178, %v501
  %v503 = vpop.f32.mrb[0].mxu0
  %v504 = vpop.f32.mrb[0].mxu0
  %v505 = vadd.f32 %v178, %v504
  %v506 = vpop.f32.mrb[0].mxu0
  %507 = vmatprep.mubr.bf16.mxu0 0
  %508 = vmatmul.mubr.bf16.gmra.mrb[0].mxu0 %v251
  %v509 = vpop.f32.mrb[0].mxu0
  %v510 = vadd.f32 %v178, %v509
  %v511 = vpop.f32.mrb[0].mxu0
  %v512 = vpop.f32.mrb[0].mxu0
  %v513 = vadd.f32 %v178, %v512
  %v514 = vpop.f32.mrb[0].mxu0
  %515 = vmatprep.mubr.bf16.mxu0 0
  %516 = vmatmul.mubr.bf16.gmra.mrb[0].mxu0 %v254
  %v517 = vpop.f32.mrb[0].mxu0
  %v518 = vadd.f32 %v178, %v517
  %v519 = vpop.f32.mrb[0].mxu0
  %v520 = vpop.f32.mrb[0].mxu0
  %v521 = vadd.f32 %v178, %v520
  %v522 = vpop.f32.mrb[0].mxu0
  %523 = vmatprep.mubr.bf16.mxu0 0
  %524 = vmatmul.mubr.bf16.gmra.mrb[0].mxu0 %v257
  %v525 = vpop.f32.mrb[0].mxu0
  %v526 = vadd.f32 %v178, %v525
  %v527 = vpop.f32.mrb[0].mxu0
  %v528 = vpop.f32.mrb[0].mxu0
  %v529 = vadd.f32 %v178, %v528
  %v530 = vpop.f32.mrb[0].mxu0
  %531 = vmatprep.mubr.bf16.mxu0 0
  %532 = vmatmul.mubr.bf16.gmra.mrb[0].mxu0 %v260
  %v533 = vpop.f32.mrb[0].mxu0
  %v534 = vadd.f32 %v178, %v533
  %v535 = vpop.f32.mrb[0].mxu0
  %v536 = vpop.f32.mrb[0].mxu0
  %v537 = vadd.f32 %v178, %v536
  %v538 = vpop.f32.mrb[0].mxu0
  %539 = vmatprep.mubr.bf16.mxu0 0
  %540 = vmatmul.mubr.bf16.gmra.mrb[0].mxu0 %v263
  %v541 = vpop.f32.mrb[0].mxu0
  %v542 = vadd.f32 %v178, %v541
  %v543 = vpop.f32.mrb[0].mxu0
  %v544 = vpop.f32.mrb[0].mxu0
  %v545 = vadd.f32 %v178, %v544
  %v546 = vpop.f32.mrb[0].mxu0
  %547 = vmatprep.mubr.bf16.mxu0 0
  %548 = vmatmul.mubr.bf16.gmra.mrb[0].mxu0 %v266
  %v549 = vpop.f32.mrb[0].mxu0
  %v550 = vadd.f32 %v178, %v549
  %v551 = vpop.f32.mrb[0].mxu0
  %v552 = vpop.f32.mrb[0].mxu0
  %v553 = vadd.f32 %v178, %v552
  %v554 = vpop.f32.mrb[0].mxu0
  %555 = vmatprep.mubr.bf16.mxu0 0
  %556 = vmatmul.mubr.bf16.gmra.mrb[0].mxu0 %v269
  %v557 = vpop.f32.mrb[0].mxu0
  %v558 = vadd.f32 %v178, %v557
  %v559 = vpop.f32.mrb[0].mxu0
  %v560 = vpop.f32.mrb[0].mxu0
  %v561 = vadd.f32 %v178, %v560
  %v562 = vpop.f32.mrb[0].mxu0
  %563 = vmatprep.mubr.bf16.mxu0 0
  %564 = vmatmul.mubr.bf16.gmra.mrb[0].mxu0 %v272
  %v565 = vpop.f32.mrb[0].mxu0
  %v566 = vadd.f32 %v178, %v565
  %v567 = vpop.f32.mrb[0].mxu0
  %v568 = vpop.f32.mrb[0].mxu0
  %v569 = vadd.f32 %v178, %v568
  %v570 = vpop.f32.mrb[0].mxu0
  %571 = vmatprep.mubr.bf16.mxu0 0
  %572 = vmatmul.mubr.bf16.gmra.mrb[0].mxu0 %v275
  %v573 = vpop.f32.mrb[0].mxu0
  %v574 = vadd.f32 %v178, %v573
  %v575 = vpop.f32.mrb[0].mxu0
  %v576 = vpop.f32.mrb[0].mxu0
  %v577 = vadd.f32 %v178, %v576
  %v578 = vpop.f32.mrb[0].mxu0
  %579 = vmatprep.mubr.bf16.mxu0 0
  %580 = vmatmul.mubr.bf16.gmra.mrb[0].mxu0 %v278
  %v581 = vpop.f32.mrb[0].mxu0
  %v582 = vadd.f32 %v178, %v581
  %v583 = vpop.f32.mrb[0].mxu0
  %v584 = vpop.f32.mrb[0].mxu0
  %v585 = vadd.f32 %v178, %v584
  %v586 = vpop.f32.mrb[0].mxu0
  %587 = vmatprep.mubr.bf16.mxu0 0
  %588 = vmatmul.mubr.bf16.gmra.mrb[0].mxu0 %v281
  %v589 = vpop.f32.mrb[0].mxu0
  %v590 = vadd.f32 %v178, %v589
  %v591 = vpop.f32.mrb[0].mxu0
  %v592 = vpop.f32.mrb[0].mxu0
  %v593 = vadd.f32 %v178, %v592
  %v594 = vpop.f32.mrb[0].mxu0
  %595 = vmatprep.mubr.bf16.mxu0 0
  %596 = vmatmul.mubr.bf16.gmra.mrb[0].mxu0 %v284
  %v597 = vpop.f32.mrb[0].mxu0
  %v598 = vadd.f32 %v178, %v597
  %v599 = vpop.f32.mrb[0].mxu0
  %v600 = vpop.f32.mrb[0].mxu0
  %v601 = vadd.f32 %v178, %v600
  %v602 = vpop.f32.mrb[0].mxu0
  %603 = vmatprep.mubr.bf16.mxu0 0
  %604 = vmatmul.mubr.bf16.gmra.mrb[0].mxu0 %v287
  %v605 = vpop.f32.mrb[0].mxu0
  %v606 = vadd.f32 %v178, %v605
  %v607 = vpop.f32.mrb[0].mxu0
  %v608 = vpop.f32.mrb[0].mxu0
  %v609 = vadd.f32 %v178, %v608
  %v610 = vpop.f32.mrb[0].mxu0
  %611 = vmatprep.mubr.bf16.mxu0 0
  %612 = vmatmul.mubr.bf16.gmra.mrb[0].mxu0 %v290
  %v613 = vpop.f32.mrb[0].mxu0
  %v614 = vadd.f32 %v178, %v613
  %v615 = vpop.f32.mrb[0].mxu0
  %v616 = vpop.f32.mrb[0].mxu0
  %v617 = vadd.f32 %v178, %v616
  %v618 = vpop.f32.mrb[0].mxu0
  %619 = vmatprep.mubr.bf16.mxu0 0
  %620 = vmatmul.mubr.bf16.gmra.mrb[0].mxu0 %v293
  %v621 = vpop.f32.mrb[0].mxu0
  %v622 = vadd.f32 %v178, %v621
  %v623 = vpop.f32.mrb[0].mxu0
  %v624 = vpop.f32.mrb[0].mxu0
  %v625 = vadd.f32 %v178, %v624
  %v626 = vpop.f32.mrb[0].mxu0
  %627 = vmatprep.mubr.bf16.mxu0 0
  %628 = vmatmul.mubr.bf16.gmra.mrb[0].mxu0 %v296
  %v629 = vpop.f32.mrb[0].mxu0
  %v630 = vadd.f32 %v178, %v629
  %v631 = vpop.f32.mrb[0].mxu0
  %v632 = vpop.f32.mrb[0].mxu0
  %v633 = vadd.f32 %v178, %v632
  %v634 = vpop.f32.mrb[0].mxu0
  %635 = vmatprep.mubr.bf16.mxu0 0
  %636 = vmatmul.mubr.bf16.gmra.mrb[0].mxu0 %v299
  %v637 = vpop.f32.mrb[0].mxu0
  %v638 = vadd.f32 %v178, %v637
  %v639 = vpop.f32.mrb[0].mxu0
  %v640 = vpop.f32.mrb[0].mxu0
  %v641 = vadd.f32 %v178, %v640
  %v642 = vpop.f32.mrb[0].mxu0
  %643 = vmatprep.mubr.bf16.mxu0 0
  %644 = vmatmul.mubr.bf16.gmra.mrb[0].mxu0 %v302
  %v645 = vpop.f32.mrb[0].mxu0
  %v646 = vadd.f32 %v178, %v645
  %v647 = vpop.f32.mrb[0].mxu0
  %v648 = vpop.f32.mrb[0].mxu0
  %v649 = vadd.f32 %v178, %v648
  %v650 = vpop.f32.mrb[0].mxu0
  %651 = vmatprep.mubr.bf16.mxu0 0
  %652 = vmatmul.mubr.bf16.gmra.mrb[0].mxu0 %v305
  %v653 = vpop.f32.mrb[0].mxu0
  %v654 = vadd.f32 %v178, %v653
  %v655 = vpop.f32.mrb[0].mxu0
  %v656 = vpop.f32.mrb[0].mxu0
  %v657 = vadd.f32 %v178, %v656
  %v658 = vpop.f32.mrb[0].mxu0
  %659 = vmatprep.mubr.bf16.mxu0 0
  %660 = vmatmul.mubr.bf16.gmra.mrb[0].mxu0 %v308
  %v661 = vpop.f32.mrb[0].mxu0
  %v662 = vadd.f32 %v178, %v661
  %v663 = vpop.f32.mrb[0].mxu0
  %v664 = vpop.f32.mrb[0].mxu0
  %v665 = vadd.f32 %v178, %v664
  %v666 = vpop.f32.mrb[0].mxu0
  %667 = vmatprep.mubr.bf16.mxu0 0
  %668 = vmatmul.mubr.bf16.gmra.mrb[0].mxu0 %v311
  %v669 = vpop.f32.mrb[0].mxu0
  %v670 = vadd.f32 %v178, %v669
  %v671 = vpop.f32.mrb[0].mxu0
  %v672 = vpop.f32.mrb[0].mxu0
  %v673 = vadd.f32 %v178, %v672
  %v674 = vpop.f32.mrb[0].mxu0
  %675 = vmatprep.mubr.bf16.mxu0 0
  %676 = vmatmul.mubr.bf16.gmra.mrb[0].mxu0 %v314
  %v677 = vpop.f32.mrb[0].mxu0
  %v678 = vadd.f32 %v178, %v677
  %v679 = vpop.f32.mrb[0].mxu0
  %v680 = vpop.f32.mrb[0].mxu0
  %v681 = vadd.f32 %v178, %v680
  %v682 = vpop.f32.mrb[0].mxu0
  %683 = vmatprep.mubr.bf16.mxu0 0
  %684 = vmatmul.mubr.bf16.gmra.mrb[0].mxu0 %v317
  %v685 = vpop.f32.mrb[0].mxu0
  %v686 = vadd.f32 %v178, %v685
  %v687 = vpop.f32.mrb[0].mxu0
  %v688 = vpop.f32.mrb[0].mxu0
  %v689 = vadd.f32 %v178, %v688
  %v690 = vpop.f32.mrb[0].mxu0
  %691 = vmatprep.mubr.bf16.mxu0 0
  %692 = vmatmul.mubr.bf16.gmra.mrb[0].mxu0 %v320
  %v693 = vpop.f32.mrb[0].mxu0
  %v694 = vadd.f32 %v178, %v693
  %v695 = vpop.f32.mrb[0].mxu0
  %v696 = vpop.f32.mrb[0].mxu0
  %v697 = vadd.f32 %v178, %v696
  %v698 = vpop.f32.mrb[0].mxu0
  %699 = vmatprep.mubr.bf16.mxu0 0
  %700 = vmatmul.mubr.bf16.gmra.mrb[0].mxu0 %v323
  %v701 = vpop.f32.mrb[0].mxu0
  %v702 = vadd.f32 %v178, %v701
  %v703 = vpop.f32.mrb[0].mxu0
  %v704 = vpop.f32.mrb[0].mxu0
  %v705 = vadd.f32 %v178, %v704
  %v706 = vpop.f32.mrb[0].mxu0
  %707 = vmatprep.mubr.bf16.mxu0 0
  %708 = vmatmul.mubr.bf16.gmra.mrb[0].mxu0 %v326
  %v709 = vpop.f32.mrb[0].mxu0
  %v710 = vadd.f32 %v178, %v709
  %v711 = vpop.f32.mrb[0].mxu0
  %v712 = vpop.f32.mrb[0].mxu0
  %v713 = vadd.f32 %v178, %v712
  %v714 = vpop.f32.mrb[0].mxu0
  %715 = vmatprep.mubr.bf16.mxu0 0
  %716 = vmatmul.mubr.bf16.gmra.mrb[0].mxu0 %v329
  %v717 = vpop.f32.mrb[0].mxu0
  %v718 = vadd.f32 %v178, %v717
  %v719 = vpop.f32.mrb[0].mxu0
  %v720 = vpop.f32.mrb[0].mxu0
  %v721 = vadd.f32 %v178, %v720
  %v722 = vpop.f32.mrb[0].mxu0
  %723 = vmatprep.mubr.bf16.mxu0 0
  %724 = vmatmul.mubr.bf16.gmra.mrb[0].mxu0 %v332
  %v725 = vpop.f32.mrb[0].mxu0
  %v726 = vadd.f32 %v178, %v725
  %v727 = vpop.f32.mrb[0].mxu0
  %v728 = vpop.f32.mrb[0].mxu0
  %v729 = vadd.f32 %v178, %v728
  %v730 = vpop.f32.mrb[0].mxu0
  %731 = vmatprep.mubr.bf16.mxu0 0
  %732 = vmatmul.mubr.bf16.gmra.mrb[0].mxu0 %v335
  %v733 = vpop.f32.mrb[0].mxu0
  %v734 = vadd.f32 %v178, %v733
  %v735 = vpop.f32.mrb[0].mxu0
  %v736 = vpop.f32.mrb[0].mxu0
  %v737 = vadd.f32 %v178, %v736
  %v738 = vpop.f32.mrb[0].mxu0
  %739 = vmatprep.mubr.bf16.mxu0 0
  %740 = vmatmul.mubr.bf16.gmra.mrb[0].mxu0 %v338
  %v741 = vpop.f32.mrb[0].mxu0
  %v742 = vadd.f32 %v178, %v741
  %v743 = vpop.f32.mrb[0].mxu0
  %v744 = vpop.f32.mrb[0].mxu0
  %v745 = vadd.f32 %v178, %v744
  %v746 = vpop.f32.mrb[0].mxu0
  %747 = vmatprep.mubr.bf16.mxu0 0
  %748 = vmatmul.mubr.bf16.gmra.mrb[0].mxu0 %v341
  %v749 = vpop.f32.mrb[0].mxu0
  %v750 = vadd.f32 %v178, %v749
  %v751 = vpop.f32.mrb[0].mxu0
  %v752 = vpop.f32.mrb[0].mxu0
  %v753 = vadd.f32 %v178, %v752
  %v754 = vpop.f32.mrb[0].mxu0
  %755 = vmatprep.mubr.bf16.mxu0 0
  %756 = vmatmul.mubr.bf16.gmra.mrb[0].mxu0 %v344
  %v757 = vpop.f32.mrb[0].mxu0
  %v758 = vadd.f32 %v178, %v757
  %v759 = vpop.f32.mrb[0].mxu0
  %v760 = vpop.f32.mrb[0].mxu0
  %v761 = vadd.f32 %v178, %v760
  %v762 = vpop.f32.mrb[0].mxu0
  %763 = vmatprep.mubr.bf16.mxu0 0
  %764 = vmatmul.mubr.bf16.gmra.mrb[0].mxu0 %v347
  %v765 = vpop.f32.mrb[0].mxu0
  %v766 = vadd.f32 %v178, %v765
  %v767 = vpop.f32.mrb[0].mxu0
  %v768 = vpop.f32.mrb[0].mxu0
  %v769 = vadd.f32 %v178, %v768
  %v770 = vpop.f32.mrb[0].mxu0
  %771 = vmatprep.mubr.bf16.mxu0 0
  %772 = vmatmul.mubr.bf16.gmra.mrb[0].mxu0 %v350
  %v773 = vpop.f32.mrb[0].mxu0
  %v774 = vadd.f32 %v178, %v773
  %v775 = vpop.f32.mrb[0].mxu0
  %v776 = vpop.f32.mrb[0].mxu0
  %v777 = vadd.f32 %v178, %v776
  %v778 = vpop.f32.mrb[0].mxu0
  %779 = vmatprep.mubr.bf16.mxu0 0
  %780 = vmatmul.mubr.bf16.gmra.mrb[0].mxu0 %v353
  %v781 = vpop.f32.mrb[0].mxu0
  %v782 = vadd.f32 %v178, %v781
  %v783 = vpop.f32.mrb[0].mxu0
  %v784 = vpop.f32.mrb[0].mxu0
  %v785 = vadd.f32 %v178, %v784
  %v786 = vpop.f32.mrb[0].mxu0
  %787 = vdwg.mxu0
  %vm788 = vcmp.gt.f32.partialorder %v390, 0.0
  %vm789 = vcmp.gt.f32.partialorder %v393, 0.0
  %vm790 = vcmp.gt.f32.partialorder %v398, 0.0
  %vm791 = vcmp.gt.f32.partialorder %v401, 0.0
  %vm792 = vcmp.gt.f32.partialorder %v406, 0.0
  %vm793 = vcmp.gt.f32.partialorder %v409, 0.0
  %vm794 = vcmp.gt.f32.partialorder %v414, 0.0
  %vm795 = vcmp.gt.f32.partialorder %v417, 0.0
  %vm796 = vcmp.gt.f32.partialorder %v422, 0.0
  %vm797 = vcmp.gt.f32.partialorder %v425, 0.0
  %vm798 = vcmp.gt.f32.partialorder %v430, 0.0
  %vm799 = vcmp.gt.f32.partialorder %v433, 0.0
  %vm800 = vcmp.gt.f32.partialorder %v438, 0.0
  %vm801 = vcmp.gt.f32.partialorder %v441, 0.0
  %vm802 = vcmp.gt.f32.partialorder %v446, 0.0
  %vm803 = vcmp.gt.f32.partialorder %v449, 0.0
  %vm804 = vcmp.gt.f32.partialorder %v454, 0.0
  %vm805 = vcmp.gt.f32.partialorder %v457, 0.0
  %vm806 = vcmp.gt.f32.partialorder %v462, 0.0
  %vm807 = vcmp.gt.f32.partialorder %v465, 0.0
  %vm808 = vcmp.gt.f32.partialorder %v470, 0.0
  %vm809 = vcmp.gt.f32.partialorder %v473, 0.0
  %vm810 = vcmp.gt.f32.partialorder %v478, 0.0
  %vm811 = vcmp.gt.f32.partialorder %v481, 0.0
  %vm812 = vcmp.gt.f32.partialorder %v486, 0.0
  %vm813 = vcmp.gt.f32.partialorder %v489, 0.0
  %vm814 = vcmp.gt.f32.partialorder %v494, 0.0
  %vm815 = vcmp.gt.f32.partialorder %v497, 0.0
  %vm816 = vcmp.gt.f32.partialorder %v502, 0.0
  %vm817 = vcmp.gt.f32.partialorder %v505, 0.0
  %vm818 = vcmp.gt.f32.partialorder %v510, 0.0
  %vm819 = vcmp.gt.f32.partialorder %v513, 0.0
  %vm820 = vcmp.gt.f32.partialorder %v518, 0.0
  %vm821 = vcmp.gt.f32.partialorder %v521, 0.0
  %vm822 = vcmp.gt.f32.partialorder %v526, 0.0
  %vm823 = vcmp.gt.f32.partialorder %v529, 0.0
  %vm824 = vcmp.gt.f32.partialorder %v534, 0.0
  %vm825 = vcmp.gt.f32.partialorder %v537, 0.0
  %vm826 = vcmp.gt.f32.partialorder %v542, 0.0
  %vm827 = vcmp.gt.f32.partialorder %v545, 0.0
  %vm828 = vcmp.gt.f32.partialorder %v550, 0.0
  %vm829 = vcmp.gt.f32.partialorder %v553, 0.0
  %vm830 = vcmp.gt.f32.partialorder %v558, 0.0
  %vm831 = vcmp.gt.f32.partialorder %v561, 0.0
  %vm832 = vcmp.gt.f32.partialorder %v566, 0.0
  %vm833 = vcmp.gt.f32.partialorder %v569, 0.0
  %vm834 = vcmp.gt.f32.partialorder %v574, 0.0
  %vm835 = vcmp.gt.f32.partialorder %v577, 0.0
  %vm836 = vcmp.gt.f32.partialorder %v582, 0.0
  %vm837 = vcmp.gt.f32.partialorder %v585, 0.0
  %vm838 = vcmp.gt.f32.partialorder %v590, 0.0
  %vm839 = vcmp.gt.f32.partialorder %v593, 0.0
  %vm840 = vcmp.gt.f32.partialorder %v598, 0.0
  %vm841 = vcmp.gt.f32.partialorder %v601, 0.0
  %vm842 = vcmp.gt.f32.partialorder %v606, 0.0
  %vm843 = vcmp.gt.f32.partialorder %v609, 0.0
  %vm844 = vcmp.gt.f32.partialorder %v614, 0.0
  %vm845 = vcmp.gt.f32.partialorder %v617, 0.0
  %vm846 = vcmp.gt.f32.partialorder %v622, 0.0
  %vm847 = vcmp.gt.f32.partialorder %v625, 0.0
  %vm848 = vcmp.gt.f32.partialorder %v630, 0.0
  %vm849 = vcmp.gt.f32.partialorder %v633, 0.0
  %vm850 = vcmp.gt.f32.partialorder %v638, 0.0
  %vm851 = vcmp.gt.f32.partialorder %v641, 0.0
  %vm852 = vcmp.gt.f32.partialorder %v646, 0.0
  %vm853 = vcmp.gt.f32.partialorder %v649, 0.0
  %vm854 = vcmp.gt.f32.partialorder %v654, 0.0
  %vm855 = vcmp.gt.f32.partialorder %v657, 0.0
  %vm856 = vcmp.gt.f32.partialorder %v662, 0.0
  %vm857 = vcmp.gt.f32.partialorder %v665, 0.0
  %vm858 = vcmp.gt.f32.partialorder %v670, 0.0
  %vm859 = vcmp.gt.f32.partialorder %v673, 0.0
  %vm860 = vcmp.gt.f32.partialorder %v678, 0.0
  %vm861 = vcmp.gt.f32.partialorder %v681, 0.0
  %vm862 = vcmp.gt.f32.partialorder %v686, 0.0
  %vm863 = vcmp.gt.f32.partialorder %v689, 0.0
  %vm864 = vcmp.gt.f32.partialorder %v694, 0.0
  %vm865 = vcmp.gt.f32.partialorder %v697, 0.0
  %vm866 = vcmp.gt.f32.partialorder %v702, 0.0
  %vm867 = vcmp.gt.f32.partialorder %v705, 0.0
  %vm868 = vcmp.gt.f32.partialorder %v710, 0.0
  %vm869 = vcmp.gt.f32.partialorder %v713, 0.0
  %vm870 = vcmp.gt.f32.partialorder %v718, 0.0
  %vm871 = vcmp.gt.f32.partialorder %v721, 0.0
  %vm872 = vcmp.gt.f32.partialorder %v726, 0.0
  %vm873 = vcmp.gt.f32.partialorder %v729, 0.0
  %vm874 = vcmp.gt.f32.partialorder %v734, 0.0
  %vm875 = vcmp.gt.f32.partialorder %v737, 0.0
  %vm876 = vcmp.gt.f32.partialorder %v742, 0.0
  %vm877 = vcmp.gt.f32.partialorder %v745, 0.0
  %vm878 = vcmp.gt.f32.partialorder %v750, 0.0
  %vm879 = vcmp.gt.f32.partialorder %v753, 0.0
  %vm880 = vcmp.gt.f32.partialorder %v758, 0.0
  %vm881 = vcmp.gt.f32.partialorder %v761, 0.0
  %vm882 = vcmp.gt.f32.partialorder %v766, 0.0
  %vm883 = vcmp.gt.f32.partialorder %v769, 0.0
  %vm884 = vcmp.gt.f32.partialorder %v774, 0.0
  %vm885 = vcmp.gt.f32.partialorder %v777, 0.0
  %vm886 = vcmp.gt.f32.partialorder %v782, 0.0
  %vm887 = vcmp.gt.f32.partialorder %v785, 0.0
  %v888 = vmul.f32 %v390, 0.01
  %v889 = vmul.f32 %v393, 0.01
  %v890 = vmul.f32 %v398, 0.01
  %v891 = vmul.f32 %v401, 0.01
  %v892 = vmul.f32 %v406, 0.01
  %v893 = vmul.f32 %v409, 0.01
  %v894 = vmul.f32 %v414, 0.01
  %v895 = vmul.f32 %v417, 0.01
  %v896 = vmul.f32 %v422, 0.01
  %v897 = vmul.f32 %v425, 0.01
  %v898 = vmul.f32 %v430, 0.01
  %v899 = vmul.f32 %v433, 0.01
  %v900 = vmul.f32 %v438, 0.01
  %v901 = vmul.f32 %v441, 0.01
  %v902 = vmul.f32 %v446, 0.01
  %v903 = vmul.f32 %v449, 0.01
  %v904 = vmul.f32 %v454, 0.01
  %v905 = vmul.f32 %v457, 0.01
  %v906 = vmul.f32 %v462, 0.01
  %v907 = vmul.f32 %v465, 0.01
  %v908 = vmul.f32 %v470, 0.01
  %v909 = vmul.f32 %v473, 0.01
  %v910 = vmul.f32 %v478, 0.01
  %v911 = vmul.f32 %v481, 0.01
  %v912 = vmul.f32 %v486, 0.01
  %v913 = vmul.f32 %v489, 0.01
  %v914 = vmul.f32 %v494, 0.01
  %v915 = vmul.f32 %v497, 0.01
  %v916 = vmul.f32 %v502, 0.01
  %v917 = vmul.f32 %v505, 0.01
  %v918 = vmul.f32 %v510, 0.01
  %v919 = vmul.f32 %v513, 0.01
  %v920 = vmul.f32 %v518, 0.01
  %v921 = vmul.f32 %v521, 0.01
  %v922 = vmul.f32 %v526, 0.01
  %v923 = vmul.f32 %v529, 0.01
  %v924 = vmul.f32 %v534, 0.01
  %v925 = vmul.f32 %v537, 0.01
  %v926 = vmul.f32 %v542, 0.01
  %v927 = vmul.f32 %v545, 0.01
  %v928 = vmul.f32 %v550, 0.01
  %v929 = vmul.f32 %v553, 0.01
  %v930 = vmul.f32 %v558, 0.01
  %v931 = vmul.f32 %v561, 0.01
  %v932 = vmul.f32 %v566, 0.01
  %v933 = vmul.f32 %v569, 0.01
  %v934 = vmul.f32 %v574, 0.01
  %v935 = vmul.f32 %v577, 0.01
  %v936 = vmul.f32 %v582, 0.01
  %v937 = vmul.f32 %v585, 0.01
  %v938 = vmul.f32 %v590, 0.01
  %v939 = vmul.f32 %v593, 0.01
  %v940 = vmul.f32 %v598, 0.01
  %v941 = vmul.f32 %v601, 0.01
  %v942 = vmul.f32 %v606, 0.01
  %v943 = vmul.f32 %v609, 0.01
  %v944 = vmul.f32 %v614, 0.01
  %v945 = vmul.f32 %v617, 0.01
  %v946 = vmul.f32 %v622, 0.01
  %v947 = vmul.f32 %v625, 0.01
  %v948 = vmul.f32 %v630, 0.01
  %v949 = vmul.f32 %v633, 0.01
  %v950 = vmul.f32 %v638, 0.01
  %v951 = vmul.f32 %v641, 0.01
  %v952 = vmul.f32 %v646, 0.01
  %v953 = vmul.f32 %v649, 0.01
  %v954 = vmul.f32 %v654, 0.01
  %v955 = vmul.f32 %v657, 0.01
  %v956 = vmul.f32 %v662, 0.01
  %v957 = vmul.f32 %v665, 0.01
  %v958 = vmul.f32 %v670, 0.01
  %v959 = vmul.f32 %v673, 0.01
  %v960 = vmul.f32 %v678, 0.01
  %v961 = vmul.f32 %v681, 0.01
  %v962 = vmul.f32 %v686, 0.01
  %v963 = vmul.f32 %v689, 0.01
  %v964 = vmul.f32 %v694, 0.01
  %v965 = vmul.f32 %v697, 0.01
  %v966 = vmul.f32 %v702, 0.01
  %v967 = vmul.f32 %v705, 0.01
  %v968 = vmul.f32 %v710, 0.01
  %v969 = vmul.f32 %v713, 0.01
  %v970 = vmul.f32 %v718, 0.01
  %v971 = vmul.f32 %v721, 0.01
  %v972 = vmul.f32 %v726, 0.01
  %v973 = vmul.f32 %v729, 0.01
  %v974 = vmul.f32 %v734, 0.01
  %v975 = vmul.f32 %v737, 0.01
  %v976 = vmul.f32 %v742, 0.01
  %v977 = vmul.f32 %v745, 0.01
  %v978 = vmul.f32 %v750, 0.01
  %v979 = vmul.f32 %v753, 0.01
  %v980 = vmul.f32 %v758, 0.01
  %v981 = vmul.f32 %v761, 0.01
  %v982 = vmul.f32 %v766, 0.01
  %v983 = vmul.f32 %v769, 0.01
  %v984 = vmul.f32 %v774, 0.01
  %v985 = vmul.f32 %v777, 0.01
  %v986 = vmul.f32 %v782, 0.01
  %v987 = vmul.f32 %v785, 0.01
  %v988 = vsel %vm788, %v390, %v888
  %v989 = vsel %vm789, %v393, %v889
  %v990 = vsel %vm790, %v398, %v890
  %v991 = vsel %vm791, %v401, %v891
  %v992 = vsel %vm792, %v406, %v892
  %v993 = vsel %vm793, %v409, %v893
  %v994 = vsel %vm794, %v414, %v894
  %v995 = vsel %vm795, %v417, %v895
  %v996 = vsel %vm796, %v422, %v896
  %v997 = vsel %vm797, %v425, %v897
  %v998 = vsel %vm798, %v430, %v898
  %v999 = vsel %vm799, %v433, %v899
  %v1000 = vsel %vm800, %v438, %v900
  %v1001 = vsel %vm801, %v441, %v901
  %v1002 = vsel %vm802, %v446, %v902
  %v1003 = vsel %vm803, %v449, %v903
  %v1004 = vsel %vm804, %v454, %v904
  %v1005 = vsel %vm805, %v457, %v905
  %v1006 = vsel %vm806, %v462, %v906
  %v1007 = vsel %vm807, %v465, %v907
  %v1008 = vsel %vm808, %v470, %v908
  %v1009 = vsel %vm809, %v473, %v909
  %v1010 = vsel %vm810, %v478, %v910
  %v1011 = vsel %vm811, %v481, %v911
  %v1012 = vsel %vm812, %v486, %v912
  %v1013 = vsel %vm813, %v489, %v913
  %v1014 = vsel %vm814, %v494, %v914
  %v1015 = vsel %vm815, %v497, %v915
  %v1016 = vsel %vm816, %v502, %v916
  %v1017 = vsel %vm817, %v505, %v917
  %v1018 = vsel %vm818, %v510, %v918
  %v1019 = vsel %vm819, %v513, %v919
  %v1020 = vsel %vm820, %v518, %v920
  %v1021 = vsel %vm821, %v521, %v921
  %v1022 = vsel %vm822, %v526, %v922
  %v1023 = vsel %vm823, %v529, %v923
  %v1024 = vsel %vm824, %v534, %v924
  %v1025 = vsel %vm825, %v537, %v925
  %v1026 = vsel %vm826, %v542, %v926
  %v1027 = vsel %vm827, %v545, %v927
  %v1028 = vsel %vm828, %v550, %v928
  %v1029 = vsel %vm829, %v553, %v929
  %v1030 = vsel %vm830, %v558, %v930
  %v1031 = vsel %vm831, %v561, %v931
  %v1032 = vsel %vm832, %v566, %v932
  %v1033 = vsel %vm833, %v569, %v933
  %v1034 = vsel %vm834, %v574, %v934
  %v1035 = vsel %vm835, %v577, %v935
  %v1036 = vsel %vm836, %v582, %v936
  %v1037 = vsel %vm837, %v585, %v937
  %v1038 = vsel %vm838, %v590, %v938
  %v1039 = vsel %vm839, %v593, %v939
  %v1040 = vsel %vm840, %v598, %v940
  %v1041 = vsel %vm841, %v601, %v941
  %v1042 = vsel %vm842, %v606, %v942
  %v1043 = vsel %vm843, %v609, %v943
  %v1044 = vsel %vm844, %v614, %v944
  %v1045 = vsel %vm845, %v617, %v945
  %v1046 = vsel %vm846, %v622, %v946
  %v1047 = vsel %vm847, %v625, %v947
  %v1048 = vsel %vm848, %v630, %v948
  %v1049 = vsel %vm849, %v633, %v949
  %v1050 = vsel %vm850, %v638, %v950
  %v1051 = vsel %vm851, %v641, %v951
  %v1052 = vsel %vm852, %v646, %v952
  %v1053 = vsel %vm853, %v649, %v953
  %v1054 = vsel %vm854, %v654, %v954
  %v1055 = vsel %vm855, %v657, %v955
  %v1056 = vsel %vm856, %v662, %v956
  %v1057 = vsel %vm857, %v665, %v957
  %v1058 = vsel %vm858, %v670, %v958
  %v1059 = vsel %vm859, %v673, %v959
  %v1060 = vsel %vm860, %v678, %v960
  %v1061 = vsel %vm861, %v681, %v961
  %v1062 = vsel %vm862, %v686, %v962
  %v1063 = vsel %vm863, %v689, %v963
  %v1064 = vsel %vm864, %v694, %v964
  %v1065 = vsel %vm865, %v697, %v965
  %v1066 = vsel %vm866, %v702, %v966
  %v1067 = vsel %vm867, %v705, %v967
  %v1068 = vsel %vm868, %v710, %v968
  %v1069 = vsel %vm869, %v713, %v969
  %v1070 = vsel %vm870, %v718, %v970
  %v1071 = vsel %vm871, %v721, %v971
  %v1072 = vsel %vm872, %v726, %v972
  %v1073 = vsel %vm873, %v729, %v973
  %v1074 = vsel %vm874, %v734, %v974
  %v1075 = vsel %vm875, %v737, %v975
  %v1076 = vsel %vm876, %v742, %v976
  %v1077 = vsel %vm877, %v745, %v977
  %v1078 = vsel %vm878, %v750, %v978
  %v1079 = vsel %vm879, %v753, %v979
  %v1080 = vsel %vm880, %v758, %v980
  %v1081 = vsel %vm881, %v761, %v981
  %v1082 = vsel %vm882, %v766, %v982
  %v1083 = vsel %vm883, %v769, %v983
  %v1084 = vsel %vm884, %v774, %v984
  %v1085 = vsel %vm885, %v777, %v985
  %v1086 = vsel %vm886, %v782, %v986
  %v1087 = vsel %vm887, %v785, %v987
  %1088 = vst.msk [vmem:[%s3] sm:$0xff] %vm204, %v988
  %1089 = vst.msk [vmem:[%s3 + $0x8] sm:$0xff] %vm204, %v989
  %1090 = vst.msk [vmem:[%s3 + $0x10] sm:$0xff] %vm204, %v990
  %1091 = vst.msk [vmem:[%s3 + $0x18] sm:$0xff] %vm204, %v991
  %1092 = vst.msk [vmem:[%s3 + $0x20] sm:$0xff] %vm204, %v992
  %1093 = vst.msk [vmem:[%s3 + $0x28] sm:$0xff] %vm204, %v993
  %1094 = vst.msk [vmem:[%s3 + $0x30] sm:$0xff] %vm204, %v994
  %1095 = vst.msk [vmem:[%s3 + $0x38] sm:$0xff] %vm204, %v995
  %1096 = vst.msk [vmem:[%s3 + $0x40] sm:$0xff] %vm204, %v996
  %1097 = vst.msk [vmem:[%s3 + $0x48] sm:$0xff] %vm204, %v997
  %1098 = vst.msk [vmem:[%s3 + $0x50] sm:$0xff] %vm204, %v998
  %1099 = vst.msk [vmem:[%s3 + $0x58] sm:$0xff] %vm204, %v999
  %1100 = vst.msk [vmem:[%s3 + $0x60] sm:$0xff] %vm204, %v1000
  %1101 = vst.msk [vmem:[%s3 + $0x68] sm:$0xff] %vm204, %v1001
  %1102 = vst.msk [vmem:[%s3 + $0x70] sm:$0xff] %vm204, %v1002
  %1103 = vst.msk [vmem:[%s3 + $0x78] sm:$0xff] %vm204, %v1003
  %1104 = vst.msk [vmem:[%s3 + $0x80] sm:$0xff] %vm204, %v1004
  %1105 = vst.msk [vmem:[%s3 + $0x88] sm:$0xff] %vm204, %v1005
  %1106 = vst.msk [vmem:[%s3 + $0x90] sm:$0xff] %vm204, %v1006
  %1107 = vst.msk [vmem:[%s3 + $0x98] sm:$0xff] %vm204, %v1007
  %1108 = vst.msk [vmem:[%s3 + $0xa0] sm:$0xff] %vm204, %v1008
  %1109 = vst.msk [vmem:[%s3 + $0xa8] sm:$0xff] %vm204, %v1009
  %1110 = vst.msk [vmem:[%s3 + $0xb0] sm:$0xff] %vm204, %v1010
  %1111 = vst.msk [vmem:[%s3 + $0xb8] sm:$0xff] %vm204, %v1011
  %1112 = vst.msk [vmem:[%s3 + $0xc0] sm:$0xff] %vm204, %v1012
  %1113 = vst.msk [vmem:[%s3 + $0xc8] sm:$0xff] %vm204, %v1013
  %1114 = vst.msk [vmem:[%s3 + $0xd0] sm:$0xff] %vm204, %v1014
  %1115 = vst.msk [vmem:[%s3 + $0xd8] sm:$0xff] %vm204, %v1015
  %1116 = vst.msk [vmem:[%s3 + $0xe0] sm:$0xff] %vm204, %v1016
  %1117 = vst.msk [vmem:[%s3 + $0xe8] sm:$0xff] %vm204, %v1017
  %1118 = vst.msk [vmem:[%s3 + $0xf0] sm:$0xff] %vm204, %v1018
  %1119 = vst.msk [vmem:[%s3 + $0xf8] sm:$0xff] %vm204, %v1019
  %1120 = vst.msk [vmem:[%s3 + $0x100] sm:$0xff] %vm204, %v1020
  %1121 = vst.msk [vmem:[%s3 + $0x108] sm:$0xff] %vm204, %v1021
  %1122 = vst.msk [vmem:[%s3 + $0x110] sm:$0xff] %vm204, %v1022
  %1123 = vst.msk [vmem:[%s3 + $0x118] sm:$0xff] %vm204, %v1023
  %1124 = vst.msk [vmem:[%s3 + $0x120] sm:$0xff] %vm204, %v1024
  %1125 = vst.msk [vmem:[%s3 + $0x128] sm:$0xff] %vm204, %v1025
  %1126 = vst.msk [vmem:[%s3 + $0x130] sm:$0xff] %vm204, %v1026
  %1127 = vst.msk [vmem:[%s3 + $0x138] sm:$0xff] %vm204, %v1027
  %1128 = vst.msk [vmem:[%s3 + $0x140] sm:$0xff] %vm204, %v1028
  %1129 = vst.msk [vmem:[%s3 + $0x148] sm:$0xff] %vm204, %v1029
  %1130 = vst.msk [vmem:[%s3 + $0x150] sm:$0xff] %vm204, %v1030
  %1131 = vst.msk [vmem:[%s3 + $0x158] sm:$0xff] %vm204, %v1031
  %1132 = vst.msk [vmem:[%s3 + $0x160] sm:$0xff] %vm204, %v1032
  %1133 = vst.msk [vmem:[%s3 + $0x168] sm:$0xff] %vm204, %v1033
  %1134 = vst.msk [vmem:[%s3 + $0x170] sm:$0xff] %vm204, %v1034
  %1135 = vst.msk [vmem:[%s3 + $0x178] sm:$0xff] %vm204, %v1035
  %1136 = vst.msk [vmem:[%s3 + $0x180] sm:$0xff] %vm204, %v1036
  %1137 = vst.msk [vmem:[%s3 + $0x188] sm:$0xff] %vm204, %v1037
  %1138 = vst.msk [vmem:[%s3 + $0x190] sm:$0xff] %vm204, %v1038
  %1139 = vst.msk [vmem:[%s3 + $0x198] sm:$0xff] %vm204, %v1039
  %1140 = vst.msk [vmem:[%s3 + $0x1a0] sm:$0xff] %vm204, %v1040
  %1141 = vst.msk [vmem:[%s3 + $0x1a8] sm:$0xff] %vm204, %v1041
  %1142 = vst.msk [vmem:[%s3 + $0x1b0] sm:$0xff] %vm204, %v1042
  %1143 = vst.msk [vmem:[%s3 + $0x1b8] sm:$0xff] %vm204, %v1043
  %1144 = vst.msk [vmem:[%s3 + $0x1c0] sm:$0xff] %vm204, %v1044
  %1145 = vst.msk [vmem:[%s3 + $0x1c8] sm:$0xff] %vm204, %v1045
  %1146 = vst.msk [vmem:[%s3 + $0x1d0] sm:$0xff] %vm204, %v1046
  %1147 = vst.msk [vmem:[%s3 + $0x1d8] sm:$0xff] %vm204, %v1047
  %1148 = vst.msk [vmem:[%s3 + $0x1e0] sm:$0xff] %vm204, %v1048
  %1149 = vst.msk [vmem:[%s3 + $0x1e8] sm:$0xff] %vm204, %v1049
  %1150 = vst.msk [vmem:[%s3 + $0x1f0] sm:$0xff] %vm204, %v1050
  %1151 = vst.msk [vmem:[%s3 + $0x1f8] sm:$0xff] %vm204, %v1051
  %1152 = vst.msk [vmem:[%s3 + $0x200] sm:$0xff] %vm204, %v1052
  %1153 = vst.msk [vmem:[%s3 + $0x208] sm:$0xff] %vm204, %v1053
  %1154 = vst.msk [vmem:[%s3 + $0x210] sm:$0xff] %vm204, %v1054
  %1155 = vst.msk [vmem:[%s3 + $0x218] sm:$0xff] %vm204, %v1055
  %1156 = vst.msk [vmem:[%s3 + $0x220] sm:$0xff] %vm204, %v1056
  %1157 = vst.msk [vmem:[%s3 + $0x228] sm:$0xff] %vm204, %v1057
  %1158 = vst.msk [vmem:[%s3 + $0x230] sm:$0xff] %vm204, %v1058
  %1159 = vst.msk [vmem:[%s3 + $0x238] sm:$0xff] %vm204, %v1059
  %1160 = vst.msk [vmem:[%s3 + $0x240] sm:$0xff] %vm204, %v1060
  %1161 = vst.msk [vmem:[%s3 + $0x248] sm:$0xff] %vm204, %v1061
  %1162 = vst.msk [vmem:[%s3 + $0x250] sm:$0xff] %vm204, %v1062
  %1163 = vst.msk [vmem:[%s3 + $0x258] sm:$0xff] %vm204, %v1063
  %1164 = vst.msk [vmem:[%s3 + $0x260] sm:$0xff] %vm204, %v1064
  %1165 = vst.msk [vmem:[%s3 + $0x268] sm:$0xff] %vm204, %v1065
  %1166 = vst.msk [vmem:[%s3 + $0x270] sm:$0xff] %vm204, %v1066
  %1167 = vst.msk [vmem:[%s3 + $0x278] sm:$0xff] %vm204, %v1067
  %1168 = vst.msk [vmem:[%s3 + $0x280] sm:$0xff] %vm204, %v1068
  %1169 = vst.msk [vmem:[%s3 + $0x288] sm:$0xff] %vm204, %v1069
  %1170 = vst.msk [vmem:[%s3 + $0x290] sm:$0xff] %vm204, %v1070
  %1171 = vst.msk [vmem:[%s3 + $0x298] sm:$0xff] %vm204, %v1071
  %1172 = vst.msk [vmem:[%s3 + $0x2a0] sm:$0xff] %vm204, %v1072
  %1173 = vst.msk [vmem:[%s3 + $0x2a8] sm:$0xff] %vm204, %v1073
  %1174 = vst.msk [vmem:[%s3 + $0x2b0] sm:$0xff] %vm204, %v1074
  %1175 = vst.msk [vmem:[%s3 + $0x2b8] sm:$0xff] %vm204, %v1075
  %1176 = vst.msk [vmem:[%s3 + $0x2c0] sm:$0xff] %vm204, %v1076
  %1177 = vst.msk [vmem:[%s3 + $0x2c8] sm:$0xff] %vm204, %v1077
  %1178 = vst.msk [vmem:[%s3 + $0x2d0] sm:$0xff] %vm204, %v1078
  %1179 = vst.msk [vmem:[%s3 + $0x2d8] sm:$0xff] %vm204, %v1079
  %1180 = vst.msk [vmem:[%s3 + $0x2e0] sm:$0xff] %vm204, %v1080
  %1181 = vst.msk [vmem:[%s3 + $0x2e8] sm:$0xff] %vm204, %v1081
  %1182 = vst.msk [vmem:[%s3 + $0x2f0] sm:$0xff] %vm204, %v1082
  %1183 = vst.msk [vmem:[%s3 + $0x2f8] sm:$0xff] %vm204, %v1083
  %1184 = vst.msk [vmem:[%s3 + $0x300] sm:$0xff] %vm204, %v1084
  %1185 = vst.msk [vmem:[%s3 + $0x308] sm:$0xff] %vm204, %v1085
  %1186 = vst.msk [vmem:[%s3 + $0x310] sm:$0xff] %vm204, %v1086
  %1187 = vst.msk [vmem:[%s3 + $0x318] sm:$0xff] %vm204, %v1087
  // Predicated region
  $region14: #{rnd_forward.4} parent=0 // pred_check
    _
  $region15: #{rnd_forward.4} parent=0 // pred_check_branch
    %1189 = sbr.rel (0) target = $region17
  $region16: #{rnd_forward.4} parent=0 // pred_region
    _
  $region17: #{rnd_forward.4} parent=0 // pred_fallthru
    _
  // Predicated region
  $region18: #{rnd_forward.4} parent=0 // pred_check
    _
  $region19: #{rnd_forward.4} parent=0 // pred_check_branch
    %1191 = sbr.rel (0) target = $region21
  $region20: #{rnd_forward.4} parent=0 // pred_region
    _
  $region21: #{rnd_forward.4} parent=0 // pred_fallthru
    _

// kernel: rnd_forward.5
$region0: #{rnd_forward.5}
  #allocation0 [shape = 'u32[]', space=smem, size = 0x4, offset = 0x4, fixed_abs, tag = 'smem constant byte address 0x4 - core index']
  #allocation1 [shape = 'u32[144,128]{1,0:T(1,128)}', space=vmem, size = 0x12000, scoped, tag = 'internal scratch']
  %s0 = inlined_call_operand.vmem [shape: f32[162,512], index: 0, kind: input, shape index: {}]
  %s1 = inlined_call_operand.vmem [shape: f32[162,512], index: 1, kind: input, shape index: {}]
  %s2 = inlined_call_operand.vmem [shape: bf16[512,64], index: 2, kind: input, shape index: {}]
  %s3 = inlined_call_operand.vmem [shape: bf16[512,64], index: 3, kind: input, shape index: {}]
  %s4 = inlined_call_operand.vmem [shape: f32[1,64], index: 4, kind: input, shape index: {}]
  %s5 = inlined_call_operand.vmem [shape: f32[1,64], index: 5, kind: input, shape index: {}]
  %s6 = inlined_call_operand.vmem [shape: f32[162,128], index: 6, kind: output, shape index: {}]
  %s7 = sld [smem:[#allocation0]]
  $region34: #{rnd_forward.5} parent=0
    _
  %s9 = ssub.s32 1, %s7
  %s10 = scalar_select 0, %s9, %s7
  // Predicated region
  $region2: #{rnd_forward.5} parent=0 // pred_check
    _
  $region3: #{rnd_forward.5} parent=0 // pred_check_branch
    %12 = sbr.rel (0) target = $region5
  $region4: #{rnd_forward.5} parent=0 // pred_region
    _
  $region5: #{rnd_forward.5} parent=0 // pred_fallthru
    _
  // Predicated region
  $region6: #{rnd_forward.5} parent=0 // pred_check
    _
  $region7: #{rnd_forward.5} parent=0 // pred_check_branch
    %14 = sbr.rel (0) target = $region9
  $region8: #{rnd_forward.5} parent=0 // pred_region
    _
  $region9: #{rnd_forward.5} parent=0 // pred_fallthru
    _
  // Predicated region
  $region10: #{rnd_forward.5} parent=0 // pred_check
    _
  $region11: #{rnd_forward.5} parent=0 // pred_check_branch
    %16 = sbr.rel (0) target = $region13
  $region12: #{rnd_forward.5} parent=0 // pred_region
    _
  $region13: #{rnd_forward.5} parent=0 // pred_fallthru
    _
  // Predicated region
  $region14: #{rnd_forward.5} parent=0 // pred_check
    _
  $region15: #{rnd_forward.5} parent=0 // pred_check_branch
    %18 = sbr.rel (0) target = $region17
  $region16: #{rnd_forward.5} parent=0 // pred_region
    _
  $region17: #{rnd_forward.5} parent=0 // pred_fallthru
    _
  // Predicated region
  $region18: #{rnd_forward.5} parent=0 // pred_check
    _
  $region19: #{rnd_forward.5} parent=0 // pred_check_branch
    %20 = sbr.rel (0) target = $region21
  $region20: #{rnd_forward.5} parent=0 // pred_region
    _
  $region21: #{rnd_forward.5} parent=0 // pred_fallthru
    _
  // Predicated region
  $region22: #{rnd_forward.5} parent=0 // pred_check
    _
  $region23: #{rnd_forward.5} parent=0 // pred_check_branch
    %22 = sbr.rel (0) target = $region25
  $region24: #{rnd_forward.5} parent=0 // pred_region
    _
  $region25: #{rnd_forward.5} parent=0 // pred_fallthru
    _
  %v24 = vld [vmem:[%s0] sm:$0xff]
  %v25 = vld [vmem:[%s0 + $0x8] sm:$0xff]
  %v26 = vld [vmem:[%s0 + $0x10] sm:$0xff]
  %v27 = vld [vmem:[%s0 + $0x18] sm:$0xff]
  %v28 = vld [vmem:[%s0 + $0x20] sm:$0xff]
  %v29 = vld [vmem:[%s0 + $0x28] sm:$0xff]
  %v30 = vld [vmem:[%s0 + $0x30] sm:$0xff]
  %v31 = vld [vmem:[%s0 + $0x38] sm:$0xff]
  %v32 = vld [vmem:[%s0 + $0x40] sm:$0xff]
  %v33 = vld [vmem:[%s0 + $0x48] sm:$0xff]
  %v34 = vld [vmem:[%s0 + $0x50] sm:$0xff]
  %v35 = vld [vmem:[%s0 + $0x58] sm:$0xff]
  %v36 = vld [vmem:[%s0 + $0x60] sm:$0xff]
  %v37 = vld [vmem:[%s0 + $0x68] sm:$0xff]
  %v38 = vld [vmem:[%s0 + $0x70] sm:$0xff]
  %v39 = vld [vmem:[%s0 + $0x78] sm:$0xff]
  %v40 = vld [vmem:[%s0 + $0x80] sm:$0xff]
  %v41 = vld [vmem:[%s0 + $0x88] sm:$0xff]
  %v42 = vld [vmem:[%s0 + $0x90] sm:$0xff]
  %v43 = vld [vmem:[%s0 + $0x98] sm:$0xff]
  %v44 = vld [vmem:[%s0 + $0xa0] sm:$0xff]
  %v45 = vld [vmem:[%s0 + $0xa8] sm:$0xff]
  %v46 = vld [vmem:[%s0 + $0xb0] sm:$0xff]
  %v47 = vld [vmem:[%s0 + $0xb8] sm:$0xff]
  %v48 = vld [vmem:[%s0 + $0xc0] sm:$0xff]
  %v49 = vld [vmem:[%s0 + $0xc8] sm:$0xff]
  %v50 = vld [vmem:[%s0 + $0xd0] sm:$0xff]
  %v51 = vld [vmem:[%s0 + $0xd8] sm:$0xff]
  %v52 = vld [vmem:[%s0 + $0xe0] sm:$0xff]
  %v53 = vld [vmem:[%s0 + $0xe8] sm:$0xff]
  %v54 = vld [vmem:[%s0 + $0xf0] sm:$0xff]
  %v55 = vld [vmem:[%s0 + $0xf8] sm:$0xff]
  %v56 = vld [vmem:[%s0 + $0x100] sm:$0xff]
  %v57 = vld [vmem:[%s0 + $0x108] sm:$0xff]
  %v58 = vld [vmem:[%s0 + $0x110] sm:$0xff]
  %v59 = vld [vmem:[%s0 + $0x118] sm:$0xff]
  %v60 = vld [vmem:[%s0 + $0x120] sm:$0xff]
  %v61 = vld [vmem:[%s0 + $0x128] sm:$0xff]
  %v62 = vld [vmem:[%s0 + $0x130] sm:$0xff]
  %v63 = vld [vmem:[%s0 + $0x138] sm:$0xff]
  %v64 = vld [vmem:[%s0 + $0x140] sm:$0xff]
  %v65 = vld [vmem:[%s0 + $0x148] sm:$0xff]
  %v66 = vld [vmem:[%s0 + $0x150] sm:$0xff]
  %v67 = vld [vmem:[%s0 + $0x158] sm:$0xff]
  %v68 = vld [vmem:[%s0 + $0x160] sm:$0xff]
  %v69 = vld [vmem:[%s0 + $0x168] sm:$0xff]
  %v70 = vld [vmem:[%s0 + $0x170] sm:$0xff]
  %v71 = vld [vmem:[%s0 + $0x178] sm:$0xff]
  %v72 = vld [vmem:[%s0 + $0x180] sm:$0xff]
  %v73 = vld [vmem:[%s0 + $0x188] sm:$0xff]
  %v74 = vld [vmem:[%s0 + $0x190] sm:$0xff]
  %v75 = vld [vmem:[%s0 + $0x198] sm:$0xff]
  %v76 = vld [vmem:[%s0 + $0x1a0] sm:$0xff]
  %v77 = vld [vmem:[%s0 + $0x1a8] sm:$0xff]
  %v78 = vld [vmem:[%s0 + $0x1b0] sm:$0xff]
  %v79 = vld [vmem:[%s0 + $0x1b8] sm:$0xff]
  %v80 = vld [vmem:[%s0 + $0x1c0] sm:$0xff]
  %v81 = vld [vmem:[%s0 + $0x1c8] sm:$0xff]
  %v82 = vld [vmem:[%s0 + $0x1d0] sm:$0xff]
  %v83 = vld [vmem:[%s0 + $0x1d8] sm:$0xff]
  %v84 = vld [vmem:[%s0 + $0x1e0] sm:$0xff]
  %v85 = vld [vmem:[%s0 + $0x1e8] sm:$0xff]
  %v86 = vld [vmem:[%s0 + $0x1f0] sm:$0xff]
  %v87 = vld [vmem:[%s0 + $0x1f8] sm:$0xff]
  %v88 = vld [vmem:[%s0 + $0x200] sm:$0xff]
  %v89 = vld [vmem:[%s0 + $0x208] sm:$0xff]
  %v90 = vld [vmem:[%s0 + $0x210] sm:$0xff]
  %v91 = vld [vmem:[%s0 + $0x218] sm:$0xff]
  %v92 = vld [vmem:[%s0 + $0x220] sm:$0xff]
  %v93 = vld [vmem:[%s0 + $0x228] sm:$0xff]
  %v94 = vld [vmem:[%s0 + $0x230] sm:$0xff]
  %v95 = vld [vmem:[%s0 + $0x238] sm:$0xff]
  %v96 = vld [vmem:[%s0 + $0x240] sm:$0xff]
  %v97 = vld [vmem:[%s0 + $0x248] sm:$0xff]
  %v98 = vld [vmem:[%s0 + $0x250] sm:$0xff]
  %v99 = vld [vmem:[%s0 + $0x258] sm:$0xff]
  %v100 = vld [vmem:[%s0 + $0x260] sm:$0xff]
  %v101 = vld [vmem:[%s0 + $0x268] sm:$0xff]
  %v102 = vld [vmem:[%s0 + $0x270] sm:$0xff]
  %v103 = vld [vmem:[%s0 + $0x278] sm:$0xff]
  %v104 = vld [vmem:[%s0 + $0x280] sm:$0x3]
  %v105 = vld [vmem:[%s0 + $0x288] sm:$0x3]
  %v106 = vld [vmem:[%s0 + $0x290] sm:$0x3]
  %v107 = vld [vmem:[%s0 + $0x298] sm:$0x3]
  %v108 = vpack.c.bf16 %v28, %v24
  %v109 = vpack.c.bf16 %v29, %v25
  %v110 = vpack.c.bf16 %v30, %v26
  %v111 = vpack.c.bf16 %v31, %v27
  %v112 = vpack.c.bf16 %v36, %v32
  %v113 = vpack.c.bf16 %v37, %v33
  %v114 = vpack.c.bf16 %v38, %v34
  %v115 = vpack.c.bf16 %v39, %v35
  %v116 = vpack.c.bf16 %v44, %v40
  %v117 = vpack.c.bf16 %v45, %v41
  %v118 = vpack.c.bf16 %v46, %v42
  %v119 = vpack.c.bf16 %v47, %v43
  %v120 = vpack.c.bf16 %v52, %v48
  %v121 = vpack.c.bf16 %v53, %v49
  %v122 = vpack.c.bf16 %v54, %v50
  %v123 = vpack.c.bf16 %v55, %v51
  %v124 = vpack.c.bf16 %v60, %v56
  %v125 = vpack.c.bf16 %v61, %v57
  %v126 = vpack.c.bf16 %v62, %v58
  %v127 = vpack.c.bf16 %v63, %v59
  %v128 = vpack.c.bf16 %v68, %v64
  %v129 = vpack.c.bf16 %v69, %v65
  %v130 = vpack.c.bf16 %v70, %v66
  %v131 = vpack.c.bf16 %v71, %v67
  %v132 = vpack.c.bf16 %v76, %v72
  %v133 = vpack.c.bf16 %v77, %v73
  %v134 = vpack.c.bf16 %v78, %v74
  %v135 = vpack.c.bf16 %v79, %v75
  %v136 = vpack.c.bf16 %v84, %v80
  %v137 = vpack.c.bf16 %v85, %v81
  %v138 = vpack.c.bf16 %v86, %v82
  %v139 = vpack.c.bf16 %v87, %v83
  %v140 = vpack.c.bf16 %v92, %v88
  %v141 = vpack.c.bf16 %v93, %v89
  %v142 = vpack.c.bf16 %v94, %v90
  %v143 = vpack.c.bf16 %v95, %v91
  %v144 = vpack.c.bf16 %v100, %v96
  %v145 = vpack.c.bf16 %v101, %v97
  %v146 = vpack.c.bf16 %v102, %v98
  %v147 = vpack.c.bf16 %v103, %v99
  %v148 = vpack.c.bf16 %v104, %v104
  %v149 = vpack.c.bf16 %v105, %v105
  %v150 = vpack.c.bf16 %v106, %v106
  %v151 = vpack.c.bf16 %v107, %v107
  %v152 = vld [vmem:[%s2] sm:$0xf]
  %v153 = vld [vmem:[%s2 + $0x4] sm:$0xf]
  %v154 = vld [vmem:[%s2 + $0x8] sm:$0xf]
  %v155 = vld [vmem:[%s2 + $0xc] sm:$0xf]
  %v156 = vld [vmem:[%s2 + $0x10] sm:$0xf]
  %v157 = vld [vmem:[%s2 + $0x14] sm:$0xf]
  %v158 = vld [vmem:[%s2 + $0x18] sm:$0xf]
  %v159 = vld [vmem:[%s2 + $0x1c] sm:$0xf]
  %v160 = vld [vmem:[%s2 + $0x20] sm:$0xf]
  %v161 = vld [vmem:[%s2 + $0x24] sm:$0xf]
  %v162 = vld [vmem:[%s2 + $0x28] sm:$0xf]
  %v163 = vld [vmem:[%s2 + $0x2c] sm:$0xf]
  %v164 = vld [vmem:[%s2 + $0x30] sm:$0xf]
  %v165 = vld [vmem:[%s2 + $0x34] sm:$0xf]
  %v166 = vld [vmem:[%s2 + $0x38] sm:$0xf]
  %v167 = vld [vmem:[%s2 + $0x3c] sm:$0xf]
  %v168 = vld [vmem:[%s2 + $0x40] sm:$0xf]
  %v169 = vld [vmem:[%s2 + $0x44] sm:$0xf]
  %v170 = vld [vmem:[%s2 + $0x48] sm:$0xf]
  %v171 = vld [vmem:[%s2 + $0x4c] sm:$0xf]
  %v172 = vld [vmem:[%s2 + $0x50] sm:$0xf]
  %v173 = vld [vmem:[%s2 + $0x54] sm:$0xf]
  %v174 = vld [vmem:[%s2 + $0x58] sm:$0xf]
  %v175 = vld [vmem:[%s2 + $0x5c] sm:$0xf]
  %v176 = vld [vmem:[%s2 + $0x60] sm:$0xf]
  %v177 = vld [vmem:[%s2 + $0x64] sm:$0xf]
  %v178 = vld [vmem:[%s2 + $0x68] sm:$0xf]
  %v179 = vld [vmem:[%s2 + $0x6c] sm:$0xf]
  %v180 = vld [vmem:[%s2 + $0x70] sm:$0xf]
  %v181 = vld [vmem:[%s2 + $0x74] sm:$0xf]
  %v182 = vld [vmem:[%s2 + $0x78] sm:$0xf]
  %v183 = vld [vmem:[%s2 + $0x7c] sm:$0xf]
  %v184 = vld [vmem:[%s2 + $0x80] sm:$0xf]
  %v185 = vld [vmem:[%s2 + $0x84] sm:$0xf]
  %v186 = vld [vmem:[%s2 + $0x88] sm:$0xf]
  %v187 = vld [vmem:[%s2 + $0x8c] sm:$0xf]
  %v188 = vld [vmem:[%s2 + $0x90] sm:$0xf]
  %v189 = vld [vmem:[%s2 + $0x94] sm:$0xf]
  %v190 = vld [vmem:[%s2 + $0x98] sm:$0xf]
  %v191 = vld [vmem:[%s2 + $0x9c] sm:$0xf]
  %v192 = vld [vmem:[%s2 + $0xa0] sm:$0xf]
  %v193 = vld [vmem:[%s2 + $0xa4] sm:$0xf]
  %v194 = vld [vmem:[%s2 + $0xa8] sm:$0xf]
  %v195 = vld [vmem:[%s2 + $0xac] sm:$0xf]
  %v196 = vld [vmem:[%s2 + $0xb0] sm:$0xf]
  %v197 = vld [vmem:[%s2 + $0xb4] sm:$0xf]
  %v198 = vld [vmem:[%s2 + $0xb8] sm:$0xf]
  %v199 = vld [vmem:[%s2 + $0xbc] sm:$0xf]
  %v200 = vld [vmem:[%s2 + $0xc0] sm:$0xf]
  %v201 = vld [vmem:[%s2 + $0xc4] sm:$0xf]
  %v202 = vld [vmem:[%s2 + $0xc8] sm:$0xf]
  %v203 = vld [vmem:[%s2 + $0xcc] sm:$0xf]
  %v204 = vld [vmem:[%s2 + $0xd0] sm:$0xf]
  %v205 = vld [vmem:[%s2 + $0xd4] sm:$0xf]
  %v206 = vld [vmem:[%s2 + $0xd8] sm:$0xf]
  %v207 = vld [vmem:[%s2 + $0xdc] sm:$0xf]
  %v208 = vld [vmem:[%s2 + $0xe0] sm:$0xf]
  %v209 = vld [vmem:[%s2 + $0xe4] sm:$0xf]
  %v210 = vld [vmem:[%s2 + $0xe8] sm:$0xf]
  %v211 = vld [vmem:[%s2 + $0xec] sm:$0xf]
  %v212 = vld [vmem:[%s2 + $0xf0] sm:$0xf]
  %v213 = vld [vmem:[%s2 + $0xf4] sm:$0xf]
  %v214 = vld [vmem:[%s2 + $0xf8] sm:$0xf]
  %v215 = vld [vmem:[%s2 + $0xfc] sm:$0xf]
  %v216 = vld [vmem:[%s4] sm:$0x1]
  %v218 = vlaneseq
  %v219 = vshrl.u32 %v218, 7
  %v220 = vsub.s32 0, %v219
  %v221 = vrot.slane %v216, %v220
  %v287 = vunpack.c.l.b16 %v152
  %v288 = vunpack.c.l.b16 %v153
  %v289 = vunpack.c.l.b16 %v154
  %v290 = vunpack.c.l.b16 %v155
  %v291 = vunpack.c.l.b16 %v156
  %v292 = vunpack.c.l.b16 %v157
  %v293 = vunpack.c.l.b16 %v158
  %v294 = vunpack.c.l.b16 %v159
  %v295 = vunpack.c.l.b16 %v160
  %v296 = vunpack.c.l.b16 %v161
  %v297 = vunpack.c.l.b16 %v162
  %v298 = vunpack.c.l.b16 %v163
  %v299 = vunpack.c.l.b16 %v164
  %v300 = vunpack.c.l.b16 %v165
  %v301 = vunpack.c.l.b16 %v166
  %v302 = vunpack.c.l.b16 %v167
  %v303 = vunpack.c.l.b16 %v168
  %v304 = vunpack.c.l.b16 %v169
  %v305 = vunpack.c.l.b16 %v170
  %v306 = vunpack.c.l.b16 %v171
  %v307 = vunpack.c.l.b16 %v172
  %v308 = vunpack.c.l.b16 %v173
  %v309 = vunpack.c.l.b16 %v174
  %v310 = vunpack.c.l.b16 %v175
  %v311 = vunpack.c.l.b16 %v176
  %v312 = vunpack.c.l.b16 %v177
  %v313 = vunpack.c.l.b16 %v178
  %v314 = vunpack.c.l.b16 %v179
  %v315 = vunpack.c.l.b16 %v180
  %v316 = vunpack.c.l.b16 %v181
  %v317 = vunpack.c.l.b16 %v182
  %v318 = vunpack.c.l.b16 %v183
  %v319 = vunpack.c.l.b16 %v184
  %v320 = vunpack.c.l.b16 %v185
  %v321 = vunpack.c.l.b16 %v186
  %v322 = vunpack.c.l.b16 %v187
  %v323 = vunpack.c.l.b16 %v188
  %v324 = vunpack.c.l.b16 %v189
  %v325 = vunpack.c.l.b16 %v190
  %v326 = vunpack.c.l.b16 %v191
  %v327 = vunpack.c.l.b16 %v192
  %v328 = vunpack.c.l.b16 %v193
  %v329 = vunpack.c.l.b16 %v194
  %v330 = vunpack.c.l.b16 %v195
  %v331 = vunpack.c.l.b16 %v196
  %v332 = vunpack.c.l.b16 %v197
  %v333 = vunpack.c.l.b16 %v198
  %v334 = vunpack.c.l.b16 %v199
  %v335 = vunpack.c.l.b16 %v200
  %v336 = vunpack.c.l.b16 %v201
  %v337 = vunpack.c.l.b16 %v202
  %v338 = vunpack.c.l.b16 %v203
  %v339 = vunpack.c.l.b16 %v204
  %v340 = vunpack.c.l.b16 %v205
  %v341 = vunpack.c.l.b16 %v206
  %v342 = vunpack.c.l.b16 %v207
  %v343 = vunpack.c.l.b16 %v208
  %v344 = vunpack.c.l.b16 %v209
  %v345 = vunpack.c.l.b16 %v210
  %v346 = vunpack.c.l.b16 %v211
  %v347 = vunpack.c.l.b16 %v212
  %v348 = vunpack.c.l.b16 %v213
  %v349 = vunpack.c.l.b16 %v214
  %v350 = vunpack.c.l.b16 %v215
  %v351 = vpack.c.b16 %v288, %v287
  %v352 = vpack.c.b16 %v290, %v289
  %v353 = vpack.c.b16 %v292, %v291
  %v354 = vpack.c.b16 %v294, %v293
  %v355 = vpack.c.b16 %v296, %v295
  %v356 = vpack.c.b16 %v298, %v297
  %v357 = vpack.c.b16 %v300, %v299
  %v358 = vpack.c.b16 %v302, %v301
  %v359 = vpack.c.b16 %v304, %v303
  %v360 = vpack.c.b16 %v306, %v305
  %v361 = vpack.c.b16 %v308, %v307
  %v362 = vpack.c.b16 %v310, %v309
  %v363 = vpack.c.b16 %v312, %v311
  %v364 = vpack.c.b16 %v314, %v313
  %v365 = vpack.c.b16 %v316, %v315
  %v366 = vpack.c.b16 %v318, %v317
  %v367 = vpack.c.b16 %v320, %v319
  %v368 = vpack.c.b16 %v322, %v321
  %v369 = vpack.c.b16 %v324, %v323
  %v370 = vpack.c.b16 %v326, %v325
  %v371 = vpack.c.b16 %v328, %v327
  %v372 = vpack.c.b16 %v330, %v329
  %v373 = vpack.c.b16 %v332, %v331
  %v374 = vpack.c.b16 %v334, %v333
  %v375 = vpack.c.b16 %v336, %v335
  %v376 = vpack.c.b16 %v338, %v337
  %v377 = vpack.c.b16 %v340, %v339
  %v378 = vpack.c.b16 %v342, %v341
  %v379 = vpack.c.b16 %v344, %v343
  %v380 = vpack.c.b16 %v346, %v345
  %v381 = vpack.c.b16 %v348, %v347
  %v382 = vpack.c.b16 %v350, %v349
  %415 = vmatprep.subr.bf16.mxu0 0
  %416 = vmatpush1.bf16.msra.mxu0 %v351
  %417 = vmatprep.subr.bf16.mxu0 0
  %418 = vmatpush1.bf16.msra.mxu0 %v352
  %419 = vmatprep.subr.bf16.mxu0 0
  %420 = vmatpush1.bf16.msra.mxu0 %v353
  %421 = vmatprep.subr.bf16.mxu0 0
  %422 = vmatpush1.bf16.msra.mxu0 %v354
  %423 = vmatprep.subr.bf16.mxu0 0
  %424 = vmatpush1.bf16.msra.mxu0 %v355
  %425 = vmatprep.subr.bf16.mxu0 0
  %426 = vmatpush1.bf16.msra.mxu0 %v356
  %427 = vmatprep.subr.bf16.mxu0 0
  %428 = vmatpush1.bf16.msra.mxu0 %v357
  %429 = vmatprep.subr.bf16.mxu0 0
  %430 = vmatpush1.bf16.msra.mxu0 %v358
  %431 = vmatprep.subr.bf16.mxu0 0
  %432 = vmatpush1.bf16.msra.mxu0 %v359
  %433 = vmatprep.subr.bf16.mxu0 0
  %434 = vmatpush1.bf16.msra.mxu0 %v360
  %435 = vmatprep.subr.bf16.mxu0 0
  %436 = vmatpush1.bf16.msra.mxu0 %v361
  %437 = vmatprep.subr.bf16.mxu0 0
  %438 = vmatpush1.bf16.msra.mxu0 %v362
  %439 = vmatprep.subr.bf16.mxu0 0
  %440 = vmatpush1.bf16.msra.mxu0 %v363
  %441 = vmatprep.subr.bf16.mxu0 0
  %442 = vmatpush1.bf16.msra.mxu0 %v364
  %443 = vmatprep.subr.bf16.mxu0 0
  %444 = vmatpush1.bf16.msra.mxu0 %v365
  %445 = vmatprep.subr.bf16.mxu0 0
  %446 = vmatpush1.bf16.msra.mxu0 %v366
  %447 = vmatprep.mubr.bf16.mxu0 %v109
  %448 = vmatmul.mubr.bf16.gmra.mrb[0].mxu0 %v108
  %v449 = vpop.f32.mrb[0].mxu0
  %v450 = vadd.f32 %v221, %v449
  %v451 = vpop.f32.mrb[0].mxu0
  %v452 = vpop.f32.mrb[0].mxu0
  %v453 = vadd.f32 %v221, %v452
  %v454 = vpop.f32.mrb[0].mxu0
  %455 = vmatprep.mubr.bf16.mxu0 %v113
  %456 = vmatmul.mubr.bf16.gmra.mrb[0].mxu0 %v112
  %v457 = vpop.f32.mrb[0].mxu0
  %v458 = vadd.f32 %v221, %v457
  %v459 = vpop.f32.mrb[0].mxu0
  %v460 = vpop.f32.mrb[0].mxu0
  %v461 = vadd.f32 %v221, %v460
  %v462 = vpop.f32.mrb[0].mxu0
  %463 = vmatprep.mubr.bf16.mxu0 %v117
  %464 = vmatmul.mubr.bf16.gmra.mrb[0].mxu0 %v116
  %v465 = vpop.f32.mrb[0].mxu0
  %v466 = vadd.f32 %v221, %v465
  %v467 = vpop.f32.mrb[0].mxu0
  %v468 = vpop.f32.mrb[0].mxu0
  %v469 = vadd.f32 %v221, %v468
  %v470 = vpop.f32.mrb[0].mxu0
  %471 = vmatprep.mubr.bf16.mxu0 %v121
  %472 = vmatmul.mubr.bf16.gmra.mrb[0].mxu0 %v120
  %v473 = vpop.f32.mrb[0].mxu0
  %v474 = vadd.f32 %v221, %v473
  %v475 = vpop.f32.mrb[0].mxu0
  %v476 = vpop.f32.mrb[0].mxu0
  %v477 = vadd.f32 %v221, %v476
  %v478 = vpop.f32.mrb[0].mxu0
  %479 = vmatprep.mubr.bf16.mxu0 %v125
  %480 = vmatmul.mubr.bf16.gmra.mrb[0].mxu0 %v124
  %v481 = vpop.f32.mrb[0].mxu0
  %v482 = vadd.f32 %v221, %v481
  %v483 = vpop.f32.mrb[0].mxu0
  %v484 = vpop.f32.mrb[0].mxu0
  %v485 = vadd.f32 %v221, %v484
  %v486 = vpop.f32.mrb[0].mxu0
  %487 = vmatprep.mubr.bf16.mxu0 %v129
  %488 = vmatmul.mubr.bf16.gmra.mrb[0].mxu0 %v128
  %v489 = vpop.f32.mrb[0].mxu0
  %v490 = vadd.f32 %v221, %v489
  %v491 = vpop.f32.mrb[0].mxu0
  %v492 = vpop.f32.mrb[0].mxu0
  %v493 = vadd.f32 %v221, %v492
  %v494 = vpop.f32.mrb[0].mxu0
  %495 = vmatprep.mubr.bf16.mxu0 %v133
  %496 = vmatmul.mubr.bf16.gmra.mrb[0].mxu0 %v132
  %v497 = vpop.f32.mrb[0].mxu0
  %v498 = vadd.f32 %v221, %v497
  %v499 = vpop.f32.mrb[0].mxu0
  %v500 = vpop.f32.mrb[0].mxu0
  %v501 = vadd.f32 %v221, %v500
  %v502 = vpop.f32.mrb[0].mxu0
  %503 = vmatprep.mubr.bf16.mxu0 %v137
  %504 = vmatmul.mubr.bf16.gmra.mrb[0].mxu0 %v136
  %v505 = vpop.f32.mrb[0].mxu0
  %v506 = vadd.f32 %v221, %v505
  %v507 = vpop.f32.mrb[0].mxu0
  %v508 = vpop.f32.mrb[0].mxu0
  %v509 = vadd.f32 %v221, %v508
  %v510 = vpop.f32.mrb[0].mxu0
  %511 = vmatprep.mubr.bf16.mxu0 %v141
  %512 = vmatmul.mubr.bf16.gmra.mrb[0].mxu0 %v140
  %v513 = vpop.f32.mrb[0].mxu0
  %v514 = vadd.f32 %v221, %v513
  %v515 = vpop.f32.mrb[0].mxu0
  %v516 = vpop.f32.mrb[0].mxu0
  %v517 = vadd.f32 %v221, %v516
  %v518 = vpop.f32.mrb[0].mxu0
  %519 = vmatprep.mubr.bf16.mxu0 %v145
  %520 = vmatmul.mubr.bf16.gmra.mrb[0].mxu0 %v144
  %v521 = vpop.f32.mrb[0].mxu0
  %v522 = vadd.f32 %v221, %v521
  %v523 = vpop.f32.mrb[0].mxu0
  %v524 = vpop.f32.mrb[0].mxu0
  %v525 = vadd.f32 %v221, %v524
  %v526 = vpop.f32.mrb[0].mxu0
  %527 = vmatprep.mubr.bf16.mxu0 %v149
  %528 = vmatmul.mubr.bf16.gmra.mrb[0].mxu0 %v148
  %v529 = vpop.f32.mrb[0].mxu0
  %v530 = vadd.f32 %v221, %v529
  %v531 = vpop.f32.mrb[0].mxu0
  %v532 = vpop.f32.mrb[0].mxu0
  %v533 = vpop.f32.mrb[0].mxu0
  %534 = vdwg.mxu0
  %535 = vmatprep.subr.bf16.mxu0 0
  %536 = vmatpush1.bf16.msra.mxu0 %v367
  %537 = vmatprep.subr.bf16.mxu0 0
  %538 = vmatpush1.bf16.msra.mxu0 %v368
  %539 = vmatprep.subr.bf16.mxu0 0
  %540 = vmatpush1.bf16.msra.mxu0 %v369
  %541 = vmatprep.subr.bf16.mxu0 0
  %542 = vmatpush1.bf16.msra.mxu0 %v370
  %543 = vmatprep.subr.bf16.mxu0 0
  %544 = vmatpush1.bf16.msra.mxu0 %v371
  %545 = vmatprep.subr.bf16.mxu0 0
  %546 = vmatpush1.bf16.msra.mxu0 %v372
  %547 = vmatprep.subr.bf16.mxu0 0
  %548 = vmatpush1.bf16.msra.mxu0 %v373
  %549 = vmatprep.subr.bf16.mxu0 0
  %550 = vmatpush1.bf16.msra.mxu0 %v374
  %551 = vmatprep.subr.bf16.mxu0 0
  %552 = vmatpush1.bf16.msra.mxu0 %v375
  %553 = vmatprep.subr.bf16.mxu0 0
  %554 = vmatpush1.bf16.msra.mxu0 %v376
  %555 = vmatprep.subr.bf16.mxu0 0
  %556 = vmatpush1.bf16.msra.mxu0 %v377
  %557 = vmatprep.subr.bf16.mxu0 0
  %558 = vmatpush1.bf16.msra.mxu0 %v378
  %559 = vmatprep.subr.bf16.mxu0 0
  %560 = vmatpush1.bf16.msra.mxu0 %v379
  %561 = vmatprep.subr.bf16.mxu0 0
  %562 = vmatpush1.bf16.msra.mxu0 %v380
  %563 = vmatprep.subr.bf16.mxu0 0
  %564 = vmatpush1.bf16.msra.mxu0 %v381
  %565 = vmatprep.subr.bf16.mxu0 0
  %566 = vmatpush1.bf16.msra.mxu0 %v382
  %567 = vmatprep.mubr.bf16.mxu0 %v111
  %568 = vmatmul.mubr.bf16.gmra.mrb[0].mxu0 %v110
  %v569 = vpop.f32.mrb[0].mxu0
  %v570 = vadd.f32 %v450, %v569
  %v571 = vpop.f32.mrb[0].mxu0
  %v572 = vpop.f32.mrb[0].mxu0
  %v573 = vadd.f32 %v453, %v572
  %v574 = vpop.f32.mrb[0].mxu0
  %575 = vmatprep.mubr.bf16.mxu0 %v115
  %576 = vmatmul.mubr.bf16.gmra.mrb[0].mxu0 %v114
  %v577 = vpop.f32.mrb[0].mxu0
  %v578 = vadd.f32 %v458, %v577
  %v579 = vpop.f32.mrb[0].mxu0
  %v580 = vpop.f32.mrb[0].mxu0
  %v581 = vadd.f32 %v461, %v580
  %v582 = vpop.f32.mrb[0].mxu0
  %583 = vmatprep.mubr.bf16.mxu0 %v119
  %584 = vmatmul.mubr.bf16.gmra.mrb[0].mxu0 %v118
  %v585 = vpop.f32.mrb[0].mxu0
  %v586 = vadd.f32 %v466, %v585
  %v587 = vpop.f32.mrb[0].mxu0
  %v588 = vpop.f32.mrb[0].mxu0
  %v589 = vadd.f32 %v469, %v588
  %v590 = vpop.f32.mrb[0].mxu0
  %591 = vmatprep.mubr.bf16.mxu0 %v123
  %592 = vmatmul.mubr.bf16.gmra.mrb[0].mxu0 %v122
  %v593 = vpop.f32.mrb[0].mxu0
  %v594 = vadd.f32 %v474, %v593
  %v595 = vpop.f32.mrb[0].mxu0
  %v596 = vpop.f32.mrb[0].mxu0
  %v597 = vadd.f32 %v477, %v596
  %v598 = vpop.f32.mrb[0].mxu0
  %599 = vmatprep.mubr.bf16.mxu0 %v127
  %600 = vmatmul.mubr.bf16.gmra.mrb[0].mxu0 %v126
  %v601 = vpop.f32.mrb[0].mxu0
  %v602 = vadd.f32 %v482, %v601
  %v603 = vpop.f32.mrb[0].mxu0
  %v604 = vpop.f32.mrb[0].mxu0
  %v605 = vadd.f32 %v485, %v604
  %v606 = vpop.f32.mrb[0].mxu0
  %607 = vmatprep.mubr.bf16.mxu0 %v131
  %608 = vmatmul.mubr.bf16.gmra.mrb[0].mxu0 %v130
  %v609 = vpop.f32.mrb[0].mxu0
  %v610 = vadd.f32 %v490, %v609
  %v611 = vpop.f32.mrb[0].mxu0
  %v612 = vpop.f32.mrb[0].mxu0
  %v613 = vadd.f32 %v493, %v612
  %v614 = vpop.f32.mrb[0].mxu0
  %615 = vmatprep.mubr.bf16.mxu0 %v135
  %616 = vmatmul.mubr.bf16.gmra.mrb[0].mxu0 %v134
  %v617 = vpop.f32.mrb[0].mxu0
  %v618 = vadd.f32 %v498, %v617
  %v619 = vpop.f32.mrb[0].mxu0
  %v620 = vpop.f32.mrb[0].mxu0
  %v621 = vadd.f32 %v501, %v620
  %v622 = vpop.f32.mrb[0].mxu0
  %623 = vmatprep.mubr.bf16.mxu0 %v139
  %624 = vmatmul.mubr.bf16.gmra.mrb[0].mxu0 %v138
  %v625 = vpop.f32.mrb[0].mxu0
  %v626 = vadd.f32 %v506, %v625
  %v627 = vpop.f32.mrb[0].mxu0
  %v628 = vpop.f32.mrb[0].mxu0
  %v629 = vadd.f32 %v509, %v628
  %v630 = vpop.f32.mrb[0].mxu0
  %631 = vmatprep.mubr.bf16.mxu0 %v143
  %632 = vmatmul.mubr.bf16.gmra.mrb[0].mxu0 %v142
  %v633 = vpop.f32.mrb[0].mxu0
  %v634 = vadd.f32 %v514, %v633
  %v635 = vpop.f32.mrb[0].mxu0
  %v636 = vpop.f32.mrb[0].mxu0
  %v637 = vadd.f32 %v517, %v636
  %v638 = vpop.f32.mrb[0].mxu0
  %639 = vmatprep.mubr.bf16.mxu0 %v147
  %640 = vmatmul.mubr.bf16.gmra.mrb[0].mxu0 %v146
  %v641 = vpop.f32.mrb[0].mxu0
  %v642 = vadd.f32 %v522, %v641
  %v643 = vpop.f32.mrb[0].mxu0
  %v644 = vpop.f32.mrb[0].mxu0
  %v645 = vadd.f32 %v525, %v644
  %v646 = vpop.f32.mrb[0].mxu0
  %647 = vmatprep.mubr.bf16.mxu0 %v151
  %648 = vmatmul.mubr.bf16.gmra.mrb[0].mxu0 %v150
  %v649 = vpop.f32.mrb[0].mxu0
  %v650 = vadd.f32 %v530, %v649
  %v651 = vpop.f32.mrb[0].mxu0
  %v652 = vpop.f32.mrb[0].mxu0
  %v653 = vpop.f32.mrb[0].mxu0
  %654 = vdwg.mxu0
  %v655 = vld [vmem:[%s1] sm:$0xff]
  %v656 = vld [vmem:[%s1 + $0x8] sm:$0xff]
  %v657 = vld [vmem:[%s1 + $0x10] sm:$0xff]
  %v658 = vld [vmem:[%s1 + $0x18] sm:$0xff]
  %v659 = vld [vmem:[%s1 + $0x20] sm:$0xff]
  %v660 = vld [vmem:[%s1 + $0x28] sm:$0xff]
  %v661 = vld [vmem:[%s1 + $0x30] sm:$0xff]
  %v662 = vld [vmem:[%s1 + $0x38] sm:$0xff]
  %v663 = vld [vmem:[%s1 + $0x40] sm:$0xff]
  %v664 = vld [vmem:[%s1 + $0x48] sm:$0xff]
  %v665 = vld [vmem:[%s1 + $0x50] sm:$0xff]
  %v666 = vld [vmem:[%s1 + $0x58] sm:$0xff]
  %v667 = vld [vmem:[%s1 + $0x60] sm:$0xff]
  %v668 = vld [vmem:[%s1 + $0x68] sm:$0xff]
  %v669 = vld [vmem:[%s1 + $0x70] sm:$0xff]
  %v670 = vld [vmem:[%s1 + $0x78] sm:$0xff]
  %v671 = vld [vmem:[%s1 + $0x80] sm:$0xff]
  %v672 = vld [vmem:[%s1 + $0x88] sm:$0xff]
  %v673 = vld [vmem:[%s1 + $0x90] sm:$0xff]
  %v674 = vld [vmem:[%s1 + $0x98] sm:$0xff]
  %v675 = vld [vmem:[%s1 + $0xa0] sm:$0xff]
  %v676 = vld [vmem:[%s1 + $0xa8] sm:$0xff]
  %v677 = vld [vmem:[%s1 + $0xb0] sm:$0xff]
  %v678 = vld [vmem:[%s1 + $0xb8] sm:$0xff]
  %v679 = vld [vmem:[%s1 + $0xc0] sm:$0xff]
  %v680 = vld [vmem:[%s1 + $0xc8] sm:$0xff]
  %v681 = vld [vmem:[%s1 + $0xd0] sm:$0xff]
  %v682 = vld [vmem:[%s1 + $0xd8] sm:$0xff]
  %v683 = vld [vmem:[%s1 + $0xe0] sm:$0xff]
  %v684 = vld [vmem:[%s1 + $0xe8] sm:$0xff]
  %v685 = vld [vmem:[%s1 + $0xf0] sm:$0xff]
  %v686 = vld [vmem:[%s1 + $0xf8] sm:$0xff]
  %v687 = vld [vmem:[%s1 + $0x100] sm:$0xff]
  %v688 = vld [vmem:[%s1 + $0x108] sm:$0xff]
  %v689 = vld [vmem:[%s1 + $0x110] sm:$0xff]
  %v690 = vld [vmem:[%s1 + $0x118] sm:$0xff]
  %v691 = vld [vmem:[%s1 + $0x120] sm:$0xff]
  %v692 = vld [vmem:[%s1 + $0x128] sm:$0xff]
  %v693 = vld [vmem:[%s1 + $0x130] sm:$0xff]
  %v694 = vld [vmem:[%s1 + $0x138] sm:$0xff]
  %v695 = vld [vmem:[%s1 + $0x140] sm:$0xff]
  %v696 = vld [vmem:[%s1 + $0x148] sm:$0xff]
  %v697 = vld [vmem:[%s1 + $0x150] sm:$0xff]
  %v698 = vld [vmem:[%s1 + $0x158] sm:$0xff]
  %v699 = vld [vmem:[%s1 + $0x160] sm:$0xff]
  %v700 = vld [vmem:[%s1 + $0x168] sm:$0xff]
  %v701 = vld [vmem:[%s1 + $0x170] sm:$0xff]
  %v702 = vld [vmem:[%s1 + $0x178] sm:$0xff]
  %v703 = vld [vmem:[%s1 + $0x180] sm:$0xff]
  %v704 = vld [vmem:[%s1 + $0x188] sm:$0xff]
  %v705 = vld [vmem:[%s1 + $0x190] sm:$0xff]
  %v706 = vld [vmem:[%s1 + $0x198] sm:$0xff]
  %v707 = vld [vmem:[%s1 + $0x1a0] sm:$0xff]
  %v708 = vld [vmem:[%s1 + $0x1a8] sm:$0xff]
  %v709 = vld [vmem:[%s1 + $0x1b0] sm:$0xff]
  %v710 = vld [vmem:[%s1 + $0x1b8] sm:$0xff]
  %v711 = vld [vmem:[%s1 + $0x1c0] sm:$0xff]
  %v712 = vld [vmem:[%s1 + $0x1c8] sm:$0xff]
  %v713 = vld [vmem:[%s1 + $0x1d0] sm:$0xff]
  %v714 = vld [vmem:[%s1 + $0x1d8] sm:$0xff]
  %v715 = vld [vmem:[%s1 + $0x1e0] sm:$0xff]
  %v716 = vld [vmem:[%s1 + $0x1e8] sm:$0xff]
  %v717 = vld [vmem:[%s1 + $0x1f0] sm:$0xff]
  %v718 = vld [vmem:[%s1 + $0x1f8] sm:$0xff]
  %v719 = vld [vmem:[%s1 + $0x200] sm:$0xff]
  %v720 = vld [vmem:[%s1 + $0x208] sm:$0xff]
  %v721 = vld [vmem:[%s1 + $0x210] sm:$0xff]
  %v722 = vld [vmem:[%s1 + $0x218] sm:$0xff]
  %v723 = vld [vmem:[%s1 + $0x220] sm:$0xff]
  %v724 = vld [vmem:[%s1 + $0x228] sm:$0xff]
  %v725 = vld [vmem:[%s1 + $0x230] sm:$0xff]
  %v726 = vld [vmem:[%s1 + $0x238] sm:$0xff]
  %v727 = vld [vmem:[%s1 + $0x240] sm:$0xff]
  %v728 = vld [vmem:[%s1 + $0x248] sm:$0xff]
  %v729 = vld [vmem:[%s1 + $0x250] sm:$0xff]
  %v730 = vld [vmem:[%s1 + $0x258] sm:$0xff]
  %v731 = vld [vmem:[%s1 + $0x260] sm:$0xff]
  %v732 = vld [vmem:[%s1 + $0x268] sm:$0xff]
  %v733 = vld [vmem:[%s1 + $0x270] sm:$0xff]
  %v734 = vld [vmem:[%s1 + $0x278] sm:$0xff]
  %v735 = vld [vmem:[%s1 + $0x280] sm:$0x3]
  %v736 = vld [vmem:[%s1 + $0x288] sm:$0x3]
  %v737 = vld [vmem:[%s1 + $0x290] sm:$0x3]
  %v738 = vld [vmem:[%s1 + $0x298] sm:$0x3]
  %v739 = vpack.c.bf16 %v659, %v655
  %v740 = vpack.c.bf16 %v660, %v656
  %v741 = vpack.c.bf16 %v661, %v657
  %v742 = vpack.c.bf16 %v662, %v658
  %v743 = vpack.c.bf16 %v667, %v663
  %v744 = vpack.c.bf16 %v668, %v664
  %v745 = vpack.c.bf16 %v669, %v665
  %v746 = vpack.c.bf16 %v670, %v666
  %v747 = vpack.c.bf16 %v675, %v671
  %v748 = vpack.c.bf16 %v676, %v672
  %v749 = vpack.c.bf16 %v677, %v673
  %v750 = vpack.c.bf16 %v678, %v674
  %v751 = vpack.c.bf16 %v683, %v679
  %v752 = vpack.c.bf16 %v684, %v680
  %v753 = vpack.c.bf16 %v685, %v681
  %v754 = vpack.c.bf16 %v686, %v682
  %v755 = vpack.c.bf16 %v691, %v687
  %v756 = vpack.c.bf16 %v692, %v688
  %v757 = vpack.c.bf16 %v693, %v689
  %v758 = vpack.c.bf16 %v694, %v690
  %v759 = vpack.c.bf16 %v699, %v695
  %v760 = vpack.c.bf16 %v700, %v696
  %v761 = vpack.c.bf16 %v701, %v697
  %v762 = vpack.c.bf16 %v702, %v698
  %v763 = vpack.c.bf16 %v707, %v703
  %v764 = vpack.c.bf16 %v708, %v704
  %v765 = vpack.c.bf16 %v709, %v705
  %v766 = vpack.c.bf16 %v710, %v706
  %v767 = vpack.c.bf16 %v715, %v711
  %v768 = vpack.c.bf16 %v716, %v712
  %v769 = vpack.c.bf16 %v717, %v713
  %v770 = vpack.c.bf16 %v718, %v714
  %v771 = vpack.c.bf16 %v723, %v719
  %v772 = vpack.c.bf16 %v724, %v720
  %v773 = vpack.c.bf16 %v725, %v721
  %v774 = vpack.c.bf16 %v726, %v722
  %v775 = vpack.c.bf16 %v731, %v727
  %v776 = vpack.c.bf16 %v732, %v728
  %v777 = vpack.c.bf16 %v733, %v729
  %v778 = vpack.c.bf16 %v734, %v730
  %v779 = vpack.c.bf16 %v735, %v735
  %v780 = vpack.c.bf16 %v736, %v736
  %v781 = vpack.c.bf16 %v737, %v737
  %v782 = vpack.c.bf16 %v738, %v738
  %v783 = vld [vmem:[%s3] sm:$0xf]
  %v784 = vld [vmem:[%s3 + $0x4] sm:$0xf]
  %v785 = vld [vmem:[%s3 + $0x8] sm:$0xf]
  %v786 = vld [vmem:[%s3 + $0xc] sm:$0xf]
  %v787 = vld [vmem:[%s3 + $0x10] sm:$0xf]
  %v788 = vld [vmem:[%s3 + $0x14] sm:$0xf]
  %v789 = vld [vmem:[%s3 + $0x18] sm:$0xf]
  %v790 = vld [vmem:[%s3 + $0x1c] sm:$0xf]
  %v791 = vld [vmem:[%s3 + $0x20] sm:$0xf]
  %v792 = vld [vmem:[%s3 + $0x24] sm:$0xf]
  %v793 = vld [vmem:[%s3 + $0x28] sm:$0xf]
  %v794 = vld [vmem:[%s3 + $0x2c] sm:$0xf]
  %v795 = vld [vmem:[%s3 + $0x30] sm:$0xf]
  %v796 = vld [vmem:[%s3 + $0x34] sm:$0xf]
  %v797 = vld [vmem:[%s3 + $0x38] sm:$0xf]
  %v798 = vld [vmem:[%s3 + $0x3c] sm:$0xf]
  %v799 = vld [vmem:[%s3 + $0x40] sm:$0xf]
  %v800 = vld [vmem:[%s3 + $0x44] sm:$0xf]
  %v801 = vld [vmem:[%s3 + $0x48] sm:$0xf]
  %v802 = vld [vmem:[%s3 + $0x4c] sm:$0xf]
  %v803 = vld [vmem:[%s3 + $0x50] sm:$0xf]
  %v804 = vld [vmem:[%s3 + $0x54] sm:$0xf]
  %v805 = vld [vmem:[%s3 + $0x58] sm:$0xf]
  %v806 = vld [vmem:[%s3 + $0x5c] sm:$0xf]
  %v807 = vld [vmem:[%s3 + $0x60] sm:$0xf]
  %v808 = vld [vmem:[%s3 + $0x64] sm:$0xf]
  %v809 = vld [vmem:[%s3 + $0x68] sm:$0xf]
  %v810 = vld [vmem:[%s3 + $0x6c] sm:$0xf]
  %v811 = vld [vmem:[%s3 + $0x70] sm:$0xf]
  %v812 = vld [vmem:[%s3 + $0x74] sm:$0xf]
  %v813 = vld [vmem:[%s3 + $0x78] sm:$0xf]
  %v814 = vld [vmem:[%s3 + $0x7c] sm:$0xf]
  %v815 = vld [vmem:[%s3 + $0x80] sm:$0xf]
  %v816 = vld [vmem:[%s3 + $0x84] sm:$0xf]
  %v817 = vld [vmem:[%s3 + $0x88] sm:$0xf]
  %v818 = vld [vmem:[%s3 + $0x8c] sm:$0xf]
  %v819 = vld [vmem:[%s3 + $0x90] sm:$0xf]
  %v820 = vld [vmem:[%s3 + $0x94] sm:$0xf]
  %v821 = vld [vmem:[%s3 + $0x98] sm:$0xf]
  %v822 = vld [vmem:[%s3 + $0x9c] sm:$0xf]
  %v823 = vld [vmem:[%s3 + $0xa0] sm:$0xf]
  %v824 = vld [vmem:[%s3 + $0xa4] sm:$0xf]
  %v825 = vld [vmem:[%s3 + $0xa8] sm:$0xf]
  %v826 = vld [vmem:[%s3 + $0xac] sm:$0xf]
  %v827 = vld [vmem:[%s3 + $0xb0] sm:$0xf]
  %v828 = vld [vmem:[%s3 + $0xb4] sm:$0xf]
  %v829 = vld [vmem:[%s3 + $0xb8] sm:$0xf]
  %v830 = vld [vmem:[%s3 + $0xbc] sm:$0xf]
  %v831 = vld [vmem:[%s3 + $0xc0] sm:$0xf]
  %v832 = vld [vmem:[%s3 + $0xc4] sm:$0xf]
  %v833 = vld [vmem:[%s3 + $0xc8] sm:$0xf]
  %v834 = vld [vmem:[%s3 + $0xcc] sm:$0xf]
  %v835 = vld [vmem:[%s3 + $0xd0] sm:$0xf]
  %v836 = vld [vmem:[%s3 + $0xd4] sm:$0xf]
  %v837 = vld [vmem:[%s3 + $0xd8] sm:$0xf]
  %v838 = vld [vmem:[%s3 + $0xdc] sm:$0xf]
  %v839 = vld [vmem:[%s3 + $0xe0] sm:$0xf]
  %v840 = vld [vmem:[%s3 + $0xe4] sm:$0xf]
  %v841 = vld [vmem:[%s3 + $0xe8] sm:$0xf]
  %v842 = vld [vmem:[%s3 + $0xec] sm:$0xf]
  %v843 = vld [vmem:[%s3 + $0xf0] sm:$0xf]
  %v844 = vld [vmem:[%s3 + $0xf4] sm:$0xf]
  %v845 = vld [vmem:[%s3 + $0xf8] sm:$0xf]
  %v846 = vld [vmem:[%s3 + $0xfc] sm:$0xf]
  %v847 = vld [vmem:[%s5] sm:$0x1]
  %v849 = vlaneseq
  %v850 = vshrl.u32 %v849, 7
  %v851 = vsub.s32 0, %v850
  %v852 = vrot.slane %v847, %v851
  %v918 = vunpack.c.l.b16 %v783
  %v919 = vunpack.c.l.b16 %v784
  %v920 = vunpack.c.l.b16 %v785
  %v921 = vunpack.c.l.b16 %v786
  %v922 = vunpack.c.l.b16 %v787
  %v923 = vunpack.c.l.b16 %v788
  %v924 = vunpack.c.l.b16 %v789
  %v925 = vunpack.c.l.b16 %v790
  %v926 = vunpack.c.l.b16 %v791
  %v927 = vunpack.c.l.b16 %v792
  %v928 = vunpack.c.l.b16 %v793
  %v929 = vunpack.c.l.b16 %v794
  %v930 = vunpack.c.l.b16 %v795
  %v931 = vunpack.c.l.b16 %v796
  %v932 = vunpack.c.l.b16 %v797
  %v933 = vunpack.c.l.b16 %v798
  %v934 = vunpack.c.l.b16 %v799
  %v935 = vunpack.c.l.b16 %v800
  %v936 = vunpack.c.l.b16 %v801
  %v937 = vunpack.c.l.b16 %v802
  %v938 = vunpack.c.l.b16 %v803
  %v939 = vunpack.c.l.b16 %v804
  %v940 = vunpack.c.l.b16 %v805
  %v941 = vunpack.c.l.b16 %v806
  %v942 = vunpack.c.l.b16 %v807
  %v943 = vunpack.c.l.b16 %v808
  %v944 = vunpack.c.l.b16 %v809
  %v945 = vunpack.c.l.b16 %v810
  %v946 = vunpack.c.l.b16 %v811
  %v947 = vunpack.c.l.b16 %v812
  %v948 = vunpack.c.l.b16 %v813
  %v949 = vunpack.c.l.b16 %v814
  %v950 = vunpack.c.l.b16 %v815
  %v951 = vunpack.c.l.b16 %v816
  %v952 = vunpack.c.l.b16 %v817
  %v953 = vunpack.c.l.b16 %v818
  %v954 = vunpack.c.l.b16 %v819
  %v955 = vunpack.c.l.b16 %v820
  %v956 = vunpack.c.l.b16 %v821
  %v957 = vunpack.c.l.b16 %v822
  %v958 = vunpack.c.l.b16 %v823
  %v959 = vunpack.c.l.b16 %v824
  %v960 = vunpack.c.l.b16 %v825
  %v961 = vunpack.c.l.b16 %v826
  %v962 = vunpack.c.l.b16 %v827
  %v963 = vunpack.c.l.b16 %v828
  %v964 = vunpack.c.l.b16 %v829
  %v965 = vunpack.c.l.b16 %v830
  %v966 = vunpack.c.l.b16 %v831
  %v967 = vunpack.c.l.b16 %v832
  %v968 = vunpack.c.l.b16 %v833
  %v969 = vunpack.c.l.b16 %v834
  %v970 = vunpack.c.l.b16 %v835
  %v971 = vunpack.c.l.b16 %v836
  %v972 = vunpack.c.l.b16 %v837
  %v973 = vunpack.c.l.b16 %v838
  %v974 = vunpack.c.l.b16 %v839
  %v975 = vunpack.c.l.b16 %v840
  %v976 = vunpack.c.l.b16 %v841
  %v977 = vunpack.c.l.b16 %v842
  %v978 = vunpack.c.l.b16 %v843
  %v979 = vunpack.c.l.b16 %v844
  %v980 = vunpack.c.l.b16 %v845
  %v981 = vunpack.c.l.b16 %v846
  %v982 = vpack.c.b16 %v919, %v918
  %v983 = vpack.c.b16 %v921, %v920
  %v984 = vpack.c.b16 %v923, %v922
  %v985 = vpack.c.b16 %v925, %v924
  %v986 = vpack.c.b16 %v927, %v926
  %v987 = vpack.c.b16 %v929, %v928
  %v988 = vpack.c.b16 %v931, %v930
  %v989 = vpack.c.b16 %v933, %v932
  %v990 = vpack.c.b16 %v935, %v934
  %v991 = vpack.c.b16 %v937, %v936
  %v992 = vpack.c.b16 %v939, %v938
  %v993 = vpack.c.b16 %v941, %v940
  %v994 = vpack.c.b16 %v943, %v942
  %v995 = vpack.c.b16 %v945, %v944
  %v996 = vpack.c.b16 %v947, %v946
  %v997 = vpack.c.b16 %v949, %v948
  %v998 = vpack.c.b16 %v951, %v950
  %v999 = vpack.c.b16 %v953, %v952
  %v1000 = vpack.c.b16 %v955, %v954
  %v1001 = vpack.c.b16 %v957, %v956
  %v1002 = vpack.c.b16 %v959, %v958
  %v1003 = vpack.c.b16 %v961, %v960
  %v1004 = vpack.c.b16 %v963, %v962
  %v1005 = vpack.c.b16 %v965, %v964
  %v1006 = vpack.c.b16 %v967, %v966
  %v1007 = vpack.c.b16 %v969, %v968
  %v1008 = vpack.c.b16 %v971, %v970
  %v1009 = vpack.c.b16 %v973, %v972
  %v1010 = vpack.c.b16 %v975, %v974
  %v1011 = vpack.c.b16 %v977, %v976
  %v1012 = vpack.c.b16 %v979, %v978
  %v1013 = vpack.c.b16 %v981, %v980
  %1046 = vmatprep.subr.bf16.mxu0 0
  %1047 = vmatpush1.bf16.msra.mxu0 %v982
  %1048 = vmatprep.subr.bf16.mxu0 0
  %1049 = vmatpush1.bf16.msra.mxu0 %v983
  %1050 = vmatprep.subr.bf16.mxu0 0
  %1051 = vmatpush1.bf16.msra.mxu0 %v984
  %1052 = vmatprep.subr.bf16.mxu0 0
  %1053 = vmatpush1.bf16.msra.mxu0 %v985
  %1054 = vmatprep.subr.bf16.mxu0 0
  %1055 = vmatpush1.bf16.msra.mxu0 %v986
  %1056 = vmatprep.subr.bf16.mxu0 0
  %1057 = vmatpush1.bf16.msra.mxu0 %v987
  %1058 = vmatprep.subr.bf16.mxu0 0
  %1059 = vmatpush1.bf16.msra.mxu0 %v988
  %1060 = vmatprep.subr.bf16.mxu0 0
  %1061 = vmatpush1.bf16.msra.mxu0 %v989
  %1062 = vmatprep.subr.bf16.mxu0 0
  %1063 = vmatpush1.bf16.msra.mxu0 %v990
  %1064 = vmatprep.subr.bf16.mxu0 0
  %1065 = vmatpush1.bf16.msra.mxu0 %v991
  %1066 = vmatprep.subr.bf16.mxu0 0
  %1067 = vmatpush1.bf16.msra.mxu0 %v992
  %1068 = vmatprep.subr.bf16.mxu0 0
  %1069 = vmatpush1.bf16.msra.mxu0 %v993
  %1070 = vmatprep.subr.bf16.mxu0 0
  %1071 = vmatpush1.bf16.msra.mxu0 %v994
  %1072 = vmatprep.subr.bf16.mxu0 0
  %1073 = vmatpush1.bf16.msra.mxu0 %v995
  %1074 = vmatprep.subr.bf16.mxu0 0
  %1075 = vmatpush1.bf16.msra.mxu0 %v996
  %1076 = vmatprep.subr.bf16.mxu0 0
  %1077 = vmatpush1.bf16.msra.mxu0 %v997
  %1078 = vmatprep.mubr.bf16.mxu0 %v740
  %1079 = vmatmul.mubr.bf16.gmra.mrb[0].mxu0 %v739
  %v1080 = vpop.f32.mrb[0].mxu0
  %v1081 = vadd.f32 %v852, %v1080
  %v1082 = vpop.f32.mrb[0].mxu0
  %v1083 = vpop.f32.mrb[0].mxu0
  %v1084 = vadd.f32 %v852, %v1083
  %v1085 = vpop.f32.mrb[0].mxu0
  %1086 = vmatprep.mubr.bf16.mxu0 %v744
  %1087 = vmatmul.mubr.bf16.gmra.mrb[0].mxu0 %v743
  %v1088 = vpop.f32.mrb[0].mxu0
  %v1089 = vadd.f32 %v852, %v1088
  %v1090 = vpop.f32.mrb[0].mxu0
  %v1091 = vpop.f32.mrb[0].mxu0
  %v1092 = vadd.f32 %v852, %v1091
  %v1093 = vpop.f32.mrb[0].mxu0
  %1094 = vmatprep.mubr.bf16.mxu0 %v748
  %1095 = vmatmul.mubr.bf16.gmra.mrb[0].mxu0 %v747
  %v1096 = vpop.f32.mrb[0].mxu0
  %v1097 = vadd.f32 %v852, %v1096
  %v1098 = vpop.f32.mrb[0].mxu0
  %v1099 = vpop.f32.mrb[0].mxu0
  %v1100 = vadd.f32 %v852, %v1099
  %v1101 = vpop.f32.mrb[0].mxu0
  %1102 = vmatprep.mubr.bf16.mxu0 %v752
  %1103 = vmatmul.mubr.bf16.gmra.mrb[0].mxu0 %v751
  %v1104 = vpop.f32.mrb[0].mxu0
  %v1105 = vadd.f32 %v852, %v1104
  %v1106 = vpop.f32.mrb[0].mxu0
  %v1107 = vpop.f32.mrb[0].mxu0
  %v1108 = vadd.f32 %v852, %v1107
  %v1109 = vpop.f32.mrb[0].mxu0
  %1110 = vmatprep.mubr.bf16.mxu0 %v756
  %1111 = vmatmul.mubr.bf16.gmra.mrb[0].mxu0 %v755
  %v1112 = vpop.f32.mrb[0].mxu0
  %v1113 = vadd.f32 %v852, %v1112
  %v1114 = vpop.f32.mrb[0].mxu0
  %v1115 = vpop.f32.mrb[0].mxu0
  %v1116 = vadd.f32 %v852, %v1115
  %v1117 = vpop.f32.mrb[0].mxu0
  %1118 = vmatprep.mubr.bf16.mxu0 %v760
  %1119 = vmatmul.mubr.bf16.gmra.mrb[0].mxu0 %v759
  %v1120 = vpop.f32.mrb[0].mxu0
  %v1121 = vadd.f32 %v852, %v1120
  %v1122 = vpop.f32.mrb[0].mxu0
  %v1123 = vpop.f32.mrb[0].mxu0
  %v1124 = vadd.f32 %v852, %v1123
  %v1125 = vpop.f32.mrb[0].mxu0
  %1126 = vmatprep.mubr.bf16.mxu0 %v764
  %1127 = vmatmul.mubr.bf16.gmra.mrb[0].mxu0 %v763
  %v1128 = vpop.f32.mrb[0].mxu0
  %v1129 = vadd.f32 %v852, %v1128
  %v1130 = vpop.f32.mrb[0].mxu0
  %v1131 = vpop.f32.mrb[0].mxu0
  %v1132 = vadd.f32 %v852, %v1131
  %v1133 = vpop.f32.mrb[0].mxu0
  %1134 = vmatprep.mubr.bf16.mxu0 %v768
  %1135 = vmatmul.mubr.bf16.gmra.mrb[0].mxu0 %v767
  %v1136 = vpop.f32.mrb[0].mxu0
  %v1137 = vadd.f32 %v852, %v1136
  %v1138 = vpop.f32.mrb[0].mxu0
  %v1139 = vpop.f32.mrb[0].mxu0
  %v1140 = vadd.f32 %v852, %v1139
  %v1141 = vpop.f32.mrb[0].mxu0
  %1142 = vmatprep.mubr.bf16.mxu0 %v772
  %1143 = vmatmul.mubr.bf16.gmra.mrb[0].mxu0 %v771
  %v1144 = vpop.f32.mrb[0].mxu0
  %v1145 = vadd.f32 %v852, %v1144
  %v1146 = vpop.f32.mrb[0].mxu0
  %v1147 = vpop.f32.mrb[0].mxu0
  %v1148 = vadd.f32 %v852, %v1147
  %v1149 = vpop.f32.mrb[0].mxu0
  %1150 = vmatprep.mubr.bf16.mxu0 %v776
  %1151 = vmatmul.mubr.bf16.gmra.mrb[0].mxu0 %v775
  %v1152 = vpop.f32.mrb[0].mxu0
  %v1153 = vadd.f32 %v852, %v1152
  %v1154 = vpop.f32.mrb[0].mxu0
  %v1155 = vpop.f32.mrb[0].mxu0
  %v1156 = vadd.f32 %v852, %v1155
  %v1157 = vpop.f32.mrb[0].mxu0
  %1158 = vmatprep.mubr.bf16.mxu0 %v780
  %1159 = vmatmul.mubr.bf16.gmra.mrb[0].mxu0 %v779
  %v1160 = vpop.f32.mrb[0].mxu0
  %v1161 = vadd.f32 %v852, %v1160
  %v1162 = vpop.f32.mrb[0].mxu0
  %v1163 = vpop.f32.mrb[0].mxu0
  %v1164 = vpop.f32.mrb[0].mxu0
  %1165 = vdwg.mxu0
  %1166 = vmatprep.subr.bf16.mxu0 0
  %1167 = vmatpush1.bf16.msra.mxu0 %v998
  %1168 = vmatprep.subr.bf16.mxu0 0
  %1169 = vmatpush1.bf16.msra.mxu0 %v999
  %1170 = vmatprep.subr.bf16.mxu0 0
  %1171 = vmatpush1.bf16.msra.mxu0 %v1000
  %1172 = vmatprep.subr.bf16.mxu0 0
  %1173 = vmatpush1.bf16.msra.mxu0 %v1001
  %1174 = vmatprep.subr.bf16.mxu0 0
  %1175 = vmatpush1.bf16.msra.mxu0 %v1002
  %1176 = vmatprep.subr.bf16.mxu0 0
  %1177 = vmatpush1.bf16.msra.mxu0 %v1003
  %1178 = vmatprep.subr.bf16.mxu0 0
  %1179 = vmatpush1.bf16.msra.mxu0 %v1004
  %1180 = vmatprep.subr.bf16.mxu0 0
  %1181 = vmatpush1.bf16.msra.mxu0 %v1005
  %1182 = vmatprep.subr.bf16.mxu0 0
  %1183 = vmatpush1.bf16.msra.mxu0 %v1006
  %1184 = vmatprep.subr.bf16.mxu0 0
  %1185 = vmatpush1.bf16.msra.mxu0 %v1007
  %1186 = vmatprep.subr.bf16.mxu0 0
  %1187 = vmatpush1.bf16.msra.mxu0 %v1008
  %1188 = vmatprep.subr.bf16.mxu0 0
  %1189 = vmatpush1.bf16.msra.mxu0 %v1009
  %1190 = vmatprep.subr.bf16.mxu0 0
  %1191 = vmatpush1.bf16.msra.mxu0 %v1010
  %1192 = vmatprep.subr.bf16.mxu0 0
  %1193 = vmatpush1.bf16.msra.mxu0 %v1011
  %1194 = vmatprep.subr.bf16.mxu0 0
  %1195 = vmatpush1.bf16.msra.mxu0 %v1012
  %1196 = vmatprep.subr.bf16.mxu0 0
  %1197 = vmatpush1.bf16.msra.mxu0 %v1013
  %1198 = vmatprep.mubr.bf16.mxu0 %v742
  %1199 = vmatmul.mubr.bf16.gmra.mrb[0].mxu0 %v741
  %v1200 = vpop.f32.mrb[0].mxu0
  %v1201 = vadd.f32 %v1081, %v1200
  %v1202 = vpop.f32.mrb[0].mxu0
  %v1203 = vpop.f32.mrb[0].mxu0
  %v1204 = vadd.f32 %v1084, %v1203
  %v1205 = vpop.f32.mrb[0].mxu0
  %1206 = vmatprep.mubr.bf16.mxu0 %v746
  %1207 = vmatmul.mubr.bf16.gmra.mrb[0].mxu0 %v745
  %v1208 = vpop.f32.mrb[0].mxu0
  %v1209 = vadd.f32 %v1089, %v1208
  %v1210 = vpop.f32.mrb[0].mxu0
  %v1211 = vpop.f32.mrb[0].mxu0
  %v1212 = vadd.f32 %v1092, %v1211
  %v1213 = vpop.f32.mrb[0].mxu0
  %1214 = vmatprep.mubr.bf16.mxu0 %v750
  %1215 = vmatmul.mubr.bf16.gmra.mrb[0].mxu0 %v749
  %v1216 = vpop.f32.mrb[0].mxu0
  %v1217 = vadd.f32 %v1097, %v1216
  %v1218 = vpop.f32.mrb[0].mxu0
  %v1219 = vpop.f32.mrb[0].mxu0
  %v1220 = vadd.f32 %v1100, %v1219
  %v1221 = vpop.f32.mrb[0].mxu0
  %1222 = vmatprep.mubr.bf16.mxu0 %v754
  %1223 = vmatmul.mubr.bf16.gmra.mrb[0].mxu0 %v753
  %v1224 = vpop.f32.mrb[0].mxu0
  %v1225 = vadd.f32 %v1105, %v1224
  %v1226 = vpop.f32.mrb[0].mxu0
  %v1227 = vpop.f32.mrb[0].mxu0
  %v1228 = vadd.f32 %v1108, %v1227
  %v1229 = vpop.f32.mrb[0].mxu0
  %1230 = vmatprep.mubr.bf16.mxu0 %v758
  %1231 = vmatmul.mubr.bf16.gmra.mrb[0].mxu0 %v757
  %v1232 = vpop.f32.mrb[0].mxu0
  %v1233 = vadd.f32 %v1113, %v1232
  %v1234 = vpop.f32.mrb[0].mxu0
  %v1235 = vpop.f32.mrb[0].mxu0
  %v1236 = vadd.f32 %v1116, %v1235
  %v1237 = vpop.f32.mrb[0].mxu0
  %1238 = vmatprep.mubr.bf16.mxu0 %v762
  %1239 = vmatmul.mubr.bf16.gmra.mrb[0].mxu0 %v761
  %v1240 = vpop.f32.mrb[0].mxu0
  %v1241 = vadd.f32 %v1121, %v1240
  %v1242 = vpop.f32.mrb[0].mxu0
  %v1243 = vpop.f32.mrb[0].mxu0
  %v1244 = vadd.f32 %v1124, %v1243
  %v1245 = vpop.f32.mrb[0].mxu0
  %1246 = vmatprep.mubr.bf16.mxu0 %v766
  %1247 = vmatmul.mubr.bf16.gmra.mrb[0].mxu0 %v765
  %v1248 = vpop.f32.mrb[0].mxu0
  %v1249 = vadd.f32 %v1129, %v1248
  %v1250 = vpop.f32.mrb[0].mxu0
  %v1251 = vpop.f32.mrb[0].mxu0
  %v1252 = vadd.f32 %v1132, %v1251
  %v1253 = vpop.f32.mrb[0].mxu0
  %1254 = vmatprep.mubr.bf16.mxu0 %v770
  %1255 = vmatmul.mubr.bf16.gmra.mrb[0].mxu0 %v769
  %v1256 = vpop.f32.mrb[0].mxu0
  %v1257 = vadd.f32 %v1137, %v1256
  %v1258 = vpop.f32.mrb[0].mxu0
  %v1259 = vpop.f32.mrb[0].mxu0
  %v1260 = vadd.f32 %v1140, %v1259
  %v1261 = vpop.f32.mrb[0].mxu0
  %1262 = vmatprep.mubr.bf16.mxu0 %v774
  %1263 = vmatmul.mubr.bf16.gmra.mrb[0].mxu0 %v773
  %v1264 = vpop.f32.mrb[0].mxu0
  %v1265 = vadd.f32 %v1145, %v1264
  %v1266 = vpop.f32.mrb[0].mxu0
  %v1267 = vpop.f32.mrb[0].mxu0
  %v1268 = vadd.f32 %v1148, %v1267
  %v1269 = vpop.f32.mrb[0].mxu0
  %1270 = vmatprep.mubr.bf16.mxu0 %v778
  %1271 = vmatmul.mubr.bf16.gmra.mrb[0].mxu0 %v777
  %v1272 = vpop.f32.mrb[0].mxu0
  %v1273 = vadd.f32 %v1153, %v1272
  %v1274 = vpop.f32.mrb[0].mxu0
  %v1275 = vpop.f32.mrb[0].mxu0
  %v1276 = vadd.f32 %v1156, %v1275
  %v1277 = vpop.f32.mrb[0].mxu0
  %1278 = vmatprep.mubr.bf16.mxu0 %v782
  %1279 = vmatmul.mubr.bf16.gmra.mrb[0].mxu0 %v781
  %v1280 = vpop.f32.mrb[0].mxu0
  %v1281 = vadd.f32 %v1161, %v1280
  %v1282 = vpop.f32.mrb[0].mxu0
  %v1283 = vpop.f32.mrb[0].mxu0
  %v1284 = vpop.f32.mrb[0].mxu0
  %1285 = vdwg.mxu0
  %1307 = vrot.lane.b32.xlu0 %v1201, 64
  %v1308 = vpop.permute.xlu0 %1307
  %1309 = vrot.lane.b32.xlu0 %v1204, 64
  %v1310 = vpop.permute.xlu0 %1309
  %1311 = vrot.lane.b32.xlu0 %v1209, 64
  %v1312 = vpop.permute.xlu0 %1311
  %1313 = vrot.lane.b32.xlu0 %v1212, 64
  %v1314 = vpop.permute.xlu0 %1313
  %1315 = vrot.lane.b32.xlu0 %v1217, 64
  %v1316 = vpop.permute.xlu0 %1315
  %1317 = vrot.lane.b32.xlu0 %v1220, 64
  %v1318 = vpop.permute.xlu0 %1317
  %1319 = vrot.lane.b32.xlu0 %v1225, 64
  %v1320 = vpop.permute.xlu0 %1319
  %1321 = vrot.lane.b32.xlu0 %v1228, 64
  %v1322 = vpop.permute.xlu0 %1321
  %1323 = vrot.lane.b32.xlu0 %v1233, 64
  %v1324 = vpop.permute.xlu0 %1323
  %1325 = vrot.lane.b32.xlu0 %v1236, 64
  %v1326 = vpop.permute.xlu0 %1325
  %1327 = vrot.lane.b32.xlu0 %v1241, 64
  %v1328 = vpop.permute.xlu0 %1327
  %1329 = vrot.lane.b32.xlu0 %v1244, 64
  %v1330 = vpop.permute.xlu0 %1329
  %1331 = vrot.lane.b32.xlu0 %v1249, 64
  %v1332 = vpop.permute.xlu0 %1331
  %1333 = vrot.lane.b32.xlu0 %v1252, 64
  %v1334 = vpop.permute.xlu0 %1333
  %1335 = vrot.lane.b32.xlu0 %v1257, 64
  %v1336 = vpop.permute.xlu0 %1335
  %1337 = vrot.lane.b32.xlu0 %v1260, 64
  %v1338 = vpop.permute.xlu0 %1337
  %1339 = vrot.lane.b32.xlu0 %v1265, 64
  %v1340 = vpop.permute.xlu0 %1339
  %1341 = vrot.lane.b32.xlu0 %v1268, 64
  %v1342 = vpop.permute.xlu0 %1341
  %1343 = vrot.lane.b32.xlu0 %v1273, 64
  %v1344 = vpop.permute.xlu0 %1343
  %1345 = vrot.lane.b32.xlu0 %v1276, 64
  %v1346 = vpop.permute.xlu0 %1345
  %1347 = vrot.lane.b32.xlu0 %v1281, 64
  %v1348 = vpop.permute.xlu0 %1347
  %vm1370 = vcmask 523264
  %v1371 = vsel %vm1370, %v570, %v1308
  %v1372 = vsel %vm1370, %v573, %v1310
  %v1373 = vsel %vm1370, %v578, %v1312
  %v1374 = vsel %vm1370, %v581, %v1314
  %v1375 = vsel %vm1370, %v586, %v1316
  %v1376 = vsel %vm1370, %v589, %v1318
  %v1377 = vsel %vm1370, %v594, %v1320
  %v1378 = vsel %vm1370, %v597, %v1322
  %v1379 = vsel %vm1370, %v602, %v1324
  %v1380 = vsel %vm1370, %v605, %v1326
  %v1381 = vsel %vm1370, %v610, %v1328
  %v1382 = vsel %vm1370, %v613, %v1330
  %v1383 = vsel %vm1370, %v618, %v1332
  %v1384 = vsel %vm1370, %v621, %v1334
  %v1385 = vsel %vm1370, %v626, %v1336
  %v1386 = vsel %vm1370, %v629, %v1338
  %v1387 = vsel %vm1370, %v634, %v1340
  %v1388 = vsel %vm1370, %v637, %v1342
  %v1389 = vsel %vm1370, %v642, %v1344
  %v1390 = vsel %vm1370, %v645, %v1346
  %v1391 = vsel %vm1370, %v650, %v1348
  %vm1392 = vcmp.gt.f32.partialorder %v1371, 0.0
  %vm1393 = vcmp.gt.f32.partialorder %v1372, 0.0
  %vm1394 = vcmp.gt.f32.partialorder %v1373, 0.0
  %vm1395 = vcmp.gt.f32.partialorder %v1374, 0.0
  %vm1396 = vcmp.gt.f32.partialorder %v1375, 0.0
  %vm1397 = vcmp.gt.f32.partialorder %v1376, 0.0
  %vm1398 = vcmp.gt.f32.partialorder %v1377, 0.0
  %vm1399 = vcmp.gt.f32.partialorder %v1378, 0.0
  %vm1400 = vcmp.gt.f32.partialorder %v1379, 0.0
  %vm1401 = vcmp.gt.f32.partialorder %v1380, 0.0
  %vm1402 = vcmp.gt.f32.partialorder %v1381, 0.0
  %vm1403 = vcmp.gt.f32.partialorder %v1382, 0.0
  %vm1404 = vcmp.gt.f32.partialorder %v1383, 0.0
  %vm1405 = vcmp.gt.f32.partialorder %v1384, 0.0
  %vm1406 = vcmp.gt.f32.partialorder %v1385, 0.0
  %vm1407 = vcmp.gt.f32.partialorder %v1386, 0.0
  %vm1408 = vcmp.gt.f32.partialorder %v1387, 0.0
  %vm1409 = vcmp.gt.f32.partialorder %v1388, 0.0
  %vm1410 = vcmp.gt.f32.partialorder %v1389, 0.0
  %vm1411 = vcmp.gt.f32.partialorder %v1390, 0.0
  %vm1412 = vcmp.gt.f32.partialorder %v1391, 0.0
  %v1413 = vmul.f32 %v1371, 0.01
  %v1414 = vmul.f32 %v1372, 0.01
  %v1415 = vmul.f32 %v1373, 0.01
  %v1416 = vmul.f32 %v1374, 0.01
  %v1417 = vmul.f32 %v1375, 0.01
  %v1418 = vmul.f32 %v1376, 0.01
  %v1419 = vmul.f32 %v1377, 0.01
  %v1420 = vmul.f32 %v1378, 0.01
  %v1421 = vmul.f32 %v1379, 0.01
  %v1422 = vmul.f32 %v1380, 0.01
  %v1423 = vmul.f32 %v1381, 0.01
  %v1424 = vmul.f32 %v1382, 0.01
  %v1425 = vmul.f32 %v1383, 0.01
  %v1426 = vmul.f32 %v1384, 0.01
  %v1427 = vmul.f32 %v1385, 0.01
  %v1428 = vmul.f32 %v1386, 0.01
  %v1429 = vmul.f32 %v1387, 0.01
  %v1430 = vmul.f32 %v1388, 0.01
  %v1431 = vmul.f32 %v1389, 0.01
  %v1432 = vmul.f32 %v1390, 0.01
  %v1433 = vmul.f32 %v1391, 0.01
  %v1434 = vsel %vm1392, %v1371, %v1413
  %v1435 = vsel %vm1393, %v1372, %v1414
  %v1436 = vsel %vm1394, %v1373, %v1415
  %v1437 = vsel %vm1395, %v1374, %v1416
  %v1438 = vsel %vm1396, %v1375, %v1417
  %v1439 = vsel %vm1397, %v1376, %v1418
  %v1440 = vsel %vm1398, %v1377, %v1419
  %v1441 = vsel %vm1399, %v1378, %v1420
  %v1442 = vsel %vm1400, %v1379, %v1421
  %v1443 = vsel %vm1401, %v1380, %v1422
  %v1444 = vsel %vm1402, %v1381, %v1423
  %v1445 = vsel %vm1403, %v1382, %v1424
  %v1446 = vsel %vm1404, %v1383, %v1425
  %v1447 = vsel %vm1405, %v1384, %v1426
  %v1448 = vsel %vm1406, %v1385, %v1427
  %v1449 = vsel %vm1407, %v1386, %v1428
  %v1450 = vsel %vm1408, %v1387, %v1429
  %v1451 = vsel %vm1409, %v1388, %v1430
  %v1452 = vsel %vm1410, %v1389, %v1431
  %v1453 = vsel %vm1411, %v1390, %v1432
  %v1454 = vsel %vm1412, %v1391, %v1433
  %1455 = vst [vmem:[%s6] sm:$0xff] %v1434
  %1456 = vst [vmem:[%s6 + $0x8] sm:$0xff] %v1435
  %1457 = vst [vmem:[%s6 + $0x10] sm:$0xff] %v1436
  %1458 = vst [vmem:[%s6 + $0x18] sm:$0xff] %v1437
  %1459 = vst [vmem:[%s6 + $0x20] sm:$0xff] %v1438
  %1460 = vst [vmem:[%s6 + $0x28] sm:$0xff] %v1439
  %1461 = vst [vmem:[%s6 + $0x30] sm:$0xff] %v1440
  %1462 = vst [vmem:[%s6 + $0x38] sm:$0xff] %v1441
  %1463 = vst [vmem:[%s6 + $0x40] sm:$0xff] %v1442
  %1464 = vst [vmem:[%s6 + $0x48] sm:$0xff] %v1443
  %1465 = vst [vmem:[%s6 + $0x50] sm:$0xff] %v1444
  %1466 = vst [vmem:[%s6 + $0x58] sm:$0xff] %v1445
  %1467 = vst [vmem:[%s6 + $0x60] sm:$0xff] %v1446
  %1468 = vst [vmem:[%s6 + $0x68] sm:$0xff] %v1447
  %1469 = vst [vmem:[%s6 + $0x70] sm:$0xff] %v1448
  %1470 = vst [vmem:[%s6 + $0x78] sm:$0xff] %v1449
  %1471 = vst [vmem:[%s6 + $0x80] sm:$0xff] %v1450
  %1472 = vst [vmem:[%s6 + $0x88] sm:$0xff] %v1451
  %1473 = vst [vmem:[%s6 + $0x90] sm:$0xff] %v1452
  %1474 = vst [vmem:[%s6 + $0x98] sm:$0xff] %v1453
  %1475 = vst [vmem:[%s6 + $0xa0] sm:$0x3] %v1454
  // Predicated region
  $region26: #{rnd_forward.5} parent=0 // pred_check
    _
  $region27: #{rnd_forward.5} parent=0 // pred_check_branch
    %1477 = sbr.rel (0) target = $region29
  $region28: #{rnd_forward.5} parent=0 // pred_region
    _
  $region29: #{rnd_forward.5} parent=0 // pred_fallthru
    _
  // Predicated region
  $region30: #{rnd_forward.5} parent=0 // pred_check
    _
  $region31: #{rnd_forward.5} parent=0 // pred_check_branch
    %1479 = sbr.rel (0) target = $region33
  $region32: #{rnd_forward.5} parent=0 // pred_region
    _
  $region33: #{rnd_forward.5} parent=0 // pred_fallthru
    _

// kernel: rnd_forward.6
$region0: #{rnd_forward.6}
  #allocation0 [shape = 'u32[]', space=smem, size = 0x4, offset = 0x4, fixed_abs, tag = 'smem constant byte address 0x4 - core index']
  #allocation1 [shape = 'u32[144,128]{1,0:T(1,128)}', space=vmem, size = 0x12000, scoped, tag = 'internal scratch']
  %s0 = inlined_call_operand.vmem [shape: f32[98,576], index: 0, kind: input, shape index: {}]
  %s1 = inlined_call_operand.vmem [shape: f32[98,576], index: 1, kind: input, shape index: {}]
  %s2 = inlined_call_operand.vmem [shape: bf16[576,64], index: 2, kind: input, shape index: {}]
  %s3 = inlined_call_operand.vmem [shape: bf16[576,64], index: 3, kind: input, shape index: {}]
  %s4 = inlined_call_operand.vmem [shape: f32[1,64], index: 4, kind: input, shape index: {}]
  %s5 = inlined_call_operand.vmem [shape: f32[1,64], index: 5, kind: input, shape index: {}]
  %s6 = inlined_call_operand.vmem [shape: f32[98,128], index: 6, kind: output, shape index: {}]
  %s7 = sld [smem:[#allocation0]]
  $region34: #{rnd_forward.6} parent=0
    _
  %s9 = ssub.s32 1, %s7
  %s10 = scalar_select 0, %s9, %s7
  // Predicated region
  $region2: #{rnd_forward.6} parent=0 // pred_check
    _
  $region3: #{rnd_forward.6} parent=0 // pred_check_branch
    %12 = sbr.rel (0) target = $region5
  $region4: #{rnd_forward.6} parent=0 // pred_region
    _
  $region5: #{rnd_forward.6} parent=0 // pred_fallthru
    _
  // Predicated region
  $region6: #{rnd_forward.6} parent=0 // pred_check
    _
  $region7: #{rnd_forward.6} parent=0 // pred_check_branch
    %14 = sbr.rel (0) target = $region9
  $region8: #{rnd_forward.6} parent=0 // pred_region
    _
  $region9: #{rnd_forward.6} parent=0 // pred_fallthru
    _
  // Predicated region
  $region10: #{rnd_forward.6} parent=0 // pred_check
    _
  $region11: #{rnd_forward.6} parent=0 // pred_check_branch
    %16 = sbr.rel (0) target = $region13
  $region12: #{rnd_forward.6} parent=0 // pred_region
    _
  $region13: #{rnd_forward.6} parent=0 // pred_fallthru
    _
  // Predicated region
  $region14: #{rnd_forward.6} parent=0 // pred_check
    _
  $region15: #{rnd_forward.6} parent=0 // pred_check_branch
    %18 = sbr.rel (0) target = $region17
  $region16: #{rnd_forward.6} parent=0 // pred_region
    _
  $region17: #{rnd_forward.6} parent=0 // pred_fallthru
    _
  // Predicated region
  $region18: #{rnd_forward.6} parent=0 // pred_check
    _
  $region19: #{rnd_forward.6} parent=0 // pred_check_branch
    %20 = sbr.rel (0) target = $region21
  $region20: #{rnd_forward.6} parent=0 // pred_region
    _
  $region21: #{rnd_forward.6} parent=0 // pred_fallthru
    _
  // Predicated region
  $region22: #{rnd_forward.6} parent=0 // pred_check
    _
  $region23: #{rnd_forward.6} parent=0 // pred_check_branch
    %22 = sbr.rel (0) target = $region25
  $region24: #{rnd_forward.6} parent=0 // pred_region
    _
  $region25: #{rnd_forward.6} parent=0 // pred_fallthru
    _
  %v24 = vld [vmem:[%s0] sm:$0xff]
  %v25 = vld [vmem:[%s0 + $0x8] sm:$0xff]
  %v26 = vld [vmem:[%s0 + $0x10] sm:$0xff]
  %v27 = vld [vmem:[%s0 + $0x18] sm:$0xff]
  %v28 = vld [vmem:[%s0 + $0x20] sm:$0xff]
  %v29 = vld [vmem:[%s0 + $0x28] sm:$0xff]
  %v30 = vld [vmem:[%s0 + $0x30] sm:$0xff]
  %v31 = vld [vmem:[%s0 + $0x38] sm:$0xff]
  %v32 = vld [vmem:[%s0 + $0x40] sm:$0xff]
  %v33 = vld [vmem:[%s0 + $0x48] sm:$0xff]
  %v34 = vld [vmem:[%s0 + $0x50] sm:$0xff]
  %v35 = vld [vmem:[%s0 + $0x58] sm:$0xff]
  %v36 = vld [vmem:[%s0 + $0x60] sm:$0xff]
  %v37 = vld [vmem:[%s0 + $0x68] sm:$0xff]
  %v38 = vld [vmem:[%s0 + $0x70] sm:$0xff]
  %v39 = vld [vmem:[%s0 + $0x78] sm:$0xff]
  %v40 = vld [vmem:[%s0 + $0x80] sm:$0xff]
  %v41 = vld [vmem:[%s0 + $0x88] sm:$0xff]
  %v42 = vld [vmem:[%s0 + $0x90] sm:$0xff]
  %v43 = vld [vmem:[%s0 + $0x98] sm:$0xff]
  %v44 = vld [vmem:[%s0 + $0xa0] sm:$0xff]
  %v45 = vld [vmem:[%s0 + $0xa8] sm:$0xff]
  %v46 = vld [vmem:[%s0 + $0xb0] sm:$0xff]
  %v47 = vld [vmem:[%s0 + $0xb8] sm:$0xff]
  %v48 = vld [vmem:[%s0 + $0xc0] sm:$0xff]
  %v49 = vld [vmem:[%s0 + $0xc8] sm:$0xff]
  %v50 = vld [vmem:[%s0 + $0xd0] sm:$0xff]
  %v51 = vld [vmem:[%s0 + $0xd8] sm:$0xff]
  %v52 = vld [vmem:[%s0 + $0xe0] sm:$0xff]
  %v53 = vld [vmem:[%s0 + $0xe8] sm:$0xff]
  %v54 = vld [vmem:[%s0 + $0xf0] sm:$0xff]
  %v55 = vld [vmem:[%s0 + $0xf8] sm:$0xff]
  %v56 = vld [vmem:[%s0 + $0x100] sm:$0xff]
  %v57 = vld [vmem:[%s0 + $0x108] sm:$0xff]
  %v58 = vld [vmem:[%s0 + $0x110] sm:$0xff]
  %v59 = vld [vmem:[%s0 + $0x118] sm:$0xff]
  %v60 = vld [vmem:[%s0 + $0x120] sm:$0xff]
  %v61 = vld [vmem:[%s0 + $0x128] sm:$0xff]
  %v62 = vld [vmem:[%s0 + $0x130] sm:$0xff]
  %v63 = vld [vmem:[%s0 + $0x138] sm:$0xff]
  %v64 = vld [vmem:[%s0 + $0x140] sm:$0xff]
  %v65 = vld [vmem:[%s0 + $0x148] sm:$0xff]
  %v66 = vld [vmem:[%s0 + $0x150] sm:$0xff]
  %v67 = vld [vmem:[%s0 + $0x158] sm:$0xff]
  %v68 = vld [vmem:[%s0 + $0x160] sm:$0xff]
  %v69 = vld [vmem:[%s0 + $0x168] sm:$0xff]
  %v70 = vld [vmem:[%s0 + $0x170] sm:$0xff]
  %v71 = vld [vmem:[%s0 + $0x178] sm:$0xff]
  %v72 = vld [vmem:[%s0 + $0x180] sm:$0xff]
  %v73 = vld [vmem:[%s0 + $0x188] sm:$0xff]
  %v74 = vld [vmem:[%s0 + $0x190] sm:$0xff]
  %v75 = vld [vmem:[%s0 + $0x198] sm:$0xff]
  %v76 = vld [vmem:[%s0 + $0x1a0] sm:$0xff]
  %v77 = vld [vmem:[%s0 + $0x1a8] sm:$0xff]
  %v78 = vld [vmem:[%s0 + $0x1b0] sm:$0xff]
  %v79 = vld [vmem:[%s0 + $0x1b8] sm:$0xff]
  %v80 = vld [vmem:[%s0 + $0x1c0] sm:$0xff]
  %v81 = vld [vmem:[%s0 + $0x1c8] sm:$0xff]
  %v82 = vld [vmem:[%s0 + $0x1d0] sm:$0xff]
  %v83 = vld [vmem:[%s0 + $0x1d8] sm:$0xff]
  %v84 = vld [vmem:[%s0 + $0x1e0] sm:$0x3]
  %v85 = vld [vmem:[%s0 + $0x1e8] sm:$0x3]
  %v86 = vld [vmem:[%s0 + $0x1f0] sm:$0x3]
  %v87 = vld [vmem:[%s0 + $0x1f8] sm:$0x3]
  %v88 = vld [vmem:[%s0 + $0x200] sm:$0x3]
  %v89 = vpack.c.bf16 %v29, %v24
  %v90 = vpack.c.bf16 %v30, %v25
  %v91 = vpack.c.bf16 %v31, %v26
  %v92 = vpack.c.bf16 %v32, %v27
  %v93 = vpack.c.bf16 %v33, %v28
  %v94 = vpack.c.bf16 %v39, %v34
  %v95 = vpack.c.bf16 %v40, %v35
  %v96 = vpack.c.bf16 %v41, %v36
  %v97 = vpack.c.bf16 %v42, %v37
  %v98 = vpack.c.bf16 %v43, %v38
  %v99 = vpack.c.bf16 %v49, %v44
  %v100 = vpack.c.bf16 %v50, %v45
  %v101 = vpack.c.bf16 %v51, %v46
  %v102 = vpack.c.bf16 %v52, %v47
  %v103 = vpack.c.bf16 %v53, %v48
  %v104 = vpack.c.bf16 %v59, %v54
  %v105 = vpack.c.bf16 %v60, %v55
  %v106 = vpack.c.bf16 %v61, %v56
  %v107 = vpack.c.bf16 %v62, %v57
  %v108 = vpack.c.bf16 %v63, %v58
  %v109 = vpack.c.bf16 %v69, %v64
  %v110 = vpack.c.bf16 %v70, %v65
  %v111 = vpack.c.bf16 %v71, %v66
  %v112 = vpack.c.bf16 %v72, %v67
  %v113 = vpack.c.bf16 %v73, %v68
  %v114 = vpack.c.bf16 %v79, %v74
  %v115 = vpack.c.bf16 %v80, %v75
  %v116 = vpack.c.bf16 %v81, %v76
  %v117 = vpack.c.bf16 %v82, %v77
  %v118 = vpack.c.bf16 %v83, %v78
  %v119 = vpack.c.bf16 %v84, %v84
  %v120 = vpack.c.bf16 %v85, %v85
  %v121 = vpack.c.bf16 %v86, %v86
  %v122 = vpack.c.bf16 %v87, %v87
  %v123 = vpack.c.bf16 %v88, %v88
  %v124 = vld [vmem:[%s2] sm:$0xf]
  %v125 = vld [vmem:[%s2 + $0x4] sm:$0xf]
  %v126 = vld [vmem:[%s2 + $0x8] sm:$0xf]
  %v127 = vld [vmem:[%s2 + $0xc] sm:$0xf]
  %v128 = vld [vmem:[%s2 + $0x10] sm:$0xf]
  %v129 = vld [vmem:[%s2 + $0x14] sm:$0xf]
  %v130 = vld [vmem:[%s2 + $0x18] sm:$0xf]
  %v131 = vld [vmem:[%s2 + $0x1c] sm:$0xf]
  %v132 = vld [vmem:[%s2 + $0x20] sm:$0xf]
  %v133 = vld [vmem:[%s2 + $0x24] sm:$0xf]
  %v134 = vld [vmem:[%s2 + $0x28] sm:$0xf]
  %v135 = vld [vmem:[%s2 + $0x2c] sm:$0xf]
  %v136 = vld [vmem:[%s2 + $0x30] sm:$0xf]
  %v137 = vld [vmem:[%s2 + $0x34] sm:$0xf]
  %v138 = vld [vmem:[%s2 + $0x38] sm:$0xf]
  %v139 = vld [vmem:[%s2 + $0x3c] sm:$0xf]
  %v140 = vld [vmem:[%s2 + $0x40] sm:$0xf]
  %v141 = vld [vmem:[%s2 + $0x44] sm:$0xf]
  %v142 = vld [vmem:[%s2 + $0x48] sm:$0xf]
  %v143 = vld [vmem:[%s2 + $0x4c] sm:$0xf]
  %v144 = vld [vmem:[%s2 + $0x50] sm:$0xf]
  %v145 = vld [vmem:[%s2 + $0x54] sm:$0xf]
  %v146 = vld [vmem:[%s2 + $0x58] sm:$0xf]
  %v147 = vld [vmem:[%s2 + $0x5c] sm:$0xf]
  %v148 = vld [vmem:[%s2 + $0x60] sm:$0xf]
  %v149 = vld [vmem:[%s2 + $0x64] sm:$0xf]
  %v150 = vld [vmem:[%s2 + $0x68] sm:$0xf]
  %v151 = vld [vmem:[%s2 + $0x6c] sm:$0xf]
  %v152 = vld [vmem:[%s2 + $0x70] sm:$0xf]
  %v153 = vld [vmem:[%s2 + $0x74] sm:$0xf]
  %v154 = vld [vmem:[%s2 + $0x78] sm:$0xf]
  %v155 = vld [vmem:[%s2 + $0x7c] sm:$0xf]
  %v156 = vld [vmem:[%s2 + $0x80] sm:$0xf]
  %v157 = vld [vmem:[%s2 + $0x84] sm:$0xf]
  %v158 = vld [vmem:[%s2 + $0x88] sm:$0xf]
  %v159 = vld [vmem:[%s2 + $0x8c] sm:$0xf]
  %v160 = vld [vmem:[%s2 + $0x90] sm:$0xf]
  %v161 = vld [vmem:[%s2 + $0x94] sm:$0xf]
  %v162 = vld [vmem:[%s2 + $0x98] sm:$0xf]
  %v163 = vld [vmem:[%s2 + $0x9c] sm:$0xf]
  %v164 = vld [vmem:[%s2 + $0xa0] sm:$0xf]
  %v165 = vld [vmem:[%s2 + $0xa4] sm:$0xf]
  %v166 = vld [vmem:[%s2 + $0xa8] sm:$0xf]
  %v167 = vld [vmem:[%s2 + $0xac] sm:$0xf]
  %v168 = vld [vmem:[%s2 + $0xb0] sm:$0xf]
  %v169 = vld [vmem:[%s2 + $0xb4] sm:$0xf]
  %v170 = vld [vmem:[%s2 + $0xb8] sm:$0xf]
  %v171 = vld [vmem:[%s2 + $0xbc] sm:$0xf]
  %v172 = vld [vmem:[%s2 + $0xc0] sm:$0xf]
  %v173 = vld [vmem:[%s2 + $0xc4] sm:$0xf]
  %v174 = vld [vmem:[%s2 + $0xc8] sm:$0xf]
  %v175 = vld [vmem:[%s2 + $0xcc] sm:$0xf]
  %v176 = vld [vmem:[%s2 + $0xd0] sm:$0xf]
  %v177 = vld [vmem:[%s2 + $0xd4] sm:$0xf]
  %v178 = vld [vmem:[%s2 + $0xd8] sm:$0xf]
  %v179 = vld [vmem:[%s2 + $0xdc] sm:$0xf]
  %v180 = vld [vmem:[%s2 + $0xe0] sm:$0xf]
  %v181 = vld [vmem:[%s2 + $0xe4] sm:$0xf]
  %v182 = vld [vmem:[%s2 + $0xe8] sm:$0xf]
  %v183 = vld [vmem:[%s2 + $0xec] sm:$0xf]
  %v184 = vld [vmem:[%s2 + $0xf0] sm:$0xf]
  %v185 = vld [vmem:[%s2 + $0xf4] sm:$0xf]
  %v186 = vld [vmem:[%s2 + $0xf8] sm:$0xf]
  %v187 = vld [vmem:[%s2 + $0xfc] sm:$0xf]
  %v188 = vld [vmem:[%s2 + $0x100] sm:$0xf]
  %v189 = vld [vmem:[%s2 + $0x104] sm:$0xf]
  %v190 = vld [vmem:[%s2 + $0x108] sm:$0xf]
  %v191 = vld [vmem:[%s2 + $0x10c] sm:$0xf]
  %v192 = vld [vmem:[%s2 + $0x110] sm:$0xf]
  %v193 = vld [vmem:[%s2 + $0x114] sm:$0xf]
  %v194 = vld [vmem:[%s2 + $0x118] sm:$0xf]
  %v195 = vld [vmem:[%s2 + $0x11c] sm:$0xf]
  %v196 = vld [vmem:[%s4] sm:$0x1]
  %v198 = vlaneseq
  %v199 = vshrl.u32 %v198, 7
  %v200 = vsub.s32 0, %v199
  %v201 = vrot.slane %v196, %v200
  %v275 = vunpack.c.l.b16 %v124
  %v276 = vunpack.c.l.b16 %v125
  %v277 = vunpack.c.l.b16 %v126
  %v278 = vunpack.c.l.b16 %v127
  %v279 = vunpack.c.l.b16 %v128
  %v280 = vunpack.c.l.b16 %v129
  %v281 = vunpack.c.l.b16 %v130
  %v282 = vunpack.c.l.b16 %v131
  %v283 = vunpack.c.l.b16 %v132
  %v284 = vunpack.c.l.b16 %v133
  %v285 = vunpack.c.l.b16 %v134
  %v286 = vunpack.c.l.b16 %v135
  %v287 = vunpack.c.l.b16 %v136
  %v288 = vunpack.c.l.b16 %v137
  %v289 = vunpack.c.l.b16 %v138
  %v290 = vunpack.c.l.b16 %v139
  %v291 = vunpack.c.l.b16 %v140
  %v292 = vunpack.c.l.b16 %v141
  %v293 = vunpack.c.l.b16 %v142
  %v294 = vunpack.c.l.b16 %v143
  %v295 = vunpack.c.l.b16 %v144
  %v296 = vunpack.c.l.b16 %v145
  %v297 = vunpack.c.l.b16 %v146
  %v298 = vunpack.c.l.b16 %v147
  %v299 = vunpack.c.l.b16 %v148
  %v300 = vunpack.c.l.b16 %v149
  %v301 = vunpack.c.l.b16 %v150
  %v302 = vunpack.c.l.b16 %v151
  %v303 = vunpack.c.l.b16 %v152
  %v304 = vunpack.c.l.b16 %v153
  %v305 = vunpack.c.l.b16 %v154
  %v306 = vunpack.c.l.b16 %v155
  %v307 = vunpack.c.l.b16 %v156
  %v308 = vunpack.c.l.b16 %v157
  %v309 = vunpack.c.l.b16 %v158
  %v310 = vunpack.c.l.b16 %v159
  %v311 = vunpack.c.l.b16 %v160
  %v312 = vunpack.c.l.b16 %v161
  %v313 = vunpack.c.l.b16 %v162
  %v314 = vunpack.c.l.b16 %v163
  %v315 = vunpack.c.l.b16 %v164
  %v316 = vunpack.c.l.b16 %v165
  %v317 = vunpack.c.l.b16 %v166
  %v318 = vunpack.c.l.b16 %v167
  %v319 = vunpack.c.l.b16 %v168
  %v320 = vunpack.c.l.b16 %v169
  %v321 = vunpack.c.l.b16 %v170
  %v322 = vunpack.c.l.b16 %v171
  %v323 = vunpack.c.l.b16 %v172
  %v324 = vunpack.c.l.b16 %v173
  %v325 = vunpack.c.l.b16 %v174
  %v326 = vunpack.c.l.b16 %v175
  %v327 = vunpack.c.l.b16 %v176
  %v328 = vunpack.c.l.b16 %v177
  %v329 = vunpack.c.l.b16 %v178
  %v330 = vunpack.c.l.b16 %v179
  %v331 = vunpack.c.l.b16 %v180
  %v332 = vunpack.c.l.b16 %v181
  %v333 = vunpack.c.l.b16 %v182
  %v334 = vunpack.c.l.b16 %v183
  %v335 = vunpack.c.l.b16 %v184
  %v336 = vunpack.c.l.b16 %v185
  %v337 = vunpack.c.l.b16 %v186
  %v338 = vunpack.c.l.b16 %v187
  %v339 = vunpack.c.l.b16 %v188
  %v340 = vunpack.c.l.b16 %v189
  %v341 = vunpack.c.l.b16 %v190
  %v342 = vunpack.c.l.b16 %v191
  %v343 = vunpack.c.l.b16 %v192
  %v344 = vunpack.c.l.b16 %v193
  %v345 = vunpack.c.l.b16 %v194
  %v346 = vunpack.c.l.b16 %v195
  %v347 = vpack.c.b16 %v276, %v275
  %v348 = vpack.c.b16 %v278, %v277
  %v349 = vpack.c.b16 %v280, %v279
  %v350 = vpack.c.b16 %v282, %v281
  %v351 = vpack.c.b16 %v284, %v283
  %v352 = vpack.c.b16 %v286, %v285
  %v353 = vpack.c.b16 %v288, %v287
  %v354 = vpack.c.b16 %v290, %v289
  %v355 = vpack.c.b16 %v292, %v291
  %v356 = vpack.c.b16 %v294, %v293
  %v357 = vpack.c.b16 %v296, %v295
  %v358 = vpack.c.b16 %v298, %v297
  %v359 = vpack.c.b16 %v300, %v299
  %v360 = vpack.c.b16 %v302, %v301
  %v361 = vpack.c.b16 %v304, %v303
  %v362 = vpack.c.b16 %v306, %v305
  %v363 = vpack.c.b16 %v308, %v307
  %v364 = vpack.c.b16 %v310, %v309
  %v365 = vpack.c.b16 %v312, %v311
  %v366 = vpack.c.b16 %v314, %v313
  %v367 = vpack.c.b16 %v316, %v315
  %v368 = vpack.c.b16 %v318, %v317
  %v369 = vpack.c.b16 %v320, %v319
  %v370 = vpack.c.b16 %v322, %v321
  %v371 = vpack.c.b16 %v324, %v323
  %v372 = vpack.c.b16 %v326, %v325
  %v373 = vpack.c.b16 %v328, %v327
  %v374 = vpack.c.b16 %v330, %v329
  %v375 = vpack.c.b16 %v332, %v331
  %v376 = vpack.c.b16 %v334, %v333
  %v377 = vpack.c.b16 %v336, %v335
  %v378 = vpack.c.b16 %v338, %v337
  %v379 = vpack.c.b16 %v340, %v339
  %v380 = vpack.c.b16 %v342, %v341
  %v381 = vpack.c.b16 %v344, %v343
  %v382 = vpack.c.b16 %v346, %v345
  %vm419 = vcmask 523264
  %v421 = vsel %vm419, %v93, 0
  %v424 = vsel %vm419, %v98, 0
  %v427 = vsel %vm419, %v103, 0
  %v430 = vsel %vm419, %v108, 0
  %v433 = vsel %vm419, %v113, 0
  %v436 = vsel %vm419, %v118, 0
  %v439 = vsel %vm419, %v123, 0
  %441 = vmatprep.subr.bf16.mxu0 0
  %442 = vmatpush1.bf16.msra.mxu0 %v347
  %443 = vmatprep.subr.bf16.mxu0 0
  %444 = vmatpush1.bf16.msra.mxu0 %v348
  %445 = vmatprep.subr.bf16.mxu0 0
  %446 = vmatpush1.bf16.msra.mxu0 %v349
  %447 = vmatprep.subr.bf16.mxu0 0
  %448 = vmatpush1.bf16.msra.mxu0 %v350
  %449 = vmatprep.subr.bf16.mxu0 0
  %450 = vmatpush1.bf16.msra.mxu0 %v351
  %451 = vmatprep.subr.bf16.mxu0 0
  %452 = vmatpush1.bf16.msra.mxu0 %v352
  %453 = vmatprep.subr.bf16.mxu0 0
  %454 = vmatpush1.bf16.msra.mxu0 %v353
  %455 = vmatprep.subr.bf16.mxu0 0
  %456 = vmatpush1.bf16.msra.mxu0 %v354
  %457 = vmatprep.subr.bf16.mxu0 0
  %458 = vmatpush1.bf16.msra.mxu0 %v355
  %459 = vmatprep.subr.bf16.mxu0 0
  %460 = vmatpush1.bf16.msra.mxu0 %v356
  %461 = vmatprep.subr.bf16.mxu0 0
  %462 = vmatpush1.bf16.msra.mxu0 %v357
  %463 = vmatprep.subr.bf16.mxu0 0
  %464 = vmatpush1.bf16.msra.mxu0 %v358
  %465 = vmatprep.subr.bf16.mxu0 0
  %466 = vmatpush1.bf16.msra.mxu0 %v359
  %467 = vmatprep.subr.bf16.mxu0 0
  %468 = vmatpush1.bf16.msra.mxu0 %v360
  %469 = vmatprep.subr.bf16.mxu0 0
  %470 = vmatpush1.bf16.msra.mxu0 %v361
  %471 = vmatprep.subr.bf16.mxu0 0
  %472 = vmatpush1.bf16.msra.mxu0 %v362
  %473 = vmatprep.mubr.bf16.mxu0 %v90
  %474 = vmatmul.mubr.bf16.gmra.mrb[0].mxu0 %v89
  %v475 = vpop.f32.mrb[0].mxu0
  %v476 = vadd.f32 %v201, %v475
  %v477 = vpop.f32.mrb[0].mxu0
  %v478 = vpop.f32.mrb[0].mxu0
  %v479 = vadd.f32 %v201, %v478
  %v480 = vpop.f32.mrb[0].mxu0
  %481 = vmatprep.mubr.bf16.mxu0 %v95
  %482 = vmatmul.mubr.bf16.gmra.mrb[0].mxu0 %v94
  %v483 = vpop.f32.mrb[0].mxu0
  %v484 = vadd.f32 %v201, %v483
  %v485 = vpop.f32.mrb[0].mxu0
  %v486 = vpop.f32.mrb[0].mxu0
  %v487 = vadd.f32 %v201, %v486
  %v488 = vpop.f32.mrb[0].mxu0
  %489 = vmatprep.mubr.bf16.mxu0 %v100
  %490 = vmatmul.mubr.bf16.gmra.mrb[0].mxu0 %v99
  %v491 = vpop.f32.mrb[0].mxu0
  %v492 = vadd.f32 %v201, %v491
  %v493 = vpop.f32.mrb[0].mxu0
  %v494 = vpop.f32.mrb[0].mxu0
  %v495 = vadd.f32 %v201, %v494
  %v496 = vpop.f32.mrb[0].mxu0
  %497 = vmatprep.mubr.bf16.mxu0 %v105
  %498 = vmatmul.mubr.bf16.gmra.mrb[0].mxu0 %v104
  %v499 = vpop.f32.mrb[0].mxu0
  %v500 = vadd.f32 %v201, %v499
  %v501 = vpop.f32.mrb[0].mxu0
  %v502 = vpop.f32.mrb[0].mxu0
  %v503 = vadd.f32 %v201, %v502
  %v504 = vpop.f32.mrb[0].mxu0
  %505 = vmatprep.mubr.bf16.mxu0 %v110
  %506 = vmatmul.mubr.bf16.gmra.mrb[0].mxu0 %v109
  %v507 = vpop.f32.mrb[0].mxu0
  %v508 = vadd.f32 %v201, %v507
  %v509 = vpop.f32.mrb[0].mxu0
  %v510 = vpop.f32.mrb[0].mxu0
  %v511 = vadd.f32 %v201, %v510
  %v512 = vpop.f32.mrb[0].mxu0
  %513 = vmatprep.mubr.bf16.mxu0 %v115
  %514 = vmatmul.mubr.bf16.gmra.mrb[0].mxu0 %v114
  %v515 = vpop.f32.mrb[0].mxu0
  %v516 = vadd.f32 %v201, %v515
  %v517 = vpop.f32.mrb[0].mxu0
  %v518 = vpop.f32.mrb[0].mxu0
  %v519 = vadd.f32 %v201, %v518
  %v520 = vpop.f32.mrb[0].mxu0
  %521 = vmatprep.mubr.bf16.mxu0 %v120
  %522 = vmatmul.mubr.bf16.gmra.mrb[0].mxu0 %v119
  %v523 = vpop.f32.mrb[0].mxu0
  %v524 = vadd.f32 %v201, %v523
  %v525 = vpop.f32.mrb[0].mxu0
  %v526 = vpop.f32.mrb[0].mxu0
  %v527 = vpop.f32.mrb[0].mxu0
  %528 = vdwg.mxu0
  %529 = vmatprep.subr.bf16.mxu0 0
  %530 = vmatpush1.bf16.msra.mxu0 %v363
  %531 = vmatprep.subr.bf16.mxu0 0
  %532 = vmatpush1.bf16.msra.mxu0 %v364
  %533 = vmatprep.subr.bf16.mxu0 0
  %534 = vmatpush1.bf16.msra.mxu0 %v365
  %535 = vmatprep.subr.bf16.mxu0 0
  %536 = vmatpush1.bf16.msra.mxu0 %v366
  %537 = vmatprep.subr.bf16.mxu0 0
  %538 = vmatpush1.bf16.msra.mxu0 %v367
  %539 = vmatprep.subr.bf16.mxu0 0
  %540 = vmatpush1.bf16.msra.mxu0 %v368
  %541 = vmatprep.subr.bf16.mxu0 0
  %542 = vmatpush1.bf16.msra.mxu0 %v369
  %543 = vmatprep.subr.bf16.mxu0 0
  %544 = vmatpush1.bf16.msra.mxu0 %v370
  %545 = vmatprep.subr.bf16.mxu0 0
  %546 = vmatpush1.bf16.msra.mxu0 %v371
  %547 = vmatprep.subr.bf16.mxu0 0
  %548 = vmatpush1.bf16.msra.mxu0 %v372
  %549 = vmatprep.subr.bf16.mxu0 0
  %550 = vmatpush1.bf16.msra.mxu0 %v373
  %551 = vmatprep.subr.bf16.mxu0 0
  %552 = vmatpush1.bf16.msra.mxu0 %v374
  %553 = vmatprep.subr.bf16.mxu0 0
  %554 = vmatpush1.bf16.msra.mxu0 %v375
  %555 = vmatprep.subr.bf16.mxu0 0
  %556 = vmatpush1.bf16.msra.mxu0 %v376
  %557 = vmatprep.subr.bf16.mxu0 0
  %558 = vmatpush1.bf16.msra.mxu0 %v377
  %559 = vmatprep.subr.bf16.mxu0 0
  %560 = vmatpush1.bf16.msra.mxu0 %v378
  %561 = vmatprep.mubr.bf16.mxu0 %v92
  %562 = vmatmul.mubr.bf16.gmra.mrb[0].mxu0 %v91
  %v563 = vpop.f32.mrb[0].mxu0
  %v564 = vadd.f32 %v476, %v563
  %v565 = vpop.f32.mrb[0].mxu0
  %v566 = vpop.f32.mrb[0].mxu0
  %v567 = vadd.f32 %v479, %v566
  %v568 = vpop.f32.mrb[0].mxu0
  %569 = vmatprep.mubr.bf16.mxu0 %v97
  %570 = vmatmul.mubr.bf16.gmra.mrb[0].mxu0 %v96
  %v571 = vpop.f32.mrb[0].mxu0
  %v572 = vadd.f32 %v484, %v571
  %v573 = vpop.f32.mrb[0].mxu0
  %v574 = vpop.f32.mrb[0].mxu0
  %v575 = vadd.f32 %v487, %v574
  %v576 = vpop.f32.mrb[0].mxu0
  %577 = vmatprep.mubr.bf16.mxu0 %v102
  %578 = vmatmul.mubr.bf16.gmra.mrb[0].mxu0 %v101
  %v579 = vpop.f32.mrb[0].mxu0
  %v580 = vadd.f32 %v492, %v579
  %v581 = vpop.f32.mrb[0].mxu0
  %v582 = vpop.f32.mrb[0].mxu0
  %v583 = vadd.f32 %v495, %v582
  %v584 = vpop.f32.mrb[0].mxu0
  %585 = vmatprep.mubr.bf16.mxu0 %v107
  %586 = vmatmul.mubr.bf16.gmra.mrb[0].mxu0 %v106
  %v587 = vpop.f32.mrb[0].mxu0
  %v588 = vadd.f32 %v500, %v587
  %v589 = vpop.f32.mrb[0].mxu0
  %v590 = vpop.f32.mrb[0].mxu0
  %v591 = vadd.f32 %v503, %v590
  %v592 = vpop.f32.mrb[0].mxu0
  %593 = vmatprep.mubr.bf16.mxu0 %v112
  %594 = vmatmul.mubr.bf16.gmra.mrb[0].mxu0 %v111
  %v595 = vpop.f32.mrb[0].mxu0
  %v596 = vadd.f32 %v508, %v595
  %v597 = vpop.f32.mrb[0].mxu0
  %v598 = vpop.f32.mrb[0].mxu0
  %v599 = vadd.f32 %v511, %v598
  %v600 = vpop.f32.mrb[0].mxu0
  %601 = vmatprep.mubr.bf16.mxu0 %v117
  %602 = vmatmul.mubr.bf16.gmra.mrb[0].mxu0 %v116
  %v603 = vpop.f32.mrb[0].mxu0
  %v604 = vadd.f32 %v516, %v603
  %v605 = vpop.f32.mrb[0].mxu0
  %v606 = vpop.f32.mrb[0].mxu0
  %v607 = vadd.f32 %v519, %v606
  %v608 = vpop.f32.mrb[0].mxu0
  %609 = vmatprep.mubr.bf16.mxu0 %v122
  %610 = vmatmul.mubr.bf16.gmra.mrb[0].mxu0 %v121
  %v611 = vpop.f32.mrb[0].mxu0
  %v612 = vadd.f32 %v524, %v611
  %v613 = vpop.f32.mrb[0].mxu0
  %v614 = vpop.f32.mrb[0].mxu0
  %v615 = vpop.f32.mrb[0].mxu0
  %616 = vdwg.mxu0
  %617 = vmatprep.subr.bf16.mxu0 0
  %618 = vmatpush1.bf16.msra.mxu0 %v379
  %619 = vmatprep.subr.bf16.mxu0 0
  %620 = vmatpush1.bf16.msra.mxu0 %v380
  %621 = vmatprep.subr.bf16.mxu0 0
  %622 = vmatpush1.bf16.msra.mxu0 %v381
  %623 = vmatprep.subr.bf16.mxu0 0
  %624 = vmatpush1.bf16.msra.mxu0 %v382
  %625 = vmatprep.subr.bf16.mxu0 0
  %626 = vmatpush1.bf16.msra.mxu0 0
  %627 = vmatprep.subr.bf16.mxu0 0
  %628 = vmatpush1.bf16.msra.mxu0 0
  %629 = vmatprep.subr.bf16.mxu0 0
  %630 = vmatpush1.bf16.msra.mxu0 0
  %631 = vmatprep.subr.bf16.mxu0 0
  %632 = vmatpush1.bf16.msra.mxu0 0
  %633 = vmatprep.subr.bf16.mxu0 0
  %634 = vmatpush1.bf16.msra.mxu0 0
  %635 = vmatprep.subr.bf16.mxu0 0
  %636 = vmatpush1.bf16.msra.mxu0 0
  %637 = vmatprep.subr.bf16.mxu0 0
  %638 = vmatpush1.bf16.msra.mxu0 0
  %639 = vmatprep.subr.bf16.mxu0 0
  %640 = vmatpush1.bf16.msra.mxu0 0
  %641 = vmatprep.subr.bf16.mxu0 0
  %642 = vmatpush1.bf16.msra.mxu0 0
  %643 = vmatprep.subr.bf16.mxu0 0
  %644 = vmatpush1.bf16.msra.mxu0 0
  %645 = vmatprep.subr.bf16.mxu0 0
  %646 = vmatpush1.bf16.msra.mxu0 0
  %647 = vmatprep.subr.bf16.mxu0 0
  %648 = vmatpush1.bf16.msra.mxu0 0
  %649 = vmatprep.mubr.bf16.mxu0 0
  %650 = vmatmul.mubr.bf16.gmra.mrb[0].mxu0 %v421
  %v651 = vpop.f32.mrb[0].mxu0
  %v652 = vadd.f32 %v564, %v651
  %v653 = vpop.f32.mrb[0].mxu0
  %v654 = vpop.f32.mrb[0].mxu0
  %v655 = vadd.f32 %v567, %v654
  %v656 = vpop.f32.mrb[0].mxu0
  %657 = vmatprep.mubr.bf16.mxu0 0
  %658 = vmatmul.mubr.bf16.gmra.mrb[0].mxu0 %v424
  %v659 = vpop.f32.mrb[0].mxu0
  %v660 = vadd.f32 %v572, %v659
  %v661 = vpop.f32.mrb[0].mxu0
  %v662 = vpop.f32.mrb[0].mxu0
  %v663 = vadd.f32 %v575, %v662
  %v664 = vpop.f32.mrb[0].mxu0
  %665 = vmatprep.mubr.bf16.mxu0 0
  %666 = vmatmul.mubr.bf16.gmra.mrb[0].mxu0 %v427
  %v667 = vpop.f32.mrb[0].mxu0
  %v668 = vadd.f32 %v580, %v667
  %v669 = vpop.f32.mrb[0].mxu0
  %v670 = vpop.f32.mrb[0].mxu0
  %v671 = vadd.f32 %v583, %v670
  %v672 = vpop.f32.mrb[0].mxu0
  %673 = vmatprep.mubr.bf16.mxu0 0
  %674 = vmatmul.mubr.bf16.gmra.mrb[0].mxu0 %v430
  %v675 = vpop.f32.mrb[0].mxu0
  %v676 = vadd.f32 %v588, %v675
  %v677 = vpop.f32.mrb[0].mxu0
  %v678 = vpop.f32.mrb[0].mxu0
  %v679 = vadd.f32 %v591, %v678
  %v680 = vpop.f32.mrb[0].mxu0
  %681 = vmatprep.mubr.bf16.mxu0 0
  %682 = vmatmul.mubr.bf16.gmra.mrb[0].mxu0 %v433
  %v683 = vpop.f32.mrb[0].mxu0
  %v684 = vadd.f32 %v596, %v683
  %v685 = vpop.f32.mrb[0].mxu0
  %v686 = vpop.f32.mrb[0].mxu0
  %v687 = vadd.f32 %v599, %v686
  %v688 = vpop.f32.mrb[0].mxu0
  %689 = vmatprep.mubr.bf16.mxu0 0
  %690 = vmatmul.mubr.bf16.gmra.mrb[0].mxu0 %v436
  %v691 = vpop.f32.mrb[0].mxu0
  %v692 = vadd.f32 %v604, %v691
  %v693 = vpop.f32.mrb[0].mxu0
  %v694 = vpop.f32.mrb[0].mxu0
  %v695 = vadd.f32 %v607, %v694
  %v696 = vpop.f32.mrb[0].mxu0
  %697 = vmatprep.mubr.bf16.mxu0 0
  %698 = vmatmul.mubr.bf16.gmra.mrb[0].mxu0 %v439
  %v699 = vpop.f32.mrb[0].mxu0
  %v700 = vadd.f32 %v612, %v699
  %v701 = vpop.f32.mrb[0].mxu0
  %v702 = vpop.f32.mrb[0].mxu0
  %v703 = vpop.f32.mrb[0].mxu0
  %704 = vdwg.mxu0
  %v705 = vld [vmem:[%s1] sm:$0xff]
  %v706 = vld [vmem:[%s1 + $0x8] sm:$0xff]
  %v707 = vld [vmem:[%s1 + $0x10] sm:$0xff]
  %v708 = vld [vmem:[%s1 + $0x18] sm:$0xff]
  %v709 = vld [vmem:[%s1 + $0x20] sm:$0xff]
  %v710 = vld [vmem:[%s1 + $0x28] sm:$0xff]
  %v711 = vld [vmem:[%s1 + $0x30] sm:$0xff]
  %v712 = vld [vmem:[%s1 + $0x38] sm:$0xff]
  %v713 = vld [vmem:[%s1 + $0x40] sm:$0xff]
  %v714 = vld [vmem:[%s1 + $0x48] sm:$0xff]
  %v715 = vld [vmem:[%s1 + $0x50] sm:$0xff]
  %v716 = vld [vmem:[%s1 + $0x58] sm:$0xff]
  %v717 = vld [vmem:[%s1 + $0x60] sm:$0xff]
  %v718 = vld [vmem:[%s1 + $0x68] sm:$0xff]
  %v719 = vld [vmem:[%s1 + $0x70] sm:$0xff]
  %v720 = vld [vmem:[%s1 + $0x78] sm:$0xff]
  %v721 = vld [vmem:[%s1 + $0x80] sm:$0xff]
  %v722 = vld [vmem:[%s1 + $0x88] sm:$0xff]
  %v723 = vld [vmem:[%s1 + $0x90] sm:$0xff]
  %v724 = vld [vmem:[%s1 + $0x98] sm:$0xff]
  %v725 = vld [vmem:[%s1 + $0xa0] sm:$0xff]
  %v726 = vld [vmem:[%s1 + $0xa8] sm:$0xff]
  %v727 = vld [vmem:[%s1 + $0xb0] sm:$0xff]
  %v728 = vld [vmem:[%s1 + $0xb8] sm:$0xff]
  %v729 = vld [vmem:[%s1 + $0xc0] sm:$0xff]
  %v730 = vld [vmem:[%s1 + $0xc8] sm:$0xff]
  %v731 = vld [vmem:[%s1 + $0xd0] sm:$0xff]
  %v732 = vld [vmem:[%s1 + $0xd8] sm:$0xff]
  %v733 = vld [vmem:[%s1 + $0xe0] sm:$0xff]
  %v734 = vld [vmem:[%s1 + $0xe8] sm:$0xff]
  %v735 = vld [vmem:[%s1 + $0xf0] sm:$0xff]
  %v736 = vld [vmem:[%s1 + $0xf8] sm:$0xff]
  %v737 = vld [vmem:[%s1 + $0x100] sm:$0xff]
  %v738 = vld [vmem:[%s1 + $0x108] sm:$0xff]
  %v739 = vld [vmem:[%s1 + $0x110] sm:$0xff]
  %v740 = vld [vmem:[%s1 + $0x118] sm:$0xff]
  %v741 = vld [vmem:[%s1 + $0x120] sm:$0xff]
  %v742 = vld [vmem:[%s1 + $0x128] sm:$0xff]
  %v743 = vld [vmem:[%s1 + $0x130] sm:$0xff]
  %v744 = vld [vmem:[%s1 + $0x138] sm:$0xff]
  %v745 = vld [vmem:[%s1 + $0x140] sm:$0xff]
  %v746 = vld [vmem:[%s1 + $0x148] sm:$0xff]
  %v747 = vld [vmem:[%s1 + $0x150] sm:$0xff]
  %v748 = vld [vmem:[%s1 + $0x158] sm:$0xff]
  %v749 = vld [vmem:[%s1 + $0x160] sm:$0xff]
  %v750 = vld [vmem:[%s1 + $0x168] sm:$0xff]
  %v751 = vld [vmem:[%s1 + $0x170] sm:$0xff]
  %v752 = vld [vmem:[%s1 + $0x178] sm:$0xff]
  %v753 = vld [vmem:[%s1 + $0x180] sm:$0xff]
  %v754 = vld [vmem:[%s1 + $0x188] sm:$0xff]
  %v755 = vld [vmem:[%s1 + $0x190] sm:$0xff]
  %v756 = vld [vmem:[%s1 + $0x198] sm:$0xff]
  %v757 = vld [vmem:[%s1 + $0x1a0] sm:$0xff]
  %v758 = vld [vmem:[%s1 + $0x1a8] sm:$0xff]
  %v759 = vld [vmem:[%s1 + $0x1b0] sm:$0xff]
  %v760 = vld [vmem:[%s1 + $0x1b8] sm:$0xff]
  %v761 = vld [vmem:[%s1 + $0x1c0] sm:$0xff]
  %v762 = vld [vmem:[%s1 + $0x1c8] sm:$0xff]
  %v763 = vld [vmem:[%s1 + $0x1d0] sm:$0xff]
  %v764 = vld [vmem:[%s1 + $0x1d8] sm:$0xff]
  %v765 = vld [vmem:[%s1 + $0x1e0] sm:$0x3]
  %v766 = vld [vmem:[%s1 + $0x1e8] sm:$0x3]
  %v767 = vld [vmem:[%s1 + $0x1f0] sm:$0x3]
  %v768 = vld [vmem:[%s1 + $0x1f8] sm:$0x3]
  %v769 = vld [vmem:[%s1 + $0x200] sm:$0x3]
  %v770 = vpack.c.bf16 %v710, %v705
  %v771 = vpack.c.bf16 %v711, %v706
  %v772 = vpack.c.bf16 %v712, %v707
  %v773 = vpack.c.bf16 %v713, %v708
  %v774 = vpack.c.bf16 %v714, %v709
  %v775 = vpack.c.bf16 %v720, %v715
  %v776 = vpack.c.bf16 %v721, %v716
  %v777 = vpack.c.bf16 %v722, %v717
  %v778 = vpack.c.bf16 %v723, %v718
  %v779 = vpack.c.bf16 %v724, %v719
  %v780 = vpack.c.bf16 %v730, %v725
  %v781 = vpack.c.bf16 %v731, %v726
  %v782 = vpack.c.bf16 %v732, %v727
  %v783 = vpack.c.bf16 %v733, %v728
  %v784 = vpack.c.bf16 %v734, %v729
  %v785 = vpack.c.bf16 %v740, %v735
  %v786 = vpack.c.bf16 %v741, %v736
  %v787 = vpack.c.bf16 %v742, %v737
  %v788 = vpack.c.bf16 %v743, %v738
  %v789 = vpack.c.bf16 %v744, %v739
  %v790 = vpack.c.bf16 %v750, %v745
  %v791 = vpack.c.bf16 %v751, %v746
  %v792 = vpack.c.bf16 %v752, %v747
  %v793 = vpack.c.bf16 %v753, %v748
  %v794 = vpack.c.bf16 %v754, %v749
  %v795 = vpack.c.bf16 %v760, %v755
  %v796 = vpack.c.bf16 %v761, %v756
  %v797 = vpack.c.bf16 %v762, %v757
  %v798 = vpack.c.bf16 %v763, %v758
  %v799 = vpack.c.bf16 %v764, %v759
  %v800 = vpack.c.bf16 %v765, %v765
  %v801 = vpack.c.bf16 %v766, %v766
  %v802 = vpack.c.bf16 %v767, %v767
  %v803 = vpack.c.bf16 %v768, %v768
  %v804 = vpack.c.bf16 %v769, %v769
  %v805 = vld [vmem:[%s3] sm:$0xf]
  %v806 = vld [vmem:[%s3 + $0x4] sm:$0xf]
  %v807 = vld [vmem:[%s3 + $0x8] sm:$0xf]
  %v808 = vld [vmem:[%s3 + $0xc] sm:$0xf]
  %v809 = vld [vmem:[%s3 + $0x10] sm:$0xf]
  %v810 = vld [vmem:[%s3 + $0x14] sm:$0xf]
  %v811 = vld [vmem:[%s3 + $0x18] sm:$0xf]
  %v812 = vld [vmem:[%s3 + $0x1c] sm:$0xf]
  %v813 = vld [vmem:[%s3 + $0x20] sm:$0xf]
  %v814 = vld [vmem:[%s3 + $0x24] sm:$0xf]
  %v815 = vld [vmem:[%s3 + $0x28] sm:$0xf]
  %v816 = vld [vmem:[%s3 + $0x2c] sm:$0xf]
  %v817 = vld [vmem:[%s3 + $0x30] sm:$0xf]
  %v818 = vld [vmem:[%s3 + $0x34] sm:$0xf]
  %v819 = vld [vmem:[%s3 + $0x38] sm:$0xf]
  %v820 = vld [vmem:[%s3 + $0x3c] sm:$0xf]
  %v821 = vld [vmem:[%s3 + $0x40] sm:$0xf]
  %v822 = vld [vmem:[%s3 + $0x44] sm:$0xf]
  %v823 = vld [vmem:[%s3 + $0x48] sm:$0xf]
  %v824 = vld [vmem:[%s3 + $0x4c] sm:$0xf]
  %v825 = vld [vmem:[%s3 + $0x50] sm:$0xf]
  %v826 = vld [vmem:[%s3 + $0x54] sm:$0xf]
  %v827 = vld [vmem:[%s3 + $0x58] sm:$0xf]
  %v828 = vld [vmem:[%s3 + $0x5c] sm:$0xf]
  %v829 = vld [vmem:[%s3 + $0x60] sm:$0xf]
  %v830 = vld [vmem:[%s3 + $0x64] sm:$0xf]
  %v831 = vld [vmem:[%s3 + $0x68] sm:$0xf]
  %v832 = vld [vmem:[%s3 + $0x6c] sm:$0xf]
  %v833 = vld [vmem:[%s3 + $0x70] sm:$0xf]
  %v834 = vld [vmem:[%s3 + $0x74] sm:$0xf]
  %v835 = vld [vmem:[%s3 + $0x78] sm:$0xf]
  %v836 = vld [vmem:[%s3 + $0x7c] sm:$0xf]
  %v837 = vld [vmem:[%s3 + $0x80] sm:$0xf]
  %v838 = vld [vmem:[%s3 + $0x84] sm:$0xf]
  %v839 = vld [vmem:[%s3 + $0x88] sm:$0xf]
  %v840 = vld [vmem:[%s3 + $0x8c] sm:$0xf]
  %v841 = vld [vmem:[%s3 + $0x90] sm:$0xf]
  %v842 = vld [vmem:[%s3 + $0x94] sm:$0xf]
  %v843 = vld [vmem:[%s3 + $0x98] sm:$0xf]
  %v844 = vld [vmem:[%s3 + $0x9c] sm:$0xf]
  %v845 = vld [vmem:[%s3 + $0xa0] sm:$0xf]
  %v846 = vld [vmem:[%s3 + $0xa4] sm:$0xf]
  %v847 = vld [vmem:[%s3 + $0xa8] sm:$0xf]
  %v848 = vld [vmem:[%s3 + $0xac] sm:$0xf]
  %v849 = vld [vmem:[%s3 + $0xb0] sm:$0xf]
  %v850 = vld [vmem:[%s3 + $0xb4] sm:$0xf]
  %v851 = vld [vmem:[%s3 + $0xb8] sm:$0xf]
  %v852 = vld [vmem:[%s3 + $0xbc] sm:$0xf]
  %v853 = vld [vmem:[%s3 + $0xc0] sm:$0xf]
  %v854 = vld [vmem:[%s3 + $0xc4] sm:$0xf]
  %v855 = vld [vmem:[%s3 + $0xc8] sm:$0xf]
  %v856 = vld [vmem:[%s3 + $0xcc] sm:$0xf]
  %v857 = vld [vmem:[%s3 + $0xd0] sm:$0xf]
  %v858 = vld [vmem:[%s3 + $0xd4] sm:$0xf]
  %v859 = vld [vmem:[%s3 + $0xd8] sm:$0xf]
  %v860 = vld [vmem:[%s3 + $0xdc] sm:$0xf]
  %v861 = vld [vmem:[%s3 + $0xe0] sm:$0xf]
  %v862 = vld [vmem:[%s3 + $0xe4] sm:$0xf]
  %v863 = vld [vmem:[%s3 + $0xe8] sm:$0xf]
  %v864 = vld [vmem:[%s3 + $0xec] sm:$0xf]
  %v865 = vld [vmem:[%s3 + $0xf0] sm:$0xf]
  %v866 = vld [vmem:[%s3 + $0xf4] sm:$0xf]
  %v867 = vld [vmem:[%s3 + $0xf8] sm:$0xf]
  %v868 = vld [vmem:[%s3 + $0xfc] sm:$0xf]
  %v869 = vld [vmem:[%s3 + $0x100] sm:$0xf]
  %v870 = vld [vmem:[%s3 + $0x104] sm:$0xf]
  %v871 = vld [vmem:[%s3 + $0x108] sm:$0xf]
  %v872 = vld [vmem:[%s3 + $0x10c] sm:$0xf]
  %v873 = vld [vmem:[%s3 + $0x110] sm:$0xf]
  %v874 = vld [vmem:[%s3 + $0x114] sm:$0xf]
  %v875 = vld [vmem:[%s3 + $0x118] sm:$0xf]
  %v876 = vld [vmem:[%s3 + $0x11c] sm:$0xf]
  %v877 = vld [vmem:[%s5] sm:$0x1]
  %v879 = vlaneseq
  %v880 = vshrl.u32 %v879, 7
  %v881 = vsub.s32 0, %v880
  %v882 = vrot.slane %v877, %v881
  %v956 = vunpack.c.l.b16 %v805
  %v957 = vunpack.c.l.b16 %v806
  %v958 = vunpack.c.l.b16 %v807
  %v959 = vunpack.c.l.b16 %v808
  %v960 = vunpack.c.l.b16 %v809
  %v961 = vunpack.c.l.b16 %v810
  %v962 = vunpack.c.l.b16 %v811
  %v963 = vunpack.c.l.b16 %v812
  %v964 = vunpack.c.l.b16 %v813
  %v965 = vunpack.c.l.b16 %v814
  %v966 = vunpack.c.l.b16 %v815
  %v967 = vunpack.c.l.b16 %v816
  %v968 = vunpack.c.l.b16 %v817
  %v969 = vunpack.c.l.b16 %v818
  %v970 = vunpack.c.l.b16 %v819
  %v971 = vunpack.c.l.b16 %v820
  %v972 = vunpack.c.l.b16 %v821
  %v973 = vunpack.c.l.b16 %v822
  %v974 = vunpack.c.l.b16 %v823
  %v975 = vunpack.c.l.b16 %v824
  %v976 = vunpack.c.l.b16 %v825
  %v977 = vunpack.c.l.b16 %v826
  %v978 = vunpack.c.l.b16 %v827
  %v979 = vunpack.c.l.b16 %v828
  %v980 = vunpack.c.l.b16 %v829
  %v981 = vunpack.c.l.b16 %v830
  %v982 = vunpack.c.l.b16 %v831
  %v983 = vunpack.c.l.b16 %v832
  %v984 = vunpack.c.l.b16 %v833
  %v985 = vunpack.c.l.b16 %v834
  %v986 = vunpack.c.l.b16 %v835
  %v987 = vunpack.c.l.b16 %v836
  %v988 = vunpack.c.l.b16 %v837
  %v989 = vunpack.c.l.b16 %v838
  %v990 = vunpack.c.l.b16 %v839
  %v991 = vunpack.c.l.b16 %v840
  %v992 = vunpack.c.l.b16 %v841
  %v993 = vunpack.c.l.b16 %v842
  %v994 = vunpack.c.l.b16 %v843
  %v995 = vunpack.c.l.b16 %v844
  %v996 = vunpack.c.l.b16 %v845
  %v997 = vunpack.c.l.b16 %v846
  %v998 = vunpack.c.l.b16 %v847
  %v999 = vunpack.c.l.b16 %v848
  %v1000 = vunpack.c.l.b16 %v849
  %v1001 = vunpack.c.l.b16 %v850
  %v1002 = vunpack.c.l.b16 %v851
  %v1003 = vunpack.c.l.b16 %v852
  %v1004 = vunpack.c.l.b16 %v853
  %v1005 = vunpack.c.l.b16 %v854
  %v1006 = vunpack.c.l.b16 %v855
  %v1007 = vunpack.c.l.b16 %v856
  %v1008 = vunpack.c.l.b16 %v857
  %v1009 = vunpack.c.l.b16 %v858
  %v1010 = vunpack.c.l.b16 %v859
  %v1011 = vunpack.c.l.b16 %v860
  %v1012 = vunpack.c.l.b16 %v861
  %v1013 = vunpack.c.l.b16 %v862
  %v1014 = vunpack.c.l.b16 %v863
  %v1015 = vunpack.c.l.b16 %v864
  %v1016 = vunpack.c.l.b16 %v865
  %v1017 = vunpack.c.l.b16 %v866
  %v1018 = vunpack.c.l.b16 %v867
  %v1019 = vunpack.c.l.b16 %v868
  %v1020 = vunpack.c.l.b16 %v869
  %v1021 = vunpack.c.l.b16 %v870
  %v1022 = vunpack.c.l.b16 %v871
  %v1023 = vunpack.c.l.b16 %v872
  %v1024 = vunpack.c.l.b16 %v873
  %v1025 = vunpack.c.l.b16 %v874
  %v1026 = vunpack.c.l.b16 %v875
  %v1027 = vunpack.c.l.b16 %v876
  %v1028 = vpack.c.b16 %v957, %v956
  %v1029 = vpack.c.b16 %v959, %v958
  %v1030 = vpack.c.b16 %v961, %v960
  %v1031 = vpack.c.b16 %v963, %v962
  %v1032 = vpack.c.b16 %v965, %v964
  %v1033 = vpack.c.b16 %v967, %v966
  %v1034 = vpack.c.b16 %v969, %v968
  %v1035 = vpack.c.b16 %v971, %v970
  %v1036 = vpack.c.b16 %v973, %v972
  %v1037 = vpack.c.b16 %v975, %v974
  %v1038 = vpack.c.b16 %v977, %v976
  %v1039 = vpack.c.b16 %v979, %v978
  %v1040 = vpack.c.b16 %v981, %v980
  %v1041 = vpack.c.b16 %v983, %v982
  %v1042 = vpack.c.b16 %v985, %v984
  %v1043 = vpack.c.b16 %v987, %v986
  %v1044 = vpack.c.b16 %v989, %v988
  %v1045 = vpack.c.b16 %v991, %v990
  %v1046 = vpack.c.b16 %v993, %v992
  %v1047 = vpack.c.b16 %v995, %v994
  %v1048 = vpack.c.b16 %v997, %v996
  %v1049 = vpack.c.b16 %v999, %v998
  %v1050 = vpack.c.b16 %v1001, %v1000
  %v1051 = vpack.c.b16 %v1003, %v1002
  %v1052 = vpack.c.b16 %v1005, %v1004
  %v1053 = vpack.c.b16 %v1007, %v1006
  %v1054 = vpack.c.b16 %v1009, %v1008
  %v1055 = vpack.c.b16 %v1011, %v1010
  %v1056 = vpack.c.b16 %v1013, %v1012
  %v1057 = vpack.c.b16 %v1015, %v1014
  %v1058 = vpack.c.b16 %v1017, %v1016
  %v1059 = vpack.c.b16 %v1019, %v1018
  %v1060 = vpack.c.b16 %v1021, %v1020
  %v1061 = vpack.c.b16 %v1023, %v1022
  %v1062 = vpack.c.b16 %v1025, %v1024
  %v1063 = vpack.c.b16 %v1027, %v1026
  %v1101 = vsel %vm419, %v774, 0
  %v1104 = vsel %vm419, %v779, 0
  %v1107 = vsel %vm419, %v784, 0
  %v1110 = vsel %vm419, %v789, 0
  %v1113 = vsel %vm419, %v794, 0
  %v1116 = vsel %vm419, %v799, 0
  %v1119 = vsel %vm419, %v804, 0
  %1121 = vmatprep.subr.bf16.mxu0 0
  %1122 = vmatpush1.bf16.msra.mxu0 %v1028
  %1123 = vmatprep.subr.bf16.mxu0 0
  %1124 = vmatpush1.bf16.msra.mxu0 %v1029
  %1125 = vmatprep.subr.bf16.mxu0 0
  %1126 = vmatpush1.bf16.msra.mxu0 %v1030
  %1127 = vmatprep.subr.bf16.mxu0 0
  %1128 = vmatpush1.bf16.msra.mxu0 %v1031
  %1129 = vmatprep.subr.bf16.mxu0 0
  %1130 = vmatpush1.bf16.msra.mxu0 %v1032
  %1131 = vmatprep.subr.bf16.mxu0 0
  %1132 = vmatpush1.bf16.msra.mxu0 %v1033
  %1133 = vmatprep.subr.bf16.mxu0 0
  %1134 = vmatpush1.bf16.msra.mxu0 %v1034
  %1135 = vmatprep.subr.bf16.mxu0 0
  %1136 = vmatpush1.bf16.msra.mxu0 %v1035
  %1137 = vmatprep.subr.bf16.mxu0 0
  %1138 = vmatpush1.bf16.msra.mxu0 %v1036
  %1139 = vmatprep.subr.bf16.mxu0 0
  %1140 = vmatpush1.bf16.msra.mxu0 %v1037
  %1141 = vmatprep.subr.bf16.mxu0 0
  %1142 = vmatpush1.bf16.msra.mxu0 %v1038
  %1143 = vmatprep.subr.bf16.mxu0 0
  %1144 = vmatpush1.bf16.msra.mxu0 %v1039
  %1145 = vmatprep.subr.bf16.mxu0 0
  %1146 = vmatpush1.bf16.msra.mxu0 %v1040
  %1147 = vmatprep.subr.bf16.mxu0 0
  %1148 = vmatpush1.bf16.msra.mxu0 %v1041
  %1149 = vmatprep.subr.bf16.mxu0 0
  %1150 = vmatpush1.bf16.msra.mxu0 %v1042
  %1151 = vmatprep.subr.bf16.mxu0 0
  %1152 = vmatpush1.bf16.msra.mxu0 %v1043
  %1153 = vmatprep.mubr.bf16.mxu0 %v771
  %1154 = vmatmul.mubr.bf16.gmra.mrb[0].mxu0 %v770
  %v1155 = vpop.f32.mrb[0].mxu0
  %v1156 = vadd.f32 %v882, %v1155
  %v1157 = vpop.f32.mrb[0].mxu0
  %v1158 = vpop.f32.mrb[0].mxu0
  %v1159 = vadd.f32 %v882, %v1158
  %v1160 = vpop.f32.mrb[0].mxu0
  %1161 = vmatprep.mubr.bf16.mxu0 %v776
  %1162 = vmatmul.mubr.bf16.gmra.mrb[0].mxu0 %v775
  %v1163 = vpop.f32.mrb[0].mxu0
  %v1164 = vadd.f32 %v882, %v1163
  %v1165 = vpop.f32.mrb[0].mxu0
  %v1166 = vpop.f32.mrb[0].mxu0
  %v1167 = vadd.f32 %v882, %v1166
  %v1168 = vpop.f32.mrb[0].mxu0
  %1169 = vmatprep.mubr.bf16.mxu0 %v781
  %1170 = vmatmul.mubr.bf16.gmra.mrb[0].mxu0 %v780
  %v1171 = vpop.f32.mrb[0].mxu0
  %v1172 = vadd.f32 %v882, %v1171
  %v1173 = vpop.f32.mrb[0].mxu0
  %v1174 = vpop.f32.mrb[0].mxu0
  %v1175 = vadd.f32 %v882, %v1174
  %v1176 = vpop.f32.mrb[0].mxu0
  %1177 = vmatprep.mubr.bf16.mxu0 %v786
  %1178 = vmatmul.mubr.bf16.gmra.mrb[0].mxu0 %v785
  %v1179 = vpop.f32.mrb[0].mxu0
  %v1180 = vadd.f32 %v882, %v1179
  %v1181 = vpop.f32.mrb[0].mxu0
  %v1182 = vpop.f32.mrb[0].mxu0
  %v1183 = vadd.f32 %v882, %v1182
  %v1184 = vpop.f32.mrb[0].mxu0
  %1185 = vmatprep.mubr.bf16.mxu0 %v791
  %1186 = vmatmul.mubr.bf16.gmra.mrb[0].mxu0 %v790
  %v1187 = vpop.f32.mrb[0].mxu0
  %v1188 = vadd.f32 %v882, %v1187
  %v1189 = vpop.f32.mrb[0].mxu0
  %v1190 = vpop.f32.mrb[0].mxu0
  %v1191 = vadd.f32 %v882, %v1190
  %v1192 = vpop.f32.mrb[0].mxu0
  %1193 = vmatprep.mubr.bf16.mxu0 %v796
  %1194 = vmatmul.mubr.bf16.gmra.mrb[0].mxu0 %v795
  %v1195 = vpop.f32.mrb[0].mxu0
  %v1196 = vadd.f32 %v882, %v1195
  %v1197 = vpop.f32.mrb[0].mxu0
  %v1198 = vpop.f32.mrb[0].mxu0
  %v1199 = vadd.f32 %v882, %v1198
  %v1200 = vpop.f32.mrb[0].mxu0
  %1201 = vmatprep.mubr.bf16.mxu0 %v801
  %1202 = vmatmul.mubr.bf16.gmra.mrb[0].mxu0 %v800
  %v1203 = vpop.f32.mrb[0].mxu0
  %v1204 = vadd.f32 %v882, %v1203
  %v1205 = vpop.f32.mrb[0].mxu0
  %v1206 = vpop.f32.mrb[0].mxu0
  %v1207 = vpop.f32.mrb[0].mxu0
  %1208 = vdwg.mxu0
  %1209 = vmatprep.subr.bf16.mxu0 0
  %1210 = vmatpush1.bf16.msra.mxu0 %v1044
  %1211 = vmatprep.subr.bf16.mxu0 0
  %1212 = vmatpush1.bf16.msra.mxu0 %v1045
  %1213 = vmatprep.subr.bf16.mxu0 0
  %1214 = vmatpush1.bf16.msra.mxu0 %v1046
  %1215 = vmatprep.subr.bf16.mxu0 0
  %1216 = vmatpush1.bf16.msra.mxu0 %v1047
  %1217 = vmatprep.subr.bf16.mxu0 0
  %1218 = vmatpush1.bf16.msra.mxu0 %v1048
  %1219 = vmatprep.subr.bf16.mxu0 0
  %1220 = vmatpush1.bf16.msra.mxu0 %v1049
  %1221 = vmatprep.subr.bf16.mxu0 0
  %1222 = vmatpush1.bf16.msra.mxu0 %v1050
  %1223 = vmatprep.subr.bf16.mxu0 0
  %1224 = vmatpush1.bf16.msra.mxu0 %v1051
  %1225 = vmatprep.subr.bf16.mxu0 0
  %1226 = vmatpush1.bf16.msra.mxu0 %v1052
  %1227 = vmatprep.subr.bf16.mxu0 0
  %1228 = vmatpush1.bf16.msra.mxu0 %v1053
  %1229 = vmatprep.subr.bf16.mxu0 0
  %1230 = vmatpush1.bf16.msra.mxu0 %v1054
  %1231 = vmatprep.subr.bf16.mxu0 0
  %1232 = vmatpush1.bf16.msra.mxu0 %v1055
  %1233 = vmatprep.subr.bf16.mxu0 0
  %1234 = vmatpush1.bf16.msra.mxu0 %v1056
  %1235 = vmatprep.subr.bf16.mxu0 0
  %1236 = vmatpush1.bf16.msra.mxu0 %v1057
  %1237 = vmatprep.subr.bf16.mxu0 0
  %1238 = vmatpush1.bf16.msra.mxu0 %v1058
  %1239 = vmatprep.subr.bf16.mxu0 0
  %1240 = vmatpush1.bf16.msra.mxu0 %v1059
  %1241 = vmatprep.mubr.bf16.mxu0 %v773
  %1242 = vmatmul.mubr.bf16.gmra.mrb[0].mxu0 %v772
  %v1243 = vpop.f32.mrb[0].mxu0
  %v1244 = vadd.f32 %v1156, %v1243
  %v1245 = vpop.f32.mrb[0].mxu0
  %v1246 = vpop.f32.mrb[0].mxu0
  %v1247 = vadd.f32 %v1159, %v1246
  %v1248 = vpop.f32.mrb[0].mxu0
  %1249 = vmatprep.mubr.bf16.mxu0 %v778
  %1250 = vmatmul.mubr.bf16.gmra.mrb[0].mxu0 %v777
  %v1251 = vpop.f32.mrb[0].mxu0
  %v1252 = vadd.f32 %v1164, %v1251
  %v1253 = vpop.f32.mrb[0].mxu0
  %v1254 = vpop.f32.mrb[0].mxu0
  %v1255 = vadd.f32 %v1167, %v1254
  %v1256 = vpop.f32.mrb[0].mxu0
  %1257 = vmatprep.mubr.bf16.mxu0 %v783
  %1258 = vmatmul.mubr.bf16.gmra.mrb[0].mxu0 %v782
  %v1259 = vpop.f32.mrb[0].mxu0
  %v1260 = vadd.f32 %v1172, %v1259
  %v1261 = vpop.f32.mrb[0].mxu0
  %v1262 = vpop.f32.mrb[0].mxu0
  %v1263 = vadd.f32 %v1175, %v1262
  %v1264 = vpop.f32.mrb[0].mxu0
  %1265 = vmatprep.mubr.bf16.mxu0 %v788
  %1266 = vmatmul.mubr.bf16.gmra.mrb[0].mxu0 %v787
  %v1267 = vpop.f32.mrb[0].mxu0
  %v1268 = vadd.f32 %v1180, %v1267
  %v1269 = vpop.f32.mrb[0].mxu0
  %v1270 = vpop.f32.mrb[0].mxu0
  %v1271 = vadd.f32 %v1183, %v1270
  %v1272 = vpop.f32.mrb[0].mxu0
  %1273 = vmatprep.mubr.bf16.mxu0 %v793
  %1274 = vmatmul.mubr.bf16.gmra.mrb[0].mxu0 %v792
  %v1275 = vpop.f32.mrb[0].mxu0
  %v1276 = vadd.f32 %v1188, %v1275
  %v1277 = vpop.f32.mrb[0].mxu0
  %v1278 = vpop.f32.mrb[0].mxu0
  %v1279 = vadd.f32 %v1191, %v1278
  %v1280 = vpop.f32.mrb[0].mxu0
  %1281 = vmatprep.mubr.bf16.mxu0 %v798
  %1282 = vmatmul.mubr.bf16.gmra.mrb[0].mxu0 %v797
  %v1283 = vpop.f32.mrb[0].mxu0
  %v1284 = vadd.f32 %v1196, %v1283
  %v1285 = vpop.f32.mrb[0].mxu0
  %v1286 = vpop.f32.mrb[0].mxu0
  %v1287 = vadd.f32 %v1199, %v1286
  %v1288 = vpop.f32.mrb[0].mxu0
  %1289 = vmatprep.mubr.bf16.mxu0 %v803
  %1290 = vmatmul.mubr.bf16.gmra.mrb[0].mxu0 %v802
  %v1291 = vpop.f32.mrb[0].mxu0
  %v1292 = vadd.f32 %v1204, %v1291
  %v1293 = vpop.f32.mrb[0].mxu0
  %v1294 = vpop.f32.mrb[0].mxu0
  %v1295 = vpop.f32.mrb[0].mxu0
  %1296 = vdwg.mxu0
  %1297 = vmatprep.subr.bf16.mxu0 0
  %1298 = vmatpush1.bf16.msra.mxu0 %v1060
  %1299 = vmatprep.subr.bf16.mxu0 0
  %1300 = vmatpush1.bf16.msra.mxu0 %v1061
  %1301 = vmatprep.subr.bf16.mxu0 0
  %1302 = vmatpush1.bf16.msra.mxu0 %v1062
  %1303 = vmatprep.subr.bf16.mxu0 0
  %1304 = vmatpush1.bf16.msra.mxu0 %v1063
  %1305 = vmatprep.subr.bf16.mxu0 0
  %1306 = vmatpush1.bf16.msra.mxu0 0
  %1307 = vmatprep.subr.bf16.mxu0 0
  %1308 = vmatpush1.bf16.msra.mxu0 0
  %1309 = vmatprep.subr.bf16.mxu0 0
  %1310 = vmatpush1.bf16.msra.mxu0 0
  %1311 = vmatprep.subr.bf16.mxu0 0
  %1312 = vmatpush1.bf16.msra.mxu0 0
  %1313 = vmatprep.subr.bf16.mxu0 0
  %1314 = vmatpush1.bf16.msra.mxu0 0
  %1315 = vmatprep.subr.bf16.mxu0 0
  %1316 = vmatpush1.bf16.msra.mxu0 0
  %1317 = vmatprep.subr.bf16.mxu0 0
  %1318 = vmatpush1.bf16.msra.mxu0 0
  %1319 = vmatprep.subr.bf16.mxu0 0
  %1320 = vmatpush1.bf16.msra.mxu0 0
  %1321 = vmatprep.subr.bf16.mxu0 0
  %1322 = vmatpush1.bf16.msra.mxu0 0
  %1323 = vmatprep.subr.bf16.mxu0 0
  %1324 = vmatpush1.bf16.msra.mxu0 0
  %1325 = vmatprep.subr.bf16.mxu0 0
  %1326 = vmatpush1.bf16.msra.mxu0 0
  %1327 = vmatprep.subr.bf16.mxu0 0
  %1328 = vmatpush1.bf16.msra.mxu0 0
  %1329 = vmatprep.mubr.bf16.mxu0 0
  %1330 = vmatmul.mubr.bf16.gmra.mrb[0].mxu0 %v1101
  %v1331 = vpop.f32.mrb[0].mxu0
  %v1332 = vadd.f32 %v1244, %v1331
  %v1333 = vpop.f32.mrb[0].mxu0
  %v1334 = vpop.f32.mrb[0].mxu0
  %v1335 = vadd.f32 %v1247, %v1334
  %v1336 = vpop.f32.mrb[0].mxu0
  %1337 = vmatprep.mubr.bf16.mxu0 0
  %1338 = vmatmul.mubr.bf16.gmra.mrb[0].mxu0 %v1104
  %v1339 = vpop.f32.mrb[0].mxu0
  %v1340 = vadd.f32 %v1252, %v1339
  %v1341 = vpop.f32.mrb[0].mxu0
  %v1342 = vpop.f32.mrb[0].mxu0
  %v1343 = vadd.f32 %v1255, %v1342
  %v1344 = vpop.f32.mrb[0].mxu0
  %1345 = vmatprep.mubr.bf16.mxu0 0
  %1346 = vmatmul.mubr.bf16.gmra.mrb[0].mxu0 %v1107
  %v1347 = vpop.f32.mrb[0].mxu0
  %v1348 = vadd.f32 %v1260, %v1347
  %v1349 = vpop.f32.mrb[0].mxu0
  %v1350 = vpop.f32.mrb[0].mxu0
  %v1351 = vadd.f32 %v1263, %v1350
  %v1352 = vpop.f32.mrb[0].mxu0
  %1353 = vmatprep.mubr.bf16.mxu0 0
  %1354 = vmatmul.mubr.bf16.gmra.mrb[0].mxu0 %v1110
  %v1355 = vpop.f32.mrb[0].mxu0
  %v1356 = vadd.f32 %v1268, %v1355
  %v1357 = vpop.f32.mrb[0].mxu0
  %v1358 = vpop.f32.mrb[0].mxu0
  %v1359 = vadd.f32 %v1271, %v1358
  %v1360 = vpop.f32.mrb[0].mxu0
  %1361 = vmatprep.mubr.bf16.mxu0 0
  %1362 = vmatmul.mubr.bf16.gmra.mrb[0].mxu0 %v1113
  %v1363 = vpop.f32.mrb[0].mxu0
  %v1364 = vadd.f32 %v1276, %v1363
  %v1365 = vpop.f32.mrb[0].mxu0
  %v1366 = vpop.f32.mrb[0].mxu0
  %v1367 = vadd.f32 %v1279, %v1366
  %v1368 = vpop.f32.mrb[0].mxu0
  %1369 = vmatprep.mubr.bf16.mxu0 0
  %1370 = vmatmul.mubr.bf16.gmra.mrb[0].mxu0 %v1116
  %v1371 = vpop.f32.mrb[0].mxu0
  %v1372 = vadd.f32 %v1284, %v1371
  %v1373 = vpop.f32.mrb[0].mxu0
  %v1374 = vpop.f32.mrb[0].mxu0
  %v1375 = vadd.f32 %v1287, %v1374
  %v1376 = vpop.f32.mrb[0].mxu0
  %1377 = vmatprep.mubr.bf16.mxu0 0
  %1378 = vmatmul.mubr.bf16.gmra.mrb[0].mxu0 %v1119
  %v1379 = vpop.f32.mrb[0].mxu0
  %v1380 = vadd.f32 %v1292, %v1379
  %v1381 = vpop.f32.mrb[0].mxu0
  %v1382 = vpop.f32.mrb[0].mxu0
  %v1383 = vpop.f32.mrb[0].mxu0
  %1384 = vdwg.mxu0
  %1398 = vrot.lane.b32.xlu0 %v1332, 64
  %v1399 = vpop.permute.xlu0 %1398
  %1400 = vrot.lane.b32.xlu0 %v1335, 64
  %v1401 = vpop.permute.xlu0 %1400
  %1402 = vrot.lane.b32.xlu0 %v1340, 64
  %v1403 = vpop.permute.xlu0 %1402
  %1404 = vrot.lane.b32.xlu0 %v1343, 64
  %v1405 = vpop.permute.xlu0 %1404
  %1406 = vrot.lane.b32.xlu0 %v1348, 64
  %v1407 = vpop.permute.xlu0 %1406
  %1408 = vrot.lane.b32.xlu0 %v1351, 64
  %v1409 = vpop.permute.xlu0 %1408
  %1410 = vrot.lane.b32.xlu0 %v1356, 64
  %v1411 = vpop.permute.xlu0 %1410
  %1412 = vrot.lane.b32.xlu0 %v1359, 64
  %v1413 = vpop.permute.xlu0 %1412
  %1414 = vrot.lane.b32.xlu0 %v1364, 64
  %v1415 = vpop.permute.xlu0 %1414
  %1416 = vrot.lane.b32.xlu0 %v1367, 64
  %v1417 = vpop.permute.xlu0 %1416
  %1418 = vrot.lane.b32.xlu0 %v1372, 64
  %v1419 = vpop.permute.xlu0 %1418
  %1420 = vrot.lane.b32.xlu0 %v1375, 64
  %v1421 = vpop.permute.xlu0 %1420
  %1422 = vrot.lane.b32.xlu0 %v1380, 64
  %v1423 = vpop.permute.xlu0 %1422
  %v1437 = vsel %vm419, %v652, %v1399
  %v1438 = vsel %vm419, %v655, %v1401
  %v1439 = vsel %vm419, %v660, %v1403
  %v1440 = vsel %vm419, %v663, %v1405
  %v1441 = vsel %vm419, %v668, %v1407
  %v1442 = vsel %vm419, %v671, %v1409
  %v1443 = vsel %vm419, %v676, %v1411
  %v1444 = vsel %vm419, %v679, %v1413
  %v1445 = vsel %vm419, %v684, %v1415
  %v1446 = vsel %vm419, %v687, %v1417
  %v1447 = vsel %vm419, %v692, %v1419
  %v1448 = vsel %vm419, %v695, %v1421
  %v1449 = vsel %vm419, %v700, %v1423
  %vm1450 = vcmp.gt.f32.partialorder %v1437, 0.0
  %vm1451 = vcmp.gt.f32.partialorder %v1438, 0.0
  %vm1452 = vcmp.gt.f32.partialorder %v1439, 0.0
  %vm1453 = vcmp.gt.f32.partialorder %v1440, 0.0
  %vm1454 = vcmp.gt.f32.partialorder %v1441, 0.0
  %vm1455 = vcmp.gt.f32.partialorder %v1442, 0.0
  %vm1456 = vcmp.gt.f32.partialorder %v1443, 0.0
  %vm1457 = vcmp.gt.f32.partialorder %v1444, 0.0
  %vm1458 = vcmp.gt.f32.partialorder %v1445, 0.0
  %vm1459 = vcmp.gt.f32.partialorder %v1446, 0.0
  %vm1460 = vcmp.gt.f32.partialorder %v1447, 0.0
  %vm1461 = vcmp.gt.f32.partialorder %v1448, 0.0
  %vm1462 = vcmp.gt.f32.partialorder %v1449, 0.0
  %v1463 = vmul.f32 %v1437, 0.01
  %v1464 = vmul.f32 %v1438, 0.01
  %v1465 = vmul.f32 %v1439, 0.01
  %v1466 = vmul.f32 %v1440, 0.01
  %v1467 = vmul.f32 %v1441, 0.01
  %v1468 = vmul.f32 %v1442, 0.01
  %v1469 = vmul.f32 %v1443, 0.01
  %v1470 = vmul.f32 %v1444, 0.01
  %v1471 = vmul.f32 %v1445, 0.01
  %v1472 = vmul.f32 %v1446, 0.01
  %v1473 = vmul.f32 %v1447, 0.01
  %v1474 = vmul.f32 %v1448, 0.01
  %v1475 = vmul.f32 %v1449, 0.01
  %v1476 = vsel %vm1450, %v1437, %v1463
  %v1477 = vsel %vm1451, %v1438, %v1464
  %v1478 = vsel %vm1452, %v1439, %v1465
  %v1479 = vsel %vm1453, %v1440, %v1466
  %v1480 = vsel %vm1454, %v1441, %v1467
  %v1481 = vsel %vm1455, %v1442, %v1468
  %v1482 = vsel %vm1456, %v1443, %v1469
  %v1483 = vsel %vm1457, %v1444, %v1470
  %v1484 = vsel %vm1458, %v1445, %v1471
  %v1485 = vsel %vm1459, %v1446, %v1472
  %v1486 = vsel %vm1460, %v1447, %v1473
  %v1487 = vsel %vm1461, %v1448, %v1474
  %v1488 = vsel %vm1462, %v1449, %v1475
  %1489 = vst [vmem:[%s6] sm:$0xff] %v1476
  %1490 = vst [vmem:[%s6 + $0x8] sm:$0xff] %v1477
  %1491 = vst [vmem:[%s6 + $0x10] sm:$0xff] %v1478
  %1492 = vst [vmem:[%s6 + $0x18] sm:$0xff] %v1479
  %1493 = vst [vmem:[%s6 + $0x20] sm:$0xff] %v1480
  %1494 = vst [vmem:[%s6 + $0x28] sm:$0xff] %v1481
  %1495 = vst [vmem:[%s6 + $0x30] sm:$0xff] %v1482
  %1496 = vst [vmem:[%s6 + $0x38] sm:$0xff] %v1483
  %1497 = vst [vmem:[%s6 + $0x40] sm:$0xff] %v1484
  %1498 = vst [vmem:[%s6 + $0x48] sm:$0xff] %v1485
  %1499 = vst [vmem:[%s6 + $0x50] sm:$0xff] %v1486
  %1500 = vst [vmem:[%s6 + $0x58] sm:$0xff] %v1487
  %1501 = vst [vmem:[%s6 + $0x60] sm:$0x3] %v1488
  // Predicated region
  $region26: #{rnd_forward.6} parent=0 // pred_check
    _
  $region27: #{rnd_forward.6} parent=0 // pred_check_branch
    %1503 = sbr.rel (0) target = $region29
  $region28: #{rnd_forward.6} parent=0 // pred_region
    _
  $region29: #{rnd_forward.6} parent=0 // pred_fallthru
    _
  // Predicated region
  $region30: #{rnd_forward.6} parent=0 // pred_check
    _
  $region31: #{rnd_forward.6} parent=0 // pred_check_branch
    %1505 = sbr.rel (0) target = $region33
  $region32: #{rnd_forward.6} parent=0 // pred_region
    _
  $region33: #{rnd_forward.6} parent=0 // pred_fallthru
    _

// kernel: rnd_forward.7
$region0: #{rnd_forward.7}
  #allocation0 [shape = 'u32[]', space=smem, size = 0x4, offset = 0x4, fixed_abs, tag = 'smem constant byte address 0x4 - core index']
  #allocation1 [shape = 'u32[144,128]{1,0:T(1,128)}', space=vmem, size = 0x12000, scoped, tag = 'internal scratch']
  %s0 = inlined_call_operand.vmem [shape: f32[2,2,3136], index: 0, kind: input, shape index: {}]
  %s1 = inlined_call_operand.vmem [shape: bf16[2,3136,512], index: 1, kind: input, shape index: {}]
  %s2 = inlined_call_operand.vmem [shape: f32[2,1,512], index: 2, kind: input, shape index: {}]
  %s3 = inlined_call_operand.vmem [shape: bf16[512,512], index: 3, kind: input, shape index: {}]
  %s4 = inlined_call_operand.vmem [shape: f32[1,512], index: 4, kind: input, shape index: {}]
  %s5 = inlined_call_operand.vmem [shape: bf16[512,512], index: 5, kind: input, shape index: {}]
  %s6 = inlined_call_operand.vmem [shape: f32[1,512], index: 6, kind: input, shape index: {}]
  %s7 = inlined_call_operand.vmem [shape: f32[2,2,512], index: 7, kind: output, shape index: {}]
  %s8 = sld [smem:[#allocation0]]
  $region69: #{rnd_forward.7} parent=0
    _
  %s10 = ssub.s32 1, %s8
  %s11 = scalar_select 0, %s10, %s8
  loop: start=0, step=1, limit=4
  $region2: #{rnd_forward.7} parent=0 // loop_pre_header
    _
  $region3: #{rnd_forward.7} parent=0 // loop_header
    %s13 = sphi 0, %s17
    %p14 = scmp.ge.s32.totalorder %s13, 4
    %s23 = sphi 0, %s25
    %s26 = sphi 0, %s23
    %s27 = sphi 0, %s26
    %s43 = sphi 0, %s27
    %s49 = sphi 0, %s51
    %s52 = sphi 0, %s49
    %s53 = sphi 0, %s52
    %s69 = sphi 0, %s53
    %s75 = sphi 0, %s77
    %s78 = sphi 0, %s75
    %s79 = sphi 0, %s78
    %s95 = sphi 0, %s79
    %s99 = sphi 0, %s99
    %s101 = sphi 0, %s99
    %s102 = sphi 0, %s101
    %s116 = sphi 0, %s102
    %s120 = sphi 0, %s120
    %s122 = sphi 0, %s120
    %s123 = sphi 0, %s122
    %s137 = sphi 0, %s123
    %s141 = sphi 0, %s141
    %s143 = sphi 0, %s141
    %s144 = sphi 0, %s143
    %s158 = sphi 0, %s144
    %s162 = sphi 0, %s162
    %s164 = sphi 0, %s162
    %s165 = sphi 0, %s164
    %s179 = sphi 0, %s165
    %s185 = sphi 0, %s187
    %s188 = sphi 0, %s185
    %s189 = sphi 0, %s188
    %s205 = sphi 0, %s189
  $region4: #{rnd_forward.7} parent=0 // loop_header_branch
    %16 = sbr.rel (%p14) target = $region8
  $region5: #{rnd_forward.7} parent=0 // loop_body
    %s18 = ssub.s32 %s13, 1
    %s19 = ssub.s32 %s13, 2
    %s20 = sadd.s32 %s13, 1
    %s21 = ssub.s32 %s13, %s20
    %p22 = scmp.eq.s32.totalorder %s21, 0
    %s24 = sadd.s32 %s23, 1
    %s25 = scalar_select %p22, %s23, %s24
    %p28 = pneg %p22
    %p29 = scmp.eq.s32.totalorder %s13, 1
    %p30 = por %p28, %p29
    %p31 = scmp.ne.s32.totalorder %s23, %s26
    %p32 = scmp.eq.s32.totalorder %s13, 0
    %p33 = por %p31, %p32
    %p34 = scmp.ne.s32.totalorder %s23, %s26
    %p35 = scmp.eq.s32.totalorder %s18, 1
    %p36 = por %p34, %p35
    %p37 = scmp.ne.s32.totalorder %s26, %s27
    %p38 = scmp.eq.s32.totalorder %s18, 0
    %p39 = por %p37, %p38
    %p40 = scmp.ne.s32.totalorder %s26, %s27
    %p41 = scmp.eq.s32.totalorder %s19, 1
    %p42 = por %p40, %p41
    %p44 = scmp.ne.s32.totalorder %s27, %s43
    %p45 = scmp.eq.s32.totalorder %s19, 0
    %p46 = por %p44, %p45
    %s47 = ssub.s32 %s13, %s20
    %p48 = scmp.eq.s32.totalorder %s47, 0
    %s50 = sadd.s32 %s49, 1
    %s51 = scalar_select %p48, %s49, %s50
    %p54 = pneg %p48
    %p55 = scmp.eq.s32.totalorder %s13, 1
    %p56 = por %p54, %p55
    %p57 = scmp.ne.s32.totalorder %s49, %s52
    %p58 = scmp.eq.s32.totalorder %s13, 0
    %p59 = por %p57, %p58
    %p60 = scmp.ne.s32.totalorder %s49, %s52
    %p61 = scmp.eq.s32.totalorder %s18, 1
    %p62 = por %p60, %p61
    %p63 = scmp.ne.s32.totalorder %s52, %s53
    %p64 = scmp.eq.s32.totalorder %s18, 0
    %p65 = por %p63, %p64
    %p66 = scmp.ne.s32.totalorder %s52, %s53
    %p67 = scmp.eq.s32.totalorder %s19, 1
    %p68 = por %p66, %p67
    %p70 = scmp.ne.s32.totalorder %s53, %s69
    %p71 = scmp.eq.s32.totalorder %s19, 0
    %p72 = por %p70, %p71
    %s73 = ssub.s32 %s13, %s20
    %p74 = scmp.eq.s32.totalorder %s73, 0
    %s76 = sadd.s32 %s75, 1
    %s77 = scalar_select %p74, %s75, %s76
    %p80 = pneg %p74
    %p81 = scmp.eq.s32.totalorder %s13, 1
    %p82 = por %p80, %p81
    %p83 = scmp.ne.s32.totalorder %s75, %s78
    %p84 = scmp.eq.s32.totalorder %s13, 0
    %p85 = por %p83, %p84
    %p86 = scmp.ne.s32.totalorder %s75, %s78
    %p87 = scmp.eq.s32.totalorder %s18, 1
    %p88 = por %p86, %p87
    %p89 = scmp.ne.s32.totalorder %s78, %s79
    %p90 = scmp.eq.s32.totalorder %s18, 0
    %p91 = por %p89, %p90
    %p92 = scmp.ne.s32.totalorder %s78, %s79
    %p93 = scmp.eq.s32.totalorder %s19, 1
    %p94 = por %p92, %p93
    %p96 = scmp.ne.s32.totalorder %s79, %s95
    %p97 = scmp.eq.s32.totalorder %s19, 0
    %p98 = por %p96, %p97
    %s100 = sadd.s32 %s99, 1
    %p103 = scmp.eq.s32.totalorder %s13, 1
    %p104 = scmp.ne.s32.totalorder %s99, %s101
    %p105 = scmp.eq.s32.totalorder %s13, 0
    %p106 = por %p104, %p105
    %p107 = scmp.ne.s32.totalorder %s99, %s101
    %p108 = scmp.eq.s32.totalorder %s18, 1
    %p109 = por %p107, %p108
    %p110 = scmp.ne.s32.totalorder %s101, %s102
    %p111 = scmp.eq.s32.totalorder %s18, 0
    %p112 = por %p110, %p111
    %p113 = scmp.ne.s32.totalorder %s101, %s102
    %p114 = scmp.eq.s32.totalorder %s19, 1
    %p115 = por %p113, %p114
    %p117 = scmp.ne.s32.totalorder %s102, %s116
    %p118 = scmp.eq.s32.totalorder %s19, 0
    %p119 = por %p117, %p118
    %s121 = sadd.s32 %s120, 1
    %p124 = scmp.eq.s32.totalorder %s13, 1
    %p125 = scmp.ne.s32.totalorder %s120, %s122
    %p126 = scmp.eq.s32.totalorder %s13, 0
    %p127 = por %p125, %p126
    %p128 = scmp.ne.s32.totalorder %s120, %s122
    %p129 = scmp.eq.s32.totalorder %s18, 1
    %p130 = por %p128, %p129
    %p131 = scmp.ne.s32.totalorder %s122, %s123
    %p132 = scmp.eq.s32.totalorder %s18, 0
    %p133 = por %p131, %p132
    %p134 = scmp.ne.s32.totalorder %s122, %s123
    %p135 = scmp.eq.s32.totalorder %s19, 1
    %p136 = por %p134, %p135
    %p138 = scmp.ne.s32.totalorder %s123, %s137
    %p139 = scmp.eq.s32.totalorder %s19, 0
    %p140 = por %p138, %p139
    %s142 = sadd.s32 %s141, 1
    %p145 = scmp.eq.s32.totalorder %s13, 1
    %p146 = scmp.ne.s32.totalorder %s141, %s143
    %p147 = scmp.eq.s32.totalorder %s13, 0
    %p148 = por %p146, %p147
    %p149 = scmp.ne.s32.totalorder %s141, %s143
    %p150 = scmp.eq.s32.totalorder %s18, 1
    %p151 = por %p149, %p150
    %p152 = scmp.ne.s32.totalorder %s143, %s144
    %p153 = scmp.eq.s32.totalorder %s18, 0
    %p154 = por %p152, %p153
    %p155 = scmp.ne.s32.totalorder %s143, %s144
    %p156 = scmp.eq.s32.totalorder %s19, 1
    %p157 = por %p155, %p156
    %p159 = scmp.ne.s32.totalorder %s144, %s158
    %p160 = scmp.eq.s32.totalorder %s19, 0
    %p161 = por %p159, %p160
    %s163 = sadd.s32 %s162, 1
    %p166 = scmp.eq.s32.totalorder %s13, 1
    %p167 = scmp.ne.s32.totalorder %s162, %s164
    %p168 = scmp.eq.s32.totalorder %s13, 0
    %p169 = por %p167, %p168
    %p170 = scmp.ne.s32.totalorder %s162, %s164
    %p171 = scmp.eq.s32.totalorder %s18, 1
    %p172 = por %p170, %p171
    %p173 = scmp.ne.s32.totalorder %s164, %s165
    %p174 = scmp.eq.s32.totalorder %s18, 0
    %p175 = por %p173, %p174
    %p176 = scmp.ne.s32.totalorder %s164, %s165
    %p177 = scmp.eq.s32.totalorder %s19, 1
    %p178 = por %p176, %p177
    %p180 = scmp.ne.s32.totalorder %s165, %s179
    %p181 = scmp.eq.s32.totalorder %s19, 0
    %p182 = por %p180, %p181
    %s183 = ssub.s32 %s13, %s20
    %p184 = scmp.eq.s32.totalorder %s183, 0
    %s186 = sadd.s32 %s185, 1
    %s187 = scalar_select %p184, %s185, %s186
    %p190 = pneg %p184
    %p191 = scmp.eq.s32.totalorder %s13, 1
    %p192 = por %p190, %p191
    %p193 = scmp.ne.s32.totalorder %s185, %s188
    %p194 = scmp.eq.s32.totalorder %s13, 0
    %p195 = por %p193, %p194
    %p196 = scmp.ne.s32.totalorder %s185, %s188
    %p197 = scmp.eq.s32.totalorder %s18, 1
    %p198 = por %p196, %p197
    %p199 = scmp.ne.s32.totalorder %s188, %s189
    %p200 = scmp.eq.s32.totalorder %s18, 0
    %p201 = por %p199, %p200
    %p202 = scmp.ne.s32.totalorder %s188, %s189
    %p203 = scmp.eq.s32.totalorder %s19, 1
    %p204 = por %p202, %p203
    %p206 = scmp.ne.s32.totalorder %s189, %s205
    %p207 = scmp.eq.s32.totalorder %s19, 0
    %p208 = por %p206, %p207
    %p209 = scmp.le.s32.totalorder 1, %s13
    %p210 = scmp.lt.s32.totalorder %s13, 3
    %p211 = pnand %p209, %p210
    %p212 = pneg %p211
    // Predicated region
    $region9: #{rnd_forward.7} parent=5 // pred_check
      _
    $region10: #{rnd_forward.7} parent=5 // pred_check_branch
      %214 = sbr.rel (%p211) target = $region12
    $region11: #{rnd_forward.7} parent=5 // pred_region
      %s215 = ssub.s32 %s13, 1
      // Predicated region
      $region13: #{rnd_forward.7} parent=11 // pred_check
        %p216 = pneg %p112
      $region14: #{rnd_forward.7} parent=11 // pred_check_branch
        %218 = sbr.rel (%p216) target = $region16
      $region15: #{rnd_forward.7} parent=11 // pred_region
        _
      $region16: #{rnd_forward.7} parent=11 // pred_fallthru
        _
      // Predicated region
      $region17: #{rnd_forward.7} parent=11 // pred_check
        %p219 = pneg %p133
      $region18: #{rnd_forward.7} parent=11 // pred_check_branch
        %221 = sbr.rel (%p219) target = $region20
      $region19: #{rnd_forward.7} parent=11 // pred_region
        _
      $region20: #{rnd_forward.7} parent=11 // pred_fallthru
        _
      // Predicated region
      $region21: #{rnd_forward.7} parent=11 // pred_check
        %p222 = pneg %p154
      $region22: #{rnd_forward.7} parent=11 // pred_check_branch
        %224 = sbr.rel (%p222) target = $region24
      $region23: #{rnd_forward.7} parent=11 // pred_region
        _
      $region24: #{rnd_forward.7} parent=11 // pred_fallthru
        _
      // Predicated region
      $region25: #{rnd_forward.7} parent=11 // pred_check
        %p225 = pneg %p175
      $region26: #{rnd_forward.7} parent=11 // pred_check_branch
        %227 = sbr.rel (%p225) target = $region28
      $region27: #{rnd_forward.7} parent=11 // pred_region
        _
      $region28: #{rnd_forward.7} parent=11 // pred_fallthru
        _
    $region12: #{rnd_forward.7} parent=5 // pred_fallthru
      _
    %p228 = scmp.lt.s32.totalorder %s13, 2
    // Predicated region
    $region29: #{rnd_forward.7} parent=5 // pred_check
      %p229 = pneg %p228
    $region30: #{rnd_forward.7} parent=5 // pred_check_branch
      %231 = sbr.rel (%p229) target = $region32
    $region31: #{rnd_forward.7} parent=5 // pred_region
      // Predicated region
      $region33: #{rnd_forward.7} parent=31 // pred_check
        %p232 = pneg %p33
      $region34: #{rnd_forward.7} parent=31 // pred_check_branch
        %234 = sbr.rel (%p232) target = $region36
      $region35: #{rnd_forward.7} parent=31 // pred_region
        %p235 = scmp.lt.s32.totalorder %s13, 1
        %s236 = scalar_select %p235, %s13, 1
        %s237 = smul.addr %s236, 25
        %s238 = smul.addr %s237, 2
        %s239 = scalar_lea.vmem %s0, %s238
      $region36: #{rnd_forward.7} parent=31 // pred_fallthru
        _
      // Predicated region
      $region37: #{rnd_forward.7} parent=31 // pred_check
        %p240 = pneg %p59
      $region38: #{rnd_forward.7} parent=31 // pred_check_branch
        %242 = sbr.rel (%p240) target = $region40
      $region39: #{rnd_forward.7} parent=31 // pred_region
        %p243 = scmp.lt.s32.totalorder %s13, 1
        %s244 = scalar_select %p243, %s13, 1
        %s245 = smul.addr %s244, 1568
        %s246 = smul.addr %s245, 4
        %s247 = scalar_lea.vmem %s1, %s246
      $region40: #{rnd_forward.7} parent=31 // pred_fallthru
        _
      // Predicated region
      $region41: #{rnd_forward.7} parent=31 // pred_check
        %p248 = pneg %p85
      $region42: #{rnd_forward.7} parent=31 // pred_check_branch
        %250 = sbr.rel (%p248) target = $region44
      $region43: #{rnd_forward.7} parent=31 // pred_region
        %p251 = scmp.lt.s32.totalorder %s13, 1
        %s252 = scalar_select %p251, %s13, 1
        %s253 = smul.addr %s252, 4
        %s254 = scalar_lea.vmem %s2, %s253
      $region44: #{rnd_forward.7} parent=31 // pred_fallthru
        _
    $region32: #{rnd_forward.7} parent=5 // pred_fallthru
      _
    %p255 = scmp.le.s32.totalorder 1, %s13
    %p256 = scmp.lt.s32.totalorder %s13, 3
    %p257 = pnand %p255, %p256
    %p258 = pneg %p257
    // Predicated region
    $region45: #{rnd_forward.7} parent=5 // pred_check
      _
    $region46: #{rnd_forward.7} parent=5 // pred_check_branch
      %260 = sbr.rel (%p257) target = $region48
    $region47: #{rnd_forward.7} parent=5 // pred_region
      %s261 = ssub.s32 %s13, 1
      %p262 = scmp.lt.s32.totalorder %s18, 1
      %s263 = scalar_select %p262, %s18, 1
      %s264 = smul.addr %s263, 25
      %s265 = smul.addr %s264, 2
      %s266 = scalar_lea.vmem %s0, %s265
      %p267 = pneg %p39
      %p268 = pneg %p36
      %p269 = scmp.lt.s32.totalorder %s18, 1
      %s270 = scalar_select %p269, %s18, 1
      %s271 = smul.addr %s270, 1568
      %s272 = smul.addr %s271, 4
      %s273 = scalar_lea.vmem %s1, %s272
      %p274 = pneg %p65
      %p275 = pneg %p62
      %p276 = scmp.lt.s32.totalorder %s18, 1
      %s277 = scalar_select %p276, %s18, 1
      %s278 = smul.addr %s277, 4
      %s279 = scalar_lea.vmem %s2, %s278
      %p280 = pneg %p91
      %p281 = pneg %p88
      %p282 = pneg %p112
      %p283 = pneg %p109
      %p284 = pneg %p133
      %p285 = pneg %p130
      %p286 = pneg %p154
      %p287 = pneg %p151
      %p288 = pneg %p175
      %p289 = pneg %p172
      %p290 = pneg %p201
      %p291 = pneg %p198
      %p292 = scmp.lt.s32.totalorder %s18, 1
      %s293 = scalar_select %p292, %s18, 1
      %s294 = smul.addr %s293, 4
      %s295 = smul.addr %s294, 2
      %s296 = scalar_lea.vmem %s7, %s295
      %p297 = scmp.lt.s32.totalorder %s18, 1
      %s298 = scalar_select %p297, %s18, 1
      %s299 = smul.addr %s298, 25
      %s300 = smul.addr %s299, 2
      %s301 = scalar_lea.vmem %s0, %s300
      %p302 = scmp.lt.s32.totalorder %s18, 1
      %s303 = scalar_select %p302, %s18, 1
      %s304 = smul.addr %s303, 1568
      %s305 = smul.addr %s304, 4
      %s306 = scalar_lea.vmem %s1, %s305
      %p307 = scmp.lt.s32.totalorder %s18, 1
      %s308 = scalar_select %p307, %s18, 1
      %s309 = smul.addr %s308, 4
      %s310 = scalar_lea.vmem %s2, %s309
      %p311 = scmp.lt.s32.totalorder %s18, 1
      %s312 = scalar_select %p311, %s18, 1
      %s313 = smul.addr %s312, 4
      %s314 = smul.addr %s313, 2
      %s315 = scalar_lea.vmem %s7, %s314
      %v317 = vld [vmem:[%s301] sm:$0xff]
      %v318 = vld [vmem:[%s301 + $0x8] sm:$0xff]
      %v319 = vld [vmem:[%s301 + $0x10] sm:$0xff]
      %v320 = vld [vmem:[%s301 + $0x18] sm:$0xff]
      %v321 = vld [vmem:[%s301 + $0x20] sm:$0xff]
      %v322 = vld [vmem:[%s301 + $0x28] sm:$0xff]
      %v323 = vld [vmem:[%s301 + $0x30] sm:$0x3]
      %v331 = vcombine.high %v317, %v317
      %v333 = vunpack.c.l.s4 1983009808
      %v334 = vunpack.c.0.s8 %v333
      %v335 = vlaneseq
      %v336 = vshrl.u32 %v335, 7
      %v337 = vsub.s32 %v334, %v336
      %v338 = vrot.slane %v317, %v337
      %v340 = vunpack.c.l.s4 1983009808
      %v341 = vunpack.c.0.s8 %v340
      %v342 = vlaneseq
      %v343 = vshrl.u32 %v342, 7
      %v344 = vsub.s32 %v341, %v343
      %v345 = vrot.slane %v331, %v344
      %v346 = vcombine.high %v338, %v338
      %v347 = vcombine.high %v345, %v345
      %v348 = vcombine.high %v318, %v318
      %v350 = vunpack.c.l.s4 1983009808
      %v351 = vunpack.c.0.s8 %v350
      %v352 = vlaneseq
      %v353 = vshrl.u32 %v352, 7
      %v354 = vsub.s32 %v351, %v353
      %v355 = vrot.slane %v318, %v354
      %v357 = vunpack.c.l.s4 1983009808
      %v358 = vunpack.c.0.s8 %v357
      %v359 = vlaneseq
      %v360 = vshrl.u32 %v359, 7
      %v361 = vsub.s32 %v358, %v360
      %v362 = vrot.slane %v348, %v361
      %v363 = vcombine.high %v355, %v355
      %v364 = vcombine.high %v362, %v362
      %v365 = vcombine.high %v319, %v319
      %v367 = vunpack.c.l.s4 1983009808
      %v368 = vunpack.c.0.s8 %v367
      %v369 = vlaneseq
      %v370 = vshrl.u32 %v369, 7
      %v371 = vsub.s32 %v368, %v370
      %v372 = vrot.slane %v319, %v371
      %v374 = vunpack.c.l.s4 1983009808
      %v375 = vunpack.c.0.s8 %v374
      %v376 = vlaneseq
      %v377 = vshrl.u32 %v376, 7
      %v378 = vsub.s32 %v375, %v377
      %v379 = vrot.slane %v365, %v378
      %v380 = vcombine.high %v372, %v372
      %v381 = vcombine.high %v379, %v379
      %v382 = vcombine.high %v320, %v320
      %v384 = vunpack.c.l.s4 1983009808
      %v385 = vunpack.c.0.s8 %v384
      %v386 = vlaneseq
      %v387 = vshrl.u32 %v386, 7
      %v388 = vsub.s32 %v385, %v387
      %v389 = vrot.slane %v320, %v388
      %v391 = vunpack.c.l.s4 1983009808
      %v392 = vunpack.c.0.s8 %v391
      %v393 = vlaneseq
      %v394 = vshrl.u32 %v393, 7
      %v395 = vsub.s32 %v392, %v394
      %v396 = vrot.slane %v382, %v395
      %v397 = vcombine.high %v389, %v389
      %v398 = vcombine.high %v396, %v396
      %v399 = vcombine.high %v321, %v321
      %v401 = vunpack.c.l.s4 1983009808
      %v402 = vunpack.c.0.s8 %v401
      %v403 = vlaneseq
      %v404 = vshrl.u32 %v403, 7
      %v405 = vsub.s32 %v402, %v404
      %v406 = vrot.slane %v321, %v405
      %v408 = vunpack.c.l.s4 1983009808
      %v409 = vunpack.c.0.s8 %v408
      %v410 = vlaneseq
      %v411 = vshrl.u32 %v410, 7
      %v412 = vsub.s32 %v409, %v411
      %v413 = vrot.slane %v399, %v412
      %v414 = vcombine.high %v406, %v406
      %v415 = vcombine.high %v413, %v413
      %v416 = vcombine.high %v322, %v322
      %v418 = vunpack.c.l.s4 1983009808
      %v419 = vunpack.c.0.s8 %v418
      %v420 = vlaneseq
      %v421 = vshrl.u32 %v420, 7
      %v422 = vsub.s32 %v419, %v421
      %v423 = vrot.slane %v322, %v422
      %v425 = vunpack.c.l.s4 1983009808
      %v426 = vunpack.c.0.s8 %v425
      %v427 = vlaneseq
      %v428 = vshrl.u32 %v427, 7
      %v429 = vsub.s32 %v426, %v428
      %v430 = vrot.slane %v416, %v429
      %v431 = vcombine.high %v423, %v423
      %v432 = vcombine.high %v430, %v430
      %v434 = vunpack.c.l.s4 1983009808
      %v435 = vunpack.c.0.s8 %v434
      %v436 = vlaneseq
      %v437 = vshrl.u32 %v436, 7
      %v438 = vsub.s32 %v435, %v437
      %v439 = vrot.slane %v323, %v438
      %v465 = vpack.c.bf16 %v338, %v338
      %v466 = vpack.c.bf16 %v346, %v346
      %v467 = vpack.c.bf16 %v345, %v345
      %v468 = vpack.c.bf16 %v347, %v347
      %v469 = vpack.c.bf16 %v355, %v355
      %v470 = vpack.c.bf16 %v363, %v363
      %v471 = vpack.c.bf16 %v362, %v362
      %v472 = vpack.c.bf16 %v364, %v364
      %v473 = vpack.c.bf16 %v372, %v372
      %v474 = vpack.c.bf16 %v380, %v380
      %v475 = vpack.c.bf16 %v379, %v379
      %v476 = vpack.c.bf16 %v381, %v381
      %v477 = vpack.c.bf16 %v389, %v389
      %v478 = vpack.c.bf16 %v397, %v397
      %v479 = vpack.c.bf16 %v396, %v396
      %v480 = vpack.c.bf16 %v398, %v398
      %v481 = vpack.c.bf16 %v406, %v406
      %v482 = vpack.c.bf16 %v414, %v414
      %v483 = vpack.c.bf16 %v413, %v413
      %v484 = vpack.c.bf16 %v415, %v415
      %v485 = vpack.c.bf16 %v423, %v423
      %v486 = vpack.c.bf16 %v431, %v431
      %v487 = vpack.c.bf16 %v430, %v430
      %v488 = vpack.c.bf16 %v432, %v432
      %v489 = vpack.c.bf16 %v439, %v439
      %v490 = vld [vmem:[%s306] sm:$0xff]
      %v491 = vld [vmem:[%s306 + $0x8] sm:$0xff]
      %v492 = vld [vmem:[%s306 + $0x10] sm:$0xff]
      %v493 = vld [vmem:[%s306 + $0x18] sm:$0xff]
      %v494 = vld [vmem:[%s306 + $0x20] sm:$0xff]
      %v495 = vld [vmem:[%s306 + $0x28] sm:$0xff]
      %v496 = vld [vmem:[%s306 + $0x30] sm:$0xff]
      %v497 = vld [vmem:[%s306 + $0x38] sm:$0xff]
      %v498 = vld [vmem:[%s306 + $0x40] sm:$0xff]
      %v499 = vld [vmem:[%s306 + $0x48] sm:$0xff]
      %v500 = vld [vmem:[%s306 + $0x50] sm:$0xff]
      %v501 = vld [vmem:[%s306 + $0x58] sm:$0xff]
      %v502 = vld [vmem:[%s306 + $0x60] sm:$0xff]
      %v503 = vld [vmem:[%s306 + $0x68] sm:$0xff]
      %v504 = vld [vmem:[%s306 + $0x70] sm:$0xff]
      %v505 = vld [vmem:[%s306 + $0x78] sm:$0xff]
      %v506 = vld [vmem:[%s306 + $0x80] sm:$0xff]
      %v507 = vld [vmem:[%s306 + $0x88] sm:$0xff]
      %v508 = vld [vmem:[%s306 + $0x90] sm:$0xff]
      %v509 = vld [vmem:[%s306 + $0x98] sm:$0xff]
      %v510 = vld [vmem:[%s306 + $0xa0] sm:$0xff]
      %v511 = vld [vmem:[%s306 + $0xa8] sm:$0xff]
      %v512 = vld [vmem:[%s306 + $0xb0] sm:$0xff]
      %v513 = vld [vmem:[%s306 + $0xb8] sm:$0xff]
      %v514 = vld [vmem:[%s306 + $0xc0] sm:$0xff]
      %v515 = vld [vmem:[%s306 + $0xc8] sm:$0xff]
      %v516 = vld [vmem:[%s306 + $0xd0] sm:$0xff]
      %v517 = vld [vmem:[%s306 + $0xd8] sm:$0xff]
      %v518 = vld [vmem:[%s306 + $0xe0] sm:$0xff]
      %v519 = vld [vmem:[%s306 + $0xe8] sm:$0xff]
      %v520 = vld [vmem:[%s306 + $0xf0] sm:$0xff]
      %v521 = vld [vmem:[%s306 + $0xf8] sm:$0xff]
      %v522 = vld [vmem:[%s306 + $0x100] sm:$0xff]
      %v523 = vld [vmem:[%s306 + $0x108] sm:$0xff]
      %v524 = vld [vmem:[%s306 + $0x110] sm:$0xff]
      %v525 = vld [vmem:[%s306 + $0x118] sm:$0xff]
      %v526 = vld [vmem:[%s306 + $0x120] sm:$0xff]
      %v527 = vld [vmem:[%s306 + $0x128] sm:$0xff]
      %v528 = vld [vmem:[%s306 + $0x130] sm:$0xff]
      %v529 = vld [vmem:[%s306 + $0x138] sm:$0xff]
      %v530 = vld [vmem:[%s306 + $0x140] sm:$0xff]
      %v531 = vld [vmem:[%s306 + $0x148] sm:$0xff]
      %v532 = vld [vmem:[%s306 + $0x150] sm:$0xff]
      %v533 = vld [vmem:[%s306 + $0x158] sm:$0xff]
      %v534 = vld [vmem:[%s306 + $0x160] sm:$0xff]
      %v535 = vld [vmem:[%s306 + $0x168] sm:$0xff]
      %v536 = vld [vmem:[%s306 + $0x170] sm:$0xff]
      %v537 = vld [vmem:[%s306 + $0x178] sm:$0xff]
      %v538 = vld [vmem:[%s306 + $0x180] sm:$0xff]
      %v539 = vld [vmem:[%s306 + $0x188] sm:$0xff]
      %v540 = vld [vmem:[%s306 + $0x190] sm:$0xff]
      %v541 = vld [vmem:[%s306 + $0x198] sm:$0xff]
      %v542 = vld [vmem:[%s306 + $0x1a0] sm:$0xff]
      %v543 = vld [vmem:[%s306 + $0x1a8] sm:$0xff]
      %v544 = vld [vmem:[%s306 + $0x1b0] sm:$0xff]
      %v545 = vld [vmem:[%s306 + $0x1b8] sm:$0xff]
      %v546 = vld [vmem:[%s306 + $0x1c0] sm:$0xff]
      %v547 = vld [vmem:[%s306 + $0x1c8] sm:$0xff]
      %v548 = vld [vmem:[%s306 + $0x1d0] sm:$0xff]
      %v549 = vld [vmem:[%s306 + $0x1d8] sm:$0xff]
      %v550 = vld [vmem:[%s306 + $0x1e0] sm:$0xff]
      %v551 = vld [vmem:[%s306 + $0x1e8] sm:$0xff]
      %v552 = vld [vmem:[%s306 + $0x1f0] sm:$0xff]
      %v553 = vld [vmem:[%s306 + $0x1f8] sm:$0xff]
      %v554 = vld [vmem:[%s306 + $0x200] sm:$0xff]
      %v555 = vld [vmem:[%s306 + $0x208] sm:$0xff]
      %v556 = vld [vmem:[%s306 + $0x210] sm:$0xff]
      %v557 = vld [vmem:[%s306 + $0x218] sm:$0xff]
      %v558 = vld [vmem:[%s306 + $0x220] sm:$0xff]
      %v559 = vld [vmem:[%s306 + $0x228] sm:$0xff]
      %v560 = vld [vmem:[%s306 + $0x230] sm:$0xff]
      %v561 = vld [vmem:[%s306 + $0x238] sm:$0xff]
      %v562 = vld [vmem:[%s306 + $0x240] sm:$0xff]
      %v563 = vld [vmem:[%s306 + $0x248] sm:$0xff]
      %v564 = vld [vmem:[%s306 + $0x250] sm:$0xff]
      %v565 = vld [vmem:[%s306 + $0x258] sm:$0xff]
      %v566 = vld [vmem:[%s306 + $0x260] sm:$0xff]
      %v567 = vld [vmem:[%s306 + $0x268] sm:$0xff]
      %v568 = vld [vmem:[%s306 + $0x270] sm:$0xff]
      %v569 = vld [vmem:[%s306 + $0x278] sm:$0xff]
      %v570 = vld [vmem:[%s306 + $0x280] sm:$0xff]
      %v571 = vld [vmem:[%s306 + $0x288] sm:$0xff]
      %v572 = vld [vmem:[%s306 + $0x290] sm:$0xff]
      %v573 = vld [vmem:[%s306 + $0x298] sm:$0xff]
      %v574 = vld [vmem:[%s306 + $0x2a0] sm:$0xff]
      %v575 = vld [vmem:[%s306 + $0x2a8] sm:$0xff]
      %v576 = vld [vmem:[%s306 + $0x2b0] sm:$0xff]
      %v577 = vld [vmem:[%s306 + $0x2b8] sm:$0xff]
      %v578 = vld [vmem:[%s306 + $0x2c0] sm:$0xff]
      %v579 = vld [vmem:[%s306 + $0x2c8] sm:$0xff]
      %v580 = vld [vmem:[%s306 + $0x2d0] sm:$0xff]
      %v581 = vld [vmem:[%s306 + $0x2d8] sm:$0xff]
      %v582 = vld [vmem:[%s306 + $0x2e0] sm:$0xff]
      %v583 = vld [vmem:[%s306 + $0x2e8] sm:$0xff]
      %v584 = vld [vmem:[%s306 + $0x2f0] sm:$0xff]
      %v585 = vld [vmem:[%s306 + $0x2f8] sm:$0xff]
      %v586 = vld [vmem:[%s306 + $0x300] sm:$0xff]
      %v587 = vld [vmem:[%s306 + $0x308] sm:$0xff]
      %v588 = vld [vmem:[%s306 + $0x310] sm:$0xff]
      %v589 = vld [vmem:[%s306 + $0x318] sm:$0xff]
      %v590 = vld [vmem:[%s306 + $0x320] sm:$0xff]
      %v591 = vld [vmem:[%s306 + $0x328] sm:$0xff]
      %v592 = vld [vmem:[%s306 + $0x330] sm:$0xff]
      %v593 = vld [vmem:[%s306 + $0x338] sm:$0xff]
      %v594 = vld [vmem:[%s306 + $0x340] sm:$0xff]
      %v595 = vld [vmem:[%s306 + $0x348] sm:$0xff]
      %v596 = vld [vmem:[%s306 + $0x350] sm:$0xff]
      %v597 = vld [vmem:[%s306 + $0x358] sm:$0xff]
      %v598 = vld [vmem:[%s306 + $0x360] sm:$0xff]
      %v599 = vld [vmem:[%s306 + $0x368] sm:$0xff]
      %v600 = vld [vmem:[%s306 + $0x370] sm:$0xff]
      %v601 = vld [vmem:[%s306 + $0x378] sm:$0xff]
      %v602 = vld [vmem:[%s306 + $0x380] sm:$0xff]
      %v603 = vld [vmem:[%s306 + $0x388] sm:$0xff]
      %v604 = vld [vmem:[%s306 + $0x390] sm:$0xff]
      %v605 = vld [vmem:[%s306 + $0x398] sm:$0xff]
      %v606 = vld [vmem:[%s306 + $0x3a0] sm:$0xff]
      %v607 = vld [vmem:[%s306 + $0x3a8] sm:$0xff]
      %v608 = vld [vmem:[%s306 + $0x3b0] sm:$0xff]
      %v609 = vld [vmem:[%s306 + $0x3b8] sm:$0xff]
      %v610 = vld [vmem:[%s306 + $0x3c0] sm:$0xff]
      %v611 = vld [vmem:[%s306 + $0x3c8] sm:$0xff]
      %v612 = vld [vmem:[%s306 + $0x3d0] sm:$0xff]
      %v613 = vld [vmem:[%s306 + $0x3d8] sm:$0xff]
      %v614 = vld [vmem:[%s306 + $0x3e0] sm:$0xff]
      %v615 = vld [vmem:[%s306 + $0x3e8] sm:$0xff]
      %v616 = vld [vmem:[%s306 + $0x3f0] sm:$0xff]
      %v617 = vld [vmem:[%s306 + $0x3f8] sm:$0xff]
      %v618 = vld [vmem:[%s306 + $0x400] sm:$0xff]
      %v619 = vld [vmem:[%s306 + $0x408] sm:$0xff]
      %v620 = vld [vmem:[%s306 + $0x410] sm:$0xff]
      %v621 = vld [vmem:[%s306 + $0x418] sm:$0xff]
      %v622 = vld [vmem:[%s306 + $0x420] sm:$0xff]
      %v623 = vld [vmem:[%s306 + $0x428] sm:$0xff]
      %v624 = vld [vmem:[%s306 + $0x430] sm:$0xff]
      %v625 = vld [vmem:[%s306 + $0x438] sm:$0xff]
      %v626 = vld [vmem:[%s306 + $0x440] sm:$0xff]
      %v627 = vld [vmem:[%s306 + $0x448] sm:$0xff]
      %v628 = vld [vmem:[%s306 + $0x450] sm:$0xff]
      %v629 = vld [vmem:[%s306 + $0x458] sm:$0xff]
      %v630 = vld [vmem:[%s306 + $0x460] sm:$0xff]
      %v631 = vld [vmem:[%s306 + $0x468] sm:$0xff]
      %v632 = vld [vmem:[%s306 + $0x470] sm:$0xff]
      %v633 = vld [vmem:[%s306 + $0x478] sm:$0xff]
      %v634 = vld [vmem:[%s306 + $0x480] sm:$0xff]
      %v635 = vld [vmem:[%s306 + $0x488] sm:$0xff]
      %v636 = vld [vmem:[%s306 + $0x490] sm:$0xff]
      %v637 = vld [vmem:[%s306 + $0x498] sm:$0xff]
      %v638 = vld [vmem:[%s306 + $0x4a0] sm:$0xff]
      %v639 = vld [vmem:[%s306 + $0x4a8] sm:$0xff]
      %v640 = vld [vmem:[%s306 + $0x4b0] sm:$0xff]
      %v641 = vld [vmem:[%s306 + $0x4b8] sm:$0xff]
      %v642 = vld [vmem:[%s306 + $0x4c0] sm:$0xff]
      %v643 = vld [vmem:[%s306 + $0x4c8] sm:$0xff]
      %v644 = vld [vmem:[%s306 + $0x4d0] sm:$0xff]
      %v645 = vld [vmem:[%s306 + $0x4d8] sm:$0xff]
      %v646 = vld [vmem:[%s306 + $0x4e0] sm:$0xff]
      %v647 = vld [vmem:[%s306 + $0x4e8] sm:$0xff]
      %v648 = vld [vmem:[%s306 + $0x4f0] sm:$0xff]
      %v649 = vld [vmem:[%s306 + $0x4f8] sm:$0xff]
      %v650 = vld [vmem:[%s306 + $0x500] sm:$0xff]
      %v651 = vld [vmem:[%s306 + $0x508] sm:$0xff]
      %v652 = vld [vmem:[%s306 + $0x510] sm:$0xff]
      %v653 = vld [vmem:[%s306 + $0x518] sm:$0xff]
      %v654 = vld [vmem:[%s306 + $0x520] sm:$0xff]
      %v655 = vld [vmem:[%s306 + $0x528] sm:$0xff]
      %v656 = vld [vmem:[%s306 + $0x530] sm:$0xff]
      %v657 = vld [vmem:[%s306 + $0x538] sm:$0xff]
      %v658 = vld [vmem:[%s306 + $0x540] sm:$0xff]
      %v659 = vld [vmem:[%s306 + $0x548] sm:$0xff]
      %v660 = vld [vmem:[%s306 + $0x550] sm:$0xff]
      %v661 = vld [vmem:[%s306 + $0x558] sm:$0xff]
      %v662 = vld [vmem:[%s306 + $0x560] sm:$0xff]
      %v663 = vld [vmem:[%s306 + $0x568] sm:$0xff]
      %v664 = vld [vmem:[%s306 + $0x570] sm:$0xff]
      %v665 = vld [vmem:[%s306 + $0x578] sm:$0xff]
      %v666 = vld [vmem:[%s306 + $0x580] sm:$0xff]
      %v667 = vld [vmem:[%s306 + $0x588] sm:$0xff]
      %v668 = vld [vmem:[%s306 + $0x590] sm:$0xff]
      %v669 = vld [vmem:[%s306 + $0x598] sm:$0xff]
      %v670 = vld [vmem:[%s306 + $0x5a0] sm:$0xff]
      %v671 = vld [vmem:[%s306 + $0x5a8] sm:$0xff]
      %v672 = vld [vmem:[%s306 + $0x5b0] sm:$0xff]
      %v673 = vld [vmem:[%s306 + $0x5b8] sm:$0xff]
      %v674 = vld [vmem:[%s306 + $0x5c0] sm:$0xff]
      %v675 = vld [vmem:[%s306 + $0x5c8] sm:$0xff]
      %v676 = vld [vmem:[%s306 + $0x5d0] sm:$0xff]
      %v677 = vld [vmem:[%s306 + $0x5d8] sm:$0xff]
      %v678 = vld [vmem:[%s306 + $0x5e0] sm:$0xff]
      %v679 = vld [vmem:[%s306 + $0x5e8] sm:$0xff]
      %v680 = vld [vmem:[%s306 + $0x5f0] sm:$0xff]
      %v681 = vld [vmem:[%s306 + $0x5f8] sm:$0xff]
      %v682 = vld [vmem:[%s306 + $0x600] sm:$0xff]
      %v683 = vld [vmem:[%s306 + $0x608] sm:$0xff]
      %v684 = vld [vmem:[%s306 + $0x610] sm:$0xff]
      %v685 = vld [vmem:[%s306 + $0x618] sm:$0xff]
      %v686 = vld [vmem:[%s306 + $0x620] sm:$0xff]
      %v687 = vld [vmem:[%s306 + $0x628] sm:$0xff]
      %v688 = vld [vmem:[%s306 + $0x630] sm:$0xff]
      %v689 = vld [vmem:[%s306 + $0x638] sm:$0xff]
      %v690 = vld [vmem:[%s306 + $0x640] sm:$0xff]
      %v691 = vld [vmem:[%s306 + $0x648] sm:$0xff]
      %v692 = vld [vmem:[%s306 + $0x650] sm:$0xff]
      %v693 = vld [vmem:[%s306 + $0x658] sm:$0xff]
      %v694 = vld [vmem:[%s306 + $0x660] sm:$0xff]
      %v695 = vld [vmem:[%s306 + $0x668] sm:$0xff]
      %v696 = vld [vmem:[%s306 + $0x670] sm:$0xff]
      %v697 = vld [vmem:[%s306 + $0x678] sm:$0xff]
      %v698 = vld [vmem:[%s306 + $0x680] sm:$0xff]
      %v699 = vld [vmem:[%s306 + $0x688] sm:$0xff]
      %v700 = vld [vmem:[%s306 + $0x690] sm:$0xff]
      %v701 = vld [vmem:[%s306 + $0x698] sm:$0xff]
      %v702 = vld [vmem:[%s306 + $0x6a0] sm:$0xff]
      %v703 = vld [vmem:[%s306 + $0x6a8] sm:$0xff]
      %v704 = vld [vmem:[%s306 + $0x6b0] sm:$0xff]
      %v705 = vld [vmem:[%s306 + $0x6b8] sm:$0xff]
      %v706 = vld [vmem:[%s306 + $0x6c0] sm:$0xff]
      %v707 = vld [vmem:[%s306 + $0x6c8] sm:$0xff]
      %v708 = vld [vmem:[%s306 + $0x6d0] sm:$0xff]
      %v709 = vld [vmem:[%s306 + $0x6d8] sm:$0xff]
      %v710 = vld [vmem:[%s306 + $0x6e0] sm:$0xff]
      %v711 = vld [vmem:[%s306 + $0x6e8] sm:$0xff]
      %v712 = vld [vmem:[%s306 + $0x6f0] sm:$0xff]
      %v713 = vld [vmem:[%s306 + $0x6f8] sm:$0xff]
      %v714 = vld [vmem:[%s306 + $0x700] sm:$0xff]
      %v715 = vld [vmem:[%s306 + $0x708] sm:$0xff]
      %v716 = vld [vmem:[%s306 + $0x710] sm:$0xff]
      %v717 = vld [vmem:[%s306 + $0x718] sm:$0xff]
      %v718 = vld [vmem:[%s306 + $0x720] sm:$0xff]
      %v719 = vld [vmem:[%s306 + $0x728] sm:$0xff]
      %v720 = vld [vmem:[%s306 + $0x730] sm:$0xff]
      %v721 = vld [vmem:[%s306 + $0x738] sm:$0xff]
      %v722 = vld [vmem:[%s306 + $0x740] sm:$0xff]
      %v723 = vld [vmem:[%s306 + $0x748] sm:$0xff]
      %v724 = vld [vmem:[%s306 + $0x750] sm:$0xff]
      %v725 = vld [vmem:[%s306 + $0x758] sm:$0xff]
      %v726 = vld [vmem:[%s306 + $0x760] sm:$0xff]
      %v727 = vld [vmem:[%s306 + $0x768] sm:$0xff]
      %v728 = vld [vmem:[%s306 + $0x770] sm:$0xff]
      %v729 = vld [vmem:[%s306 + $0x778] sm:$0xff]
      %v730 = vld [vmem:[%s306 + $0x780] sm:$0xff]
      %v731 = vld [vmem:[%s306 + $0x788] sm:$0xff]
      %v732 = vld [vmem:[%s306 + $0x790] sm:$0xff]
      %v733 = vld [vmem:[%s306 + $0x798] sm:$0xff]
      %v734 = vld [vmem:[%s306 + $0x7a0] sm:$0xff]
      %v735 = vld [vmem:[%s306 + $0x7a8] sm:$0xff]
      %v736 = vld [vmem:[%s306 + $0x7b0] sm:$0xff]
      %v737 = vld [vmem:[%s306 + $0x7b8] sm:$0xff]
      %v738 = vld [vmem:[%s306 + $0x7c0] sm:$0xff]
      %v739 = vld [vmem:[%s306 + $0x7c8] sm:$0xff]
      %v740 = vld [vmem:[%s306 + $0x7d0] sm:$0xff]
      %v741 = vld [vmem:[%s306 + $0x7d8] sm:$0xff]
      %v742 = vld [vmem:[%s306 + $0x7e0] sm:$0xff]
      %v743 = vld [vmem:[%s306 + $0x7e8] sm:$0xff]
      %v744 = vld [vmem:[%s306 + $0x7f0] sm:$0xff]
      %v745 = vld [vmem:[%s306 + $0x7f8] sm:$0xff]
      %v746 = vld [vmem:[%s306 + $0x800] sm:$0xff]
      %v747 = vld [vmem:[%s306 + $0x808] sm:$0xff]
      %v748 = vld [vmem:[%s306 + $0x810] sm:$0xff]
      %v749 = vld [vmem:[%s306 + $0x818] sm:$0xff]
      %v750 = vld [vmem:[%s306 + $0x820] sm:$0xff]
      %v751 = vld [vmem:[%s306 + $0x828] sm:$0xff]
      %v752 = vld [vmem:[%s306 + $0x830] sm:$0xff]
      %v753 = vld [vmem:[%s306 + $0x838] sm:$0xff]
      %v754 = vld [vmem:[%s306 + $0x840] sm:$0xff]
      %v755 = vld [vmem:[%s306 + $0x848] sm:$0xff]
      %v756 = vld [vmem:[%s306 + $0x850] sm:$0xff]
      %v757 = vld [vmem:[%s306 + $0x858] sm:$0xff]
      %v758 = vld [vmem:[%s306 + $0x860] sm:$0xff]
      %v759 = vld [vmem:[%s306 + $0x868] sm:$0xff]
      %v760 = vld [vmem:[%s306 + $0x870] sm:$0xff]
      %v761 = vld [vmem:[%s306 + $0x878] sm:$0xff]
      %v762 = vld [vmem:[%s306 + $0x880] sm:$0xff]
      %v763 = vld [vmem:[%s306 + $0x888] sm:$0xff]
      %v764 = vld [vmem:[%s306 + $0x890] sm:$0xff]
      %v765 = vld [vmem:[%s306 + $0x898] sm:$0xff]
      %v766 = vld [vmem:[%s306 + $0x8a0] sm:$0xff]
      %v767 = vld [vmem:[%s306 + $0x8a8] sm:$0xff]
      %v768 = vld [vmem:[%s306 + $0x8b0] sm:$0xff]
      %v769 = vld [vmem:[%s306 + $0x8b8] sm:$0xff]
      %v770 = vld [vmem:[%s306 + $0x8c0] sm:$0xff]
      %v771 = vld [vmem:[%s306 + $0x8c8] sm:$0xff]
      %v772 = vld [vmem:[%s306 + $0x8d0] sm:$0xff]
      %v773 = vld [vmem:[%s306 + $0x8d8] sm:$0xff]
      %v774 = vld [vmem:[%s306 + $0x8e0] sm:$0xff]
      %v775 = vld [vmem:[%s306 + $0x8e8] sm:$0xff]
      %v776 = vld [vmem:[%s306 + $0x8f0] sm:$0xff]
      %v777 = vld [vmem:[%s306 + $0x8f8] sm:$0xff]
      %v778 = vld [vmem:[%s306 + $0x900] sm:$0xff]
      %v779 = vld [vmem:[%s306 + $0x908] sm:$0xff]
      %v780 = vld [vmem:[%s306 + $0x910] sm:$0xff]
      %v781 = vld [vmem:[%s306 + $0x918] sm:$0xff]
      %v782 = vld [vmem:[%s306 + $0x920] sm:$0xff]
      %v783 = vld [vmem:[%s306 + $0x928] sm:$0xff]
      %v784 = vld [vmem:[%s306 + $0x930] sm:$0xff]
      %v785 = vld [vmem:[%s306 + $0x938] sm:$0xff]
      %v786 = vld [vmem:[%s306 + $0x940] sm:$0xff]
      %v787 = vld [vmem:[%s306 + $0x948] sm:$0xff]
      %v788 = vld [vmem:[%s306 + $0x950] sm:$0xff]
      %v789 = vld [vmem:[%s306 + $0x958] sm:$0xff]
      %v790 = vld [vmem:[%s306 + $0x960] sm:$0xff]
      %v791 = vld [vmem:[%s306 + $0x968] sm:$0xff]
      %v792 = vld [vmem:[%s306 + $0x970] sm:$0xff]
      %v793 = vld [vmem:[%s306 + $0x978] sm:$0xff]
      %v794 = vld [vmem:[%s306 + $0x980] sm:$0xff]
      %v795 = vld [vmem:[%s306 + $0x988] sm:$0xff]
      %v796 = vld [vmem:[%s306 + $0x990] sm:$0xff]
      %v797 = vld [vmem:[%s306 + $0x998] sm:$0xff]
      %v798 = vld [vmem:[%s306 + $0x9a0] sm:$0xff]
      %v799 = vld [vmem:[%s306 + $0x9a8] sm:$0xff]
      %v800 = vld [vmem:[%s306 + $0x9b0] sm:$0xff]
      %v801 = vld [vmem:[%s306 + $0x9b8] sm:$0xff]
      %v802 = vld [vmem:[%s306 + $0x9c0] sm:$0xff]
      %v803 = vld [vmem:[%s306 + $0x9c8] sm:$0xff]
      %v804 = vld [vmem:[%s306 + $0x9d0] sm:$0xff]
      %v805 = vld [vmem:[%s306 + $0x9d8] sm:$0xff]
      %v806 = vld [vmem:[%s306 + $0x9e0] sm:$0xff]
      %v807 = vld [vmem:[%s306 + $0x9e8] sm:$0xff]
      %v808 = vld [vmem:[%s306 + $0x9f0] sm:$0xff]
      %v809 = vld [vmem:[%s306 + $0x9f8] sm:$0xff]
      %v810 = vld [vmem:[%s306 + $0xa00] sm:$0xff]
      %v811 = vld [vmem:[%s306 + $0xa08] sm:$0xff]
      %v812 = vld [vmem:[%s306 + $0xa10] sm:$0xff]
      %v813 = vld [vmem:[%s306 + $0xa18] sm:$0xff]
      %v814 = vld [vmem:[%s306 + $0xa20] sm:$0xff]
      %v815 = vld [vmem:[%s306 + $0xa28] sm:$0xff]
      %v816 = vld [vmem:[%s306 + $0xa30] sm:$0xff]
      %v817 = vld [vmem:[%s306 + $0xa38] sm:$0xff]
      %v818 = vld [vmem:[%s306 + $0xa40] sm:$0xff]
      %v819 = vld [vmem:[%s306 + $0xa48] sm:$0xff]
      %v820 = vld [vmem:[%s306 + $0xa50] sm:$0xff]
      %v821 = vld [vmem:[%s306 + $0xa58] sm:$0xff]
      %v822 = vld [vmem:[%s306 + $0xa60] sm:$0xff]
      %v823 = vld [vmem:[%s306 + $0xa68] sm:$0xff]
      %v824 = vld [vmem:[%s306 + $0xa70] sm:$0xff]
      %v825 = vld [vmem:[%s306 + $0xa78] sm:$0xff]
      %v826 = vld [vmem:[%s306 + $0xa80] sm:$0xff]
      %v827 = vld [vmem:[%s306 + $0xa88] sm:$0xff]
      %v828 = vld [vmem:[%s306 + $0xa90] sm:$0xff]
      %v829 = vld [vmem:[%s306 + $0xa98] sm:$0xff]
      %v830 = vld [vmem:[%s306 + $0xaa0] sm:$0xff]
      %v831 = vld [vmem:[%s306 + $0xaa8] sm:$0xff]
      %v832 = vld [vmem:[%s306 + $0xab0] sm:$0xff]
      %v833 = vld [vmem:[%s306 + $0xab8] sm:$0xff]
      %v834 = vld [vmem:[%s306 + $0xac0] sm:$0xff]
      %v835 = vld [vmem:[%s306 + $0xac8] sm:$0xff]
      %v836 = vld [vmem:[%s306 + $0xad0] sm:$0xff]
      %v837 = vld [vmem:[%s306 + $0xad8] sm:$0xff]
      %v838 = vld [vmem:[%s306 + $0xae0] sm:$0xff]
      %v839 = vld [vmem:[%s306 + $0xae8] sm:$0xff]
      %v840 = vld [vmem:[%s306 + $0xaf0] sm:$0xff]
      %v841 = vld [vmem:[%s306 + $0xaf8] sm:$0xff]
      %v842 = vld [vmem:[%s306 + $0xb00] sm:$0xff]
      %v843 = vld [vmem:[%s306 + $0xb08] sm:$0xff]
      %v844 = vld [vmem:[%s306 + $0xb10] sm:$0xff]
      %v845 = vld [vmem:[%s306 + $0xb18] sm:$0xff]
      %v846 = vld [vmem:[%s306 + $0xb20] sm:$0xff]
      %v847 = vld [vmem:[%s306 + $0xb28] sm:$0xff]
      %v848 = vld [vmem:[%s306 + $0xb30] sm:$0xff]
      %v849 = vld [vmem:[%s306 + $0xb38] sm:$0xff]
      %v850 = vld [vmem:[%s306 + $0xb40] sm:$0xff]
      %v851 = vld [vmem:[%s306 + $0xb48] sm:$0xff]
      %v852 = vld [vmem:[%s306 + $0xb50] sm:$0xff]
      %v853 = vld [vmem:[%s306 + $0xb58] sm:$0xff]
      %v854 = vld [vmem:[%s306 + $0xb60] sm:$0xff]
      %v855 = vld [vmem:[%s306 + $0xb68] sm:$0xff]
      %v856 = vld [vmem:[%s306 + $0xb70] sm:$0xff]
      %v857 = vld [vmem:[%s306 + $0xb78] sm:$0xff]
      %v858 = vld [vmem:[%s306 + $0xb80] sm:$0xff]
      %v859 = vld [vmem:[%s306 + $0xb88] sm:$0xff]
      %v860 = vld [vmem:[%s306 + $0xb90] sm:$0xff]
      %v861 = vld [vmem:[%s306 + $0xb98] sm:$0xff]
      %v862 = vld [vmem:[%s306 + $0xba0] sm:$0xff]
      %v863 = vld [vmem:[%s306 + $0xba8] sm:$0xff]
      %v864 = vld [vmem:[%s306 + $0xbb0] sm:$0xff]
      %v865 = vld [vmem:[%s306 + $0xbb8] sm:$0xff]
      %v866 = vld [vmem:[%s306 + $0xbc0] sm:$0xff]
      %v867 = vld [vmem:[%s306 + $0xbc8] sm:$0xff]
      %v868 = vld [vmem:[%s306 + $0xbd0] sm:$0xff]
      %v869 = vld [vmem:[%s306 + $0xbd8] sm:$0xff]
      %v870 = vld [vmem:[%s306 + $0xbe0] sm:$0xff]
      %v871 = vld [vmem:[%s306 + $0xbe8] sm:$0xff]
      %v872 = vld [vmem:[%s306 + $0xbf0] sm:$0xff]
      %v873 = vld [vmem:[%s306 + $0xbf8] sm:$0xff]
      %v874 = vld [vmem:[%s306 + $0xc00] sm:$0xff]
      %v875 = vld [vmem:[%s306 + $0xc08] sm:$0xff]
      %v876 = vld [vmem:[%s306 + $0xc10] sm:$0xff]
      %v877 = vld [vmem:[%s306 + $0xc18] sm:$0xff]
      %v878 = vld [vmem:[%s306 + $0xc20] sm:$0xff]
      %v879 = vld [vmem:[%s306 + $0xc28] sm:$0xff]
      %v880 = vld [vmem:[%s306 + $0xc30] sm:$0xff]
      %v881 = vld [vmem:[%s306 + $0xc38] sm:$0xff]
      %v882 = vld [vmem:[%s306 + $0xc40] sm:$0xff]
      %v883 = vld [vmem:[%s306 + $0xc48] sm:$0xff]
      %v884 = vld [vmem:[%s306 + $0xc50] sm:$0xff]
      %v885 = vld [vmem:[%s306 + $0xc58] sm:$0xff]
      %v886 = vld [vmem:[%s306 + $0xc60] sm:$0xff]
      %v887 = vld [vmem:[%s306 + $0xc68] sm:$0xff]
      %v888 = vld [vmem:[%s306 + $0xc70] sm:$0xff]
      %v889 = vld [vmem:[%s306 + $0xc78] sm:$0xff]
      %v890 = vld [vmem:[%s306 + $0xc80] sm:$0xff]
      %v891 = vld [vmem:[%s306 + $0xc88] sm:$0xff]
      %v892 = vld [vmem:[%s306 + $0xc90] sm:$0xff]
      %v893 = vld [vmem:[%s306 + $0xc98] sm:$0xff]
      %v894 = vld [vmem:[%s306 + $0xca0] sm:$0xff]
      %v895 = vld [vmem:[%s306 + $0xca8] sm:$0xff]
      %v896 = vld [vmem:[%s306 + $0xcb0] sm:$0xff]
      %v897 = vld [vmem:[%s306 + $0xcb8] sm:$0xff]
      %v898 = vld [vmem:[%s306 + $0xcc0] sm:$0xff]
      %v899 = vld [vmem:[%s306 + $0xcc8] sm:$0xff]
      %v900 = vld [vmem:[%s306 + $0xcd0] sm:$0xff]
      %v901 = vld [vmem:[%s306 + $0xcd8] sm:$0xff]
      %v902 = vld [vmem:[%s306 + $0xce0] sm:$0xff]
      %v903 = vld [vmem:[%s306 + $0xce8] sm:$0xff]
      %v904 = vld [vmem:[%s306 + $0xcf0] sm:$0xff]
      %v905 = vld [vmem:[%s306 + $0xcf8] sm:$0xff]
      %v906 = vld [vmem:[%s306 + $0xd00] sm:$0xff]
      %v907 = vld [vmem:[%s306 + $0xd08] sm:$0xff]
      %v908 = vld [vmem:[%s306 + $0xd10] sm:$0xff]
      %v909 = vld [vmem:[%s306 + $0xd18] sm:$0xff]
      %v910 = vld [vmem:[%s306 + $0xd20] sm:$0xff]
      %v911 = vld [vmem:[%s306 + $0xd28] sm:$0xff]
      %v912 = vld [vmem:[%s306 + $0xd30] sm:$0xff]
      %v913 = vld [vmem:[%s306 + $0xd38] sm:$0xff]
      %v914 = vld [vmem:[%s306 + $0xd40] sm:$0xff]
      %v915 = vld [vmem:[%s306 + $0xd48] sm:$0xff]
      %v916 = vld [vmem:[%s306 + $0xd50] sm:$0xff]
      %v917 = vld [vmem:[%s306 + $0xd58] sm:$0xff]
      %v918 = vld [vmem:[%s306 + $0xd60] sm:$0xff]
      %v919 = vld [vmem:[%s306 + $0xd68] sm:$0xff]
      %v920 = vld [vmem:[%s306 + $0xd70] sm:$0xff]
      %v921 = vld [vmem:[%s306 + $0xd78] sm:$0xff]
      %v922 = vld [vmem:[%s306 + $0xd80] sm:$0xff]
      %v923 = vld [vmem:[%s306 + $0xd88] sm:$0xff]
      %v924 = vld [vmem:[%s306 + $0xd90] sm:$0xff]
      %v925 = vld [vmem:[%s306 + $0xd98] sm:$0xff]
      %v926 = vld [vmem:[%s306 + $0xda0] sm:$0xff]
      %v927 = vld [vmem:[%s306 + $0xda8] sm:$0xff]
      %v928 = vld [vmem:[%s306 + $0xdb0] sm:$0xff]
      %v929 = vld [vmem:[%s306 + $0xdb8] sm:$0xff]
      %v930 = vld [vmem:[%s306 + $0xdc0] sm:$0xff]
      %v931 = vld [vmem:[%s306 + $0xdc8] sm:$0xff]
      %v932 = vld [vmem:[%s306 + $0xdd0] sm:$0xff]
      %v933 = vld [vmem:[%s306 + $0xdd8] sm:$0xff]
      %v934 = vld [vmem:[%s306 + $0xde0] sm:$0xff]
      %v935 = vld [vmem:[%s306 + $0xde8] sm:$0xff]
      %v936 = vld [vmem:[%s306 + $0xdf0] sm:$0xff]
      %v937 = vld [vmem:[%s306 + $0xdf8] sm:$0xff]
      %v938 = vld [vmem:[%s306 + $0xe00] sm:$0xff]
      %v939 = vld [vmem:[%s306 + $0xe08] sm:$0xff]
      %v940 = vld [vmem:[%s306 + $0xe10] sm:$0xff]
      %v941 = vld [vmem:[%s306 + $0xe18] sm:$0xff]
      %v942 = vld [vmem:[%s306 + $0xe20] sm:$0xff]
      %v943 = vld [vmem:[%s306 + $0xe28] sm:$0xff]
      %v944 = vld [vmem:[%s306 + $0xe30] sm:$0xff]
      %v945 = vld [vmem:[%s306 + $0xe38] sm:$0xff]
      %v946 = vld [vmem:[%s306 + $0xe40] sm:$0xff]
      %v947 = vld [vmem:[%s306 + $0xe48] sm:$0xff]
      %v948 = vld [vmem:[%s306 + $0xe50] sm:$0xff]
      %v949 = vld [vmem:[%s306 + $0xe58] sm:$0xff]
      %v950 = vld [vmem:[%s306 + $0xe60] sm:$0xff]
      %v951 = vld [vmem:[%s306 + $0xe68] sm:$0xff]
      %v952 = vld [vmem:[%s306 + $0xe70] sm:$0xff]
      %v953 = vld [vmem:[%s306 + $0xe78] sm:$0xff]
      %v954 = vld [vmem:[%s306 + $0xe80] sm:$0xff]
      %v955 = vld [vmem:[%s306 + $0xe88] sm:$0xff]
      %v956 = vld [vmem:[%s306 + $0xe90] sm:$0xff]
      %v957 = vld [vmem:[%s306 + $0xe98] sm:$0xff]
      %v958 = vld [vmem:[%s306 + $0xea0] sm:$0xff]
      %v959 = vld [vmem:[%s306 + $0xea8] sm:$0xff]
      %v960 = vld [vmem:[%s306 + $0xeb0] sm:$0xff]
      %v961 = vld [vmem:[%s306 + $0xeb8] sm:$0xff]
      %v962 = vld [vmem:[%s306 + $0xec0] sm:$0xff]
      %v963 = vld [vmem:[%s306 + $0xec8] sm:$0xff]
      %v964 = vld [vmem:[%s306 + $0xed0] sm:$0xff]
      %v965 = vld [vmem:[%s306 + $0xed8] sm:$0xff]
      %v966 = vld [vmem:[%s306 + $0xee0] sm:$0xff]
      %v967 = vld [vmem:[%s306 + $0xee8] sm:$0xff]
      %v968 = vld [vmem:[%s306 + $0xef0] sm:$0xff]
      %v969 = vld [vmem:[%s306 + $0xef8] sm:$0xff]
      %v970 = vld [vmem:[%s306 + $0xf00] sm:$0xff]
      %v971 = vld [vmem:[%s306 + $0xf08] sm:$0xff]
      %v972 = vld [vmem:[%s306 + $0xf10] sm:$0xff]
      %v973 = vld [vmem:[%s306 + $0xf18] sm:$0xff]
      %v974 = vld [vmem:[%s306 + $0xf20] sm:$0xff]
      %v975 = vld [vmem:[%s306 + $0xf28] sm:$0xff]
      %v976 = vld [vmem:[%s306 + $0xf30] sm:$0xff]
      %v977 = vld [vmem:[%s306 + $0xf38] sm:$0xff]
      %v978 = vld [vmem:[%s306 + $0xf40] sm:$0xff]
      %v979 = vld [vmem:[%s306 + $0xf48] sm:$0xff]
      %v980 = vld [vmem:[%s306 + $0xf50] sm:$0xff]
      %v981 = vld [vmem:[%s306 + $0xf58] sm:$0xff]
      %v982 = vld [vmem:[%s306 + $0xf60] sm:$0xff]
      %v983 = vld [vmem:[%s306 + $0xf68] sm:$0xff]
      %v984 = vld [vmem:[%s306 + $0xf70] sm:$0xff]
      %v985 = vld [vmem:[%s306 + $0xf78] sm:$0xff]
      %v986 = vld [vmem:[%s306 + $0xf80] sm:$0xff]
      %v987 = vld [vmem:[%s306 + $0xf88] sm:$0xff]
      %v988 = vld [vmem:[%s306 + $0xf90] sm:$0xff]
      %v989 = vld [vmem:[%s306 + $0xf98] sm:$0xff]
      %v990 = vld [vmem:[%s306 + $0xfa0] sm:$0xff]
      %v991 = vld [vmem:[%s306 + $0xfa8] sm:$0xff]
      %v992 = vld [vmem:[%s306 + $0xfb0] sm:$0xff]
      %v993 = vld [vmem:[%s306 + $0xfb8] sm:$0xff]
      %v994 = vld [vmem:[%s306 + $0xfc0] sm:$0xff]
      %v995 = vld [vmem:[%s306 + $0xfc8] sm:$0xff]
      %v996 = vld [vmem:[%s306 + $0xfd0] sm:$0xff]
      %v997 = vld [vmem:[%s306 + $0xfd8] sm:$0xff]
      %v998 = vld [vmem:[%s306 + $0xfe0] sm:$0xff]
      %v999 = vld [vmem:[%s306 + $0xfe8] sm:$0xff]
      %v1000 = vld [vmem:[%s306 + $0xff0] sm:$0xff]
      %v1001 = vld [vmem:[%s306 + $0xff8] sm:$0xff]
      %v1002 = vld [vmem:[%s306 + $0x1000] sm:$0xff]
      %v1003 = vld [vmem:[%s306 + $0x1008] sm:$0xff]
      %v1004 = vld [vmem:[%s306 + $0x1010] sm:$0xff]
      %v1005 = vld [vmem:[%s306 + $0x1018] sm:$0xff]
      %v1006 = vld [vmem:[%s306 + $0x1020] sm:$0xff]
      %v1007 = vld [vmem:[%s306 + $0x1028] sm:$0xff]
      %v1008 = vld [vmem:[%s306 + $0x1030] sm:$0xff]
      %v1009 = vld [vmem:[%s306 + $0x1038] sm:$0xff]
      %v1010 = vld [vmem:[%s306 + $0x1040] sm:$0xff]
      %v1011 = vld [vmem:[%s306 + $0x1048] sm:$0xff]
      %v1012 = vld [vmem:[%s306 + $0x1050] sm:$0xff]
      %v1013 = vld [vmem:[%s306 + $0x1058] sm:$0xff]
      %v1014 = vld [vmem:[%s306 + $0x1060] sm:$0xff]
      %v1015 = vld [vmem:[%s306 + $0x1068] sm:$0xff]
      %v1016 = vld [vmem:[%s306 + $0x1070] sm:$0xff]
      %v1017 = vld [vmem:[%s306 + $0x1078] sm:$0xff]
      %v1018 = vld [vmem:[%s306 + $0x1080] sm:$0xff]
      %v1019 = vld [vmem:[%s306 + $0x1088] sm:$0xff]
      %v1020 = vld [vmem:[%s306 + $0x1090] sm:$0xff]
      %v1021 = vld [vmem:[%s306 + $0x1098] sm:$0xff]
      %v1022 = vld [vmem:[%s306 + $0x10a0] sm:$0xff]
      %v1023 = vld [vmem:[%s306 + $0x10a8] sm:$0xff]
      %v1024 = vld [vmem:[%s306 + $0x10b0] sm:$0xff]
      %v1025 = vld [vmem:[%s306 + $0x10b8] sm:$0xff]
      %v1026 = vld [vmem:[%s306 + $0x10c0] sm:$0xff]
      %v1027 = vld [vmem:[%s306 + $0x10c8] sm:$0xff]
      %v1028 = vld [vmem:[%s306 + $0x10d0] sm:$0xff]
      %v1029 = vld [vmem:[%s306 + $0x10d8] sm:$0xff]
      %v1030 = vld [vmem:[%s306 + $0x10e0] sm:$0xff]
      %v1031 = vld [vmem:[%s306 + $0x10e8] sm:$0xff]
      %v1032 = vld [vmem:[%s306 + $0x10f0] sm:$0xff]
      %v1033 = vld [vmem:[%s306 + $0x10f8] sm:$0xff]
      %v1034 = vld [vmem:[%s306 + $0x1100] sm:$0xff]
      %v1035 = vld [vmem:[%s306 + $0x1108] sm:$0xff]
      %v1036 = vld [vmem:[%s306 + $0x1110] sm:$0xff]
      %v1037 = vld [vmem:[%s306 + $0x1118] sm:$0xff]
      %v1038 = vld [vmem:[%s306 + $0x1120] sm:$0xff]
      %v1039 = vld [vmem:[%s306 + $0x1128] sm:$0xff]
      %v1040 = vld [vmem:[%s306 + $0x1130] sm:$0xff]
      %v1041 = vld [vmem:[%s306 + $0x1138] sm:$0xff]
      %v1042 = vld [vmem:[%s306 + $0x1140] sm:$0xff]
      %v1043 = vld [vmem:[%s306 + $0x1148] sm:$0xff]
      %v1044 = vld [vmem:[%s306 + $0x1150] sm:$0xff]
      %v1045 = vld [vmem:[%s306 + $0x1158] sm:$0xff]
      %v1046 = vld [vmem:[%s306 + $0x1160] sm:$0xff]
      %v1047 = vld [vmem:[%s306 + $0x1168] sm:$0xff]
      %v1048 = vld [vmem:[%s306 + $0x1170] sm:$0xff]
      %v1049 = vld [vmem:[%s306 + $0x1178] sm:$0xff]
      %v1050 = vld [vmem:[%s306 + $0x1180] sm:$0xff]
      %v1051 = vld [vmem:[%s306 + $0x1188] sm:$0xff]
      %v1052 = vld [vmem:[%s306 + $0x1190] sm:$0xff]
      %v1053 = vld [vmem:[%s306 + $0x1198] sm:$0xff]
      %v1054 = vld [vmem:[%s306 + $0x11a0] sm:$0xff]
      %v1055 = vld [vmem:[%s306 + $0x11a8] sm:$0xff]
      %v1056 = vld [vmem:[%s306 + $0x11b0] sm:$0xff]
      %v1057 = vld [vmem:[%s306 + $0x11b8] sm:$0xff]
      %v1058 = vld [vmem:[%s306 + $0x11c0] sm:$0xff]
      %v1059 = vld [vmem:[%s306 + $0x11c8] sm:$0xff]
      %v1060 = vld [vmem:[%s306 + $0x11d0] sm:$0xff]
      %v1061 = vld [vmem:[%s306 + $0x11d8] sm:$0xff]
      %v1062 = vld [vmem:[%s306 + $0x11e0] sm:$0xff]
      %v1063 = vld [vmem:[%s306 + $0x11e8] sm:$0xff]
      %v1064 = vld [vmem:[%s306 + $0x11f0] sm:$0xff]
      %v1065 = vld [vmem:[%s306 + $0x11f8] sm:$0xff]
      %v1066 = vld [vmem:[%s306 + $0x1200] sm:$0xff]
      %v1067 = vld [vmem:[%s306 + $0x1208] sm:$0xff]
      %v1068 = vld [vmem:[%s306 + $0x1210] sm:$0xff]
      %v1069 = vld [vmem:[%s306 + $0x1218] sm:$0xff]
      %v1070 = vld [vmem:[%s306 + $0x1220] sm:$0xff]
      %v1071 = vld [vmem:[%s306 + $0x1228] sm:$0xff]
      %v1072 = vld [vmem:[%s306 + $0x1230] sm:$0xff]
      %v1073 = vld [vmem:[%s306 + $0x1238] sm:$0xff]
      %v1074 = vld [vmem:[%s306 + $0x1240] sm:$0xff]
      %v1075 = vld [vmem:[%s306 + $0x1248] sm:$0xff]
      %v1076 = vld [vmem:[%s306 + $0x1250] sm:$0xff]
      %v1077 = vld [vmem:[%s306 + $0x1258] sm:$0xff]
      %v1078 = vld [vmem:[%s306 + $0x1260] sm:$0xff]
      %v1079 = vld [vmem:[%s306 + $0x1268] sm:$0xff]
      %v1080 = vld [vmem:[%s306 + $0x1270] sm:$0xff]
      %v1081 = vld [vmem:[%s306 + $0x1278] sm:$0xff]
      %v1082 = vld [vmem:[%s306 + $0x1280] sm:$0xff]
      %v1083 = vld [vmem:[%s306 + $0x1288] sm:$0xff]
      %v1084 = vld [vmem:[%s306 + $0x1290] sm:$0xff]
      %v1085 = vld [vmem:[%s306 + $0x1298] sm:$0xff]
      %v1086 = vld [vmem:[%s306 + $0x12a0] sm:$0xff]
      %v1087 = vld [vmem:[%s306 + $0x12a8] sm:$0xff]
      %v1088 = vld [vmem:[%s306 + $0x12b0] sm:$0xff]
      %v1089 = vld [vmem:[%s306 + $0x12b8] sm:$0xff]
      %v1090 = vld [vmem:[%s306 + $0x12c0] sm:$0xff]
      %v1091 = vld [vmem:[%s306 + $0x12c8] sm:$0xff]
      %v1092 = vld [vmem:[%s306 + $0x12d0] sm:$0xff]
      %v1093 = vld [vmem:[%s306 + $0x12d8] sm:$0xff]
      %v1094 = vld [vmem:[%s306 + $0x12e0] sm:$0xff]
      %v1095 = vld [vmem:[%s306 + $0x12e8] sm:$0xff]
      %v1096 = vld [vmem:[%s306 + $0x12f0] sm:$0xff]
      %v1097 = vld [vmem:[%s306 + $0x12f8] sm:$0xff]
      %v1098 = vld [vmem:[%s306 + $0x1300] sm:$0xff]
      %v1099 = vld [vmem:[%s306 + $0x1308] sm:$0xff]
      %v1100 = vld [vmem:[%s306 + $0x1310] sm:$0xff]
      %v1101 = vld [vmem:[%s306 + $0x1318] sm:$0xff]
      %v1102 = vld [vmem:[%s306 + $0x1320] sm:$0xff]
      %v1103 = vld [vmem:[%s306 + $0x1328] sm:$0xff]
      %v1104 = vld [vmem:[%s306 + $0x1330] sm:$0xff]
      %v1105 = vld [vmem:[%s306 + $0x1338] sm:$0xff]
      %v1106 = vld [vmem:[%s306 + $0x1340] sm:$0xff]
      %v1107 = vld [vmem:[%s306 + $0x1348] sm:$0xff]
      %v1108 = vld [vmem:[%s306 + $0x1350] sm:$0xff]
      %v1109 = vld [vmem:[%s306 + $0x1358] sm:$0xff]
      %v1110 = vld [vmem:[%s306 + $0x1360] sm:$0xff]
      %v1111 = vld [vmem:[%s306 + $0x1368] sm:$0xff]
      %v1112 = vld [vmem:[%s306 + $0x1370] sm:$0xff]
      %v1113 = vld [vmem:[%s306 + $0x1378] sm:$0xff]
      %v1114 = vld [vmem:[%s306 + $0x1380] sm:$0xff]
      %v1115 = vld [vmem:[%s306 + $0x1388] sm:$0xff]
      %v1116 = vld [vmem:[%s306 + $0x1390] sm:$0xff]
      %v1117 = vld [vmem:[%s306 + $0x1398] sm:$0xff]
      %v1118 = vld [vmem:[%s306 + $0x13a0] sm:$0xff]
      %v1119 = vld [vmem:[%s306 + $0x13a8] sm:$0xff]
      %v1120 = vld [vmem:[%s306 + $0x13b0] sm:$0xff]
      %v1121 = vld [vmem:[%s306 + $0x13b8] sm:$0xff]
      %v1122 = vld [vmem:[%s306 + $0x13c0] sm:$0xff]
      %v1123 = vld [vmem:[%s306 + $0x13c8] sm:$0xff]
      %v1124 = vld [vmem:[%s306 + $0x13d0] sm:$0xff]
      %v1125 = vld [vmem:[%s306 + $0x13d8] sm:$0xff]
      %v1126 = vld [vmem:[%s306 + $0x13e0] sm:$0xff]
      %v1127 = vld [vmem:[%s306 + $0x13e8] sm:$0xff]
      %v1128 = vld [vmem:[%s306 + $0x13f0] sm:$0xff]
      %v1129 = vld [vmem:[%s306 + $0x13f8] sm:$0xff]
      %v1130 = vld [vmem:[%s306 + $0x1400] sm:$0xff]
      %v1131 = vld [vmem:[%s306 + $0x1408] sm:$0xff]
      %v1132 = vld [vmem:[%s306 + $0x1410] sm:$0xff]
      %v1133 = vld [vmem:[%s306 + $0x1418] sm:$0xff]
      %v1134 = vld [vmem:[%s306 + $0x1420] sm:$0xff]
      %v1135 = vld [vmem:[%s306 + $0x1428] sm:$0xff]
      %v1136 = vld [vmem:[%s306 + $0x1430] sm:$0xff]
      %v1137 = vld [vmem:[%s306 + $0x1438] sm:$0xff]
      %v1138 = vld [vmem:[%s306 + $0x1440] sm:$0xff]
      %v1139 = vld [vmem:[%s306 + $0x1448] sm:$0xff]
      %v1140 = vld [vmem:[%s306 + $0x1450] sm:$0xff]
      %v1141 = vld [vmem:[%s306 + $0x1458] sm:$0xff]
      %v1142 = vld [vmem:[%s306 + $0x1460] sm:$0xff]
      %v1143 = vld [vmem:[%s306 + $0x1468] sm:$0xff]
      %v1144 = vld [vmem:[%s306 + $0x1470] sm:$0xff]
      %v1145 = vld [vmem:[%s306 + $0x1478] sm:$0xff]
      %v1146 = vld [vmem:[%s306 + $0x1480] sm:$0xff]
      %v1147 = vld [vmem:[%s306 + $0x1488] sm:$0xff]
      %v1148 = vld [vmem:[%s306 + $0x1490] sm:$0xff]
      %v1149 = vld [vmem:[%s306 + $0x1498] sm:$0xff]
      %v1150 = vld [vmem:[%s306 + $0x14a0] sm:$0xff]
      %v1151 = vld [vmem:[%s306 + $0x14a8] sm:$0xff]
      %v1152 = vld [vmem:[%s306 + $0x14b0] sm:$0xff]
      %v1153 = vld [vmem:[%s306 + $0x14b8] sm:$0xff]
      %v1154 = vld [vmem:[%s306 + $0x14c0] sm:$0xff]
      %v1155 = vld [vmem:[%s306 + $0x14c8] sm:$0xff]
      %v1156 = vld [vmem:[%s306 + $0x14d0] sm:$0xff]
      %v1157 = vld [vmem:[%s306 + $0x14d8] sm:$0xff]
      %v1158 = vld [vmem:[%s306 + $0x14e0] sm:$0xff]
      %v1159 = vld [vmem:[%s306 + $0x14e8] sm:$0xff]
      %v1160 = vld [vmem:[%s306 + $0x14f0] sm:$0xff]
      %v1161 = vld [vmem:[%s306 + $0x14f8] sm:$0xff]
      %v1162 = vld [vmem:[%s306 + $0x1500] sm:$0xff]
      %v1163 = vld [vmem:[%s306 + $0x1508] sm:$0xff]
      %v1164 = vld [vmem:[%s306 + $0x1510] sm:$0xff]
      %v1165 = vld [vmem:[%s306 + $0x1518] sm:$0xff]
      %v1166 = vld [vmem:[%s306 + $0x1520] sm:$0xff]
      %v1167 = vld [vmem:[%s306 + $0x1528] sm:$0xff]
      %v1168 = vld [vmem:[%s306 + $0x1530] sm:$0xff]
      %v1169 = vld [vmem:[%s306 + $0x1538] sm:$0xff]
      %v1170 = vld [vmem:[%s306 + $0x1540] sm:$0xff]
      %v1171 = vld [vmem:[%s306 + $0x1548] sm:$0xff]
      %v1172 = vld [vmem:[%s306 + $0x1550] sm:$0xff]
      %v1173 = vld [vmem:[%s306 + $0x1558] sm:$0xff]
      %v1174 = vld [vmem:[%s306 + $0x1560] sm:$0xff]
      %v1175 = vld [vmem:[%s306 + $0x1568] sm:$0xff]
      %v1176 = vld [vmem:[%s306 + $0x1570] sm:$0xff]
      %v1177 = vld [vmem:[%s306 + $0x1578] sm:$0xff]
      %v1178 = vld [vmem:[%s306 + $0x1580] sm:$0xff]
      %v1179 = vld [vmem:[%s306 + $0x1588] sm:$0xff]
      %v1180 = vld [vmem:[%s306 + $0x1590] sm:$0xff]
      %v1181 = vld [vmem:[%s306 + $0x1598] sm:$0xff]
      %v1182 = vld [vmem:[%s306 + $0x15a0] sm:$0xff]
      %v1183 = vld [vmem:[%s306 + $0x15a8] sm:$0xff]
      %v1184 = vld [vmem:[%s306 + $0x15b0] sm:$0xff]
      %v1185 = vld [vmem:[%s306 + $0x15b8] sm:$0xff]
      %v1186 = vld [vmem:[%s306 + $0x15c0] sm:$0xff]
      %v1187 = vld [vmem:[%s306 + $0x15c8] sm:$0xff]
      %v1188 = vld [vmem:[%s306 + $0x15d0] sm:$0xff]
      %v1189 = vld [vmem:[%s306 + $0x15d8] sm:$0xff]
      %v1190 = vld [vmem:[%s306 + $0x15e0] sm:$0xff]
      %v1191 = vld [vmem:[%s306 + $0x15e8] sm:$0xff]
      %v1192 = vld [vmem:[%s306 + $0x15f0] sm:$0xff]
      %v1193 = vld [vmem:[%s306 + $0x15f8] sm:$0xff]
      %v1194 = vld [vmem:[%s306 + $0x1600] sm:$0xff]
      %v1195 = vld [vmem:[%s306 + $0x1608] sm:$0xff]
      %v1196 = vld [vmem:[%s306 + $0x1610] sm:$0xff]
      %v1197 = vld [vmem:[%s306 + $0x1618] sm:$0xff]
      %v1198 = vld [vmem:[%s306 + $0x1620] sm:$0xff]
      %v1199 = vld [vmem:[%s306 + $0x1628] sm:$0xff]
      %v1200 = vld [vmem:[%s306 + $0x1630] sm:$0xff]
      %v1201 = vld [vmem:[%s306 + $0x1638] sm:$0xff]
      %v1202 = vld [vmem:[%s306 + $0x1640] sm:$0xff]
      %v1203 = vld [vmem:[%s306 + $0x1648] sm:$0xff]
      %v1204 = vld [vmem:[%s306 + $0x1650] sm:$0xff]
      %v1205 = vld [vmem:[%s306 + $0x1658] sm:$0xff]
      %v1206 = vld [vmem:[%s306 + $0x1660] sm:$0xff]
      %v1207 = vld [vmem:[%s306 + $0x1668] sm:$0xff]
      %v1208 = vld [vmem:[%s306 + $0x1670] sm:$0xff]
      %v1209 = vld [vmem:[%s306 + $0x1678] sm:$0xff]
      %v1210 = vld [vmem:[%s306 + $0x1680] sm:$0xff]
      %v1211 = vld [vmem:[%s306 + $0x1688] sm:$0xff]
      %v1212 = vld [vmem:[%s306 + $0x1690] sm:$0xff]
      %v1213 = vld [vmem:[%s306 + $0x1698] sm:$0xff]
      %v1214 = vld [vmem:[%s306 + $0x16a0] sm:$0xff]
      %v1215 = vld [vmem:[%s306 + $0x16a8] sm:$0xff]
      %v1216 = vld [vmem:[%s306 + $0x16b0] sm:$0xff]
      %v1217 = vld [vmem:[%s306 + $0x16b8] sm:$0xff]
      %v1218 = vld [vmem:[%s306 + $0x16c0] sm:$0xff]
      %v1219 = vld [vmem:[%s306 + $0x16c8] sm:$0xff]
      %v1220 = vld [vmem:[%s306 + $0x16d0] sm:$0xff]
      %v1221 = vld [vmem:[%s306 + $0x16d8] sm:$0xff]
      %v1222 = vld [vmem:[%s306 + $0x16e0] sm:$0xff]
      %v1223 = vld [vmem:[%s306 + $0x16e8] sm:$0xff]
      %v1224 = vld [vmem:[%s306 + $0x16f0] sm:$0xff]
      %v1225 = vld [vmem:[%s306 + $0x16f8] sm:$0xff]
      %v1226 = vld [vmem:[%s306 + $0x1700] sm:$0xff]
      %v1227 = vld [vmem:[%s306 + $0x1708] sm:$0xff]
      %v1228 = vld [vmem:[%s306 + $0x1710] sm:$0xff]
      %v1229 = vld [vmem:[%s306 + $0x1718] sm:$0xff]
      %v1230 = vld [vmem:[%s306 + $0x1720] sm:$0xff]
      %v1231 = vld [vmem:[%s306 + $0x1728] sm:$0xff]
      %v1232 = vld [vmem:[%s306 + $0x1730] sm:$0xff]
      %v1233 = vld [vmem:[%s306 + $0x1738] sm:$0xff]
      %v1234 = vld [vmem:[%s306 + $0x1740] sm:$0xff]
      %v1235 = vld [vmem:[%s306 + $0x1748] sm:$0xff]
      %v1236 = vld [vmem:[%s306 + $0x1750] sm:$0xff]
      %v1237 = vld [vmem:[%s306 + $0x1758] sm:$0xff]
      %v1238 = vld [vmem:[%s306 + $0x1760] sm:$0xff]
      %v1239 = vld [vmem:[%s306 + $0x1768] sm:$0xff]
      %v1240 = vld [vmem:[%s306 + $0x1770] sm:$0xff]
      %v1241 = vld [vmem:[%s306 + $0x1778] sm:$0xff]
      %v1242 = vld [vmem:[%s306 + $0x1780] sm:$0xff]
      %v1243 = vld [vmem:[%s306 + $0x1788] sm:$0xff]
      %v1244 = vld [vmem:[%s306 + $0x1790] sm:$0xff]
      %v1245 = vld [vmem:[%s306 + $0x1798] sm:$0xff]
      %v1246 = vld [vmem:[%s306 + $0x17a0] sm:$0xff]
      %v1247 = vld [vmem:[%s306 + $0x17a8] sm:$0xff]
      %v1248 = vld [vmem:[%s306 + $0x17b0] sm:$0xff]
      %v1249 = vld [vmem:[%s306 + $0x17b8] sm:$0xff]
      %v1250 = vld [vmem:[%s306 + $0x17c0] sm:$0xff]
      %v1251 = vld [vmem:[%s306 + $0x17c8] sm:$0xff]
      %v1252 = vld [vmem:[%s306 + $0x17d0] sm:$0xff]
      %v1253 = vld [vmem:[%s306 + $0x17d8] sm:$0xff]
      %v1254 = vld [vmem:[%s306 + $0x17e0] sm:$0xff]
      %v1255 = vld [vmem:[%s306 + $0x17e8] sm:$0xff]
      %v1256 = vld [vmem:[%s306 + $0x17f0] sm:$0xff]
      %v1257 = vld [vmem:[%s306 + $0x17f8] sm:$0xff]
      %v1258 = vld [vmem:[%s306 + $0x1800] sm:$0xff]
      %v1259 = vld [vmem:[%s306 + $0x1808] sm:$0xff]
      %v1260 = vld [vmem:[%s306 + $0x1810] sm:$0xff]
      %v1261 = vld [vmem:[%s306 + $0x1818] sm:$0xff]
      %v1262 = vld [vmem:[%s306 + $0x1820] sm:$0xff]
      %v1263 = vld [vmem:[%s306 + $0x1828] sm:$0xff]
      %v1264 = vld [vmem:[%s306 + $0x1830] sm:$0xff]
      %v1265 = vld [vmem:[%s306 + $0x1838] sm:$0xff]
      %v1266 = vld [vmem:[%s306 + $0x1840] sm:$0xff]
      %v1267 = vld [vmem:[%s306 + $0x1848] sm:$0xff]
      %v1268 = vld [vmem:[%s306 + $0x1850] sm:$0xff]
      %v1269 = vld [vmem:[%s306 + $0x1858] sm:$0xff]
      %v1270 = vld [vmem:[%s306 + $0x1860] sm:$0xff]
      %v1271 = vld [vmem:[%s306 + $0x1868] sm:$0xff]
      %v1272 = vld [vmem:[%s306 + $0x1870] sm:$0xff]
      %v1273 = vld [vmem:[%s306 + $0x1878] sm:$0xff]
      %v1274 = vld [vmem:[%s310] sm:$0xf]
      %v1276 = vlaneseq
      %v1277 = vshrl.u32 %v1276, 7
      %v1278 = vsub.s32 0, %v1277
      %v1279 = vrot.slane %v1274, %v1278
      %v1280 = vlaneseq
      %v1281 = vshrl.u32 %v1280, 7
      %v1282 = vsub.s32 1, %v1281
      %v1283 = vrot.slane %v1274, %v1282
      %v1284 = vlaneseq
      %v1285 = vshrl.u32 %v1284, 7
      %v1286 = vsub.s32 2, %v1285
      %v1287 = vrot.slane %v1274, %v1286
      %v1288 = vlaneseq
      %v1289 = vshrl.u32 %v1288, 7
      %v1290 = vsub.s32 3, %v1289
      %v1291 = vrot.slane %v1274, %v1290
      %v2080 = vunpack.c.l.b16 %v490
      %v2081 = vunpack.c.h.b16 %v490
      %v2082 = vunpack.c.l.b16 %v491
      %v2083 = vunpack.c.h.b16 %v491
      %v2084 = vunpack.c.l.b16 %v492
      %v2085 = vunpack.c.h.b16 %v492
      %v2086 = vunpack.c.l.b16 %v493
      %v2087 = vunpack.c.h.b16 %v493
      %v2088 = vunpack.c.l.b16 %v494
      %v2089 = vunpack.c.h.b16 %v494
      %v2090 = vunpack.c.l.b16 %v495
      %v2091 = vunpack.c.h.b16 %v495
      %v2092 = vunpack.c.l.b16 %v496
      %v2093 = vunpack.c.h.b16 %v496
      %v2094 = vunpack.c.l.b16 %v497
      %v2095 = vunpack.c.h.b16 %v497
      %v2096 = vunpack.c.l.b16 %v498
      %v2097 = vunpack.c.h.b16 %v498
      %v2098 = vunpack.c.l.b16 %v499
      %v2099 = vunpack.c.h.b16 %v499
      %v2100 = vunpack.c.l.b16 %v500
      %v2101 = vunpack.c.h.b16 %v500
      %v2102 = vunpack.c.l.b16 %v501
      %v2103 = vunpack.c.h.b16 %v501
      %v2104 = vunpack.c.l.b16 %v502
      %v2105 = vunpack.c.h.b16 %v502
      %v2106 = vunpack.c.l.b16 %v503
      %v2107 = vunpack.c.h.b16 %v503
      %v2108 = vunpack.c.l.b16 %v504
      %v2109 = vunpack.c.h.b16 %v504
      %v2110 = vunpack.c.l.b16 %v505
      %v2111 = vunpack.c.h.b16 %v505
      %v2112 = vunpack.c.l.b16 %v506
      %v2113 = vunpack.c.h.b16 %v506
      %v2114 = vunpack.c.l.b16 %v507
      %v2115 = vunpack.c.h.b16 %v507
      %v2116 = vunpack.c.l.b16 %v508
      %v2117 = vunpack.c.h.b16 %v508
      %v2118 = vunpack.c.l.b16 %v509
      %v2119 = vunpack.c.h.b16 %v509
      %v2120 = vunpack.c.l.b16 %v510
      %v2121 = vunpack.c.h.b16 %v510
      %v2122 = vunpack.c.l.b16 %v511
      %v2123 = vunpack.c.h.b16 %v511
      %v2124 = vunpack.c.l.b16 %v512
      %v2125 = vunpack.c.h.b16 %v512
      %v2126 = vunpack.c.l.b16 %v513
      %v2127 = vunpack.c.h.b16 %v513
      %v2128 = vunpack.c.l.b16 %v514
      %v2129 = vunpack.c.h.b16 %v514
      %v2130 = vunpack.c.l.b16 %v515
      %v2131 = vunpack.c.h.b16 %v515
      %v2132 = vunpack.c.l.b16 %v516
      %v2133 = vunpack.c.h.b16 %v516
      %v2134 = vunpack.c.l.b16 %v517
      %v2135 = vunpack.c.h.b16 %v517
      %v2136 = vunpack.c.l.b16 %v518
      %v2137 = vunpack.c.h.b16 %v518
      %v2138 = vunpack.c.l.b16 %v519
      %v2139 = vunpack.c.h.b16 %v519
      %v2140 = vunpack.c.l.b16 %v520
      %v2141 = vunpack.c.h.b16 %v520
      %v2142 = vunpack.c.l.b16 %v521
      %v2143 = vunpack.c.h.b16 %v521
      %v2144 = vunpack.c.l.b16 %v522
      %v2145 = vunpack.c.h.b16 %v522
      %v2146 = vunpack.c.l.b16 %v523
      %v2147 = vunpack.c.h.b16 %v523
      %v2148 = vunpack.c.l.b16 %v524
      %v2149 = vunpack.c.h.b16 %v524
      %v2150 = vunpack.c.l.b16 %v525
      %v2151 = vunpack.c.h.b16 %v525
      %v2152 = vunpack.c.l.b16 %v526
      %v2153 = vunpack.c.h.b16 %v526
      %v2154 = vunpack.c.l.b16 %v527
      %v2155 = vunpack.c.h.b16 %v527
      %v2156 = vunpack.c.l.b16 %v528
      %v2157 = vunpack.c.h.b16 %v528
      %v2158 = vunpack.c.l.b16 %v529
      %v2159 = vunpack.c.h.b16 %v529
      %v2160 = vunpack.c.l.b16 %v530
      %v2161 = vunpack.c.h.b16 %v530
      %v2162 = vunpack.c.l.b16 %v531
      %v2163 = vunpack.c.h.b16 %v531
      %v2164 = vunpack.c.l.b16 %v532
      %v2165 = vunpack.c.h.b16 %v532
      %v2166 = vunpack.c.l.b16 %v533
      %v2167 = vunpack.c.h.b16 %v533
      %v2168 = vunpack.c.l.b16 %v534
      %v2169 = vunpack.c.h.b16 %v534
      %v2170 = vunpack.c.l.b16 %v535
      %v2171 = vunpack.c.h.b16 %v535
      %v2172 = vunpack.c.l.b16 %v536
      %v2173 = vunpack.c.h.b16 %v536
      %v2174 = vunpack.c.l.b16 %v537
      %v2175 = vunpack.c.h.b16 %v537
      %v2176 = vunpack.c.l.b16 %v538
      %v2177 = vunpack.c.h.b16 %v538
      %v2178 = vunpack.c.l.b16 %v539
      %v2179 = vunpack.c.h.b16 %v539
      %v2180 = vunpack.c.l.b16 %v540
      %v2181 = vunpack.c.h.b16 %v540
      %v2182 = vunpack.c.l.b16 %v541
      %v2183 = vunpack.c.h.b16 %v541
      %v2184 = vunpack.c.l.b16 %v542
      %v2185 = vunpack.c.h.b16 %v542
      %v2186 = vunpack.c.l.b16 %v543
      %v2187 = vunpack.c.h.b16 %v543
      %v2188 = vunpack.c.l.b16 %v544
      %v2189 = vunpack.c.h.b16 %v544
      %v2190 = vunpack.c.l.b16 %v545
      %v2191 = vunpack.c.h.b16 %v545
      %v2192 = vunpack.c.l.b16 %v546
      %v2193 = vunpack.c.h.b16 %v546
      %v2194 = vunpack.c.l.b16 %v547
      %v2195 = vunpack.c.h.b16 %v547
      %v2196 = vunpack.c.l.b16 %v548
      %v2197 = vunpack.c.h.b16 %v548
      %v2198 = vunpack.c.l.b16 %v549
      %v2199 = vunpack.c.h.b16 %v549
      %v2200 = vunpack.c.l.b16 %v550
      %v2201 = vunpack.c.h.b16 %v550
      %v2202 = vunpack.c.l.b16 %v551
      %v2203 = vunpack.c.h.b16 %v551
      %v2204 = vunpack.c.l.b16 %v552
      %v2205 = vunpack.c.h.b16 %v552
      %v2206 = vunpack.c.l.b16 %v553
      %v2207 = vunpack.c.h.b16 %v553
      %v2208 = vunpack.c.l.b16 %v554
      %v2209 = vunpack.c.h.b16 %v554
      %v2210 = vunpack.c.l.b16 %v555
      %v2211 = vunpack.c.h.b16 %v555
      %v2212 = vunpack.c.l.b16 %v556
      %v2213 = vunpack.c.h.b16 %v556
      %v2214 = vunpack.c.l.b16 %v557
      %v2215 = vunpack.c.h.b16 %v557
      %v2216 = vunpack.c.l.b16 %v558
      %v2217 = vunpack.c.h.b16 %v558
      %v2218 = vunpack.c.l.b16 %v559
      %v2219 = vunpack.c.h.b16 %v559
      %v2220 = vunpack.c.l.b16 %v560
      %v2221 = vunpack.c.h.b16 %v560
      %v2222 = vunpack.c.l.b16 %v561
      %v2223 = vunpack.c.h.b16 %v561
      %v2224 = vunpack.c.l.b16 %v562
      %v2225 = vunpack.c.h.b16 %v562
      %v2226 = vunpack.c.l.b16 %v563
      %v2227 = vunpack.c.h.b16 %v563
      %v2228 = vunpack.c.l.b16 %v564
      %v2229 = vunpack.c.h.b16 %v564
      %v2230 = vunpack.c.l.b16 %v565
      %v2231 = vunpack.c.h.b16 %v565
      %v2232 = vunpack.c.l.b16 %v566
      %v2233 = vunpack.c.h.b16 %v566
      %v2234 = vunpack.c.l.b16 %v567
      %v2235 = vunpack.c.h.b16 %v567
      %v2236 = vunpack.c.l.b16 %v568
      %v2237 = vunpack.c.h.b16 %v568
      %v2238 = vunpack.c.l.b16 %v569
      %v2239 = vunpack.c.h.b16 %v569
      %v2240 = vunpack.c.l.b16 %v570
      %v2241 = vunpack.c.h.b16 %v570
      %v2242 = vunpack.c.l.b16 %v571
      %v2243 = vunpack.c.h.b16 %v571
      %v2244 = vunpack.c.l.b16 %v572
      %v2245 = vunpack.c.h.b16 %v572
      %v2246 = vunpack.c.l.b16 %v573
      %v2247 = vunpack.c.h.b16 %v573
      %v2248 = vunpack.c.l.b16 %v574
      %v2249 = vunpack.c.h.b16 %v574
      %v2250 = vunpack.c.l.b16 %v575
      %v2251 = vunpack.c.h.b16 %v575
      %v2252 = vunpack.c.l.b16 %v576
      %v2253 = vunpack.c.h.b16 %v576
      %v2254 = vunpack.c.l.b16 %v577
      %v2255 = vunpack.c.h.b16 %v577
      %v2256 = vunpack.c.l.b16 %v578
      %v2257 = vunpack.c.h.b16 %v578
      %v2258 = vunpack.c.l.b16 %v579
      %v2259 = vunpack.c.h.b16 %v579
      %v2260 = vunpack.c.l.b16 %v580
      %v2261 = vunpack.c.h.b16 %v580
      %v2262 = vunpack.c.l.b16 %v581
      %v2263 = vunpack.c.h.b16 %v581
      %v2264 = vunpack.c.l.b16 %v582
      %v2265 = vunpack.c.h.b16 %v582
      %v2266 = vunpack.c.l.b16 %v583
      %v2267 = vunpack.c.h.b16 %v583
      %v2268 = vunpack.c.l.b16 %v584
      %v2269 = vunpack.c.h.b16 %v584
      %v2270 = vunpack.c.l.b16 %v585
      %v2271 = vunpack.c.h.b16 %v585
      %v2272 = vunpack.c.l.b16 %v586
      %v2273 = vunpack.c.h.b16 %v586
      %v2274 = vunpack.c.l.b16 %v587
      %v2275 = vunpack.c.h.b16 %v587
      %v2276 = vunpack.c.l.b16 %v588
      %v2277 = vunpack.c.h.b16 %v588
      %v2278 = vunpack.c.l.b16 %v589
      %v2279 = vunpack.c.h.b16 %v589
      %v2280 = vunpack.c.l.b16 %v590
      %v2281 = vunpack.c.h.b16 %v590
      %v2282 = vunpack.c.l.b16 %v591
      %v2283 = vunpack.c.h.b16 %v591
      %v2284 = vunpack.c.l.b16 %v592
      %v2285 = vunpack.c.h.b16 %v592
      %v2286 = vunpack.c.l.b16 %v593
      %v2287 = vunpack.c.h.b16 %v593
      %v2288 = vunpack.c.l.b16 %v594
      %v2289 = vunpack.c.h.b16 %v594
      %v2290 = vunpack.c.l.b16 %v595
      %v2291 = vunpack.c.h.b16 %v595
      %v2292 = vunpack.c.l.b16 %v596
      %v2293 = vunpack.c.h.b16 %v596
      %v2294 = vunpack.c.l.b16 %v597
      %v2295 = vunpack.c.h.b16 %v597
      %v2296 = vunpack.c.l.b16 %v598
      %v2297 = vunpack.c.h.b16 %v598
      %v2298 = vunpack.c.l.b16 %v599
      %v2299 = vunpack.c.h.b16 %v599
      %v2300 = vunpack.c.l.b16 %v600
      %v2301 = vunpack.c.h.b16 %v600
      %v2302 = vunpack.c.l.b16 %v601
      %v2303 = vunpack.c.h.b16 %v601
      %v2304 = vunpack.c.l.b16 %v602
      %v2305 = vunpack.c.h.b16 %v602
      %v2306 = vunpack.c.l.b16 %v603
      %v2307 = vunpack.c.h.b16 %v603
      %v2308 = vunpack.c.l.b16 %v604
      %v2309 = vunpack.c.h.b16 %v604
      %v2310 = vunpack.c.l.b16 %v605
      %v2311 = vunpack.c.h.b16 %v605
      %v2312 = vunpack.c.l.b16 %v606
      %v2313 = vunpack.c.h.b16 %v606
      %v2314 = vunpack.c.l.b16 %v607
      %v2315 = vunpack.c.h.b16 %v607
      %v2316 = vunpack.c.l.b16 %v608
      %v2317 = vunpack.c.h.b16 %v608
      %v2318 = vunpack.c.l.b16 %v609
      %v2319 = vunpack.c.h.b16 %v609
      %v2320 = vunpack.c.l.b16 %v610
      %v2321 = vunpack.c.h.b16 %v610
      %v2322 = vunpack.c.l.b16 %v611
      %v2323 = vunpack.c.h.b16 %v611
      %v2324 = vunpack.c.l.b16 %v612
      %v2325 = vunpack.c.h.b16 %v612
      %v2326 = vunpack.c.l.b16 %v613
      %v2327 = vunpack.c.h.b16 %v613
      %v2328 = vunpack.c.l.b16 %v614
      %v2329 = vunpack.c.h.b16 %v614
      %v2330 = vunpack.c.l.b16 %v615
      %v2331 = vunpack.c.h.b16 %v615
      %v2332 = vunpack.c.l.b16 %v616
      %v2333 = vunpack.c.h.b16 %v616
      %v2334 = vunpack.c.l.b16 %v617
      %v2335 = vunpack.c.h.b16 %v617
      %v2336 = vunpack.c.l.b16 %v618
      %v2337 = vunpack.c.h.b16 %v618
      %v2338 = vunpack.c.l.b16 %v619
      %v2339 = vunpack.c.h.b16 %v619
      %v2340 = vunpack.c.l.b16 %v620
      %v2341 = vunpack.c.h.b16 %v620
      %v2342 = vunpack.c.l.b16 %v621
      %v2343 = vunpack.c.h.b16 %v621
      %v2344 = vunpack.c.l.b16 %v622
      %v2345 = vunpack.c.h.b16 %v622
      %v2346 = vunpack.c.l.b16 %v623
      %v2347 = vunpack.c.h.b16 %v623
      %v2348 = vunpack.c.l.b16 %v624
      %v2349 = vunpack.c.h.b16 %v624
      %v2350 = vunpack.c.l.b16 %v625
      %v2351 = vunpack.c.h.b16 %v625
      %v2352 = vunpack.c.l.b16 %v626
      %v2353 = vunpack.c.h.b16 %v626
      %v2354 = vunpack.c.l.b16 %v627
      %v2355 = vunpack.c.h.b16 %v627
      %v2356 = vunpack.c.l.b16 %v628
      %v2357 = vunpack.c.h.b16 %v628
      %v2358 = vunpack.c.l.b16 %v629
      %v2359 = vunpack.c.h.b16 %v629
      %v2360 = vunpack.c.l.b16 %v630
      %v2361 = vunpack.c.h.b16 %v630
      %v2362 = vunpack.c.l.b16 %v631
      %v2363 = vunpack.c.h.b16 %v631
      %v2364 = vunpack.c.l.b16 %v632
      %v2365 = vunpack.c.h.b16 %v632
      %v2366 = vunpack.c.l.b16 %v633
      %v2367 = vunpack.c.h.b16 %v633
      %v2368 = vunpack.c.l.b16 %v634
      %v2369 = vunpack.c.h.b16 %v634
      %v2370 = vunpack.c.l.b16 %v635
      %v2371 = vunpack.c.h.b16 %v635
      %v2372 = vunpack.c.l.b16 %v636
      %v2373 = vunpack.c.h.b16 %v636
      %v2374 = vunpack.c.l.b16 %v637
      %v2375 = vunpack.c.h.b16 %v637
      %v2376 = vunpack.c.l.b16 %v638
      %v2377 = vunpack.c.h.b16 %v638
      %v2378 = vunpack.c.l.b16 %v639
      %v2379 = vunpack.c.h.b16 %v639
      %v2380 = vunpack.c.l.b16 %v640
      %v2381 = vunpack.c.h.b16 %v640
      %v2382 = vunpack.c.l.b16 %v641
      %v2383 = vunpack.c.h.b16 %v641
      %v2384 = vunpack.c.l.b16 %v642
      %v2385 = vunpack.c.h.b16 %v642
      %v2386 = vunpack.c.l.b16 %v643
      %v2387 = vunpack.c.h.b16 %v643
      %v2388 = vunpack.c.l.b16 %v644
      %v2389 = vunpack.c.h.b16 %v644
      %v2390 = vunpack.c.l.b16 %v645
      %v2391 = vunpack.c.h.b16 %v645
      %v2392 = vunpack.c.l.b16 %v646
      %v2393 = vunpack.c.h.b16 %v646
      %v2394 = vunpack.c.l.b16 %v647
      %v2395 = vunpack.c.h.b16 %v647
      %v2396 = vunpack.c.l.b16 %v648
      %v2397 = vunpack.c.h.b16 %v648
      %v2398 = vunpack.c.l.b16 %v649
      %v2399 = vunpack.c.h.b16 %v649
      %v2400 = vunpack.c.l.b16 %v650
      %v2401 = vunpack.c.h.b16 %v650
      %v2402 = vunpack.c.l.b16 %v651
      %v2403 = vunpack.c.h.b16 %v651
      %v2404 = vunpack.c.l.b16 %v652
      %v2405 = vunpack.c.h.b16 %v652
      %v2406 = vunpack.c.l.b16 %v653
      %v2407 = vunpack.c.h.b16 %v653
      %v2408 = vunpack.c.l.b16 %v654
      %v2409 = vunpack.c.h.b16 %v654
      %v2410 = vunpack.c.l.b16 %v655
      %v2411 = vunpack.c.h.b16 %v655
      %v2412 = vunpack.c.l.b16 %v656
      %v2413 = vunpack.c.h.b16 %v656
      %v2414 = vunpack.c.l.b16 %v657
      %v2415 = vunpack.c.h.b16 %v657
      %v2416 = vunpack.c.l.b16 %v658
      %v2417 = vunpack.c.h.b16 %v658
      %v2418 = vunpack.c.l.b16 %v659
      %v2419 = vunpack.c.h.b16 %v659
      %v2420 = vunpack.c.l.b16 %v660
      %v2421 = vunpack.c.h.b16 %v660
      %v2422 = vunpack.c.l.b16 %v661
      %v2423 = vunpack.c.h.b16 %v661
      %v2424 = vunpack.c.l.b16 %v662
      %v2425 = vunpack.c.h.b16 %v662
      %v2426 = vunpack.c.l.b16 %v663
      %v2427 = vunpack.c.h.b16 %v663
      %v2428 = vunpack.c.l.b16 %v664
      %v2429 = vunpack.c.h.b16 %v664
      %v2430 = vunpack.c.l.b16 %v665
      %v2431 = vunpack.c.h.b16 %v665
      %v2432 = vunpack.c.l.b16 %v666
      %v2433 = vunpack.c.h.b16 %v666
      %v2434 = vunpack.c.l.b16 %v667
      %v2435 = vunpack.c.h.b16 %v667
      %v2436 = vunpack.c.l.b16 %v668
      %v2437 = vunpack.c.h.b16 %v668
      %v2438 = vunpack.c.l.b16 %v669
      %v2439 = vunpack.c.h.b16 %v669
      %v2440 = vunpack.c.l.b16 %v670
      %v2441 = vunpack.c.h.b16 %v670
      %v2442 = vunpack.c.l.b16 %v671
      %v2443 = vunpack.c.h.b16 %v671
      %v2444 = vunpack.c.l.b16 %v672
      %v2445 = vunpack.c.h.b16 %v672
      %v2446 = vunpack.c.l.b16 %v673
      %v2447 = vunpack.c.h.b16 %v673
      %v2448 = vunpack.c.l.b16 %v674
      %v2449 = vunpack.c.h.b16 %v674
      %v2450 = vunpack.c.l.b16 %v675
      %v2451 = vunpack.c.h.b16 %v675
      %v2452 = vunpack.c.l.b16 %v676
      %v2453 = vunpack.c.h.b16 %v676
      %v2454 = vunpack.c.l.b16 %v677
      %v2455 = vunpack.c.h.b16 %v677
      %v2456 = vunpack.c.l.b16 %v678
      %v2457 = vunpack.c.h.b16 %v678
      %v2458 = vunpack.c.l.b16 %v679
      %v2459 = vunpack.c.h.b16 %v679
      %v2460 = vunpack.c.l.b16 %v680
      %v2461 = vunpack.c.h.b16 %v680
      %v2462 = vunpack.c.l.b16 %v681
      %v2463 = vunpack.c.h.b16 %v681
      %v2464 = vunpack.c.l.b16 %v682
      %v2465 = vunpack.c.h.b16 %v682
      %v2466 = vunpack.c.l.b16 %v683
      %v2467 = vunpack.c.h.b16 %v683
      %v2468 = vunpack.c.l.b16 %v684
      %v2469 = vunpack.c.h.b16 %v684
      %v2470 = vunpack.c.l.b16 %v685
      %v2471 = vunpack.c.h.b16 %v685
      %v2472 = vunpack.c.l.b16 %v686
      %v2473 = vunpack.c.h.b16 %v686
      %v2474 = vunpack.c.l.b16 %v687
      %v2475 = vunpack.c.h.b16 %v687
      %v2476 = vunpack.c.l.b16 %v688
      %v2477 = vunpack.c.h.b16 %v688
      %v2478 = vunpack.c.l.b16 %v689
      %v2479 = vunpack.c.h.b16 %v689
      %v2480 = vunpack.c.l.b16 %v690
      %v2481 = vunpack.c.h.b16 %v690
      %v2482 = vunpack.c.l.b16 %v691
      %v2483 = vunpack.c.h.b16 %v691
      %v2484 = vunpack.c.l.b16 %v692
      %v2485 = vunpack.c.h.b16 %v692
      %v2486 = vunpack.c.l.b16 %v693
      %v2487 = vunpack.c.h.b16 %v693
      %v2488 = vunpack.c.l.b16 %v694
      %v2489 = vunpack.c.h.b16 %v694
      %v2490 = vunpack.c.l.b16 %v695
      %v2491 = vunpack.c.h.b16 %v695
      %v2492 = vunpack.c.l.b16 %v696
      %v2493 = vunpack.c.h.b16 %v696
      %v2494 = vunpack.c.l.b16 %v697
      %v2495 = vunpack.c.h.b16 %v697
      %v2496 = vunpack.c.l.b16 %v698
      %v2497 = vunpack.c.h.b16 %v698
      %v2498 = vunpack.c.l.b16 %v699
      %v2499 = vunpack.c.h.b16 %v699
      %v2500 = vunpack.c.l.b16 %v700
      %v2501 = vunpack.c.h.b16 %v700
      %v2502 = vunpack.c.l.b16 %v701
      %v2503 = vunpack.c.h.b16 %v701
      %v2504 = vunpack.c.l.b16 %v702
      %v2505 = vunpack.c.h.b16 %v702
      %v2506 = vunpack.c.l.b16 %v703
      %v2507 = vunpack.c.h.b16 %v703
      %v2508 = vunpack.c.l.b16 %v704
      %v2509 = vunpack.c.h.b16 %v704
      %v2510 = vunpack.c.l.b16 %v705
      %v2511 = vunpack.c.h.b16 %v705
      %v2512 = vunpack.c.l.b16 %v706
      %v2513 = vunpack.c.h.b16 %v706
      %v2514 = vunpack.c.l.b16 %v707
      %v2515 = vunpack.c.h.b16 %v707
      %v2516 = vunpack.c.l.b16 %v708
      %v2517 = vunpack.c.h.b16 %v708
      %v2518 = vunpack.c.l.b16 %v709
      %v2519 = vunpack.c.h.b16 %v709
      %v2520 = vunpack.c.l.b16 %v710
      %v2521 = vunpack.c.h.b16 %v710
      %v2522 = vunpack.c.l.b16 %v711
      %v2523 = vunpack.c.h.b16 %v711
      %v2524 = vunpack.c.l.b16 %v712
      %v2525 = vunpack.c.h.b16 %v712
      %v2526 = vunpack.c.l.b16 %v713
      %v2527 = vunpack.c.h.b16 %v713
      %v2528 = vunpack.c.l.b16 %v714
      %v2529 = vunpack.c.h.b16 %v714
      %v2530 = vunpack.c.l.b16 %v715
      %v2531 = vunpack.c.h.b16 %v715
      %v2532 = vunpack.c.l.b16 %v716
      %v2533 = vunpack.c.h.b16 %v716
      %v2534 = vunpack.c.l.b16 %v717
      %v2535 = vunpack.c.h.b16 %v717
      %v2536 = vunpack.c.l.b16 %v718
      %v2537 = vunpack.c.h.b16 %v718
      %v2538 = vunpack.c.l.b16 %v719
      %v2539 = vunpack.c.h.b16 %v719
      %v2540 = vunpack.c.l.b16 %v720
      %v2541 = vunpack.c.h.b16 %v720
      %v2542 = vunpack.c.l.b16 %v721
      %v2543 = vunpack.c.h.b16 %v721
      %v2544 = vunpack.c.l.b16 %v722
      %v2545 = vunpack.c.h.b16 %v722
      %v2546 = vunpack.c.l.b16 %v723
      %v2547 = vunpack.c.h.b16 %v723
      %v2548 = vunpack.c.l.b16 %v724
      %v2549 = vunpack.c.h.b16 %v724
      %v2550 = vunpack.c.l.b16 %v725
      %v2551 = vunpack.c.h.b16 %v725
      %v2552 = vunpack.c.l.b16 %v726
      %v2553 = vunpack.c.h.b16 %v726
      %v2554 = vunpack.c.l.b16 %v727
      %v2555 = vunpack.c.h.b16 %v727
      %v2556 = vunpack.c.l.b16 %v728
      %v2557 = vunpack.c.h.b16 %v728
      %v2558 = vunpack.c.l.b16 %v729
      %v2559 = vunpack.c.h.b16 %v729
      %v2560 = vunpack.c.l.b16 %v730
      %v2561 = vunpack.c.h.b16 %v730
      %v2562 = vunpack.c.l.b16 %v731
      %v2563 = vunpack.c.h.b16 %v731
      %v2564 = vunpack.c.l.b16 %v732
      %v2565 = vunpack.c.h.b16 %v732
      %v2566 = vunpack.c.l.b16 %v733
      %v2567 = vunpack.c.h.b16 %v733
      %v2568 = vunpack.c.l.b16 %v734
      %v2569 = vunpack.c.h.b16 %v734
      %v2570 = vunpack.c.l.b16 %v735
      %v2571 = vunpack.c.h.b16 %v735
      %v2572 = vunpack.c.l.b16 %v736
      %v2573 = vunpack.c.h.b16 %v736
      %v2574 = vunpack.c.l.b16 %v737
      %v2575 = vunpack.c.h.b16 %v737
      %v2576 = vunpack.c.l.b16 %v738
      %v2577 = vunpack.c.h.b16 %v738
      %v2578 = vunpack.c.l.b16 %v739
      %v2579 = vunpack.c.h.b16 %v739
      %v2580 = vunpack.c.l.b16 %v740
      %v2581 = vunpack.c.h.b16 %v740
      %v2582 = vunpack.c.l.b16 %v741
      %v2583 = vunpack.c.h.b16 %v741
      %v2584 = vunpack.c.l.b16 %v742
      %v2585 = vunpack.c.h.b16 %v742
      %v2586 = vunpack.c.l.b16 %v743
      %v2587 = vunpack.c.h.b16 %v743
      %v2588 = vunpack.c.l.b16 %v744
      %v2589 = vunpack.c.h.b16 %v744
      %v2590 = vunpack.c.l.b16 %v745
      %v2591 = vunpack.c.h.b16 %v745
      %v2592 = vunpack.c.l.b16 %v746
      %v2593 = vunpack.c.h.b16 %v746
      %v2594 = vunpack.c.l.b16 %v747
      %v2595 = vunpack.c.h.b16 %v747
      %v2596 = vunpack.c.l.b16 %v748
      %v2597 = vunpack.c.h.b16 %v748
      %v2598 = vunpack.c.l.b16 %v749
      %v2599 = vunpack.c.h.b16 %v749
      %v2600 = vunpack.c.l.b16 %v750
      %v2601 = vunpack.c.h.b16 %v750
      %v2602 = vunpack.c.l.b16 %v751
      %v2603 = vunpack.c.h.b16 %v751
      %v2604 = vunpack.c.l.b16 %v752
      %v2605 = vunpack.c.h.b16 %v752
      %v2606 = vunpack.c.l.b16 %v753
      %v2607 = vunpack.c.h.b16 %v753
      %v2608 = vunpack.c.l.b16 %v754
      %v2609 = vunpack.c.h.b16 %v754
      %v2610 = vunpack.c.l.b16 %v755
      %v2611 = vunpack.c.h.b16 %v755
      %v2612 = vunpack.c.l.b16 %v756
      %v2613 = vunpack.c.h.b16 %v756
      %v2614 = vunpack.c.l.b16 %v757
      %v2615 = vunpack.c.h.b16 %v757
      %v2616 = vunpack.c.l.b16 %v758
      %v2617 = vunpack.c.h.b16 %v758
      %v2618 = vunpack.c.l.b16 %v759
      %v2619 = vunpack.c.h.b16 %v759
      %v2620 = vunpack.c.l.b16 %v760
      %v2621 = vunpack.c.h.b16 %v760
      %v2622 = vunpack.c.l.b16 %v761
      %v2623 = vunpack.c.h.b16 %v761
      %v2624 = vunpack.c.l.b16 %v762
      %v2625 = vunpack.c.h.b16 %v762
      %v2626 = vunpack.c.l.b16 %v763
      %v2627 = vunpack.c.h.b16 %v763
      %v2628 = vunpack.c.l.b16 %v764
      %v2629 = vunpack.c.h.b16 %v764
      %v2630 = vunpack.c.l.b16 %v765
      %v2631 = vunpack.c.h.b16 %v765
      %v2632 = vunpack.c.l.b16 %v766
      %v2633 = vunpack.c.h.b16 %v766
      %v2634 = vunpack.c.l.b16 %v767
      %v2635 = vunpack.c.h.b16 %v767
      %v2636 = vunpack.c.l.b16 %v768
      %v2637 = vunpack.c.h.b16 %v768
      %v2638 = vunpack.c.l.b16 %v769
      %v2639 = vunpack.c.h.b16 %v769
      %v2640 = vunpack.c.l.b16 %v770
      %v2641 = vunpack.c.h.b16 %v770
      %v2642 = vunpack.c.l.b16 %v771
      %v2643 = vunpack.c.h.b16 %v771
      %v2644 = vunpack.c.l.b16 %v772
      %v2645 = vunpack.c.h.b16 %v772
      %v2646 = vunpack.c.l.b16 %v773
      %v2647 = vunpack.c.h.b16 %v773
      %v2648 = vunpack.c.l.b16 %v774
      %v2649 = vunpack.c.h.b16 %v774
      %v2650 = vunpack.c.l.b16 %v775
      %v2651 = vunpack.c.h.b16 %v775
      %v2652 = vunpack.c.l.b16 %v776
      %v2653 = vunpack.c.h.b16 %v776
      %v2654 = vunpack.c.l.b16 %v777
      %v2655 = vunpack.c.h.b16 %v777
      %v2656 = vunpack.c.l.b16 %v778
      %v2657 = vunpack.c.h.b16 %v778
      %v2658 = vunpack.c.l.b16 %v779
      %v2659 = vunpack.c.h.b16 %v779
      %v2660 = vunpack.c.l.b16 %v780
      %v2661 = vunpack.c.h.b16 %v780
      %v2662 = vunpack.c.l.b16 %v781
      %v2663 = vunpack.c.h.b16 %v781
      %v2664 = vunpack.c.l.b16 %v782
      %v2665 = vunpack.c.h.b16 %v782
      %v2666 = vunpack.c.l.b16 %v783
      %v2667 = vunpack.c.h.b16 %v783
      %v2668 = vunpack.c.l.b16 %v784
      %v2669 = vunpack.c.h.b16 %v784
      %v2670 = vunpack.c.l.b16 %v785
      %v2671 = vunpack.c.h.b16 %v785
      %v2672 = vunpack.c.l.b16 %v786
      %v2673 = vunpack.c.h.b16 %v786
      %v2674 = vunpack.c.l.b16 %v787
      %v2675 = vunpack.c.h.b16 %v787
      %v2676 = vunpack.c.l.b16 %v788
      %v2677 = vunpack.c.h.b16 %v788
      %v2678 = vunpack.c.l.b16 %v789
      %v2679 = vunpack.c.h.b16 %v789
      %v2680 = vunpack.c.l.b16 %v790
      %v2681 = vunpack.c.h.b16 %v790
      %v2682 = vunpack.c.l.b16 %v791
      %v2683 = vunpack.c.h.b16 %v791
      %v2684 = vunpack.c.l.b16 %v792
      %v2685 = vunpack.c.h.b16 %v792
      %v2686 = vunpack.c.l.b16 %v793
      %v2687 = vunpack.c.h.b16 %v793
      %v2688 = vunpack.c.l.b16 %v794
      %v2689 = vunpack.c.h.b16 %v794
      %v2690 = vunpack.c.l.b16 %v795
      %v2691 = vunpack.c.h.b16 %v795
      %v2692 = vunpack.c.l.b16 %v796
      %v2693 = vunpack.c.h.b16 %v796
      %v2694 = vunpack.c.l.b16 %v797
      %v2695 = vunpack.c.h.b16 %v797
      %v2696 = vunpack.c.l.b16 %v798
      %v2697 = vunpack.c.h.b16 %v798
      %v2698 = vunpack.c.l.b16 %v799
      %v2699 = vunpack.c.h.b16 %v799
      %v2700 = vunpack.c.l.b16 %v800
      %v2701 = vunpack.c.h.b16 %v800
      %v2702 = vunpack.c.l.b16 %v801
      %v2703 = vunpack.c.h.b16 %v801
      %v2704 = vunpack.c.l.b16 %v802
      %v2705 = vunpack.c.h.b16 %v802
      %v2706 = vunpack.c.l.b16 %v803
      %v2707 = vunpack.c.h.b16 %v803
      %v2708 = vunpack.c.l.b16 %v804
      %v2709 = vunpack.c.h.b16 %v804
      %v2710 = vunpack.c.l.b16 %v805
      %v2711 = vunpack.c.h.b16 %v805
      %v2712 = vunpack.c.l.b16 %v806
      %v2713 = vunpack.c.h.b16 %v806
      %v2714 = vunpack.c.l.b16 %v807
      %v2715 = vunpack.c.h.b16 %v807
      %v2716 = vunpack.c.l.b16 %v808
      %v2717 = vunpack.c.h.b16 %v808
      %v2718 = vunpack.c.l.b16 %v809
      %v2719 = vunpack.c.h.b16 %v809
      %v2720 = vunpack.c.l.b16 %v810
      %v2721 = vunpack.c.h.b16 %v810
      %v2722 = vunpack.c.l.b16 %v811
      %v2723 = vunpack.c.h.b16 %v811
      %v2724 = vunpack.c.l.b16 %v812
      %v2725 = vunpack.c.h.b16 %v812
      %v2726 = vunpack.c.l.b16 %v813
      %v2727 = vunpack.c.h.b16 %v813
      %v2728 = vunpack.c.l.b16 %v814
      %v2729 = vunpack.c.h.b16 %v814
      %v2730 = vunpack.c.l.b16 %v815
      %v2731 = vunpack.c.h.b16 %v815
      %v2732 = vunpack.c.l.b16 %v816
      %v2733 = vunpack.c.h.b16 %v816
      %v2734 = vunpack.c.l.b16 %v817
      %v2735 = vunpack.c.h.b16 %v817
      %v2736 = vunpack.c.l.b16 %v818
      %v2737 = vunpack.c.h.b16 %v818
      %v2738 = vunpack.c.l.b16 %v819
      %v2739 = vunpack.c.h.b16 %v819
      %v2740 = vunpack.c.l.b16 %v820
      %v2741 = vunpack.c.h.b16 %v820
      %v2742 = vunpack.c.l.b16 %v821
      %v2743 = vunpack.c.h.b16 %v821
      %v2744 = vunpack.c.l.b16 %v822
      %v2745 = vunpack.c.h.b16 %v822
      %v2746 = vunpack.c.l.b16 %v823
      %v2747 = vunpack.c.h.b16 %v823
      %v2748 = vunpack.c.l.b16 %v824
      %v2749 = vunpack.c.h.b16 %v824
      %v2750 = vunpack.c.l.b16 %v825
      %v2751 = vunpack.c.h.b16 %v825
      %v2752 = vunpack.c.l.b16 %v826
      %v2753 = vunpack.c.h.b16 %v826
      %v2754 = vunpack.c.l.b16 %v827
      %v2755 = vunpack.c.h.b16 %v827
      %v2756 = vunpack.c.l.b16 %v828
      %v2757 = vunpack.c.h.b16 %v828
      %v2758 = vunpack.c.l.b16 %v829
      %v2759 = vunpack.c.h.b16 %v829
      %v2760 = vunpack.c.l.b16 %v830
      %v2761 = vunpack.c.h.b16 %v830
      %v2762 = vunpack.c.l.b16 %v831
      %v2763 = vunpack.c.h.b16 %v831
      %v2764 = vunpack.c.l.b16 %v832
      %v2765 = vunpack.c.h.b16 %v832
      %v2766 = vunpack.c.l.b16 %v833
      %v2767 = vunpack.c.h.b16 %v833
      %v2768 = vunpack.c.l.b16 %v834
      %v2769 = vunpack.c.h.b16 %v834
      %v2770 = vunpack.c.l.b16 %v835
      %v2771 = vunpack.c.h.b16 %v835
      %v2772 = vunpack.c.l.b16 %v836
      %v2773 = vunpack.c.h.b16 %v836
      %v2774 = vunpack.c.l.b16 %v837
      %v2775 = vunpack.c.h.b16 %v837
      %v2776 = vunpack.c.l.b16 %v838
      %v2777 = vunpack.c.h.b16 %v838
      %v2778 = vunpack.c.l.b16 %v839
      %v2779 = vunpack.c.h.b16 %v839
      %v2780 = vunpack.c.l.b16 %v840
      %v2781 = vunpack.c.h.b16 %v840
      %v2782 = vunpack.c.l.b16 %v841
      %v2783 = vunpack.c.h.b16 %v841
      %v2784 = vunpack.c.l.b16 %v842
      %v2785 = vunpack.c.h.b16 %v842
      %v2786 = vunpack.c.l.b16 %v843
      %v2787 = vunpack.c.h.b16 %v843
      %v2788 = vunpack.c.l.b16 %v844
      %v2789 = vunpack.c.h.b16 %v844
      %v2790 = vunpack.c.l.b16 %v845
      %v2791 = vunpack.c.h.b16 %v845
      %v2792 = vunpack.c.l.b16 %v846
      %v2793 = vunpack.c.h.b16 %v846
      %v2794 = vunpack.c.l.b16 %v847
      %v2795 = vunpack.c.h.b16 %v847
      %v2796 = vunpack.c.l.b16 %v848
      %v2797 = vunpack.c.h.b16 %v848
      %v2798 = vunpack.c.l.b16 %v849
      %v2799 = vunpack.c.h.b16 %v849
      %v2800 = vunpack.c.l.b16 %v850
      %v2801 = vunpack.c.h.b16 %v850
      %v2802 = vunpack.c.l.b16 %v851
      %v2803 = vunpack.c.h.b16 %v851
      %v2804 = vunpack.c.l.b16 %v852
      %v2805 = vunpack.c.h.b16 %v852
      %v2806 = vunpack.c.l.b16 %v853
      %v2807 = vunpack.c.h.b16 %v853
      %v2808 = vunpack.c.l.b16 %v854
      %v2809 = vunpack.c.h.b16 %v854
      %v2810 = vunpack.c.l.b16 %v855
      %v2811 = vunpack.c.h.b16 %v855
      %v2812 = vunpack.c.l.b16 %v856
      %v2813 = vunpack.c.h.b16 %v856
      %v2814 = vunpack.c.l.b16 %v857
      %v2815 = vunpack.c.h.b16 %v857
      %v2816 = vunpack.c.l.b16 %v858
      %v2817 = vunpack.c.h.b16 %v858
      %v2818 = vunpack.c.l.b16 %v859
      %v2819 = vunpack.c.h.b16 %v859
      %v2820 = vunpack.c.l.b16 %v860
      %v2821 = vunpack.c.h.b16 %v860
      %v2822 = vunpack.c.l.b16 %v861
      %v2823 = vunpack.c.h.b16 %v861
      %v2824 = vunpack.c.l.b16 %v862
      %v2825 = vunpack.c.h.b16 %v862
      %v2826 = vunpack.c.l.b16 %v863
      %v2827 = vunpack.c.h.b16 %v863
      %v2828 = vunpack.c.l.b16 %v864
      %v2829 = vunpack.c.h.b16 %v864
      %v2830 = vunpack.c.l.b16 %v865
      %v2831 = vunpack.c.h.b16 %v865
      %v2832 = vunpack.c.l.b16 %v866
      %v2833 = vunpack.c.h.b16 %v866
      %v2834 = vunpack.c.l.b16 %v867
      %v2835 = vunpack.c.h.b16 %v867
      %v2836 = vunpack.c.l.b16 %v868
      %v2837 = vunpack.c.h.b16 %v868
      %v2838 = vunpack.c.l.b16 %v869
      %v2839 = vunpack.c.h.b16 %v869
      %v2840 = vunpack.c.l.b16 %v870
      %v2841 = vunpack.c.h.b16 %v870
      %v2842 = vunpack.c.l.b16 %v871
      %v2843 = vunpack.c.h.b16 %v871
      %v2844 = vunpack.c.l.b16 %v872
      %v2845 = vunpack.c.h.b16 %v872
      %v2846 = vunpack.c.l.b16 %v873
      %v2847 = vunpack.c.h.b16 %v873
      %v2848 = vunpack.c.l.b16 %v874
      %v2849 = vunpack.c.h.b16 %v874
      %v2850 = vunpack.c.l.b16 %v875
      %v2851 = vunpack.c.h.b16 %v875
      %v2852 = vunpack.c.l.b16 %v876
      %v2853 = vunpack.c.h.b16 %v876
      %v2854 = vunpack.c.l.b16 %v877
      %v2855 = vunpack.c.h.b16 %v877
      %v2856 = vunpack.c.l.b16 %v878
      %v2857 = vunpack.c.h.b16 %v878
      %v2858 = vunpack.c.l.b16 %v879
      %v2859 = vunpack.c.h.b16 %v879
      %v2860 = vunpack.c.l.b16 %v880
      %v2861 = vunpack.c.h.b16 %v880
      %v2862 = vunpack.c.l.b16 %v881
      %v2863 = vunpack.c.h.b16 %v881
      %v2864 = vunpack.c.l.b16 %v882
      %v2865 = vunpack.c.h.b16 %v882
      %v2866 = vunpack.c.l.b16 %v883
      %v2867 = vunpack.c.h.b16 %v883
      %v2868 = vunpack.c.l.b16 %v884
      %v2869 = vunpack.c.h.b16 %v884
      %v2870 = vunpack.c.l.b16 %v885
      %v2871 = vunpack.c.h.b16 %v885
      %v2872 = vunpack.c.l.b16 %v886
      %v2873 = vunpack.c.h.b16 %v886
      %v2874 = vunpack.c.l.b16 %v887
      %v2875 = vunpack.c.h.b16 %v887
      %v2876 = vunpack.c.l.b16 %v888
      %v2877 = vunpack.c.h.b16 %v888
      %v2878 = vunpack.c.l.b16 %v889
      %v2879 = vunpack.c.h.b16 %v889
      %v2880 = vunpack.c.l.b16 %v890
      %v2881 = vunpack.c.h.b16 %v890
      %v2882 = vunpack.c.l.b16 %v891
      %v2883 = vunpack.c.h.b16 %v891
      %v2884 = vunpack.c.l.b16 %v892
      %v2885 = vunpack.c.h.b16 %v892
      %v2886 = vunpack.c.l.b16 %v893
      %v2887 = vunpack.c.h.b16 %v893
      %v2888 = vunpack.c.l.b16 %v894
      %v2889 = vunpack.c.h.b16 %v894
      %v2890 = vunpack.c.l.b16 %v895
      %v2891 = vunpack.c.h.b16 %v895
      %v2892 = vunpack.c.l.b16 %v896
      %v2893 = vunpack.c.h.b16 %v896
      %v2894 = vunpack.c.l.b16 %v897
      %v2895 = vunpack.c.h.b16 %v897
      %v2896 = vunpack.c.l.b16 %v898
      %v2897 = vunpack.c.h.b16 %v898
      %v2898 = vunpack.c.l.b16 %v899
      %v2899 = vunpack.c.h.b16 %v899
      %v2900 = vunpack.c.l.b16 %v900
      %v2901 = vunpack.c.h.b16 %v900
      %v2902 = vunpack.c.l.b16 %v901
      %v2903 = vunpack.c.h.b16 %v901
      %v2904 = vunpack.c.l.b16 %v902
      %v2905 = vunpack.c.h.b16 %v902
      %v2906 = vunpack.c.l.b16 %v903
      %v2907 = vunpack.c.h.b16 %v903
      %v2908 = vunpack.c.l.b16 %v904
      %v2909 = vunpack.c.h.b16 %v904
      %v2910 = vunpack.c.l.b16 %v905
      %v2911 = vunpack.c.h.b16 %v905
      %v2912 = vunpack.c.l.b16 %v906
      %v2913 = vunpack.c.h.b16 %v906
      %v2914 = vunpack.c.l.b16 %v907
      %v2915 = vunpack.c.h.b16 %v907
      %v2916 = vunpack.c.l.b16 %v908
      %v2917 = vunpack.c.h.b16 %v908
      %v2918 = vunpack.c.l.b16 %v909
      %v2919 = vunpack.c.h.b16 %v909
      %v2920 = vunpack.c.l.b16 %v910
      %v2921 = vunpack.c.h.b16 %v910
      %v2922 = vunpack.c.l.b16 %v911
      %v2923 = vunpack.c.h.b16 %v911
      %v2924 = vunpack.c.l.b16 %v912
      %v2925 = vunpack.c.h.b16 %v912
      %v2926 = vunpack.c.l.b16 %v913
      %v2927 = vunpack.c.h.b16 %v913
      %v2928 = vunpack.c.l.b16 %v914
      %v2929 = vunpack.c.h.b16 %v914
      %v2930 = vunpack.c.l.b16 %v915
      %v2931 = vunpack.c.h.b16 %v915
      %v2932 = vunpack.c.l.b16 %v916
      %v2933 = vunpack.c.h.b16 %v916
      %v2934 = vunpack.c.l.b16 %v917
      %v2935 = vunpack.c.h.b16 %v917
      %v2936 = vunpack.c.l.b16 %v918
      %v2937 = vunpack.c.h.b16 %v918
      %v2938 = vunpack.c.l.b16 %v919
      %v2939 = vunpack.c.h.b16 %v919
      %v2940 = vunpack.c.l.b16 %v920
      %v2941 = vunpack.c.h.b16 %v920
      %v2942 = vunpack.c.l.b16 %v921
      %v2943 = vunpack.c.h.b16 %v921
      %v2944 = vunpack.c.l.b16 %v922
      %v2945 = vunpack.c.h.b16 %v922
      %v2946 = vunpack.c.l.b16 %v923
      %v2947 = vunpack.c.h.b16 %v923
      %v2948 = vunpack.c.l.b16 %v924
      %v2949 = vunpack.c.h.b16 %v924
      %v2950 = vunpack.c.l.b16 %v925
      %v2951 = vunpack.c.h.b16 %v925
      %v2952 = vunpack.c.l.b16 %v926
      %v2953 = vunpack.c.h.b16 %v926
      %v2954 = vunpack.c.l.b16 %v927
      %v2955 = vunpack.c.h.b16 %v927
      %v2956 = vunpack.c.l.b16 %v928
      %v2957 = vunpack.c.h.b16 %v928
      %v2958 = vunpack.c.l.b16 %v929
      %v2959 = vunpack.c.h.b16 %v929
      %v2960 = vunpack.c.l.b16 %v930
      %v2961 = vunpack.c.h.b16 %v930
      %v2962 = vunpack.c.l.b16 %v931
      %v2963 = vunpack.c.h.b16 %v931
      %v2964 = vunpack.c.l.b16 %v932
      %v2965 = vunpack.c.h.b16 %v932
      %v2966 = vunpack.c.l.b16 %v933
      %v2967 = vunpack.c.h.b16 %v933
      %v2968 = vunpack.c.l.b16 %v934
      %v2969 = vunpack.c.h.b16 %v934
      %v2970 = vunpack.c.l.b16 %v935
      %v2971 = vunpack.c.h.b16 %v935
      %v2972 = vunpack.c.l.b16 %v936
      %v2973 = vunpack.c.h.b16 %v936
      %v2974 = vunpack.c.l.b16 %v937
      %v2975 = vunpack.c.h.b16 %v937
      %v2976 = vunpack.c.l.b16 %v938
      %v2977 = vunpack.c.h.b16 %v938
      %v2978 = vunpack.c.l.b16 %v939
      %v2979 = vunpack.c.h.b16 %v939
      %v2980 = vunpack.c.l.b16 %v940
      %v2981 = vunpack.c.h.b16 %v940
      %v2982 = vunpack.c.l.b16 %v941
      %v2983 = vunpack.c.h.b16 %v941
      %v2984 = vunpack.c.l.b16 %v942
      %v2985 = vunpack.c.h.b16 %v942
      %v2986 = vunpack.c.l.b16 %v943
      %v2987 = vunpack.c.h.b16 %v943
      %v2988 = vunpack.c.l.b16 %v944
      %v2989 = vunpack.c.h.b16 %v944
      %v2990 = vunpack.c.l.b16 %v945
      %v2991 = vunpack.c.h.b16 %v945
      %v2992 = vunpack.c.l.b16 %v946
      %v2993 = vunpack.c.h.b16 %v946
      %v2994 = vunpack.c.l.b16 %v947
      %v2995 = vunpack.c.h.b16 %v947
      %v2996 = vunpack.c.l.b16 %v948
      %v2997 = vunpack.c.h.b16 %v948
      %v2998 = vunpack.c.l.b16 %v949
      %v2999 = vunpack.c.h.b16 %v949
      %v3000 = vunpack.c.l.b16 %v950
      %v3001 = vunpack.c.h.b16 %v950
      %v3002 = vunpack.c.l.b16 %v951
      %v3003 = vunpack.c.h.b16 %v951
      %v3004 = vunpack.c.l.b16 %v952
      %v3005 = vunpack.c.h.b16 %v952
      %v3006 = vunpack.c.l.b16 %v953
      %v3007 = vunpack.c.h.b16 %v953
      %v3008 = vunpack.c.l.b16 %v954
      %v3009 = vunpack.c.h.b16 %v954
      %v3010 = vunpack.c.l.b16 %v955
      %v3011 = vunpack.c.h.b16 %v955
      %v3012 = vunpack.c.l.b16 %v956
      %v3013 = vunpack.c.h.b16 %v956
      %v3014 = vunpack.c.l.b16 %v957
      %v3015 = vunpack.c.h.b16 %v957
      %v3016 = vunpack.c.l.b16 %v958
      %v3017 = vunpack.c.h.b16 %v958
      %v3018 = vunpack.c.l.b16 %v959
      %v3019 = vunpack.c.h.b16 %v959
      %v3020 = vunpack.c.l.b16 %v960
      %v3021 = vunpack.c.h.b16 %v960
      %v3022 = vunpack.c.l.b16 %v961
      %v3023 = vunpack.c.h.b16 %v961
      %v3024 = vunpack.c.l.b16 %v962
      %v3025 = vunpack.c.h.b16 %v962
      %v3026 = vunpack.c.l.b16 %v963
      %v3027 = vunpack.c.h.b16 %v963
      %v3028 = vunpack.c.l.b16 %v964
      %v3029 = vunpack.c.h.b16 %v964
      %v3030 = vunpack.c.l.b16 %v965
      %v3031 = vunpack.c.h.b16 %v965
      %v3032 = vunpack.c.l.b16 %v966
      %v3033 = vunpack.c.h.b16 %v966
      %v3034 = vunpack.c.l.b16 %v967
      %v3035 = vunpack.c.h.b16 %v967
      %v3036 = vunpack.c.l.b16 %v968
      %v3037 = vunpack.c.h.b16 %v968
      %v3038 = vunpack.c.l.b16 %v969
      %v3039 = vunpack.c.h.b16 %v969
      %v3040 = vunpack.c.l.b16 %v970
      %v3041 = vunpack.c.h.b16 %v970
      %v3042 = vunpack.c.l.b16 %v971
      %v3043 = vunpack.c.h.b16 %v971
      %v3044 = vunpack.c.l.b16 %v972
      %v3045 = vunpack.c.h.b16 %v972
      %v3046 = vunpack.c.l.b16 %v973
      %v3047 = vunpack.c.h.b16 %v973
      %v3048 = vunpack.c.l.b16 %v974
      %v3049 = vunpack.c.h.b16 %v974
      %v3050 = vunpack.c.l.b16 %v975
      %v3051 = vunpack.c.h.b16 %v975
      %v3052 = vunpack.c.l.b16 %v976
      %v3053 = vunpack.c.h.b16 %v976
      %v3054 = vunpack.c.l.b16 %v977
      %v3055 = vunpack.c.h.b16 %v977
      %v3056 = vunpack.c.l.b16 %v978
      %v3057 = vunpack.c.h.b16 %v978
      %v3058 = vunpack.c.l.b16 %v979
      %v3059 = vunpack.c.h.b16 %v979
      %v3060 = vunpack.c.l.b16 %v980
      %v3061 = vunpack.c.h.b16 %v980
      %v3062 = vunpack.c.l.b16 %v981
      %v3063 = vunpack.c.h.b16 %v981
      %v3064 = vunpack.c.l.b16 %v982
      %v3065 = vunpack.c.h.b16 %v982
      %v3066 = vunpack.c.l.b16 %v983
      %v3067 = vunpack.c.h.b16 %v983
      %v3068 = vunpack.c.l.b16 %v984
      %v3069 = vunpack.c.h.b16 %v984
      %v3070 = vunpack.c.l.b16 %v985
      %v3071 = vunpack.c.h.b16 %v985
      %v3072 = vunpack.c.l.b16 %v986
      %v3073 = vunpack.c.h.b16 %v986
      %v3074 = vunpack.c.l.b16 %v987
      %v3075 = vunpack.c.h.b16 %v987
      %v3076 = vunpack.c.l.b16 %v988
      %v3077 = vunpack.c.h.b16 %v988
      %v3078 = vunpack.c.l.b16 %v989
      %v3079 = vunpack.c.h.b16 %v989
      %v3080 = vunpack.c.l.b16 %v990
      %v3081 = vunpack.c.h.b16 %v990
      %v3082 = vunpack.c.l.b16 %v991
      %v3083 = vunpack.c.h.b16 %v991
      %v3084 = vunpack.c.l.b16 %v992
      %v3085 = vunpack.c.h.b16 %v992
      %v3086 = vunpack.c.l.b16 %v993
      %v3087 = vunpack.c.h.b16 %v993
      %v3088 = vunpack.c.l.b16 %v994
      %v3089 = vunpack.c.h.b16 %v994
      %v3090 = vunpack.c.l.b16 %v995
      %v3091 = vunpack.c.h.b16 %v995
      %v3092 = vunpack.c.l.b16 %v996
      %v3093 = vunpack.c.h.b16 %v996
      %v3094 = vunpack.c.l.b16 %v997
      %v3095 = vunpack.c.h.b16 %v997
      %v3096 = vunpack.c.l.b16 %v998
      %v3097 = vunpack.c.h.b16 %v998
      %v3098 = vunpack.c.l.b16 %v999
      %v3099 = vunpack.c.h.b16 %v999
      %v3100 = vunpack.c.l.b16 %v1000
      %v3101 = vunpack.c.h.b16 %v1000
      %v3102 = vunpack.c.l.b16 %v1001
      %v3103 = vunpack.c.h.b16 %v1001
      %v3104 = vunpack.c.l.b16 %v1002
      %v3105 = vunpack.c.h.b16 %v1002
      %v3106 = vunpack.c.l.b16 %v1003
      %v3107 = vunpack.c.h.b16 %v1003
      %v3108 = vunpack.c.l.b16 %v1004
      %v3109 = vunpack.c.h.b16 %v1004
      %v3110 = vunpack.c.l.b16 %v1005
      %v3111 = vunpack.c.h.b16 %v1005
      %v3112 = vunpack.c.l.b16 %v1006
      %v3113 = vunpack.c.h.b16 %v1006
      %v3114 = vunpack.c.l.b16 %v1007
      %v3115 = vunpack.c.h.b16 %v1007
      %v3116 = vunpack.c.l.b16 %v1008
      %v3117 = vunpack.c.h.b16 %v1008
      %v3118 = vunpack.c.l.b16 %v1009
      %v3119 = vunpack.c.h.b16 %v1009
      %v3120 = vunpack.c.l.b16 %v1010
      %v3121 = vunpack.c.h.b16 %v1010
      %v3122 = vunpack.c.l.b16 %v1011
      %v3123 = vunpack.c.h.b16 %v1011
      %v3124 = vunpack.c.l.b16 %v1012
      %v3125 = vunpack.c.h.b16 %v1012
      %v3126 = vunpack.c.l.b16 %v1013
      %v3127 = vunpack.c.h.b16 %v1013
      %v3128 = vunpack.c.l.b16 %v1014
      %v3129 = vunpack.c.h.b16 %v1014
      %v3130 = vunpack.c.l.b16 %v1015
      %v3131 = vunpack.c.h.b16 %v1015
      %v3132 = vunpack.c.l.b16 %v1016
      %v3133 = vunpack.c.h.b16 %v1016
      %v3134 = vunpack.c.l.b16 %v1017
      %v3135 = vunpack.c.h.b16 %v1017
      %v3136 = vunpack.c.l.b16 %v1018
      %v3137 = vunpack.c.h.b16 %v1018
      %v3138 = vunpack.c.l.b16 %v1019
      %v3139 = vunpack.c.h.b16 %v1019
      %v3140 = vunpack.c.l.b16 %v1020
      %v3141 = vunpack.c.h.b16 %v1020
      %v3142 = vunpack.c.l.b16 %v1021
      %v3143 = vunpack.c.h.b16 %v1021
      %v3144 = vunpack.c.l.b16 %v1022
      %v3145 = vunpack.c.h.b16 %v1022
      %v3146 = vunpack.c.l.b16 %v1023
      %v3147 = vunpack.c.h.b16 %v1023
      %v3148 = vunpack.c.l.b16 %v1024
      %v3149 = vunpack.c.h.b16 %v1024
      %v3150 = vunpack.c.l.b16 %v1025
      %v3151 = vunpack.c.h.b16 %v1025
      %v3152 = vunpack.c.l.b16 %v1026
      %v3153 = vunpack.c.h.b16 %v1026
      %v3154 = vunpack.c.l.b16 %v1027
      %v3155 = vunpack.c.h.b16 %v1027
      %v3156 = vunpack.c.l.b16 %v1028
      %v3157 = vunpack.c.h.b16 %v1028
      %v3158 = vunpack.c.l.b16 %v1029
      %v3159 = vunpack.c.h.b16 %v1029
      %v3160 = vunpack.c.l.b16 %v1030
      %v3161 = vunpack.c.h.b16 %v1030
      %v3162 = vunpack.c.l.b16 %v1031
      %v3163 = vunpack.c.h.b16 %v1031
      %v3164 = vunpack.c.l.b16 %v1032
      %v3165 = vunpack.c.h.b16 %v1032
      %v3166 = vunpack.c.l.b16 %v1033
      %v3167 = vunpack.c.h.b16 %v1033
      %v3168 = vunpack.c.l.b16 %v1034
      %v3169 = vunpack.c.h.b16 %v1034
      %v3170 = vunpack.c.l.b16 %v1035
      %v3171 = vunpack.c.h.b16 %v1035
      %v3172 = vunpack.c.l.b16 %v1036
      %v3173 = vunpack.c.h.b16 %v1036
      %v3174 = vunpack.c.l.b16 %v1037
      %v3175 = vunpack.c.h.b16 %v1037
      %v3176 = vunpack.c.l.b16 %v1038
      %v3177 = vunpack.c.h.b16 %v1038
      %v3178 = vunpack.c.l.b16 %v1039
      %v3179 = vunpack.c.h.b16 %v1039
      %v3180 = vunpack.c.l.b16 %v1040
      %v3181 = vunpack.c.h.b16 %v1040
      %v3182 = vunpack.c.l.b16 %v1041
      %v3183 = vunpack.c.h.b16 %v1041
      %v3184 = vunpack.c.l.b16 %v1042
      %v3185 = vunpack.c.h.b16 %v1042
      %v3186 = vunpack.c.l.b16 %v1043
      %v3187 = vunpack.c.h.b16 %v1043
      %v3188 = vunpack.c.l.b16 %v1044
      %v3189 = vunpack.c.h.b16 %v1044
      %v3190 = vunpack.c.l.b16 %v1045
      %v3191 = vunpack.c.h.b16 %v1045
      %v3192 = vunpack.c.l.b16 %v1046
      %v3193 = vunpack.c.h.b16 %v1046
      %v3194 = vunpack.c.l.b16 %v1047
      %v3195 = vunpack.c.h.b16 %v1047
      %v3196 = vunpack.c.l.b16 %v1048
      %v3197 = vunpack.c.h.b16 %v1048
      %v3198 = vunpack.c.l.b16 %v1049
      %v3199 = vunpack.c.h.b16 %v1049
      %v3200 = vunpack.c.l.b16 %v1050
      %v3201 = vunpack.c.h.b16 %v1050
      %v3202 = vunpack.c.l.b16 %v1051
      %v3203 = vunpack.c.h.b16 %v1051
      %v3204 = vunpack.c.l.b16 %v1052
      %v3205 = vunpack.c.h.b16 %v1052
      %v3206 = vunpack.c.l.b16 %v1053
      %v3207 = vunpack.c.h.b16 %v1053
      %v3208 = vunpack.c.l.b16 %v1054
      %v3209 = vunpack.c.h.b16 %v1054
      %v3210 = vunpack.c.l.b16 %v1055
      %v3211 = vunpack.c.h.b16 %v1055
      %v3212 = vunpack.c.l.b16 %v1056
      %v3213 = vunpack.c.h.b16 %v1056
      %v3214 = vunpack.c.l.b16 %v1057
      %v3215 = vunpack.c.h.b16 %v1057
      %v3216 = vunpack.c.l.b16 %v1058
      %v3217 = vunpack.c.h.b16 %v1058
      %v3218 = vunpack.c.l.b16 %v1059
      %v3219 = vunpack.c.h.b16 %v1059
      %v3220 = vunpack.c.l.b16 %v1060
      %v3221 = vunpack.c.h.b16 %v1060
      %v3222 = vunpack.c.l.b16 %v1061
      %v3223 = vunpack.c.h.b16 %v1061
      %v3224 = vunpack.c.l.b16 %v1062
      %v3225 = vunpack.c.h.b16 %v1062
      %v3226 = vunpack.c.l.b16 %v1063
      %v3227 = vunpack.c.h.b16 %v1063
      %v3228 = vunpack.c.l.b16 %v1064
      %v3229 = vunpack.c.h.b16 %v1064
      %v3230 = vunpack.c.l.b16 %v1065
      %v3231 = vunpack.c.h.b16 %v1065
      %v3232 = vunpack.c.l.b16 %v1066
      %v3233 = vunpack.c.h.b16 %v1066
      %v3234 = vunpack.c.l.b16 %v1067
      %v3235 = vunpack.c.h.b16 %v1067
      %v3236 = vunpack.c.l.b16 %v1068
      %v3237 = vunpack.c.h.b16 %v1068
      %v3238 = vunpack.c.l.b16 %v1069
      %v3239 = vunpack.c.h.b16 %v1069
      %v3240 = vunpack.c.l.b16 %v1070
      %v3241 = vunpack.c.h.b16 %v1070
      %v3242 = vunpack.c.l.b16 %v1071
      %v3243 = vunpack.c.h.b16 %v1071
      %v3244 = vunpack.c.l.b16 %v1072
      %v3245 = vunpack.c.h.b16 %v1072
      %v3246 = vunpack.c.l.b16 %v1073
      %v3247 = vunpack.c.h.b16 %v1073
      %v3248 = vunpack.c.l.b16 %v1074
      %v3249 = vunpack.c.h.b16 %v1074
      %v3250 = vunpack.c.l.b16 %v1075
      %v3251 = vunpack.c.h.b16 %v1075
      %v3252 = vunpack.c.l.b16 %v1076
      %v3253 = vunpack.c.h.b16 %v1076
      %v3254 = vunpack.c.l.b16 %v1077
      %v3255 = vunpack.c.h.b16 %v1077
      %v3256 = vunpack.c.l.b16 %v1078
      %v3257 = vunpack.c.h.b16 %v1078
      %v3258 = vunpack.c.l.b16 %v1079
      %v3259 = vunpack.c.h.b16 %v1079
      %v3260 = vunpack.c.l.b16 %v1080
      %v3261 = vunpack.c.h.b16 %v1080
      %v3262 = vunpack.c.l.b16 %v1081
      %v3263 = vunpack.c.h.b16 %v1081
      %v3264 = vunpack.c.l.b16 %v1082
      %v3265 = vunpack.c.h.b16 %v1082
      %v3266 = vunpack.c.l.b16 %v1083
      %v3267 = vunpack.c.h.b16 %v1083
      %v3268 = vunpack.c.l.b16 %v1084
      %v3269 = vunpack.c.h.b16 %v1084
      %v3270 = vunpack.c.l.b16 %v1085
      %v3271 = vunpack.c.h.b16 %v1085
      %v3272 = vunpack.c.l.b16 %v1086
      %v3273 = vunpack.c.h.b16 %v1086
      %v3274 = vunpack.c.l.b16 %v1087
      %v3275 = vunpack.c.h.b16 %v1087
      %v3276 = vunpack.c.l.b16 %v1088
      %v3277 = vunpack.c.h.b16 %v1088
      %v3278 = vunpack.c.l.b16 %v1089
      %v3279 = vunpack.c.h.b16 %v1089
      %v3280 = vunpack.c.l.b16 %v1090
      %v3281 = vunpack.c.h.b16 %v1090
      %v3282 = vunpack.c.l.b16 %v1091
      %v3283 = vunpack.c.h.b16 %v1091
      %v3284 = vunpack.c.l.b16 %v1092
      %v3285 = vunpack.c.h.b16 %v1092
      %v3286 = vunpack.c.l.b16 %v1093
      %v3287 = vunpack.c.h.b16 %v1093
      %v3288 = vunpack.c.l.b16 %v1094
      %v3289 = vunpack.c.h.b16 %v1094
      %v3290 = vunpack.c.l.b16 %v1095
      %v3291 = vunpack.c.h.b16 %v1095
      %v3292 = vunpack.c.l.b16 %v1096
      %v3293 = vunpack.c.h.b16 %v1096
      %v3294 = vunpack.c.l.b16 %v1097
      %v3295 = vunpack.c.h.b16 %v1097
      %v3296 = vunpack.c.l.b16 %v1098
      %v3297 = vunpack.c.h.b16 %v1098
      %v3298 = vunpack.c.l.b16 %v1099
      %v3299 = vunpack.c.h.b16 %v1099
      %v3300 = vunpack.c.l.b16 %v1100
      %v3301 = vunpack.c.h.b16 %v1100
      %v3302 = vunpack.c.l.b16 %v1101
      %v3303 = vunpack.c.h.b16 %v1101
      %v3304 = vunpack.c.l.b16 %v1102
      %v3305 = vunpack.c.h.b16 %v1102
      %v3306 = vunpack.c.l.b16 %v1103
      %v3307 = vunpack.c.h.b16 %v1103
      %v3308 = vunpack.c.l.b16 %v1104
      %v3309 = vunpack.c.h.b16 %v1104
      %v3310 = vunpack.c.l.b16 %v1105
      %v3311 = vunpack.c.h.b16 %v1105
      %v3312 = vunpack.c.l.b16 %v1106
      %v3313 = vunpack.c.h.b16 %v1106
      %v3314 = vunpack.c.l.b16 %v1107
      %v3315 = vunpack.c.h.b16 %v1107
      %v3316 = vunpack.c.l.b16 %v1108
      %v3317 = vunpack.c.h.b16 %v1108
      %v3318 = vunpack.c.l.b16 %v1109
      %v3319 = vunpack.c.h.b16 %v1109
      %v3320 = vunpack.c.l.b16 %v1110
      %v3321 = vunpack.c.h.b16 %v1110
      %v3322 = vunpack.c.l.b16 %v1111
      %v3323 = vunpack.c.h.b16 %v1111
      %v3324 = vunpack.c.l.b16 %v1112
      %v3325 = vunpack.c.h.b16 %v1112
      %v3326 = vunpack.c.l.b16 %v1113
      %v3327 = vunpack.c.h.b16 %v1113
      %v3328 = vunpack.c.l.b16 %v1114
      %v3329 = vunpack.c.h.b16 %v1114
      %v3330 = vunpack.c.l.b16 %v1115
      %v3331 = vunpack.c.h.b16 %v1115
      %v3332 = vunpack.c.l.b16 %v1116
      %v3333 = vunpack.c.h.b16 %v1116
      %v3334 = vunpack.c.l.b16 %v1117
      %v3335 = vunpack.c.h.b16 %v1117
      %v3336 = vunpack.c.l.b16 %v1118
      %v3337 = vunpack.c.h.b16 %v1118
      %v3338 = vunpack.c.l.b16 %v1119
      %v3339 = vunpack.c.h.b16 %v1119
      %v3340 = vunpack.c.l.b16 %v1120
      %v3341 = vunpack.c.h.b16 %v1120
      %v3342 = vunpack.c.l.b16 %v1121
      %v3343 = vunpack.c.h.b16 %v1121
      %v3344 = vunpack.c.l.b16 %v1122
      %v3345 = vunpack.c.h.b16 %v1122
      %v3346 = vunpack.c.l.b16 %v1123
      %v3347 = vunpack.c.h.b16 %v1123
      %v3348 = vunpack.c.l.b16 %v1124
      %v3349 = vunpack.c.h.b16 %v1124
      %v3350 = vunpack.c.l.b16 %v1125
      %v3351 = vunpack.c.h.b16 %v1125
      %v3352 = vunpack.c.l.b16 %v1126
      %v3353 = vunpack.c.h.b16 %v1126
      %v3354 = vunpack.c.l.b16 %v1127
      %v3355 = vunpack.c.h.b16 %v1127
      %v3356 = vunpack.c.l.b16 %v1128
      %v3357 = vunpack.c.h.b16 %v1128
      %v3358 = vunpack.c.l.b16 %v1129
      %v3359 = vunpack.c.h.b16 %v1129
      %v3360 = vunpack.c.l.b16 %v1130
      %v3361 = vunpack.c.h.b16 %v1130
      %v3362 = vunpack.c.l.b16 %v1131
      %v3363 = vunpack.c.h.b16 %v1131
      %v3364 = vunpack.c.l.b16 %v1132
      %v3365 = vunpack.c.h.b16 %v1132
      %v3366 = vunpack.c.l.b16 %v1133
      %v3367 = vunpack.c.h.b16 %v1133
      %v3368 = vunpack.c.l.b16 %v1134
      %v3369 = vunpack.c.h.b16 %v1134
      %v3370 = vunpack.c.l.b16 %v1135
      %v3371 = vunpack.c.h.b16 %v1135
      %v3372 = vunpack.c.l.b16 %v1136
      %v3373 = vunpack.c.h.b16 %v1136
      %v3374 = vunpack.c.l.b16 %v1137
      %v3375 = vunpack.c.h.b16 %v1137
      %v3376 = vunpack.c.l.b16 %v1138
      %v3377 = vunpack.c.h.b16 %v1138
      %v3378 = vunpack.c.l.b16 %v1139
      %v3379 = vunpack.c.h.b16 %v1139
      %v3380 = vunpack.c.l.b16 %v1140
      %v3381 = vunpack.c.h.b16 %v1140
      %v3382 = vunpack.c.l.b16 %v1141
      %v3383 = vunpack.c.h.b16 %v1141
      %v3384 = vunpack.c.l.b16 %v1142
      %v3385 = vunpack.c.h.b16 %v1142
      %v3386 = vunpack.c.l.b16 %v1143
      %v3387 = vunpack.c.h.b16 %v1143
      %v3388 = vunpack.c.l.b16 %v1144
      %v3389 = vunpack.c.h.b16 %v1144
      %v3390 = vunpack.c.l.b16 %v1145
      %v3391 = vunpack.c.h.b16 %v1145
      %v3392 = vunpack.c.l.b16 %v1146
      %v3393 = vunpack.c.h.b16 %v1146
      %v3394 = vunpack.c.l.b16 %v1147
      %v3395 = vunpack.c.h.b16 %v1147
      %v3396 = vunpack.c.l.b16 %v1148
      %v3397 = vunpack.c.h.b16 %v1148
      %v3398 = vunpack.c.l.b16 %v1149
      %v3399 = vunpack.c.h.b16 %v1149
      %v3400 = vunpack.c.l.b16 %v1150
      %v3401 = vunpack.c.h.b16 %v1150
      %v3402 = vunpack.c.l.b16 %v1151
      %v3403 = vunpack.c.h.b16 %v1151
      %v3404 = vunpack.c.l.b16 %v1152
      %v3405 = vunpack.c.h.b16 %v1152
      %v3406 = vunpack.c.l.b16 %v1153
      %v3407 = vunpack.c.h.b16 %v1153
      %v3408 = vunpack.c.l.b16 %v1154
      %v3409 = vunpack.c.h.b16 %v1154
      %v3410 = vunpack.c.l.b16 %v1155
      %v3411 = vunpack.c.h.b16 %v1155
      %v3412 = vunpack.c.l.b16 %v1156
      %v3413 = vunpack.c.h.b16 %v1156
      %v3414 = vunpack.c.l.b16 %v1157
      %v3415 = vunpack.c.h.b16 %v1157
      %v3416 = vunpack.c.l.b16 %v1158
      %v3417 = vunpack.c.h.b16 %v1158
      %v3418 = vunpack.c.l.b16 %v1159
      %v3419 = vunpack.c.h.b16 %v1159
      %v3420 = vunpack.c.l.b16 %v1160
      %v3421 = vunpack.c.h.b16 %v1160
      %v3422 = vunpack.c.l.b16 %v1161
      %v3423 = vunpack.c.h.b16 %v1161
      %v3424 = vunpack.c.l.b16 %v1162
      %v3425 = vunpack.c.h.b16 %v1162
      %v3426 = vunpack.c.l.b16 %v1163
      %v3427 = vunpack.c.h.b16 %v1163
      %v3428 = vunpack.c.l.b16 %v1164
      %v3429 = vunpack.c.h.b16 %v1164
      %v3430 = vunpack.c.l.b16 %v1165
      %v3431 = vunpack.c.h.b16 %v1165
      %v3432 = vunpack.c.l.b16 %v1166
      %v3433 = vunpack.c.h.b16 %v1166
      %v3434 = vunpack.c.l.b16 %v1167
      %v3435 = vunpack.c.h.b16 %v1167
      %v3436 = vunpack.c.l.b16 %v1168
      %v3437 = vunpack.c.h.b16 %v1168
      %v3438 = vunpack.c.l.b16 %v1169
      %v3439 = vunpack.c.h.b16 %v1169
      %v3440 = vunpack.c.l.b16 %v1170
      %v3441 = vunpack.c.h.b16 %v1170
      %v3442 = vunpack.c.l.b16 %v1171
      %v3443 = vunpack.c.h.b16 %v1171
      %v3444 = vunpack.c.l.b16 %v1172
      %v3445 = vunpack.c.h.b16 %v1172
      %v3446 = vunpack.c.l.b16 %v1173
      %v3447 = vunpack.c.h.b16 %v1173
      %v3448 = vunpack.c.l.b16 %v1174
      %v3449 = vunpack.c.h.b16 %v1174
      %v3450 = vunpack.c.l.b16 %v1175
      %v3451 = vunpack.c.h.b16 %v1175
      %v3452 = vunpack.c.l.b16 %v1176
      %v3453 = vunpack.c.h.b16 %v1176
      %v3454 = vunpack.c.l.b16 %v1177
      %v3455 = vunpack.c.h.b16 %v1177
      %v3456 = vunpack.c.l.b16 %v1178
      %v3457 = vunpack.c.h.b16 %v1178
      %v3458 = vunpack.c.l.b16 %v1179
      %v3459 = vunpack.c.h.b16 %v1179
      %v3460 = vunpack.c.l.b16 %v1180
      %v3461 = vunpack.c.h.b16 %v1180
      %v3462 = vunpack.c.l.b16 %v1181
      %v3463 = vunpack.c.h.b16 %v1181
      %v3464 = vunpack.c.l.b16 %v1182
      %v3465 = vunpack.c.h.b16 %v1182
      %v3466 = vunpack.c.l.b16 %v1183
      %v3467 = vunpack.c.h.b16 %v1183
      %v3468 = vunpack.c.l.b16 %v1184
      %v3469 = vunpack.c.h.b16 %v1184
      %v3470 = vunpack.c.l.b16 %v1185
      %v3471 = vunpack.c.h.b16 %v1185
      %v3472 = vunpack.c.l.b16 %v1186
      %v3473 = vunpack.c.h.b16 %v1186
      %v3474 = vunpack.c.l.b16 %v1187
      %v3475 = vunpack.c.h.b16 %v1187
      %v3476 = vunpack.c.l.b16 %v1188
      %v3477 = vunpack.c.h.b16 %v1188
      %v3478 = vunpack.c.l.b16 %v1189
      %v3479 = vunpack.c.h.b16 %v1189
      %v3480 = vunpack.c.l.b16 %v1190
      %v3481 = vunpack.c.h.b16 %v1190
      %v3482 = vunpack.c.l.b16 %v1191
      %v3483 = vunpack.c.h.b16 %v1191
      %v3484 = vunpack.c.l.b16 %v1192
      %v3485 = vunpack.c.h.b16 %v1192
      %v3486 = vunpack.c.l.b16 %v1193
      %v3487 = vunpack.c.h.b16 %v1193
      %v3488 = vunpack.c.l.b16 %v1194
      %v3489 = vunpack.c.h.b16 %v1194
      %v3490 = vunpack.c.l.b16 %v1195
      %v3491 = vunpack.c.h.b16 %v1195
      %v3492 = vunpack.c.l.b16 %v1196
      %v3493 = vunpack.c.h.b16 %v1196
      %v3494 = vunpack.c.l.b16 %v1197
      %v3495 = vunpack.c.h.b16 %v1197
      %v3496 = vunpack.c.l.b16 %v1198
      %v3497 = vunpack.c.h.b16 %v1198
      %v3498 = vunpack.c.l.b16 %v1199
      %v3499 = vunpack.c.h.b16 %v1199
      %v3500 = vunpack.c.l.b16 %v1200
      %v3501 = vunpack.c.h.b16 %v1200
      %v3502 = vunpack.c.l.b16 %v1201
      %v3503 = vunpack.c.h.b16 %v1201
      %v3504 = vunpack.c.l.b16 %v1202
      %v3505 = vunpack.c.h.b16 %v1202
      %v3506 = vunpack.c.l.b16 %v1203
      %v3507 = vunpack.c.h.b16 %v1203
      %v3508 = vunpack.c.l.b16 %v1204
      %v3509 = vunpack.c.h.b16 %v1204
      %v3510 = vunpack.c.l.b16 %v1205
      %v3511 = vunpack.c.h.b16 %v1205
      %v3512 = vunpack.c.l.b16 %v1206
      %v3513 = vunpack.c.h.b16 %v1206
      %v3514 = vunpack.c.l.b16 %v1207
      %v3515 = vunpack.c.h.b16 %v1207
      %v3516 = vunpack.c.l.b16 %v1208
      %v3517 = vunpack.c.h.b16 %v1208
      %v3518 = vunpack.c.l.b16 %v1209
      %v3519 = vunpack.c.h.b16 %v1209
      %v3520 = vunpack.c.l.b16 %v1210
      %v3521 = vunpack.c.h.b16 %v1210
      %v3522 = vunpack.c.l.b16 %v1211
      %v3523 = vunpack.c.h.b16 %v1211
      %v3524 = vunpack.c.l.b16 %v1212
      %v3525 = vunpack.c.h.b16 %v1212
      %v3526 = vunpack.c.l.b16 %v1213
      %v3527 = vunpack.c.h.b16 %v1213
      %v3528 = vunpack.c.l.b16 %v1214
      %v3529 = vunpack.c.h.b16 %v1214
      %v3530 = vunpack.c.l.b16 %v1215
      %v3531 = vunpack.c.h.b16 %v1215
      %v3532 = vunpack.c.l.b16 %v1216
      %v3533 = vunpack.c.h.b16 %v1216
      %v3534 = vunpack.c.l.b16 %v1217
      %v3535 = vunpack.c.h.b16 %v1217
      %v3536 = vunpack.c.l.b16 %v1218
      %v3537 = vunpack.c.h.b16 %v1218
      %v3538 = vunpack.c.l.b16 %v1219
      %v3539 = vunpack.c.h.b16 %v1219
      %v3540 = vunpack.c.l.b16 %v1220
      %v3541 = vunpack.c.h.b16 %v1220
      %v3542 = vunpack.c.l.b16 %v1221
      %v3543 = vunpack.c.h.b16 %v1221
      %v3544 = vunpack.c.l.b16 %v1222
      %v3545 = vunpack.c.h.b16 %v1222
      %v3546 = vunpack.c.l.b16 %v1223
      %v3547 = vunpack.c.h.b16 %v1223
      %v3548 = vunpack.c.l.b16 %v1224
      %v3549 = vunpack.c.h.b16 %v1224
      %v3550 = vunpack.c.l.b16 %v1225
      %v3551 = vunpack.c.h.b16 %v1225
      %v3552 = vunpack.c.l.b16 %v1226
      %v3553 = vunpack.c.h.b16 %v1226
      %v3554 = vunpack.c.l.b16 %v1227
      %v3555 = vunpack.c.h.b16 %v1227
      %v3556 = vunpack.c.l.b16 %v1228
      %v3557 = vunpack.c.h.b16 %v1228
      %v3558 = vunpack.c.l.b16 %v1229
      %v3559 = vunpack.c.h.b16 %v1229
      %v3560 = vunpack.c.l.b16 %v1230
      %v3561 = vunpack.c.h.b16 %v1230
      %v3562 = vunpack.c.l.b16 %v1231
      %v3563 = vunpack.c.h.b16 %v1231
      %v3564 = vunpack.c.l.b16 %v1232
      %v3565 = vunpack.c.h.b16 %v1232
      %v3566 = vunpack.c.l.b16 %v1233
      %v3567 = vunpack.c.h.b16 %v1233
      %v3568 = vunpack.c.l.b16 %v1234
      %v3569 = vunpack.c.h.b16 %v1234
      %v3570 = vunpack.c.l.b16 %v1235
      %v3571 = vunpack.c.h.b16 %v1235
      %v3572 = vunpack.c.l.b16 %v1236
      %v3573 = vunpack.c.h.b16 %v1236
      %v3574 = vunpack.c.l.b16 %v1237
      %v3575 = vunpack.c.h.b16 %v1237
      %v3576 = vunpack.c.l.b16 %v1238
      %v3577 = vunpack.c.h.b16 %v1238
      %v3578 = vunpack.c.l.b16 %v1239
      %v3579 = vunpack.c.h.b16 %v1239
      %v3580 = vunpack.c.l.b16 %v1240
      %v3581 = vunpack.c.h.b16 %v1240
      %v3582 = vunpack.c.l.b16 %v1241
      %v3583 = vunpack.c.h.b16 %v1241
      %v3584 = vunpack.c.l.b16 %v1242
      %v3585 = vunpack.c.h.b16 %v1242
      %v3586 = vunpack.c.l.b16 %v1243
      %v3587 = vunpack.c.h.b16 %v1243
      %v3588 = vunpack.c.l.b16 %v1244
      %v3589 = vunpack.c.h.b16 %v1244
      %v3590 = vunpack.c.l.b16 %v1245
      %v3591 = vunpack.c.h.b16 %v1245
      %v3592 = vunpack.c.l.b16 %v1246
      %v3593 = vunpack.c.h.b16 %v1246
      %v3594 = vunpack.c.l.b16 %v1247
      %v3595 = vunpack.c.h.b16 %v1247
      %v3596 = vunpack.c.l.b16 %v1248
      %v3597 = vunpack.c.h.b16 %v1248
      %v3598 = vunpack.c.l.b16 %v1249
      %v3599 = vunpack.c.h.b16 %v1249
      %v3600 = vunpack.c.l.b16 %v1250
      %v3601 = vunpack.c.h.b16 %v1250
      %v3602 = vunpack.c.l.b16 %v1251
      %v3603 = vunpack.c.h.b16 %v1251
      %v3604 = vunpack.c.l.b16 %v1252
      %v3605 = vunpack.c.h.b16 %v1252
      %v3606 = vunpack.c.l.b16 %v1253
      %v3607 = vunpack.c.h.b16 %v1253
      %v3608 = vunpack.c.l.b16 %v1254
      %v3609 = vunpack.c.h.b16 %v1254
      %v3610 = vunpack.c.l.b16 %v1255
      %v3611 = vunpack.c.h.b16 %v1255
      %v3612 = vunpack.c.l.b16 %v1256
      %v3613 = vunpack.c.h.b16 %v1256
      %v3614 = vunpack.c.l.b16 %v1257
      %v3615 = vunpack.c.h.b16 %v1257
      %v3616 = vunpack.c.l.b16 %v1258
      %v3617 = vunpack.c.h.b16 %v1258
      %v3618 = vunpack.c.l.b16 %v1259
      %v3619 = vunpack.c.h.b16 %v1259
      %v3620 = vunpack.c.l.b16 %v1260
      %v3621 = vunpack.c.h.b16 %v1260
      %v3622 = vunpack.c.l.b16 %v1261
      %v3623 = vunpack.c.h.b16 %v1261
      %v3624 = vunpack.c.l.b16 %v1262
      %v3625 = vunpack.c.h.b16 %v1262
      %v3626 = vunpack.c.l.b16 %v1263
      %v3627 = vunpack.c.h.b16 %v1263
      %v3628 = vunpack.c.l.b16 %v1264
      %v3629 = vunpack.c.h.b16 %v1264
      %v3630 = vunpack.c.l.b16 %v1265
      %v3631 = vunpack.c.h.b16 %v1265
      %v3632 = vunpack.c.l.b16 %v1266
      %v3633 = vunpack.c.h.b16 %v1266
      %v3634 = vunpack.c.l.b16 %v1267
      %v3635 = vunpack.c.h.b16 %v1267
      %v3636 = vunpack.c.l.b16 %v1268
      %v3637 = vunpack.c.h.b16 %v1268
      %v3638 = vunpack.c.l.b16 %v1269
      %v3639 = vunpack.c.h.b16 %v1269
      %v3640 = vunpack.c.l.b16 %v1270
      %v3641 = vunpack.c.h.b16 %v1270
      %v3642 = vunpack.c.l.b16 %v1271
      %v3643 = vunpack.c.h.b16 %v1271
      %v3644 = vunpack.c.l.b16 %v1272
      %v3645 = vunpack.c.h.b16 %v1272
      %v3646 = vunpack.c.l.b16 %v1273
      %v3647 = vunpack.c.h.b16 %v1273
      %v3648 = vpack.c.b16 %v2084, %v2080
      %v3649 = vpack.c.b16 %v2085, %v2081
      %v3650 = vpack.c.b16 %v2086, %v2082
      %v3651 = vpack.c.b16 %v2087, %v2083
      %v3652 = vpack.c.b16 %v2092, %v2088
      %v3653 = vpack.c.b16 %v2093, %v2089
      %v3654 = vpack.c.b16 %v2094, %v2090
      %v3655 = vpack.c.b16 %v2095, %v2091
      %v3656 = vpack.c.b16 %v2100, %v2096
      %v3657 = vpack.c.b16 %v2101, %v2097
      %v3658 = vpack.c.b16 %v2102, %v2098
      %v3659 = vpack.c.b16 %v2103, %v2099
      %v3660 = vpack.c.b16 %v2108, %v2104
      %v3661 = vpack.c.b16 %v2109, %v2105
      %v3662 = vpack.c.b16 %v2110, %v2106
      %v3663 = vpack.c.b16 %v2111, %v2107
      %v3664 = vpack.c.b16 %v2116, %v2112
      %v3665 = vpack.c.b16 %v2117, %v2113
      %v3666 = vpack.c.b16 %v2118, %v2114
      %v3667 = vpack.c.b16 %v2119, %v2115
      %v3668 = vpack.c.b16 %v2124, %v2120
      %v3669 = vpack.c.b16 %v2125, %v2121
      %v3670 = vpack.c.b16 %v2126, %v2122
      %v3671 = vpack.c.b16 %v2127, %v2123
      %v3672 = vpack.c.b16 %v2132, %v2128
      %v3673 = vpack.c.b16 %v2133, %v2129
      %v3674 = vpack.c.b16 %v2134, %v2130
      %v3675 = vpack.c.b16 %v2135, %v2131
      %v3676 = vpack.c.b16 %v2140, %v2136
      %v3677 = vpack.c.b16 %v2141, %v2137
      %v3678 = vpack.c.b16 %v2142, %v2138
      %v3679 = vpack.c.b16 %v2143, %v2139
      %v3680 = vpack.c.b16 %v2148, %v2144
      %v3681 = vpack.c.b16 %v2149, %v2145
      %v3682 = vpack.c.b16 %v2150, %v2146
      %v3683 = vpack.c.b16 %v2151, %v2147
      %v3684 = vpack.c.b16 %v2156, %v2152
      %v3685 = vpack.c.b16 %v2157, %v2153
      %v3686 = vpack.c.b16 %v2158, %v2154
      %v3687 = vpack.c.b16 %v2159, %v2155
      %v3688 = vpack.c.b16 %v2164, %v2160
      %v3689 = vpack.c.b16 %v2165, %v2161
      %v3690 = vpack.c.b16 %v2166, %v2162
      %v3691 = vpack.c.b16 %v2167, %v2163
      %v3692 = vpack.c.b16 %v2172, %v2168
      %v3693 = vpack.c.b16 %v2173, %v2169
      %v3694 = vpack.c.b16 %v2174, %v2170
      %v3695 = vpack.c.b16 %v2175, %v2171
      %v3696 = vpack.c.b16 %v2180, %v2176
      %v3697 = vpack.c.b16 %v2181, %v2177
      %v3698 = vpack.c.b16 %v2182, %v2178
      %v3699 = vpack.c.b16 %v2183, %v2179
      %v3700 = vpack.c.b16 %v2188, %v2184
      %v3701 = vpack.c.b16 %v2189, %v2185
      %v3702 = vpack.c.b16 %v2190, %v2186
      %v3703 = vpack.c.b16 %v2191, %v2187
      %v3704 = vpack.c.b16 %v2196, %v2192
      %v3705 = vpack.c.b16 %v2197, %v2193
      %v3706 = vpack.c.b16 %v2198, %v2194
      %v3707 = vpack.c.b16 %v2199, %v2195
      %v3708 = vpack.c.b16 %v2204, %v2200
      %v3709 = vpack.c.b16 %v2205, %v2201
      %v3710 = vpack.c.b16 %v2206, %v2202
      %v3711 = vpack.c.b16 %v2207, %v2203
      %v3712 = vpack.c.b16 %v2212, %v2208
      %v3713 = vpack.c.b16 %v2213, %v2209
      %v3714 = vpack.c.b16 %v2214, %v2210
      %v3715 = vpack.c.b16 %v2215, %v2211
      %v3716 = vpack.c.b16 %v2220, %v2216
      %v3717 = vpack.c.b16 %v2221, %v2217
      %v3718 = vpack.c.b16 %v2222, %v2218
      %v3719 = vpack.c.b16 %v2223, %v2219
      %v3720 = vpack.c.b16 %v2228, %v2224
      %v3721 = vpack.c.b16 %v2229, %v2225
      %v3722 = vpack.c.b16 %v2230, %v2226
      %v3723 = vpack.c.b16 %v2231, %v2227
      %v3724 = vpack.c.b16 %v2236, %v2232
      %v3725 = vpack.c.b16 %v2237, %v2233
      %v3726 = vpack.c.b16 %v2238, %v2234
      %v3727 = vpack.c.b16 %v2239, %v2235
      %v3728 = vpack.c.b16 %v2244, %v2240
      %v3729 = vpack.c.b16 %v2245, %v2241
      %v3730 = vpack.c.b16 %v2246, %v2242
      %v3731 = vpack.c.b16 %v2247, %v2243
      %v3732 = vpack.c.b16 %v2252, %v2248
      %v3733 = vpack.c.b16 %v2253, %v2249
      %v3734 = vpack.c.b16 %v2254, %v2250
      %v3735 = vpack.c.b16 %v2255, %v2251
      %v3736 = vpack.c.b16 %v2260, %v2256
      %v3737 = vpack.c.b16 %v2261, %v2257
      %v3738 = vpack.c.b16 %v2262, %v2258
      %v3739 = vpack.c.b16 %v2263, %v2259
      %v3740 = vpack.c.b16 %v2268, %v2264
      %v3741 = vpack.c.b16 %v2269, %v2265
      %v3742 = vpack.c.b16 %v2270, %v2266
      %v3743 = vpack.c.b16 %v2271, %v2267
      %v3744 = vpack.c.b16 %v2276, %v2272
      %v3745 = vpack.c.b16 %v2277, %v2273
      %v3746 = vpack.c.b16 %v2278, %v2274
      %v3747 = vpack.c.b16 %v2279, %v2275
      %v3748 = vpack.c.b16 %v2284, %v2280
      %v3749 = vpack.c.b16 %v2285, %v2281
      %v3750 = vpack.c.b16 %v2286, %v2282
      %v3751 = vpack.c.b16 %v2287, %v2283
      %v3752 = vpack.c.b16 %v2292, %v2288
      %v3753 = vpack.c.b16 %v2293, %v2289
      %v3754 = vpack.c.b16 %v2294, %v2290
      %v3755 = vpack.c.b16 %v2295, %v2291
      %v3756 = vpack.c.b16 %v2300, %v2296
      %v3757 = vpack.c.b16 %v2301, %v2297
      %v3758 = vpack.c.b16 %v2302, %v2298
      %v3759 = vpack.c.b16 %v2303, %v2299
      %v3760 = vpack.c.b16 %v2308, %v2304
      %v3761 = vpack.c.b16 %v2309, %v2305
      %v3762 = vpack.c.b16 %v2310, %v2306
      %v3763 = vpack.c.b16 %v2311, %v2307
      %v3764 = vpack.c.b16 %v2316, %v2312
      %v3765 = vpack.c.b16 %v2317, %v2313
      %v3766 = vpack.c.b16 %v2318, %v2314
      %v3767 = vpack.c.b16 %v2319, %v2315
      %v3768 = vpack.c.b16 %v2324, %v2320
      %v3769 = vpack.c.b16 %v2325, %v2321
      %v3770 = vpack.c.b16 %v2326, %v2322
      %v3771 = vpack.c.b16 %v2327, %v2323
      %v3772 = vpack.c.b16 %v2332, %v2328
      %v3773 = vpack.c.b16 %v2333, %v2329
      %v3774 = vpack.c.b16 %v2334, %v2330
      %v3775 = vpack.c.b16 %v2335, %v2331
      %v3776 = vpack.c.b16 %v2340, %v2336
      %v3777 = vpack.c.b16 %v2341, %v2337
      %v3778 = vpack.c.b16 %v2342, %v2338
      %v3779 = vpack.c.b16 %v2343, %v2339
      %v3780 = vpack.c.b16 %v2348, %v2344
      %v3781 = vpack.c.b16 %v2349, %v2345
      %v3782 = vpack.c.b16 %v2350, %v2346
      %v3783 = vpack.c.b16 %v2351, %v2347
      %v3784 = vpack.c.b16 %v2356, %v2352
      %v3785 = vpack.c.b16 %v2357, %v2353
      %v3786 = vpack.c.b16 %v2358, %v2354
      %v3787 = vpack.c.b16 %v2359, %v2355
      %v3788 = vpack.c.b16 %v2364, %v2360
      %v3789 = vpack.c.b16 %v2365, %v2361
      %v3790 = vpack.c.b16 %v2366, %v2362
      %v3791 = vpack.c.b16 %v2367, %v2363
      %v3792 = vpack.c.b16 %v2372, %v2368
      %v3793 = vpack.c.b16 %v2373, %v2369
      %v3794 = vpack.c.b16 %v2374, %v2370
      %v3795 = vpack.c.b16 %v2375, %v2371
      %v3796 = vpack.c.b16 %v2380, %v2376
      %v3797 = vpack.c.b16 %v2381, %v2377
      %v3798 = vpack.c.b16 %v2382, %v2378
      %v3799 = vpack.c.b16 %v2383, %v2379
      %v3800 = vpack.c.b16 %v2388, %v2384
      %v3801 = vpack.c.b16 %v2389, %v2385
      %v3802 = vpack.c.b16 %v2390, %v2386
      %v3803 = vpack.c.b16 %v2391, %v2387
      %v3804 = vpack.c.b16 %v2396, %v2392
      %v3805 = vpack.c.b16 %v2397, %v2393
      %v3806 = vpack.c.b16 %v2398, %v2394
      %v3807 = vpack.c.b16 %v2399, %v2395
      %v3808 = vpack.c.b16 %v2404, %v2400
      %v3809 = vpack.c.b16 %v2405, %v2401
      %v3810 = vpack.c.b16 %v2406, %v2402
      %v3811 = vpack.c.b16 %v2407, %v2403
      %v3812 = vpack.c.b16 %v2412, %v2408
      %v3813 = vpack.c.b16 %v2413, %v2409
      %v3814 = vpack.c.b16 %v2414, %v2410
      %v3815 = vpack.c.b16 %v2415, %v2411
      %v3816 = vpack.c.b16 %v2420, %v2416
      %v3817 = vpack.c.b16 %v2421, %v2417
      %v3818 = vpack.c.b16 %v2422, %v2418
      %v3819 = vpack.c.b16 %v2423, %v2419
      %v3820 = vpack.c.b16 %v2428, %v2424
      %v3821 = vpack.c.b16 %v2429, %v2425
      %v3822 = vpack.c.b16 %v2430, %v2426
      %v3823 = vpack.c.b16 %v2431, %v2427
      %v3824 = vpack.c.b16 %v2436, %v2432
      %v3825 = vpack.c.b16 %v2437, %v2433
      %v3826 = vpack.c.b16 %v2438, %v2434
      %v3827 = vpack.c.b16 %v2439, %v2435
      %v3828 = vpack.c.b16 %v2444, %v2440
      %v3829 = vpack.c.b16 %v2445, %v2441
      %v3830 = vpack.c.b16 %v2446, %v2442
      %v3831 = vpack.c.b16 %v2447, %v2443
      %v3832 = vpack.c.b16 %v2452, %v2448
      %v3833 = vpack.c.b16 %v2453, %v2449
      %v3834 = vpack.c.b16 %v2454, %v2450
      %v3835 = vpack.c.b16 %v2455, %v2451
      %v3836 = vpack.c.b16 %v2460, %v2456
      %v3837 = vpack.c.b16 %v2461, %v2457
      %v3838 = vpack.c.b16 %v2462, %v2458
      %v3839 = vpack.c.b16 %v2463, %v2459
      %v3840 = vpack.c.b16 %v2468, %v2464
      %v3841 = vpack.c.b16 %v2469, %v2465
      %v3842 = vpack.c.b16 %v2470, %v2466
      %v3843 = vpack.c.b16 %v2471, %v2467
      %v3844 = vpack.c.b16 %v2476, %v2472
      %v3845 = vpack.c.b16 %v2477, %v2473
      %v3846 = vpack.c.b16 %v2478, %v2474
      %v3847 = vpack.c.b16 %v2479, %v2475
      %v3848 = vpack.c.b16 %v2484, %v2480
      %v3849 = vpack.c.b16 %v2485, %v2481
      %v3850 = vpack.c.b16 %v2486, %v2482
      %v3851 = vpack.c.b16 %v2487, %v2483
      %v3852 = vpack.c.b16 %v2492, %v2488
      %v3853 = vpack.c.b16 %v2493, %v2489
      %v3854 = vpack.c.b16 %v2494, %v2490
      %v3855 = vpack.c.b16 %v2495, %v2491
      %v3856 = vpack.c.b16 %v2500, %v2496
      %v3857 = vpack.c.b16 %v2501, %v2497
      %v3858 = vpack.c.b16 %v2502, %v2498
      %v3859 = vpack.c.b16 %v2503, %v2499
      %v3860 = vpack.c.b16 %v2508, %v2504
      %v3861 = vpack.c.b16 %v2509, %v2505
      %v3862 = vpack.c.b16 %v2510, %v2506
      %v3863 = vpack.c.b16 %v2511, %v2507
      %v3864 = vpack.c.b16 %v2516, %v2512
      %v3865 = vpack.c.b16 %v2517, %v2513
      %v3866 = vpack.c.b16 %v2518, %v2514
      %v3867 = vpack.c.b16 %v2519, %v2515
      %v3868 = vpack.c.b16 %v2524, %v2520
      %v3869 = vpack.c.b16 %v2525, %v2521
      %v3870 = vpack.c.b16 %v2526, %v2522
      %v3871 = vpack.c.b16 %v2527, %v2523
      %v3872 = vpack.c.b16 %v2532, %v2528
      %v3873 = vpack.c.b16 %v2533, %v2529
      %v3874 = vpack.c.b16 %v2534, %v2530
      %v3875 = vpack.c.b16 %v2535, %v2531
      %v3876 = vpack.c.b16 %v2540, %v2536
      %v3877 = vpack.c.b16 %v2541, %v2537
      %v3878 = vpack.c.b16 %v2542, %v2538
      %v3879 = vpack.c.b16 %v2543, %v2539
      %v3880 = vpack.c.b16 %v2548, %v2544
      %v3881 = vpack.c.b16 %v2549, %v2545
      %v3882 = vpack.c.b16 %v2550, %v2546
      %v3883 = vpack.c.b16 %v2551, %v2547
      %v3884 = vpack.c.b16 %v2556, %v2552
      %v3885 = vpack.c.b16 %v2557, %v2553
      %v3886 = vpack.c.b16 %v2558, %v2554
      %v3887 = vpack.c.b16 %v2559, %v2555
      %v3888 = vpack.c.b16 %v2564, %v2560
      %v3889 = vpack.c.b16 %v2565, %v2561
      %v3890 = vpack.c.b16 %v2566, %v2562
      %v3891 = vpack.c.b16 %v2567, %v2563
      %v3892 = vpack.c.b16 %v2572, %v2568
      %v3893 = vpack.c.b16 %v2573, %v2569
      %v3894 = vpack.c.b16 %v2574, %v2570
      %v3895 = vpack.c.b16 %v2575, %v2571
      %v3896 = vpack.c.b16 %v2580, %v2576
      %v3897 = vpack.c.b16 %v2581, %v2577
      %v3898 = vpack.c.b16 %v2582, %v2578
      %v3899 = vpack.c.b16 %v2583, %v2579
      %v3900 = vpack.c.b16 %v2588, %v2584
      %v3901 = vpack.c.b16 %v2589, %v2585
      %v3902 = vpack.c.b16 %v2590, %v2586
      %v3903 = vpack.c.b16 %v2591, %v2587
      %v3904 = vpack.c.b16 %v2596, %v2592
      %v3905 = vpack.c.b16 %v2597, %v2593
      %v3906 = vpack.c.b16 %v2598, %v2594
      %v3907 = vpack.c.b16 %v2599, %v2595
      %v3908 = vpack.c.b16 %v2604, %v2600
      %v3909 = vpack.c.b16 %v2605, %v2601
      %v3910 = vpack.c.b16 %v2606, %v2602
      %v3911 = vpack.c.b16 %v2607, %v2603
      %v3912 = vpack.c.b16 %v2612, %v2608
      %v3913 = vpack.c.b16 %v2613, %v2609
      %v3914 = vpack.c.b16 %v2614, %v2610
      %v3915 = vpack.c.b16 %v2615, %v2611
      %v3916 = vpack.c.b16 %v2620, %v2616
      %v3917 = vpack.c.b16 %v2621, %v2617
      %v3918 = vpack.c.b16 %v2622, %v2618
      %v3919 = vpack.c.b16 %v2623, %v2619
      %v3920 = vpack.c.b16 %v2628, %v2624
      %v3921 = vpack.c.b16 %v2629, %v2625
      %v3922 = vpack.c.b16 %v2630, %v2626
      %v3923 = vpack.c.b16 %v2631, %v2627
      %v3924 = vpack.c.b16 %v2636, %v2632
      %v3925 = vpack.c.b16 %v2637, %v2633
      %v3926 = vpack.c.b16 %v2638, %v2634
      %v3927 = vpack.c.b16 %v2639, %v2635
      %v3928 = vpack.c.b16 %v2644, %v2640
      %v3929 = vpack.c.b16 %v2645, %v2641
      %v3930 = vpack.c.b16 %v2646, %v2642
      %v3931 = vpack.c.b16 %v2647, %v2643
      %v3932 = vpack.c.b16 %v2652, %v2648
      %v3933 = vpack.c.b16 %v2653, %v2649
      %v3934 = vpack.c.b16 %v2654, %v2650
      %v3935 = vpack.c.b16 %v2655, %v2651
      %v3936 = vpack.c.b16 %v2660, %v2656
      %v3937 = vpack.c.b16 %v2661, %v2657
      %v3938 = vpack.c.b16 %v2662, %v2658
      %v3939 = vpack.c.b16 %v2663, %v2659
      %v3940 = vpack.c.b16 %v2668, %v2664
      %v3941 = vpack.c.b16 %v2669, %v2665
      %v3942 = vpack.c.b16 %v2670, %v2666
      %v3943 = vpack.c.b16 %v2671, %v2667
      %v3944 = vpack.c.b16 %v2676, %v2672
      %v3945 = vpack.c.b16 %v2677, %v2673
      %v3946 = vpack.c.b16 %v2678, %v2674
      %v3947 = vpack.c.b16 %v2679, %v2675
      %v3948 = vpack.c.b16 %v2684, %v2680
      %v3949 = vpack.c.b16 %v2685, %v2681
      %v3950 = vpack.c.b16 %v2686, %v2682
      %v3951 = vpack.c.b16 %v2687, %v2683
      %v3952 = vpack.c.b16 %v2692, %v2688
      %v3953 = vpack.c.b16 %v2693, %v2689
      %v3954 = vpack.c.b16 %v2694, %v2690
      %v3955 = vpack.c.b16 %v2695, %v2691
      %v3956 = vpack.c.b16 %v2700, %v2696
      %v3957 = vpack.c.b16 %v2701, %v2697
      %v3958 = vpack.c.b16 %v2702, %v2698
      %v3959 = vpack.c.b16 %v2703, %v2699
      %v3960 = vpack.c.b16 %v2708, %v2704
      %v3961 = vpack.c.b16 %v2709, %v2705
      %v3962 = vpack.c.b16 %v2710, %v2706
      %v3963 = vpack.c.b16 %v2711, %v2707
      %v3964 = vpack.c.b16 %v2716, %v2712
      %v3965 = vpack.c.b16 %v2717, %v2713
      %v3966 = vpack.c.b16 %v2718, %v2714
      %v3967 = vpack.c.b16 %v2719, %v2715
      %v3968 = vpack.c.b16 %v2724, %v2720
      %v3969 = vpack.c.b16 %v2725, %v2721
      %v3970 = vpack.c.b16 %v2726, %v2722
      %v3971 = vpack.c.b16 %v2727, %v2723
      %v3972 = vpack.c.b16 %v2732, %v2728
      %v3973 = vpack.c.b16 %v2733, %v2729
      %v3974 = vpack.c.b16 %v2734, %v2730
      %v3975 = vpack.c.b16 %v2735, %v2731
      %v3976 = vpack.c.b16 %v2740, %v2736
      %v3977 = vpack.c.b16 %v2741, %v2737
      %v3978 = vpack.c.b16 %v2742, %v2738
      %v3979 = vpack.c.b16 %v2743, %v2739
      %v3980 = vpack.c.b16 %v2748, %v2744
      %v3981 = vpack.c.b16 %v2749, %v2745
      %v3982 = vpack.c.b16 %v2750, %v2746
      %v3983 = vpack.c.b16 %v2751, %v2747
      %v3984 = vpack.c.b16 %v2756, %v2752
      %v3985 = vpack.c.b16 %v2757, %v2753
      %v3986 = vpack.c.b16 %v2758, %v2754
      %v3987 = vpack.c.b16 %v2759, %v2755
      %v3988 = vpack.c.b16 %v2764, %v2760
      %v3989 = vpack.c.b16 %v2765, %v2761
      %v3990 = vpack.c.b16 %v2766, %v2762
      %v3991 = vpack.c.b16 %v2767, %v2763
      %v3992 = vpack.c.b16 %v2772, %v2768
      %v3993 = vpack.c.b16 %v2773, %v2769
      %v3994 = vpack.c.b16 %v2774, %v2770
      %v3995 = vpack.c.b16 %v2775, %v2771
      %v3996 = vpack.c.b16 %v2780, %v2776
      %v3997 = vpack.c.b16 %v2781, %v2777
      %v3998 = vpack.c.b16 %v2782, %v2778
      %v3999 = vpack.c.b16 %v2783, %v2779
      %v4000 = vpack.c.b16 %v2788, %v2784
      %v4001 = vpack.c.b16 %v2789, %v2785
      %v4002 = vpack.c.b16 %v2790, %v2786
      %v4003 = vpack.c.b16 %v2791, %v2787
      %v4004 = vpack.c.b16 %v2796, %v2792
      %v4005 = vpack.c.b16 %v2797, %v2793
      %v4006 = vpack.c.b16 %v2798, %v2794
      %v4007 = vpack.c.b16 %v2799, %v2795
      %v4008 = vpack.c.b16 %v2804, %v2800
      %v4009 = vpack.c.b16 %v2805, %v2801
      %v4010 = vpack.c.b16 %v2806, %v2802
      %v4011 = vpack.c.b16 %v2807, %v2803
      %v4012 = vpack.c.b16 %v2812, %v2808
      %v4013 = vpack.c.b16 %v2813, %v2809
      %v4014 = vpack.c.b16 %v2814, %v2810
      %v4015 = vpack.c.b16 %v2815, %v2811
      %v4016 = vpack.c.b16 %v2820, %v2816
      %v4017 = vpack.c.b16 %v2821, %v2817
      %v4018 = vpack.c.b16 %v2822, %v2818
      %v4019 = vpack.c.b16 %v2823, %v2819
      %v4020 = vpack.c.b16 %v2828, %v2824
      %v4021 = vpack.c.b16 %v2829, %v2825
      %v4022 = vpack.c.b16 %v2830, %v2826
      %v4023 = vpack.c.b16 %v2831, %v2827
      %v4024 = vpack.c.b16 %v2836, %v2832
      %v4025 = vpack.c.b16 %v2837, %v2833
      %v4026 = vpack.c.b16 %v2838, %v2834
      %v4027 = vpack.c.b16 %v2839, %v2835
      %v4028 = vpack.c.b16 %v2844, %v2840
      %v4029 = vpack.c.b16 %v2845, %v2841
      %v4030 = vpack.c.b16 %v2846, %v2842
      %v4031 = vpack.c.b16 %v2847, %v2843
      %v4032 = vpack.c.b16 %v2852, %v2848
      %v4033 = vpack.c.b16 %v2853, %v2849
      %v4034 = vpack.c.b16 %v2854, %v2850
      %v4035 = vpack.c.b16 %v2855, %v2851
      %v4036 = vpack.c.b16 %v2860, %v2856
      %v4037 = vpack.c.b16 %v2861, %v2857
      %v4038 = vpack.c.b16 %v2862, %v2858
      %v4039 = vpack.c.b16 %v2863, %v2859
      %v4040 = vpack.c.b16 %v2868, %v2864
      %v4041 = vpack.c.b16 %v2869, %v2865
      %v4042 = vpack.c.b16 %v2870, %v2866
      %v4043 = vpack.c.b16 %v2871, %v2867
      %v4044 = vpack.c.b16 %v2876, %v2872
      %v4045 = vpack.c.b16 %v2877, %v2873
      %v4046 = vpack.c.b16 %v2878, %v2874
      %v4047 = vpack.c.b16 %v2879, %v2875
      %v4048 = vpack.c.b16 %v2884, %v2880
      %v4049 = vpack.c.b16 %v2885, %v2881
      %v4050 = vpack.c.b16 %v2886, %v2882
      %v4051 = vpack.c.b16 %v2887, %v2883
      %v4052 = vpack.c.b16 %v2892, %v2888
      %v4053 = vpack.c.b16 %v2893, %v2889
      %v4054 = vpack.c.b16 %v2894, %v2890
      %v4055 = vpack.c.b16 %v2895, %v2891
      %v4056 = vpack.c.b16 %v2900, %v2896
      %v4057 = vpack.c.b16 %v2901, %v2897
      %v4058 = vpack.c.b16 %v2902, %v2898
      %v4059 = vpack.c.b16 %v2903, %v2899
      %v4060 = vpack.c.b16 %v2908, %v2904
      %v4061 = vpack.c.b16 %v2909, %v2905
      %v4062 = vpack.c.b16 %v2910, %v2906
      %v4063 = vpack.c.b16 %v2911, %v2907
      %v4064 = vpack.c.b16 %v2916, %v2912
      %v4065 = vpack.c.b16 %v2917, %v2913
      %v4066 = vpack.c.b16 %v2918, %v2914
      %v4067 = vpack.c.b16 %v2919, %v2915
      %v4068 = vpack.c.b16 %v2924, %v2920
      %v4069 = vpack.c.b16 %v2925, %v2921
      %v4070 = vpack.c.b16 %v2926, %v2922
      %v4071 = vpack.c.b16 %v2927, %v2923
      %v4072 = vpack.c.b16 %v2932, %v2928
      %v4073 = vpack.c.b16 %v2933, %v2929
      %v4074 = vpack.c.b16 %v2934, %v2930
      %v4075 = vpack.c.b16 %v2935, %v2931
      %v4076 = vpack.c.b16 %v2940, %v2936
      %v4077 = vpack.c.b16 %v2941, %v2937
      %v4078 = vpack.c.b16 %v2942, %v2938
      %v4079 = vpack.c.b16 %v2943, %v2939
      %v4080 = vpack.c.b16 %v2948, %v2944
      %v4081 = vpack.c.b16 %v2949, %v2945
      %v4082 = vpack.c.b16 %v2950, %v2946
      %v4083 = vpack.c.b16 %v2951, %v2947
      %v4084 = vpack.c.b16 %v2956, %v2952
      %v4085 = vpack.c.b16 %v2957, %v2953
      %v4086 = vpack.c.b16 %v2958, %v2954
      %v4087 = vpack.c.b16 %v2959, %v2955
      %v4088 = vpack.c.b16 %v2964, %v2960
      %v4089 = vpack.c.b16 %v2965, %v2961
      %v4090 = vpack.c.b16 %v2966, %v2962
      %v4091 = vpack.c.b16 %v2967, %v2963
      %v4092 = vpack.c.b16 %v2972, %v2968
      %v4093 = vpack.c.b16 %v2973, %v2969
      %v4094 = vpack.c.b16 %v2974, %v2970
      %v4095 = vpack.c.b16 %v2975, %v2971
      %v4096 = vpack.c.b16 %v2980, %v2976
      %v4097 = vpack.c.b16 %v2981, %v2977
      %v4098 = vpack.c.b16 %v2982, %v2978
      %v4099 = vpack.c.b16 %v2983, %v2979
      %v4100 = vpack.c.b16 %v2988, %v2984
      %v4101 = vpack.c.b16 %v2989, %v2985
      %v4102 = vpack.c.b16 %v2990, %v2986
      %v4103 = vpack.c.b16 %v2991, %v2987
      %v4104 = vpack.c.b16 %v2996, %v2992
      %v4105 = vpack.c.b16 %v2997, %v2993
      %v4106 = vpack.c.b16 %v2998, %v2994
      %v4107 = vpack.c.b16 %v2999, %v2995
      %v4108 = vpack.c.b16 %v3004, %v3000
      %v4109 = vpack.c.b16 %v3005, %v3001
      %v4110 = vpack.c.b16 %v3006, %v3002
      %v4111 = vpack.c.b16 %v3007, %v3003
      %v4112 = vpack.c.b16 %v3012, %v3008
      %v4113 = vpack.c.b16 %v3013, %v3009
      %v4114 = vpack.c.b16 %v3014, %v3010
      %v4115 = vpack.c.b16 %v3015, %v3011
      %v4116 = vpack.c.b16 %v3020, %v3016
      %v4117 = vpack.c.b16 %v3021, %v3017
      %v4118 = vpack.c.b16 %v3022, %v3018
      %v4119 = vpack.c.b16 %v3023, %v3019
      %v4120 = vpack.c.b16 %v3028, %v3024
      %v4121 = vpack.c.b16 %v3029, %v3025
      %v4122 = vpack.c.b16 %v3030, %v3026
      %v4123 = vpack.c.b16 %v3031, %v3027
      %v4124 = vpack.c.b16 %v3036, %v3032
      %v4125 = vpack.c.b16 %v3037, %v3033
      %v4126 = vpack.c.b16 %v3038, %v3034
      %v4127 = vpack.c.b16 %v3039, %v3035
      %v4128 = vpack.c.b16 %v3044, %v3040
      %v4129 = vpack.c.b16 %v3045, %v3041
      %v4130 = vpack.c.b16 %v3046, %v3042
      %v4131 = vpack.c.b16 %v3047, %v3043
      %v4132 = vpack.c.b16 %v3052, %v3048
      %v4133 = vpack.c.b16 %v3053, %v3049
      %v4134 = vpack.c.b16 %v3054, %v3050
      %v4135 = vpack.c.b16 %v3055, %v3051
      %v4136 = vpack.c.b16 %v3060, %v3056
      %v4137 = vpack.c.b16 %v3061, %v3057
      %v4138 = vpack.c.b16 %v3062, %v3058
      %v4139 = vpack.c.b16 %v3063, %v3059
      %v4140 = vpack.c.b16 %v3068, %v3064
      %v4141 = vpack.c.b16 %v3069, %v3065
      %v4142 = vpack.c.b16 %v3070, %v3066
      %v4143 = vpack.c.b16 %v3071, %v3067
      %v4144 = vpack.c.b16 %v3076, %v3072
      %v4145 = vpack.c.b16 %v3077, %v3073
      %v4146 = vpack.c.b16 %v3078, %v3074
      %v4147 = vpack.c.b16 %v3079, %v3075
      %v4148 = vpack.c.b16 %v3084, %v3080
      %v4149 = vpack.c.b16 %v3085, %v3081
      %v4150 = vpack.c.b16 %v3086, %v3082
      %v4151 = vpack.c.b16 %v3087, %v3083
      %v4152 = vpack.c.b16 %v3092, %v3088
      %v4153 = vpack.c.b16 %v3093, %v3089
      %v4154 = vpack.c.b16 %v3094, %v3090
      %v4155 = vpack.c.b16 %v3095, %v3091
      %v4156 = vpack.c.b16 %v3100, %v3096
      %v4157 = vpack.c.b16 %v3101, %v3097
      %v4158 = vpack.c.b16 %v3102, %v3098
      %v4159 = vpack.c.b16 %v3103, %v3099
      %v4160 = vpack.c.b16 %v3108, %v3104
      %v4161 = vpack.c.b16 %v3109, %v3105
      %v4162 = vpack.c.b16 %v3110, %v3106
      %v4163 = vpack.c.b16 %v3111, %v3107
      %v4164 = vpack.c.b16 %v3116, %v3112
      %v4165 = vpack.c.b16 %v3117, %v3113
      %v4166 = vpack.c.b16 %v3118, %v3114
      %v4167 = vpack.c.b16 %v3119, %v3115
      %v4168 = vpack.c.b16 %v3124, %v3120
      %v4169 = vpack.c.b16 %v3125, %v3121
      %v4170 = vpack.c.b16 %v3126, %v3122
      %v4171 = vpack.c.b16 %v3127, %v3123
      %v4172 = vpack.c.b16 %v3132, %v3128
      %v4173 = vpack.c.b16 %v3133, %v3129
      %v4174 = vpack.c.b16 %v3134, %v3130
      %v4175 = vpack.c.b16 %v3135, %v3131
      %v4176 = vpack.c.b16 %v3140, %v3136
      %v4177 = vpack.c.b16 %v3141, %v3137
      %v4178 = vpack.c.b16 %v3142, %v3138
      %v4179 = vpack.c.b16 %v3143, %v3139
      %v4180 = vpack.c.b16 %v3148, %v3144
      %v4181 = vpack.c.b16 %v3149, %v3145
      %v4182 = vpack.c.b16 %v3150, %v3146
      %v4183 = vpack.c.b16 %v3151, %v3147
      %v4184 = vpack.c.b16 %v3156, %v3152
      %v4185 = vpack.c.b16 %v3157, %v3153
      %v4186 = vpack.c.b16 %v3158, %v3154
      %v4187 = vpack.c.b16 %v3159, %v3155
      %v4188 = vpack.c.b16 %v3164, %v3160
      %v4189 = vpack.c.b16 %v3165, %v3161
      %v4190 = vpack.c.b16 %v3166, %v3162
      %v4191 = vpack.c.b16 %v3167, %v3163
      %v4192 = vpack.c.b16 %v3172, %v3168
      %v4193 = vpack.c.b16 %v3173, %v3169
      %v4194 = vpack.c.b16 %v3174, %v3170
      %v4195 = vpack.c.b16 %v3175, %v3171
      %v4196 = vpack.c.b16 %v3180, %v3176
      %v4197 = vpack.c.b16 %v3181, %v3177
      %v4198 = vpack.c.b16 %v3182, %v3178
      %v4199 = vpack.c.b16 %v3183, %v3179
      %v4200 = vpack.c.b16 %v3188, %v3184
      %v4201 = vpack.c.b16 %v3189, %v3185
      %v4202 = vpack.c.b16 %v3190, %v3186
      %v4203 = vpack.c.b16 %v3191, %v3187
      %v4204 = vpack.c.b16 %v3196, %v3192
      %v4205 = vpack.c.b16 %v3197, %v3193
      %v4206 = vpack.c.b16 %v3198, %v3194
      %v4207 = vpack.c.b16 %v3199, %v3195
      %v4208 = vpack.c.b16 %v3204, %v3200
      %v4209 = vpack.c.b16 %v3205, %v3201
      %v4210 = vpack.c.b16 %v3206, %v3202
      %v4211 = vpack.c.b16 %v3207, %v3203
      %v4212 = vpack.c.b16 %v3212, %v3208
      %v4213 = vpack.c.b16 %v3213, %v3209
      %v4214 = vpack.c.b16 %v3214, %v3210
      %v4215 = vpack.c.b16 %v3215, %v3211
      %v4216 = vpack.c.b16 %v3220, %v3216
      %v4217 = vpack.c.b16 %v3221, %v3217
      %v4218 = vpack.c.b16 %v3222, %v3218
      %v4219 = vpack.c.b16 %v3223, %v3219
      %v4220 = vpack.c.b16 %v3228, %v3224
      %v4221 = vpack.c.b16 %v3229, %v3225
      %v4222 = vpack.c.b16 %v3230, %v3226
      %v4223 = vpack.c.b16 %v3231, %v3227
      %v4224 = vpack.c.b16 %v3236, %v3232
      %v4225 = vpack.c.b16 %v3237, %v3233
      %v4226 = vpack.c.b16 %v3238, %v3234
      %v4227 = vpack.c.b16 %v3239, %v3235
      %v4228 = vpack.c.b16 %v3244, %v3240
      %v4229 = vpack.c.b16 %v3245, %v3241
      %v4230 = vpack.c.b16 %v3246, %v3242
      %v4231 = vpack.c.b16 %v3247, %v3243
      %v4232 = vpack.c.b16 %v3252, %v3248
      %v4233 = vpack.c.b16 %v3253, %v3249
      %v4234 = vpack.c.b16 %v3254, %v3250
      %v4235 = vpack.c.b16 %v3255, %v3251
      %v4236 = vpack.c.b16 %v3260, %v3256
      %v4237 = vpack.c.b16 %v3261, %v3257
      %v4238 = vpack.c.b16 %v3262, %v3258
      %v4239 = vpack.c.b16 %v3263, %v3259
      %v4240 = vpack.c.b16 %v3268, %v3264
      %v4241 = vpack.c.b16 %v3269, %v3265
      %v4242 = vpack.c.b16 %v3270, %v3266
      %v4243 = vpack.c.b16 %v3271, %v3267
      %v4244 = vpack.c.b16 %v3276, %v3272
      %v4245 = vpack.c.b16 %v3277, %v3273
      %v4246 = vpack.c.b16 %v3278, %v3274
      %v4247 = vpack.c.b16 %v3279, %v3275
      %v4248 = vpack.c.b16 %v3284, %v3280
      %v4249 = vpack.c.b16 %v3285, %v3281
      %v4250 = vpack.c.b16 %v3286, %v3282
      %v4251 = vpack.c.b16 %v3287, %v3283
      %v4252 = vpack.c.b16 %v3292, %v3288
      %v4253 = vpack.c.b16 %v3293, %v3289
      %v4254 = vpack.c.b16 %v3294, %v3290
      %v4255 = vpack.c.b16 %v3295, %v3291
      %v4256 = vpack.c.b16 %v3300, %v3296
      %v4257 = vpack.c.b16 %v3301, %v3297
      %v4258 = vpack.c.b16 %v3302, %v3298
      %v4259 = vpack.c.b16 %v3303, %v3299
      %v4260 = vpack.c.b16 %v3308, %v3304
      %v4261 = vpack.c.b16 %v3309, %v3305
      %v4262 = vpack.c.b16 %v3310, %v3306
      %v4263 = vpack.c.b16 %v3311, %v3307
      %v4264 = vpack.c.b16 %v3316, %v3312
      %v4265 = vpack.c.b16 %v3317, %v3313
      %v4266 = vpack.c.b16 %v3318, %v3314
      %v4267 = vpack.c.b16 %v3319, %v3315
      %v4268 = vpack.c.b16 %v3324, %v3320
      %v4269 = vpack.c.b16 %v3325, %v3321
      %v4270 = vpack.c.b16 %v3326, %v3322
      %v4271 = vpack.c.b16 %v3327, %v3323
      %v4272 = vpack.c.b16 %v3332, %v3328
      %v4273 = vpack.c.b16 %v3333, %v3329
      %v4274 = vpack.c.b16 %v3334, %v3330
      %v4275 = vpack.c.b16 %v3335, %v3331
      %v4276 = vpack.c.b16 %v3340, %v3336
      %v4277 = vpack.c.b16 %v3341, %v3337
      %v4278 = vpack.c.b16 %v3342, %v3338
      %v4279 = vpack.c.b16 %v3343, %v3339
      %v4280 = vpack.c.b16 %v3348, %v3344
      %v4281 = vpack.c.b16 %v3349, %v3345
      %v4282 = vpack.c.b16 %v3350, %v3346
      %v4283 = vpack.c.b16 %v3351, %v3347
      %v4284 = vpack.c.b16 %v3356, %v3352
      %v4285 = vpack.c.b16 %v3357, %v3353
      %v4286 = vpack.c.b16 %v3358, %v3354
      %v4287 = vpack.c.b16 %v3359, %v3355
      %v4288 = vpack.c.b16 %v3364, %v3360
      %v4289 = vpack.c.b16 %v3365, %v3361
      %v4290 = vpack.c.b16 %v3366, %v3362
      %v4291 = vpack.c.b16 %v3367, %v3363
      %v4292 = vpack.c.b16 %v3372, %v3368
      %v4293 = vpack.c.b16 %v3373, %v3369
      %v4294 = vpack.c.b16 %v3374, %v3370
      %v4295 = vpack.c.b16 %v3375, %v3371
      %v4296 = vpack.c.b16 %v3380, %v3376
      %v4297 = vpack.c.b16 %v3381, %v3377
      %v4298 = vpack.c.b16 %v3382, %v3378
      %v4299 = vpack.c.b16 %v3383, %v3379
      %v4300 = vpack.c.b16 %v3388, %v3384
      %v4301 = vpack.c.b16 %v3389, %v3385
      %v4302 = vpack.c.b16 %v3390, %v3386
      %v4303 = vpack.c.b16 %v3391, %v3387
      %v4304 = vpack.c.b16 %v3396, %v3392
      %v4305 = vpack.c.b16 %v3397, %v3393
      %v4306 = vpack.c.b16 %v3398, %v3394
      %v4307 = vpack.c.b16 %v3399, %v3395
      %v4308 = vpack.c.b16 %v3404, %v3400
      %v4309 = vpack.c.b16 %v3405, %v3401
      %v4310 = vpack.c.b16 %v3406, %v3402
      %v4311 = vpack.c.b16 %v3407, %v3403
      %v4312 = vpack.c.b16 %v3412, %v3408
      %v4313 = vpack.c.b16 %v3413, %v3409
      %v4314 = vpack.c.b16 %v3414, %v3410
      %v4315 = vpack.c.b16 %v3415, %v3411
      %v4316 = vpack.c.b16 %v3420, %v3416
      %v4317 = vpack.c.b16 %v3421, %v3417
      %v4318 = vpack.c.b16 %v3422, %v3418
      %v4319 = vpack.c.b16 %v3423, %v3419
      %v4320 = vpack.c.b16 %v3428, %v3424
      %v4321 = vpack.c.b16 %v3429, %v3425
      %v4322 = vpack.c.b16 %v3430, %v3426
      %v4323 = vpack.c.b16 %v3431, %v3427
      %v4324 = vpack.c.b16 %v3436, %v3432
      %v4325 = vpack.c.b16 %v3437, %v3433
      %v4326 = vpack.c.b16 %v3438, %v3434
      %v4327 = vpack.c.b16 %v3439, %v3435
      %v4328 = vpack.c.b16 %v3444, %v3440
      %v4329 = vpack.c.b16 %v3445, %v3441
      %v4330 = vpack.c.b16 %v3446, %v3442
      %v4331 = vpack.c.b16 %v3447, %v3443
      %v4332 = vpack.c.b16 %v3452, %v3448
      %v4333 = vpack.c.b16 %v3453, %v3449
      %v4334 = vpack.c.b16 %v3454, %v3450
      %v4335 = vpack.c.b16 %v3455, %v3451
      %v4336 = vpack.c.b16 %v3460, %v3456
      %v4337 = vpack.c.b16 %v3461, %v3457
      %v4338 = vpack.c.b16 %v3462, %v3458
      %v4339 = vpack.c.b16 %v3463, %v3459
      %v4340 = vpack.c.b16 %v3468, %v3464
      %v4341 = vpack.c.b16 %v3469, %v3465
      %v4342 = vpack.c.b16 %v3470, %v3466
      %v4343 = vpack.c.b16 %v3471, %v3467
      %v4344 = vpack.c.b16 %v3476, %v3472
      %v4345 = vpack.c.b16 %v3477, %v3473
      %v4346 = vpack.c.b16 %v3478, %v3474
      %v4347 = vpack.c.b16 %v3479, %v3475
      %v4348 = vpack.c.b16 %v3484, %v3480
      %v4349 = vpack.c.b16 %v3485, %v3481
      %v4350 = vpack.c.b16 %v3486, %v3482
      %v4351 = vpack.c.b16 %v3487, %v3483
      %v4352 = vpack.c.b16 %v3492, %v3488
      %v4353 = vpack.c.b16 %v3493, %v3489
      %v4354 = vpack.c.b16 %v3494, %v3490
      %v4355 = vpack.c.b16 %v3495, %v3491
      %v4356 = vpack.c.b16 %v3500, %v3496
      %v4357 = vpack.c.b16 %v3501, %v3497
      %v4358 = vpack.c.b16 %v3502, %v3498
      %v4359 = vpack.c.b16 %v3503, %v3499
      %v4360 = vpack.c.b16 %v3508, %v3504
      %v4361 = vpack.c.b16 %v3509, %v3505
      %v4362 = vpack.c.b16 %v3510, %v3506
      %v4363 = vpack.c.b16 %v3511, %v3507
      %v4364 = vpack.c.b16 %v3516, %v3512
      %v4365 = vpack.c.b16 %v3517, %v3513
      %v4366 = vpack.c.b16 %v3518, %v3514
      %v4367 = vpack.c.b16 %v3519, %v3515
      %v4368 = vpack.c.b16 %v3524, %v3520
      %v4369 = vpack.c.b16 %v3525, %v3521
      %v4370 = vpack.c.b16 %v3526, %v3522
      %v4371 = vpack.c.b16 %v3527, %v3523
      %v4372 = vpack.c.b16 %v3532, %v3528
      %v4373 = vpack.c.b16 %v3533, %v3529
      %v4374 = vpack.c.b16 %v3534, %v3530
      %v4375 = vpack.c.b16 %v3535, %v3531
      %v4376 = vpack.c.b16 %v3540, %v3536
      %v4377 = vpack.c.b16 %v3541, %v3537
      %v4378 = vpack.c.b16 %v3542, %v3538
      %v4379 = vpack.c.b16 %v3543, %v3539
      %v4380 = vpack.c.b16 %v3548, %v3544
      %v4381 = vpack.c.b16 %v3549, %v3545
      %v4382 = vpack.c.b16 %v3550, %v3546
      %v4383 = vpack.c.b16 %v3551, %v3547
      %v4384 = vpack.c.b16 %v3556, %v3552
      %v4385 = vpack.c.b16 %v3557, %v3553
      %v4386 = vpack.c.b16 %v3558, %v3554
      %v4387 = vpack.c.b16 %v3559, %v3555
      %v4388 = vpack.c.b16 %v3564, %v3560
      %v4389 = vpack.c.b16 %v3565, %v3561
      %v4390 = vpack.c.b16 %v3566, %v3562
      %v4391 = vpack.c.b16 %v3567, %v3563
      %v4392 = vpack.c.b16 %v3572, %v3568
      %v4393 = vpack.c.b16 %v3573, %v3569
      %v4394 = vpack.c.b16 %v3574, %v3570
      %v4395 = vpack.c.b16 %v3575, %v3571
      %v4396 = vpack.c.b16 %v3580, %v3576
      %v4397 = vpack.c.b16 %v3581, %v3577
      %v4398 = vpack.c.b16 %v3582, %v3578
      %v4399 = vpack.c.b16 %v3583, %v3579
      %v4400 = vpack.c.b16 %v3588, %v3584
      %v4401 = vpack.c.b16 %v3589, %v3585
      %v4402 = vpack.c.b16 %v3590, %v3586
      %v4403 = vpack.c.b16 %v3591, %v3587
      %v4404 = vpack.c.b16 %v3596, %v3592
      %v4405 = vpack.c.b16 %v3597, %v3593
      %v4406 = vpack.c.b16 %v3598, %v3594
      %v4407 = vpack.c.b16 %v3599, %v3595
      %v4408 = vpack.c.b16 %v3604, %v3600
      %v4409 = vpack.c.b16 %v3605, %v3601
      %v4410 = vpack.c.b16 %v3606, %v3602
      %v4411 = vpack.c.b16 %v3607, %v3603
      %v4412 = vpack.c.b16 %v3612, %v3608
      %v4413 = vpack.c.b16 %v3613, %v3609
      %v4414 = vpack.c.b16 %v3614, %v3610
      %v4415 = vpack.c.b16 %v3615, %v3611
      %v4416 = vpack.c.b16 %v3620, %v3616
      %v4417 = vpack.c.b16 %v3621, %v3617
      %v4418 = vpack.c.b16 %v3622, %v3618
      %v4419 = vpack.c.b16 %v3623, %v3619
      %v4420 = vpack.c.b16 %v3628, %v3624
      %v4421 = vpack.c.b16 %v3629, %v3625
      %v4422 = vpack.c.b16 %v3630, %v3626
      %v4423 = vpack.c.b16 %v3631, %v3627
      %v4424 = vpack.c.b16 %v3636, %v3632
      %v4425 = vpack.c.b16 %v3637, %v3633
      %v4426 = vpack.c.b16 %v3638, %v3634
      %v4427 = vpack.c.b16 %v3639, %v3635
      %v4428 = vpack.c.b16 %v3644, %v3640
      %v4429 = vpack.c.b16 %v3645, %v3641
      %v4430 = vpack.c.b16 %v3646, %v3642
      %v4431 = vpack.c.b16 %v3647, %v3643
      %vm5216 = vcmask 523264
      %v5218 = vsel %vm5216, %v489, 0
      %5220 = vmatprep.subr.bf16.mxu0 %v3649
      %5221 = vmatpush1.bf16.msra.mxu0 %v3648
      %5222 = vmatprep.subr.bf16.mxu0 %v3653
      %5223 = vmatpush1.bf16.msra.mxu0 %v3652
      %5224 = vmatprep.subr.bf16.mxu0 %v3657
      %5225 = vmatpush1.bf16.msra.mxu0 %v3656
      %5226 = vmatprep.subr.bf16.mxu0 %v3661
      %5227 = vmatpush1.bf16.msra.mxu0 %v3660
      %5228 = vmatprep.subr.bf16.mxu0 %v3665
      %5229 = vmatpush1.bf16.msra.mxu0 %v3664
      %5230 = vmatprep.subr.bf16.mxu0 %v3669
      %5231 = vmatpush1.bf16.msra.mxu0 %v3668
      %5232 = vmatprep.subr.bf16.mxu0 %v3673
      %5233 = vmatpush1.bf16.msra.mxu0 %v3672
      %5234 = vmatprep.subr.bf16.mxu0 %v3677
      %5235 = vmatpush1.bf16.msra.mxu0 %v3676
      %5236 = vmatprep.subr.bf16.mxu0 %v3681
      %5237 = vmatpush1.bf16.msra.mxu0 %v3680
      %5238 = vmatprep.subr.bf16.mxu0 %v3685
      %5239 = vmatpush1.bf16.msra.mxu0 %v3684
      %5240 = vmatprep.subr.bf16.mxu0 %v3689
      %5241 = vmatpush1.bf16.msra.mxu0 %v3688
      %5242 = vmatprep.subr.bf16.mxu0 %v3693
      %5243 = vmatpush1.bf16.msra.mxu0 %v3692
      %5244 = vmatprep.subr.bf16.mxu0 %v3697
      %5245 = vmatpush1.bf16.msra.mxu0 %v3696
      %5246 = vmatprep.subr.bf16.mxu0 %v3701
      %5247 = vmatpush1.bf16.msra.mxu0 %v3700
      %5248 = vmatprep.subr.bf16.mxu0 %v3705
      %5249 = vmatpush1.bf16.msra.mxu0 %v3704
      %5250 = vmatprep.subr.bf16.mxu0 %v3709
      %5251 = vmatpush1.bf16.msra.mxu0 %v3708
      %5252 = vmatprep.mubr.bf16.mxu0 %v466
      %5253 = vmatmul.mubr.bf16.gmra.mrb[0].mxu0 %v465
      %v5254 = vpop.f32.mrb[0].mxu0
      %v5255 = vadd.f32 %v1279, %v5254
      %v5256 = vpop.f32.mrb[0].mxu0
      %v5257 = vadd.f32 %v1283, %v5256
      %v5258 = vpop.f32.mrb[0].mxu0
      %v5259 = vpop.f32.mrb[0].mxu0
      %5260 = vdwg.mxu0
      %5261 = vmatprep.subr.bf16.mxu0 %v3713
      %5262 = vmatpush1.bf16.msra.mxu0 %v3712
      %5263 = vmatprep.subr.bf16.mxu0 %v3717
      %5264 = vmatpush1.bf16.msra.mxu0 %v3716
      %5265 = vmatprep.subr.bf16.mxu0 %v3721
      %5266 = vmatpush1.bf16.msra.mxu0 %v3720
      %5267 = vmatprep.subr.bf16.mxu0 %v3725
      %5268 = vmatpush1.bf16.msra.mxu0 %v3724
      %5269 = vmatprep.subr.bf16.mxu0 %v3729
      %5270 = vmatpush1.bf16.msra.mxu0 %v3728
      %5271 = vmatprep.subr.bf16.mxu0 %v3733
      %5272 = vmatpush1.bf16.msra.mxu0 %v3732
      %5273 = vmatprep.subr.bf16.mxu0 %v3737
      %5274 = vmatpush1.bf16.msra.mxu0 %v3736
      %5275 = vmatprep.subr.bf16.mxu0 %v3741
      %5276 = vmatpush1.bf16.msra.mxu0 %v3740
      %5277 = vmatprep.subr.bf16.mxu0 %v3745
      %5278 = vmatpush1.bf16.msra.mxu0 %v3744
      %5279 = vmatprep.subr.bf16.mxu0 %v3749
      %5280 = vmatpush1.bf16.msra.mxu0 %v3748
      %5281 = vmatprep.subr.bf16.mxu0 %v3753
      %5282 = vmatpush1.bf16.msra.mxu0 %v3752
      %5283 = vmatprep.subr.bf16.mxu0 %v3757
      %5284 = vmatpush1.bf16.msra.mxu0 %v3756
      %5285 = vmatprep.subr.bf16.mxu0 %v3761
      %5286 = vmatpush1.bf16.msra.mxu0 %v3760
      %5287 = vmatprep.subr.bf16.mxu0 %v3765
      %5288 = vmatpush1.bf16.msra.mxu0 %v3764
      %5289 = vmatprep.subr.bf16.mxu0 %v3769
      %5290 = vmatpush1.bf16.msra.mxu0 %v3768
      %5291 = vmatprep.subr.bf16.mxu0 %v3773
      %5292 = vmatpush1.bf16.msra.mxu0 %v3772
      %5293 = vmatprep.mubr.bf16.mxu0 %v468
      %5294 = vmatmul.mubr.bf16.gmra.mrb[0].mxu0 %v467
      %v5295 = vpop.f32.mrb[0].mxu0
      %v5296 = vadd.f32 %v5255, %v5295
      %v5297 = vpop.f32.mrb[0].mxu0
      %v5298 = vadd.f32 %v5257, %v5297
      %v5299 = vpop.f32.mrb[0].mxu0
      %v5300 = vpop.f32.mrb[0].mxu0
      %5301 = vdwg.mxu0
      %5302 = vmatprep.subr.bf16.mxu0 %v3777
      %5303 = vmatpush1.bf16.msra.mxu0 %v3776
      %5304 = vmatprep.subr.bf16.mxu0 %v3781
      %5305 = vmatpush1.bf16.msra.mxu0 %v3780
      %5306 = vmatprep.subr.bf16.mxu0 %v3785
      %5307 = vmatpush1.bf16.msra.mxu0 %v3784
      %5308 = vmatprep.subr.bf16.mxu0 %v3789
      %5309 = vmatpush1.bf16.msra.mxu0 %v3788
      %5310 = vmatprep.subr.bf16.mxu0 %v3793
      %5311 = vmatpush1.bf16.msra.mxu0 %v3792
      %5312 = vmatprep.subr.bf16.mxu0 %v3797
      %5313 = vmatpush1.bf16.msra.mxu0 %v3796
      %5314 = vmatprep.subr.bf16.mxu0 %v3801
      %5315 = vmatpush1.bf16.msra.mxu0 %v3800
      %5316 = vmatprep.subr.bf16.mxu0 %v3805
      %5317 = vmatpush1.bf16.msra.mxu0 %v3804
      %5318 = vmatprep.subr.bf16.mxu0 %v3809
      %5319 = vmatpush1.bf16.msra.mxu0 %v3808
      %5320 = vmatprep.subr.bf16.mxu0 %v3813
      %5321 = vmatpush1.bf16.msra.mxu0 %v3812
      %5322 = vmatprep.subr.bf16.mxu0 %v3817
      %5323 = vmatpush1.bf16.msra.mxu0 %v3816
      %5324 = vmatprep.subr.bf16.mxu0 %v3821
      %5325 = vmatpush1.bf16.msra.mxu0 %v3820
      %5326 = vmatprep.subr.bf16.mxu0 %v3825
      %5327 = vmatpush1.bf16.msra.mxu0 %v3824
      %5328 = vmatprep.subr.bf16.mxu0 %v3829
      %5329 = vmatpush1.bf16.msra.mxu0 %v3828
      %5330 = vmatprep.subr.bf16.mxu0 %v3833
      %5331 = vmatpush1.bf16.msra.mxu0 %v3832
      %5332 = vmatprep.subr.bf16.mxu0 %v3837
      %5333 = vmatpush1.bf16.msra.mxu0 %v3836
      %5334 = vmatprep.mubr.bf16.mxu0 %v470
      %5335 = vmatmul.mubr.bf16.gmra.mrb[0].mxu0 %v469
      %v5336 = vpop.f32.mrb[0].mxu0
      %v5337 = vadd.f32 %v5296, %v5336
      %v5338 = vpop.f32.mrb[0].mxu0
      %v5339 = vadd.f32 %v5298, %v5338
      %v5340 = vpop.f32.mrb[0].mxu0
      %v5341 = vpop.f32.mrb[0].mxu0
      %5342 = vdwg.mxu0
      %5343 = vmatprep.subr.bf16.mxu0 %v3841
      %5344 = vmatpush1.bf16.msra.mxu0 %v3840
      %5345 = vmatprep.subr.bf16.mxu0 %v3845
      %5346 = vmatpush1.bf16.msra.mxu0 %v3844
      %5347 = vmatprep.subr.bf16.mxu0 %v3849
      %5348 = vmatpush1.bf16.msra.mxu0 %v3848
      %5349 = vmatprep.subr.bf16.mxu0 %v3853
      %5350 = vmatpush1.bf16.msra.mxu0 %v3852
      %5351 = vmatprep.subr.bf16.mxu0 %v3857
      %5352 = vmatpush1.bf16.msra.mxu0 %v3856
      %5353 = vmatprep.subr.bf16.mxu0 %v3861
      %5354 = vmatpush1.bf16.msra.mxu0 %v3860
      %5355 = vmatprep.subr.bf16.mxu0 %v3865
      %5356 = vmatpush1.bf16.msra.mxu0 %v3864
      %5357 = vmatprep.subr.bf16.mxu0 %v3869
      %5358 = vmatpush1.bf16.msra.mxu0 %v3868
      %5359 = vmatprep.subr.bf16.mxu0 %v3873
      %5360 = vmatpush1.bf16.msra.mxu0 %v3872
      %5361 = vmatprep.subr.bf16.mxu0 %v3877
      %5362 = vmatpush1.bf16.msra.mxu0 %v3876
      %5363 = vmatprep.subr.bf16.mxu0 %v3881
      %5364 = vmatpush1.bf16.msra.mxu0 %v3880
      %5365 = vmatprep.subr.bf16.mxu0 %v3885
      %5366 = vmatpush1.bf16.msra.mxu0 %v3884
      %5367 = vmatprep.subr.bf16.mxu0 %v3889
      %5368 = vmatpush1.bf16.msra.mxu0 %v3888
      %5369 = vmatprep.subr.bf16.mxu0 %v3893
      %5370 = vmatpush1.bf16.msra.mxu0 %v3892
      %5371 = vmatprep.subr.bf16.mxu0 %v3897
      %5372 = vmatpush1.bf16.msra.mxu0 %v3896
      %5373 = vmatprep.subr.bf16.mxu0 %v3901
      %5374 = vmatpush1.bf16.msra.mxu0 %v3900
      %5375 = vmatprep.mubr.bf16.mxu0 %v472
      %5376 = vmatmul.mubr.bf16.gmra.mrb[0].mxu0 %v471
      %v5377 = vpop.f32.mrb[0].mxu0
      %v5378 = vadd.f32 %v5337, %v5377
      %v5379 = vpop.f32.mrb[0].mxu0
      %v5380 = vadd.f32 %v5339, %v5379
      %v5381 = vpop.f32.mrb[0].mxu0
      %v5382 = vpop.f32.mrb[0].mxu0
      %5383 = vdwg.mxu0
      %5384 = vmatprep.subr.bf16.mxu0 %v3905
      %5385 = vmatpush1.bf16.msra.mxu0 %v3904
      %5386 = vmatprep.subr.bf16.mxu0 %v3909
      %5387 = vmatpush1.bf16.msra.mxu0 %v3908
      %5388 = vmatprep.subr.bf16.mxu0 %v3913
      %5389 = vmatpush1.bf16.msra.mxu0 %v3912
      %5390 = vmatprep.subr.bf16.mxu0 %v3917
      %5391 = vmatpush1.bf16.msra.mxu0 %v3916
      %5392 = vmatprep.subr.bf16.mxu0 %v3921
      %5393 = vmatpush1.bf16.msra.mxu0 %v3920
      %5394 = vmatprep.subr.bf16.mxu0 %v3925
      %5395 = vmatpush1.bf16.msra.mxu0 %v3924
      %5396 = vmatprep.subr.bf16.mxu0 %v3929
      %5397 = vmatpush1.bf16.msra.mxu0 %v3928
      %5398 = vmatprep.subr.bf16.mxu0 %v3933
      %5399 = vmatpush1.bf16.msra.mxu0 %v3932
      %5400 = vmatprep.subr.bf16.mxu0 %v3937
      %5401 = vmatpush1.bf16.msra.mxu0 %v3936
      %5402 = vmatprep.subr.bf16.mxu0 %v3941
      %5403 = vmatpush1.bf16.msra.mxu0 %v3940
      %5404 = vmatprep.subr.bf16.mxu0 %v3945
      %5405 = vmatpush1.bf16.msra.mxu0 %v3944
      %5406 = vmatprep.subr.bf16.mxu0 %v3949
      %5407 = vmatpush1.bf16.msra.mxu0 %v3948
      %5408 = vmatprep.subr.bf16.mxu0 %v3953
      %5409 = vmatpush1.bf16.msra.mxu0 %v3952
      %5410 = vmatprep.subr.bf16.mxu0 %v3957
      %5411 = vmatpush1.bf16.msra.mxu0 %v3956
      %5412 = vmatprep.subr.bf16.mxu0 %v3961
      %5413 = vmatpush1.bf16.msra.mxu0 %v3960
      %5414 = vmatprep.subr.bf16.mxu0 %v3965
      %5415 = vmatpush1.bf16.msra.mxu0 %v3964
      %5416 = vmatprep.mubr.bf16.mxu0 %v474
      %5417 = vmatmul.mubr.bf16.gmra.mrb[0].mxu0 %v473
      %v5418 = vpop.f32.mrb[0].mxu0
      %v5419 = vadd.f32 %v5378, %v5418
      %v5420 = vpop.f32.mrb[0].mxu0
      %v5421 = vadd.f32 %v5380, %v5420
      %v5422 = vpop.f32.mrb[0].mxu0
      %v5423 = vpop.f32.mrb[0].mxu0
      %5424 = vdwg.mxu0
      %5425 = vmatprep.subr.bf16.mxu0 %v3969
      %5426 = vmatpush1.bf16.msra.mxu0 %v3968
      %5427 = vmatprep.subr.bf16.mxu0 %v3973
      %5428 = vmatpush1.bf16.msra.mxu0 %v3972
      %5429 = vmatprep.subr.bf16.mxu0 %v3977
      %5430 = vmatpush1.bf16.msra.mxu0 %v3976
      %5431 = vmatprep.subr.bf16.mxu0 %v3981
      %5432 = vmatpush1.bf16.msra.mxu0 %v3980
      %5433 = vmatprep.subr.bf16.mxu0 %v3985
      %5434 = vmatpush1.bf16.msra.mxu0 %v3984
      %5435 = vmatprep.subr.bf16.mxu0 %v3989
      %5436 = vmatpush1.bf16.msra.mxu0 %v3988
      %5437 = vmatprep.subr.bf16.mxu0 %v3993
      %5438 = vmatpush1.bf16.msra.mxu0 %v3992
      %5439 = vmatprep.subr.bf16.mxu0 %v3997
      %5440 = vmatpush1.bf16.msra.mxu0 %v3996
      %5441 = vmatprep.subr.bf16.mxu0 %v4001
      %5442 = vmatpush1.bf16.msra.mxu0 %v4000
      %5443 = vmatprep.subr.bf16.mxu0 %v4005
      %5444 = vmatpush1.bf16.msra.mxu0 %v4004
      %5445 = vmatprep.subr.bf16.mxu0 %v4009
      %5446 = vmatpush1.bf16.msra.mxu0 %v4008
      %5447 = vmatprep.subr.bf16.mxu0 %v4013
      %5448 = vmatpush1.bf16.msra.mxu0 %v4012
      %5449 = vmatprep.subr.bf16.mxu0 %v4017
      %5450 = vmatpush1.bf16.msra.mxu0 %v4016
      %5451 = vmatprep.subr.bf16.mxu0 %v4021
      %5452 = vmatpush1.bf16.msra.mxu0 %v4020
      %5453 = vmatprep.subr.bf16.mxu0 %v4025
      %5454 = vmatpush1.bf16.msra.mxu0 %v4024
      %5455 = vmatprep.subr.bf16.mxu0 %v4029
      %5456 = vmatpush1.bf16.msra.mxu0 %v4028
      %5457 = vmatprep.mubr.bf16.mxu0 %v476
      %5458 = vmatmul.mubr.bf16.gmra.mrb[0].mxu0 %v475
      %v5459 = vpop.f32.mrb[0].mxu0
      %v5460 = vadd.f32 %v5419, %v5459
      %v5461 = vpop.f32.mrb[0].mxu0
      %v5462 = vadd.f32 %v5421, %v5461
      %v5463 = vpop.f32.mrb[0].mxu0
      %v5464 = vpop.f32.mrb[0].mxu0
      %5465 = vdwg.mxu0
      %5466 = vmatprep.subr.bf16.mxu0 %v4033
      %5467 = vmatpush1.bf16.msra.mxu0 %v4032
      %5468 = vmatprep.subr.bf16.mxu0 %v4037
      %5469 = vmatpush1.bf16.msra.mxu0 %v4036
      %5470 = vmatprep.subr.bf16.mxu0 %v4041
      %5471 = vmatpush1.bf16.msra.mxu0 %v4040
      %5472 = vmatprep.subr.bf16.mxu0 %v4045
      %5473 = vmatpush1.bf16.msra.mxu0 %v4044
      %5474 = vmatprep.subr.bf16.mxu0 %v4049
      %5475 = vmatpush1.bf16.msra.mxu0 %v4048
      %5476 = vmatprep.subr.bf16.mxu0 %v4053
      %5477 = vmatpush1.bf16.msra.mxu0 %v4052
      %5478 = vmatprep.subr.bf16.mxu0 %v4057
      %5479 = vmatpush1.bf16.msra.mxu0 %v4056
      %5480 = vmatprep.subr.bf16.mxu0 %v4061
      %5481 = vmatpush1.bf16.msra.mxu0 %v4060
      %5482 = vmatprep.subr.bf16.mxu0 %v4065
      %5483 = vmatpush1.bf16.msra.mxu0 %v4064
      %5484 = vmatprep.subr.bf16.mxu0 %v4069
      %5485 = vmatpush1.bf16.msra.mxu0 %v4068
      %5486 = vmatprep.subr.bf16.mxu0 %v4073
      %5487 = vmatpush1.bf16.msra.mxu0 %v4072
      %5488 = vmatprep.subr.bf16.mxu0 %v4077
      %5489 = vmatpush1.bf16.msra.mxu0 %v4076
      %5490 = vmatprep.subr.bf16.mxu0 %v4081
      %5491 = vmatpush1.bf16.msra.mxu0 %v4080
      %5492 = vmatprep.subr.bf16.mxu0 %v4085
      %5493 = vmatpush1.bf16.msra.mxu0 %v4084
      %5494 = vmatprep.subr.bf16.mxu0 %v4089
      %5495 = vmatpush1.bf16.msra.mxu0 %v4088
      %5496 = vmatprep.subr.bf16.mxu0 %v4093
      %5497 = vmatpush1.bf16.msra.mxu0 %v4092
      %5498 = vmatprep.mubr.bf16.mxu0 %v478
      %5499 = vmatmul.mubr.bf16.gmra.mrb[0].mxu0 %v477
      %v5500 = vpop.f32.mrb[0].mxu0
      %v5501 = vadd.f32 %v5460, %v5500
      %v5502 = vpop.f32.mrb[0].mxu0
      %v5503 = vadd.f32 %v5462, %v5502
      %v5504 = vpop.f32.mrb[0].mxu0
      %v5505 = vpop.f32.mrb[0].mxu0
      %5506 = vdwg.mxu0
      %5507 = vmatprep.subr.bf16.mxu0 %v4097
      %5508 = vmatpush1.bf16.msra.mxu0 %v4096
      %5509 = vmatprep.subr.bf16.mxu0 %v4101
      %5510 = vmatpush1.bf16.msra.mxu0 %v4100
      %5511 = vmatprep.subr.bf16.mxu0 %v4105
      %5512 = vmatpush1.bf16.msra.mxu0 %v4104
      %5513 = vmatprep.subr.bf16.mxu0 %v4109
      %5514 = vmatpush1.bf16.msra.mxu0 %v4108
      %5515 = vmatprep.subr.bf16.mxu0 %v4113
      %5516 = vmatpush1.bf16.msra.mxu0 %v4112
      %5517 = vmatprep.subr.bf16.mxu0 %v4117
      %5518 = vmatpush1.bf16.msra.mxu0 %v4116
      %5519 = vmatprep.subr.bf16.mxu0 %v4121
      %5520 = vmatpush1.bf16.msra.mxu0 %v4120
      %5521 = vmatprep.subr.bf16.mxu0 %v4125
      %5522 = vmatpush1.bf16.msra.mxu0 %v4124
      %5523 = vmatprep.subr.bf16.mxu0 %v4129
      %5524 = vmatpush1.bf16.msra.mxu0 %v4128
      %5525 = vmatprep.subr.bf16.mxu0 %v4133
      %5526 = vmatpush1.bf16.msra.mxu0 %v4132
      %5527 = vmatprep.subr.bf16.mxu0 %v4137
      %5528 = vmatpush1.bf16.msra.mxu0 %v4136
      %5529 = vmatprep.subr.bf16.mxu0 %v4141
      %5530 = vmatpush1.bf16.msra.mxu0 %v4140
      %5531 = vmatprep.subr.bf16.mxu0 %v4145
      %5532 = vmatpush1.bf16.msra.mxu0 %v4144
      %5533 = vmatprep.subr.bf16.mxu0 %v4149
      %5534 = vmatpush1.bf16.msra.mxu0 %v4148
      %5535 = vmatprep.subr.bf16.mxu0 %v4153
      %5536 = vmatpush1.bf16.msra.mxu0 %v4152
      %5537 = vmatprep.subr.bf16.mxu0 %v4157
      %5538 = vmatpush1.bf16.msra.mxu0 %v4156
      %5539 = vmatprep.mubr.bf16.mxu0 %v480
      %5540 = vmatmul.mubr.bf16.gmra.mrb[0].mxu0 %v479
      %v5541 = vpop.f32.mrb[0].mxu0
      %v5542 = vadd.f32 %v5501, %v5541
      %v5543 = vpop.f32.mrb[0].mxu0
      %v5544 = vadd.f32 %v5503, %v5543
      %v5545 = vpop.f32.mrb[0].mxu0
      %v5546 = vpop.f32.mrb[0].mxu0
      %5547 = vdwg.mxu0
      %5548 = vmatprep.subr.bf16.mxu0 %v4161
      %5549 = vmatpush1.bf16.msra.mxu0 %v4160
      %5550 = vmatprep.subr.bf16.mxu0 %v4165
      %5551 = vmatpush1.bf16.msra.mxu0 %v4164
      %5552 = vmatprep.subr.bf16.mxu0 %v4169
      %5553 = vmatpush1.bf16.msra.mxu0 %v4168
      %5554 = vmatprep.subr.bf16.mxu0 %v4173
      %5555 = vmatpush1.bf16.msra.mxu0 %v4172
      %5556 = vmatprep.subr.bf16.mxu0 %v4177
      %5557 = vmatpush1.bf16.msra.mxu0 %v4176
      %5558 = vmatprep.subr.bf16.mxu0 %v4181
      %5559 = vmatpush1.bf16.msra.mxu0 %v4180
      %5560 = vmatprep.subr.bf16.mxu0 %v4185
      %5561 = vmatpush1.bf16.msra.mxu0 %v4184
      %5562 = vmatprep.subr.bf16.mxu0 %v4189
      %5563 = vmatpush1.bf16.msra.mxu0 %v4188
      %5564 = vmatprep.subr.bf16.mxu0 %v4193
      %5565 = vmatpush1.bf16.msra.mxu0 %v4192
      %5566 = vmatprep.subr.bf16.mxu0 %v4197
      %5567 = vmatpush1.bf16.msra.mxu0 %v4196
      %5568 = vmatprep.subr.bf16.mxu0 %v4201
      %5569 = vmatpush1.bf16.msra.mxu0 %v4200
      %5570 = vmatprep.subr.bf16.mxu0 %v4205
      %5571 = vmatpush1.bf16.msra.mxu0 %v4204
      %5572 = vmatprep.subr.bf16.mxu0 %v4209
      %5573 = vmatpush1.bf16.msra.mxu0 %v4208
      %5574 = vmatprep.subr.bf16.mxu0 %v4213
      %5575 = vmatpush1.bf16.msra.mxu0 %v4212
      %5576 = vmatprep.subr.bf16.mxu0 %v4217
      %5577 = vmatpush1.bf16.msra.mxu0 %v4216
      %5578 = vmatprep.subr.bf16.mxu0 %v4221
      %5579 = vmatpush1.bf16.msra.mxu0 %v4220
      %5580 = vmatprep.mubr.bf16.mxu0 %v482
      %5581 = vmatmul.mubr.bf16.gmra.mrb[0].mxu0 %v481
      %v5582 = vpop.f32.mrb[0].mxu0
      %v5583 = vadd.f32 %v5542, %v5582
      %v5584 = vpop.f32.mrb[0].mxu0
      %v5585 = vadd.f32 %v5544, %v5584
      %v5586 = vpop.f32.mrb[0].mxu0
      %v5587 = vpop.f32.mrb[0].mxu0
      %5588 = vdwg.mxu0
      %5589 = vmatprep.subr.bf16.mxu0 %v4225
      %5590 = vmatpush1.bf16.msra.mxu0 %v4224
      %5591 = vmatprep.subr.bf16.mxu0 %v4229
      %5592 = vmatpush1.bf16.msra.mxu0 %v4228
      %5593 = vmatprep.subr.bf16.mxu0 %v4233
      %5594 = vmatpush1.bf16.msra.mxu0 %v4232
      %5595 = vmatprep.subr.bf16.mxu0 %v4237
      %5596 = vmatpush1.bf16.msra.mxu0 %v4236
      %5597 = vmatprep.subr.bf16.mxu0 %v4241
      %5598 = vmatpush1.bf16.msra.mxu0 %v4240
      %5599 = vmatprep.subr.bf16.mxu0 %v4245
      %5600 = vmatpush1.bf16.msra.mxu0 %v4244
      %5601 = vmatprep.subr.bf16.mxu0 %v4249
      %5602 = vmatpush1.bf16.msra.mxu0 %v4248
      %5603 = vmatprep.subr.bf16.mxu0 %v4253
      %5604 = vmatpush1.bf16.msra.mxu0 %v4252
      %5605 = vmatprep.subr.bf16.mxu0 %v4257
      %5606 = vmatpush1.bf16.msra.mxu0 %v4256
      %5607 = vmatprep.subr.bf16.mxu0 %v4261
      %5608 = vmatpush1.bf16.msra.mxu0 %v4260
      %5609 = vmatprep.subr.bf16.mxu0 %v4265
      %5610 = vmatpush1.bf16.msra.mxu0 %v4264
      %5611 = vmatprep.subr.bf16.mxu0 %v4269
      %5612 = vmatpush1.bf16.msra.mxu0 %v4268
      %5613 = vmatprep.subr.bf16.mxu0 %v4273
      %5614 = vmatpush1.bf16.msra.mxu0 %v4272
      %5615 = vmatprep.subr.bf16.mxu0 %v4277
      %5616 = vmatpush1.bf16.msra.mxu0 %v4276
      %5617 = vmatprep.subr.bf16.mxu0 %v4281
      %5618 = vmatpush1.bf16.msra.mxu0 %v4280
      %5619 = vmatprep.subr.bf16.mxu0 %v4285
      %5620 = vmatpush1.bf16.msra.mxu0 %v4284
      %5621 = vmatprep.mubr.bf16.mxu0 %v484
      %5622 = vmatmul.mubr.bf16.gmra.mrb[0].mxu0 %v483
      %v5623 = vpop.f32.mrb[0].mxu0
      %v5624 = vadd.f32 %v5583, %v5623
      %v5625 = vpop.f32.mrb[0].mxu0
      %v5626 = vadd.f32 %v5585, %v5625
      %v5627 = vpop.f32.mrb[0].mxu0
      %v5628 = vpop.f32.mrb[0].mxu0
      %5629 = vdwg.mxu0
      %5630 = vmatprep.subr.bf16.mxu0 %v4289
      %5631 = vmatpush1.bf16.msra.mxu0 %v4288
      %5632 = vmatprep.subr.bf16.mxu0 %v4293
      %5633 = vmatpush1.bf16.msra.mxu0 %v4292
      %5634 = vmatprep.subr.bf16.mxu0 %v4297
      %5635 = vmatpush1.bf16.msra.mxu0 %v4296
      %5636 = vmatprep.subr.bf16.mxu0 %v4301
      %5637 = vmatpush1.bf16.msra.mxu0 %v4300
      %5638 = vmatprep.subr.bf16.mxu0 %v4305
      %5639 = vmatpush1.bf16.msra.mxu0 %v4304
      %5640 = vmatprep.subr.bf16.mxu0 %v4309
      %5641 = vmatpush1.bf16.msra.mxu0 %v4308
      %5642 = vmatprep.subr.bf16.mxu0 %v4313
      %5643 = vmatpush1.bf16.msra.mxu0 %v4312
      %5644 = vmatprep.subr.bf16.mxu0 %v4317
      %5645 = vmatpush1.bf16.msra.mxu0 %v4316
      %5646 = vmatprep.subr.bf16.mxu0 %v4321
      %5647 = vmatpush1.bf16.msra.mxu0 %v4320
      %5648 = vmatprep.subr.bf16.mxu0 %v4325
      %5649 = vmatpush1.bf16.msra.mxu0 %v4324
      %5650 = vmatprep.subr.bf16.mxu0 %v4329
      %5651 = vmatpush1.bf16.msra.mxu0 %v4328
      %5652 = vmatprep.subr.bf16.mxu0 %v4333
      %5653 = vmatpush1.bf16.msra.mxu0 %v4332
      %5654 = vmatprep.subr.bf16.mxu0 %v4337
      %5655 = vmatpush1.bf16.msra.mxu0 %v4336
      %5656 = vmatprep.subr.bf16.mxu0 %v4341
      %5657 = vmatpush1.bf16.msra.mxu0 %v4340
      %5658 = vmatprep.subr.bf16.mxu0 %v4345
      %5659 = vmatpush1.bf16.msra.mxu0 %v4344
      %5660 = vmatprep.subr.bf16.mxu0 %v4349
      %5661 = vmatpush1.bf16.msra.mxu0 %v4348
      %5662 = vmatprep.mubr.bf16.mxu0 %v486
      %5663 = vmatmul.mubr.bf16.gmra.mrb[0].mxu0 %v485
      %v5664 = vpop.f32.mrb[0].mxu0
      %v5665 = vadd.f32 %v5624, %v5664
      %v5666 = vpop.f32.mrb[0].mxu0
      %v5667 = vadd.f32 %v5626, %v5666
      %v5668 = vpop.f32.mrb[0].mxu0
      %v5669 = vpop.f32.mrb[0].mxu0
      %5670 = vdwg.mxu0
      %5671 = vmatprep.subr.bf16.mxu0 %v4353
      %5672 = vmatpush1.bf16.msra.mxu0 %v4352
      %5673 = vmatprep.subr.bf16.mxu0 %v4357
      %5674 = vmatpush1.bf16.msra.mxu0 %v4356
      %5675 = vmatprep.subr.bf16.mxu0 %v4361
      %5676 = vmatpush1.bf16.msra.mxu0 %v4360
      %5677 = vmatprep.subr.bf16.mxu0 %v4365
      %5678 = vmatpush1.bf16.msra.mxu0 %v4364
      %5679 = vmatprep.subr.bf16.mxu0 %v4369
      %5680 = vmatpush1.bf16.msra.mxu0 %v4368
      %5681 = vmatprep.subr.bf16.mxu0 %v4373
      %5682 = vmatpush1.bf16.msra.mxu0 %v4372
      %5683 = vmatprep.subr.bf16.mxu0 %v4377
      %5684 = vmatpush1.bf16.msra.mxu0 %v4376
      %5685 = vmatprep.subr.bf16.mxu0 %v4381
      %5686 = vmatpush1.bf16.msra.mxu0 %v4380
      %5687 = vmatprep.subr.bf16.mxu0 %v4385
      %5688 = vmatpush1.bf16.msra.mxu0 %v4384
      %5689 = vmatprep.subr.bf16.mxu0 %v4389
      %5690 = vmatpush1.bf16.msra.mxu0 %v4388
      %5691 = vmatprep.subr.bf16.mxu0 %v4393
      %5692 = vmatpush1.bf16.msra.mxu0 %v4392
      %5693 = vmatprep.subr.bf16.mxu0 %v4397
      %5694 = vmatpush1.bf16.msra.mxu0 %v4396
      %5695 = vmatprep.subr.bf16.mxu0 %v4401
      %5696 = vmatpush1.bf16.msra.mxu0 %v4400
      %5697 = vmatprep.subr.bf16.mxu0 %v4405
      %5698 = vmatpush1.bf16.msra.mxu0 %v4404
      %5699 = vmatprep.subr.bf16.mxu0 %v4409
      %5700 = vmatpush1.bf16.msra.mxu0 %v4408
      %5701 = vmatprep.subr.bf16.mxu0 %v4413
      %5702 = vmatpush1.bf16.msra.mxu0 %v4412
      %5703 = vmatprep.mubr.bf16.mxu0 %v488
      %5704 = vmatmul.mubr.bf16.gmra.mrb[0].mxu0 %v487
      %v5705 = vpop.f32.mrb[0].mxu0
      %v5706 = vadd.f32 %v5665, %v5705
      %v5707 = vpop.f32.mrb[0].mxu0
      %v5708 = vadd.f32 %v5667, %v5707
      %v5709 = vpop.f32.mrb[0].mxu0
      %v5710 = vpop.f32.mrb[0].mxu0
      %5711 = vdwg.mxu0
      %5712 = vmatprep.subr.bf16.mxu0 %v4417
      %5713 = vmatpush1.bf16.msra.mxu0 %v4416
      %5714 = vmatprep.subr.bf16.mxu0 %v4421
      %5715 = vmatpush1.bf16.msra.mxu0 %v4420
      %5716 = vmatprep.subr.bf16.mxu0 %v4425
      %5717 = vmatpush1.bf16.msra.mxu0 %v4424
      %5718 = vmatprep.subr.bf16.mxu0 %v4429
      %5719 = vmatpush1.bf16.msra.mxu0 %v4428
      %5720 = vmatprep.subr.bf16.mxu0 0
      %5721 = vmatpush1.bf16.msra.mxu0 0
      %5722 = vmatprep.subr.bf16.mxu0 0
      %5723 = vmatpush1.bf16.msra.mxu0 0
      %5724 = vmatprep.subr.bf16.mxu0 0
      %5725 = vmatpush1.bf16.msra.mxu0 0
      %5726 = vmatprep.subr.bf16.mxu0 0
      %5727 = vmatpush1.bf16.msra.mxu0 0
      %5728 = vmatprep.subr.bf16.mxu0 0
      %5729 = vmatpush1.bf16.msra.mxu0 0
      %5730 = vmatprep.subr.bf16.mxu0 0
      %5731 = vmatpush1.bf16.msra.mxu0 0
      %5732 = vmatprep.subr.bf16.mxu0 0
      %5733 = vmatpush1.bf16.msra.mxu0 0
      %5734 = vmatprep.subr.bf16.mxu0 0
      %5735 = vmatpush1.bf16.msra.mxu0 0
      %5736 = vmatprep.subr.bf16.mxu0 0
      %5737 = vmatpush1.bf16.msra.mxu0 0
      %5738 = vmatprep.subr.bf16.mxu0 0
      %5739 = vmatpush1.bf16.msra.mxu0 0
      %5740 = vmatprep.subr.bf16.mxu0 0
      %5741 = vmatpush1.bf16.msra.mxu0 0
      %5742 = vmatprep.subr.bf16.mxu0 0
      %5743 = vmatpush1.bf16.msra.mxu0 0
      %5744 = vmatprep.mubr.bf16.mxu0 0
      %5745 = vmatmul.mubr.bf16.gmra.mrb[0].mxu0 %v5218
      %v5746 = vpop.f32.mrb[0].mxu0
      %v5747 = vadd.f32 %v5706, %v5746
      %v5748 = vpop.f32.mrb[0].mxu0
      %v5749 = vadd.f32 %v5708, %v5748
      %v5750 = vpop.f32.mrb[0].mxu0
      %v5751 = vpop.f32.mrb[0].mxu0
      %5752 = vdwg.mxu0
      %5753 = vmatprep.subr.bf16.mxu0 %v3651
      %5754 = vmatpush1.bf16.msra.mxu0 %v3650
      %5755 = vmatprep.subr.bf16.mxu0 %v3655
      %5756 = vmatpush1.bf16.msra.mxu0 %v3654
      %5757 = vmatprep.subr.bf16.mxu0 %v3659
      %5758 = vmatpush1.bf16.msra.mxu0 %v3658
      %5759 = vmatprep.subr.bf16.mxu0 %v3663
      %5760 = vmatpush1.bf16.msra.mxu0 %v3662
      %5761 = vmatprep.subr.bf16.mxu0 %v3667
      %5762 = vmatpush1.bf16.msra.mxu0 %v3666
      %5763 = vmatprep.subr.bf16.mxu0 %v3671
      %5764 = vmatpush1.bf16.msra.mxu0 %v3670
      %5765 = vmatprep.subr.bf16.mxu0 %v3675
      %5766 = vmatpush1.bf16.msra.mxu0 %v3674
      %5767 = vmatprep.subr.bf16.mxu0 %v3679
      %5768 = vmatpush1.bf16.msra.mxu0 %v3678
      %5769 = vmatprep.subr.bf16.mxu0 %v3683
      %5770 = vmatpush1.bf16.msra.mxu0 %v3682
      %5771 = vmatprep.subr.bf16.mxu0 %v3687
      %5772 = vmatpush1.bf16.msra.mxu0 %v3686
      %5773 = vmatprep.subr.bf16.mxu0 %v3691
      %5774 = vmatpush1.bf16.msra.mxu0 %v3690
      %5775 = vmatprep.subr.bf16.mxu0 %v3695
      %5776 = vmatpush1.bf16.msra.mxu0 %v3694
      %5777 = vmatprep.subr.bf16.mxu0 %v3699
      %5778 = vmatpush1.bf16.msra.mxu0 %v3698
      %5779 = vmatprep.subr.bf16.mxu0 %v3703
      %5780 = vmatpush1.bf16.msra.mxu0 %v3702
      %5781 = vmatprep.subr.bf16.mxu0 %v3707
      %5782 = vmatpush1.bf16.msra.mxu0 %v3706
      %5783 = vmatprep.subr.bf16.mxu0 %v3711
      %5784 = vmatpush1.bf16.msra.mxu0 %v3710
      %5785 = vmatprep.mubr.bf16.mxu0 %v466
      %5786 = vmatmul.mubr.bf16.gmra.mrb[0].mxu0 %v465
      %v5787 = vpop.f32.mrb[0].mxu0
      %v5788 = vadd.f32 %v1287, %v5787
      %v5789 = vpop.f32.mrb[0].mxu0
      %v5790 = vadd.f32 %v1291, %v5789
      %v5791 = vpop.f32.mrb[0].mxu0
      %v5792 = vpop.f32.mrb[0].mxu0
      %5793 = vdwg.mxu0
      %5794 = vmatprep.subr.bf16.mxu0 %v3715
      %5795 = vmatpush1.bf16.msra.mxu0 %v3714
      %5796 = vmatprep.subr.bf16.mxu0 %v3719
      %5797 = vmatpush1.bf16.msra.mxu0 %v3718
      %5798 = vmatprep.subr.bf16.mxu0 %v3723
      %5799 = vmatpush1.bf16.msra.mxu0 %v3722
      %5800 = vmatprep.subr.bf16.mxu0 %v3727
      %5801 = vmatpush1.bf16.msra.mxu0 %v3726
      %5802 = vmatprep.subr.bf16.mxu0 %v3731
      %5803 = vmatpush1.bf16.msra.mxu0 %v3730
      %5804 = vmatprep.subr.bf16.mxu0 %v3735
      %5805 = vmatpush1.bf16.msra.mxu0 %v3734
      %5806 = vmatprep.subr.bf16.mxu0 %v3739
      %5807 = vmatpush1.bf16.msra.mxu0 %v3738
      %5808 = vmatprep.subr.bf16.mxu0 %v3743
      %5809 = vmatpush1.bf16.msra.mxu0 %v3742
      %5810 = vmatprep.subr.bf16.mxu0 %v3747
      %5811 = vmatpush1.bf16.msra.mxu0 %v3746
      %5812 = vmatprep.subr.bf16.mxu0 %v3751
      %5813 = vmatpush1.bf16.msra.mxu0 %v3750
      %5814 = vmatprep.subr.bf16.mxu0 %v3755
      %5815 = vmatpush1.bf16.msra.mxu0 %v3754
      %5816 = vmatprep.subr.bf16.mxu0 %v3759
      %5817 = vmatpush1.bf16.msra.mxu0 %v3758
      %5818 = vmatprep.subr.bf16.mxu0 %v3763
      %5819 = vmatpush1.bf16.msra.mxu0 %v3762
      %5820 = vmatprep.subr.bf16.mxu0 %v3767
      %5821 = vmatpush1.bf16.msra.mxu0 %v3766
      %5822 = vmatprep.subr.bf16.mxu0 %v3771
      %5823 = vmatpush1.bf16.msra.mxu0 %v3770
      %5824 = vmatprep.subr.bf16.mxu0 %v3775
      %5825 = vmatpush1.bf16.msra.mxu0 %v3774
      %5826 = vmatprep.mubr.bf16.mxu0 %v468
      %5827 = vmatmul.mubr.bf16.gmra.mrb[0].mxu0 %v467
      %v5828 = vpop.f32.mrb[0].mxu0
      %v5829 = vadd.f32 %v5788, %v5828
      %v5830 = vpop.f32.mrb[0].mxu0
      %v5831 = vadd.f32 %v5790, %v5830
      %v5832 = vpop.f32.mrb[0].mxu0
      %v5833 = vpop.f32.mrb[0].mxu0
      %5834 = vdwg.mxu0
      %5835 = vmatprep.subr.bf16.mxu0 %v3779
      %5836 = vmatpush1.bf16.msra.mxu0 %v3778
      %5837 = vmatprep.subr.bf16.mxu0 %v3783
      %5838 = vmatpush1.bf16.msra.mxu0 %v3782
      %5839 = vmatprep.subr.bf16.mxu0 %v3787
      %5840 = vmatpush1.bf16.msra.mxu0 %v3786
      %5841 = vmatprep.subr.bf16.mxu0 %v3791
      %5842 = vmatpush1.bf16.msra.mxu0 %v3790
      %5843 = vmatprep.subr.bf16.mxu0 %v3795
      %5844 = vmatpush1.bf16.msra.mxu0 %v3794
      %5845 = vmatprep.subr.bf16.mxu0 %v3799
      %5846 = vmatpush1.bf16.msra.mxu0 %v3798
      %5847 = vmatprep.subr.bf16.mxu0 %v3803
      %5848 = vmatpush1.bf16.msra.mxu0 %v3802
      %5849 = vmatprep.subr.bf16.mxu0 %v3807
      %5850 = vmatpush1.bf16.msra.mxu0 %v3806
      %5851 = vmatprep.subr.bf16.mxu0 %v3811
      %5852 = vmatpush1.bf16.msra.mxu0 %v3810
      %5853 = vmatprep.subr.bf16.mxu0 %v3815
      %5854 = vmatpush1.bf16.msra.mxu0 %v3814
      %5855 = vmatprep.subr.bf16.mxu0 %v3819
      %5856 = vmatpush1.bf16.msra.mxu0 %v3818
      %5857 = vmatprep.subr.bf16.mxu0 %v3823
      %5858 = vmatpush1.bf16.msra.mxu0 %v3822
      %5859 = vmatprep.subr.bf16.mxu0 %v3827
      %5860 = vmatpush1.bf16.msra.mxu0 %v3826
      %5861 = vmatprep.subr.bf16.mxu0 %v3831
      %5862 = vmatpush1.bf16.msra.mxu0 %v3830
      %5863 = vmatprep.subr.bf16.mxu0 %v3835
      %5864 = vmatpush1.bf16.msra.mxu0 %v3834
      %5865 = vmatprep.subr.bf16.mxu0 %v3839
      %5866 = vmatpush1.bf16.msra.mxu0 %v3838
      %5867 = vmatprep.mubr.bf16.mxu0 %v470
      %5868 = vmatmul.mubr.bf16.gmra.mrb[0].mxu0 %v469
      %v5869 = vpop.f32.mrb[0].mxu0
      %v5870 = vadd.f32 %v5829, %v5869
      %v5871 = vpop.f32.mrb[0].mxu0
      %v5872 = vadd.f32 %v5831, %v5871
      %v5873 = vpop.f32.mrb[0].mxu0
      %v5874 = vpop.f32.mrb[0].mxu0
      %5875 = vdwg.mxu0
      %5876 = vmatprep.subr.bf16.mxu0 %v3843
      %5877 = vmatpush1.bf16.msra.mxu0 %v3842
      %5878 = vmatprep.subr.bf16.mxu0 %v3847
      %5879 = vmatpush1.bf16.msra.mxu0 %v3846
      %5880 = vmatprep.subr.bf16.mxu0 %v3851
      %5881 = vmatpush1.bf16.msra.mxu0 %v3850
      %5882 = vmatprep.subr.bf16.mxu0 %v3855
      %5883 = vmatpush1.bf16.msra.mxu0 %v3854
      %5884 = vmatprep.subr.bf16.mxu0 %v3859
      %5885 = vmatpush1.bf16.msra.mxu0 %v3858
      %5886 = vmatprep.subr.bf16.mxu0 %v3863
      %5887 = vmatpush1.bf16.msra.mxu0 %v3862
      %5888 = vmatprep.subr.bf16.mxu0 %v3867
      %5889 = vmatpush1.bf16.msra.mxu0 %v3866
      %5890 = vmatprep.subr.bf16.mxu0 %v3871
      %5891 = vmatpush1.bf16.msra.mxu0 %v3870
      %5892 = vmatprep.subr.bf16.mxu0 %v3875
      %5893 = vmatpush1.bf16.msra.mxu0 %v3874
      %5894 = vmatprep.subr.bf16.mxu0 %v3879
      %5895 = vmatpush1.bf16.msra.mxu0 %v3878
      %5896 = vmatprep.subr.bf16.mxu0 %v3883
      %5897 = vmatpush1.bf16.msra.mxu0 %v3882
      %5898 = vmatprep.subr.bf16.mxu0 %v3887
      %5899 = vmatpush1.bf16.msra.mxu0 %v3886
      %5900 = vmatprep.subr.bf16.mxu0 %v3891
      %5901 = vmatpush1.bf16.msra.mxu0 %v3890
      %5902 = vmatprep.subr.bf16.mxu0 %v3895
      %5903 = vmatpush1.bf16.msra.mxu0 %v3894
      %5904 = vmatprep.subr.bf16.mxu0 %v3899
      %5905 = vmatpush1.bf16.msra.mxu0 %v3898
      %5906 = vmatprep.subr.bf16.mxu0 %v3903
      %5907 = vmatpush1.bf16.msra.mxu0 %v3902
      %5908 = vmatprep.mubr.bf16.mxu0 %v472
      %5909 = vmatmul.mubr.bf16.gmra.mrb[0].mxu0 %v471
      %v5910 = vpop.f32.mrb[0].mxu0
      %v5911 = vadd.f32 %v5870, %v5910
      %v5912 = vpop.f32.mrb[0].mxu0
      %v5913 = vadd.f32 %v5872, %v5912
      %v5914 = vpop.f32.mrb[0].mxu0
      %v5915 = vpop.f32.mrb[0].mxu0
      %5916 = vdwg.mxu0
      %5917 = vmatprep.subr.bf16.mxu0 %v3907
      %5918 = vmatpush1.bf16.msra.mxu0 %v3906
      %5919 = vmatprep.subr.bf16.mxu0 %v3911
      %5920 = vmatpush1.bf16.msra.mxu0 %v3910
      %5921 = vmatprep.subr.bf16.mxu0 %v3915
      %5922 = vmatpush1.bf16.msra.mxu0 %v3914
      %5923 = vmatprep.subr.bf16.mxu0 %v3919
      %5924 = vmatpush1.bf16.msra.mxu0 %v3918
      %5925 = vmatprep.subr.bf16.mxu0 %v3923
      %5926 = vmatpush1.bf16.msra.mxu0 %v3922
      %5927 = vmatprep.subr.bf16.mxu0 %v3927
      %5928 = vmatpush1.bf16.msra.mxu0 %v3926
      %5929 = vmatprep.subr.bf16.mxu0 %v3931
      %5930 = vmatpush1.bf16.msra.mxu0 %v3930
      %5931 = vmatprep.subr.bf16.mxu0 %v3935
      %5932 = vmatpush1.bf16.msra.mxu0 %v3934
      %5933 = vmatprep.subr.bf16.mxu0 %v3939
      %5934 = vmatpush1.bf16.msra.mxu0 %v3938
      %5935 = vmatprep.subr.bf16.mxu0 %v3943
      %5936 = vmatpush1.bf16.msra.mxu0 %v3942
      %5937 = vmatprep.subr.bf16.mxu0 %v3947
      %5938 = vmatpush1.bf16.msra.mxu0 %v3946
      %5939 = vmatprep.subr.bf16.mxu0 %v3951
      %5940 = vmatpush1.bf16.msra.mxu0 %v3950
      %5941 = vmatprep.subr.bf16.mxu0 %v3955
      %5942 = vmatpush1.bf16.msra.mxu0 %v3954
      %5943 = vmatprep.subr.bf16.mxu0 %v3959
      %5944 = vmatpush1.bf16.msra.mxu0 %v3958
      %5945 = vmatprep.subr.bf16.mxu0 %v3963
      %5946 = vmatpush1.bf16.msra.mxu0 %v3962
      %5947 = vmatprep.subr.bf16.mxu0 %v3967
      %5948 = vmatpush1.bf16.msra.mxu0 %v3966
      %5949 = vmatprep.mubr.bf16.mxu0 %v474
      %5950 = vmatmul.mubr.bf16.gmra.mrb[0].mxu0 %v473
      %v5951 = vpop.f32.mrb[0].mxu0
      %v5952 = vadd.f32 %v5911, %v5951
      %v5953 = vpop.f32.mrb[0].mxu0
      %v5954 = vadd.f32 %v5913, %v5953
      %v5955 = vpop.f32.mrb[0].mxu0
      %v5956 = vpop.f32.mrb[0].mxu0
      %5957 = vdwg.mxu0
      %5958 = vmatprep.subr.bf16.mxu0 %v3971
      %5959 = vmatpush1.bf16.msra.mxu0 %v3970
      %5960 = vmatprep.subr.bf16.mxu0 %v3975
      %5961 = vmatpush1.bf16.msra.mxu0 %v3974
      %5962 = vmatprep.subr.bf16.mxu0 %v3979
      %5963 = vmatpush1.bf16.msra.mxu0 %v3978
      %5964 = vmatprep.subr.bf16.mxu0 %v3983
      %5965 = vmatpush1.bf16.msra.mxu0 %v3982
      %5966 = vmatprep.subr.bf16.mxu0 %v3987
      %5967 = vmatpush1.bf16.msra.mxu0 %v3986
      %5968 = vmatprep.subr.bf16.mxu0 %v3991
      %5969 = vmatpush1.bf16.msra.mxu0 %v3990
      %5970 = vmatprep.subr.bf16.mxu0 %v3995
      %5971 = vmatpush1.bf16.msra.mxu0 %v3994
      %5972 = vmatprep.subr.bf16.mxu0 %v3999
      %5973 = vmatpush1.bf16.msra.mxu0 %v3998
      %5974 = vmatprep.subr.bf16.mxu0 %v4003
      %5975 = vmatpush1.bf16.msra.mxu0 %v4002
      %5976 = vmatprep.subr.bf16.mxu0 %v4007
      %5977 = vmatpush1.bf16.msra.mxu0 %v4006
      %5978 = vmatprep.subr.bf16.mxu0 %v4011
      %5979 = vmatpush1.bf16.msra.mxu0 %v4010
      %5980 = vmatprep.subr.bf16.mxu0 %v4015
      %5981 = vmatpush1.bf16.msra.mxu0 %v4014
      %5982 = vmatprep.subr.bf16.mxu0 %v4019
      %5983 = vmatpush1.bf16.msra.mxu0 %v4018
      %5984 = vmatprep.subr.bf16.mxu0 %v4023
      %5985 = vmatpush1.bf16.msra.mxu0 %v4022
      %5986 = vmatprep.subr.bf16.mxu0 %v4027
      %5987 = vmatpush1.bf16.msra.mxu0 %v4026
      %5988 = vmatprep.subr.bf16.mxu0 %v4031
      %5989 = vmatpush1.bf16.msra.mxu0 %v4030
      %5990 = vmatprep.mubr.bf16.mxu0 %v476
      %5991 = vmatmul.mubr.bf16.gmra.mrb[0].mxu0 %v475
      %v5992 = vpop.f32.mrb[0].mxu0
      %v5993 = vadd.f32 %v5952, %v5992
      %v5994 = vpop.f32.mrb[0].mxu0
      %v5995 = vadd.f32 %v5954, %v5994
      %v5996 = vpop.f32.mrb[0].mxu0
      %v5997 = vpop.f32.mrb[0].mxu0
      %5998 = vdwg.mxu0
      %5999 = vmatprep.subr.bf16.mxu0 %v4035
      %6000 = vmatpush1.bf16.msra.mxu0 %v4034
      %6001 = vmatprep.subr.bf16.mxu0 %v4039
      %6002 = vmatpush1.bf16.msra.mxu0 %v4038
      %6003 = vmatprep.subr.bf16.mxu0 %v4043
      %6004 = vmatpush1.bf16.msra.mxu0 %v4042
      %6005 = vmatprep.subr.bf16.mxu0 %v4047
      %6006 = vmatpush1.bf16.msra.mxu0 %v4046
      %6007 = vmatprep.subr.bf16.mxu0 %v4051
      %6008 = vmatpush1.bf16.msra.mxu0 %v4050
      %6009 = vmatprep.subr.bf16.mxu0 %v4055
      %6010 = vmatpush1.bf16.msra.mxu0 %v4054
      %6011 = vmatprep.subr.bf16.mxu0 %v4059
      %6012 = vmatpush1.bf16.msra.mxu0 %v4058
      %6013 = vmatprep.subr.bf16.mxu0 %v4063
      %6014 = vmatpush1.bf16.msra.mxu0 %v4062
      %6015 = vmatprep.subr.bf16.mxu0 %v4067
      %6016 = vmatpush1.bf16.msra.mxu0 %v4066
      %6017 = vmatprep.subr.bf16.mxu0 %v4071
      %6018 = vmatpush1.bf16.msra.mxu0 %v4070
      %6019 = vmatprep.subr.bf16.mxu0 %v4075
      %6020 = vmatpush1.bf16.msra.mxu0 %v4074
      %6021 = vmatprep.subr.bf16.mxu0 %v4079
      %6022 = vmatpush1.bf16.msra.mxu0 %v4078
      %6023 = vmatprep.subr.bf16.mxu0 %v4083
      %6024 = vmatpush1.bf16.msra.mxu0 %v4082
      %6025 = vmatprep.subr.bf16.mxu0 %v4087
      %6026 = vmatpush1.bf16.msra.mxu0 %v4086
      %6027 = vmatprep.subr.bf16.mxu0 %v4091
      %6028 = vmatpush1.bf16.msra.mxu0 %v4090
      %6029 = vmatprep.subr.bf16.mxu0 %v4095
      %6030 = vmatpush1.bf16.msra.mxu0 %v4094
      %6031 = vmatprep.mubr.bf16.mxu0 %v478
      %6032 = vmatmul.mubr.bf16.gmra.mrb[0].mxu0 %v477
      %v6033 = vpop.f32.mrb[0].mxu0
      %v6034 = vadd.f32 %v5993, %v6033
      %v6035 = vpop.f32.mrb[0].mxu0
      %v6036 = vadd.f32 %v5995, %v6035
      %v6037 = vpop.f32.mrb[0].mxu0
      %v6038 = vpop.f32.mrb[0].mxu0
      %6039 = vdwg.mxu0
      %6040 = vmatprep.subr.bf16.mxu0 %v4099
      %6041 = vmatpush1.bf16.msra.mxu0 %v4098
      %6042 = vmatprep.subr.bf16.mxu0 %v4103
      %6043 = vmatpush1.bf16.msra.mxu0 %v4102
      %6044 = vmatprep.subr.bf16.mxu0 %v4107
      %6045 = vmatpush1.bf16.msra.mxu0 %v4106
      %6046 = vmatprep.subr.bf16.mxu0 %v4111
      %6047 = vmatpush1.bf16.msra.mxu0 %v4110
      %6048 = vmatprep.subr.bf16.mxu0 %v4115
      %6049 = vmatpush1.bf16.msra.mxu0 %v4114
      %6050 = vmatprep.subr.bf16.mxu0 %v4119
      %6051 = vmatpush1.bf16.msra.mxu0 %v4118
      %6052 = vmatprep.subr.bf16.mxu0 %v4123
      %6053 = vmatpush1.bf16.msra.mxu0 %v4122
      %6054 = vmatprep.subr.bf16.mxu0 %v4127
      %6055 = vmatpush1.bf16.msra.mxu0 %v4126
      %6056 = vmatprep.subr.bf16.mxu0 %v4131
      %6057 = vmatpush1.bf16.msra.mxu0 %v4130
      %6058 = vmatprep.subr.bf16.mxu0 %v4135
      %6059 = vmatpush1.bf16.msra.mxu0 %v4134
      %6060 = vmatprep.subr.bf16.mxu0 %v4139
      %6061 = vmatpush1.bf16.msra.mxu0 %v4138
      %6062 = vmatprep.subr.bf16.mxu0 %v4143
      %6063 = vmatpush1.bf16.msra.mxu0 %v4142
      %6064 = vmatprep.subr.bf16.mxu0 %v4147
      %6065 = vmatpush1.bf16.msra.mxu0 %v4146
      %6066 = vmatprep.subr.bf16.mxu0 %v4151
      %6067 = vmatpush1.bf16.msra.mxu0 %v4150
      %6068 = vmatprep.subr.bf16.mxu0 %v4155
      %6069 = vmatpush1.bf16.msra.mxu0 %v4154
      %6070 = vmatprep.subr.bf16.mxu0 %v4159
      %6071 = vmatpush1.bf16.msra.mxu0 %v4158
      %6072 = vmatprep.mubr.bf16.mxu0 %v480
      %6073 = vmatmul.mubr.bf16.gmra.mrb[0].mxu0 %v479
      %v6074 = vpop.f32.mrb[0].mxu0
      %v6075 = vadd.f32 %v6034, %v6074
      %v6076 = vpop.f32.mrb[0].mxu0
      %v6077 = vadd.f32 %v6036, %v6076
      %v6078 = vpop.f32.mrb[0].mxu0
      %v6079 = vpop.f32.mrb[0].mxu0
      %6080 = vdwg.mxu0
      %6081 = vmatprep.subr.bf16.mxu0 %v4163
      %6082 = vmatpush1.bf16.msra.mxu0 %v4162
      %6083 = vmatprep.subr.bf16.mxu0 %v4167
      %6084 = vmatpush1.bf16.msra.mxu0 %v4166
      %6085 = vmatprep.subr.bf16.mxu0 %v4171
      %6086 = vmatpush1.bf16.msra.mxu0 %v4170
      %6087 = vmatprep.subr.bf16.mxu0 %v4175
      %6088 = vmatpush1.bf16.msra.mxu0 %v4174
      %6089 = vmatprep.subr.bf16.mxu0 %v4179
      %6090 = vmatpush1.bf16.msra.mxu0 %v4178
      %6091 = vmatprep.subr.bf16.mxu0 %v4183
      %6092 = vmatpush1.bf16.msra.mxu0 %v4182
      %6093 = vmatprep.subr.bf16.mxu0 %v4187
      %6094 = vmatpush1.bf16.msra.mxu0 %v4186
      %6095 = vmatprep.subr.bf16.mxu0 %v4191
      %6096 = vmatpush1.bf16.msra.mxu0 %v4190
      %6097 = vmatprep.subr.bf16.mxu0 %v4195
      %6098 = vmatpush1.bf16.msra.mxu0 %v4194
      %6099 = vmatprep.subr.bf16.mxu0 %v4199
      %6100 = vmatpush1.bf16.msra.mxu0 %v4198
      %6101 = vmatprep.subr.bf16.mxu0 %v4203
      %6102 = vmatpush1.bf16.msra.mxu0 %v4202
      %6103 = vmatprep.subr.bf16.mxu0 %v4207
      %6104 = vmatpush1.bf16.msra.mxu0 %v4206
      %6105 = vmatprep.subr.bf16.mxu0 %v4211
      %6106 = vmatpush1.bf16.msra.mxu0 %v4210
      %6107 = vmatprep.subr.bf16.mxu0 %v4215
      %6108 = vmatpush1.bf16.msra.mxu0 %v4214
      %6109 = vmatprep.subr.bf16.mxu0 %v4219
      %6110 = vmatpush1.bf16.msra.mxu0 %v4218
      %6111 = vmatprep.subr.bf16.mxu0 %v4223
      %6112 = vmatpush1.bf16.msra.mxu0 %v4222
      %6113 = vmatprep.mubr.bf16.mxu0 %v482
      %6114 = vmatmul.mubr.bf16.gmra.mrb[0].mxu0 %v481
      %v6115 = vpop.f32.mrb[0].mxu0
      %v6116 = vadd.f32 %v6075, %v6115
      %v6117 = vpop.f32.mrb[0].mxu0
      %v6118 = vadd.f32 %v6077, %v6117
      %v6119 = vpop.f32.mrb[0].mxu0
      %v6120 = vpop.f32.mrb[0].mxu0
      %6121 = vdwg.mxu0
      %6122 = vmatprep.subr.bf16.mxu0 %v4227
      %6123 = vmatpush1.bf16.msra.mxu0 %v4226
      %6124 = vmatprep.subr.bf16.mxu0 %v4231
      %6125 = vmatpush1.bf16.msra.mxu0 %v4230
      %6126 = vmatprep.subr.bf16.mxu0 %v4235
      %6127 = vmatpush1.bf16.msra.mxu0 %v4234
      %6128 = vmatprep.subr.bf16.mxu0 %v4239
      %6129 = vmatpush1.bf16.msra.mxu0 %v4238
      %6130 = vmatprep.subr.bf16.mxu0 %v4243
      %6131 = vmatpush1.bf16.msra.mxu0 %v4242
      %6132 = vmatprep.subr.bf16.mxu0 %v4247
      %6133 = vmatpush1.bf16.msra.mxu0 %v4246
      %6134 = vmatprep.subr.bf16.mxu0 %v4251
      %6135 = vmatpush1.bf16.msra.mxu0 %v4250
      %6136 = vmatprep.subr.bf16.mxu0 %v4255
      %6137 = vmatpush1.bf16.msra.mxu0 %v4254
      %6138 = vmatprep.subr.bf16.mxu0 %v4259
      %6139 = vmatpush1.bf16.msra.mxu0 %v4258
      %6140 = vmatprep.subr.bf16.mxu0 %v4263
      %6141 = vmatpush1.bf16.msra.mxu0 %v4262
      %6142 = vmatprep.subr.bf16.mxu0 %v4267
      %6143 = vmatpush1.bf16.msra.mxu0 %v4266
      %6144 = vmatprep.subr.bf16.mxu0 %v4271
      %6145 = vmatpush1.bf16.msra.mxu0 %v4270
      %6146 = vmatprep.subr.bf16.mxu0 %v4275
      %6147 = vmatpush1.bf16.msra.mxu0 %v4274
      %6148 = vmatprep.subr.bf16.mxu0 %v4279
      %6149 = vmatpush1.bf16.msra.mxu0 %v4278
      %6150 = vmatprep.subr.bf16.mxu0 %v4283
      %6151 = vmatpush1.bf16.msra.mxu0 %v4282
      %6152 = vmatprep.subr.bf16.mxu0 %v4287
      %6153 = vmatpush1.bf16.msra.mxu0 %v4286
      %6154 = vmatprep.mubr.bf16.mxu0 %v484
      %6155 = vmatmul.mubr.bf16.gmra.mrb[0].mxu0 %v483
      %v6156 = vpop.f32.mrb[0].mxu0
      %v6157 = vadd.f32 %v6116, %v6156
      %v6158 = vpop.f32.mrb[0].mxu0
      %v6159 = vadd.f32 %v6118, %v6158
      %v6160 = vpop.f32.mrb[0].mxu0
      %v6161 = vpop.f32.mrb[0].mxu0
      %6162 = vdwg.mxu0
      %6163 = vmatprep.subr.bf16.mxu0 %v4291
      %6164 = vmatpush1.bf16.msra.mxu0 %v4290
      %6165 = vmatprep.subr.bf16.mxu0 %v4295
      %6166 = vmatpush1.bf16.msra.mxu0 %v4294
      %6167 = vmatprep.subr.bf16.mxu0 %v4299
      %6168 = vmatpush1.bf16.msra.mxu0 %v4298
      %6169 = vmatprep.subr.bf16.mxu0 %v4303
      %6170 = vmatpush1.bf16.msra.mxu0 %v4302
      %6171 = vmatprep.subr.bf16.mxu0 %v4307
      %6172 = vmatpush1.bf16.msra.mxu0 %v4306
      %6173 = vmatprep.subr.bf16.mxu0 %v4311
      %6174 = vmatpush1.bf16.msra.mxu0 %v4310
      %6175 = vmatprep.subr.bf16.mxu0 %v4315
      %6176 = vmatpush1.bf16.msra.mxu0 %v4314
      %6177 = vmatprep.subr.bf16.mxu0 %v4319
      %6178 = vmatpush1.bf16.msra.mxu0 %v4318
      %6179 = vmatprep.subr.bf16.mxu0 %v4323
      %6180 = vmatpush1.bf16.msra.mxu0 %v4322
      %6181 = vmatprep.subr.bf16.mxu0 %v4327
      %6182 = vmatpush1.bf16.msra.mxu0 %v4326
      %6183 = vmatprep.subr.bf16.mxu0 %v4331
      %6184 = vmatpush1.bf16.msra.mxu0 %v4330
      %6185 = vmatprep.subr.bf16.mxu0 %v4335
      %6186 = vmatpush1.bf16.msra.mxu0 %v4334
      %6187 = vmatprep.subr.bf16.mxu0 %v4339
      %6188 = vmatpush1.bf16.msra.mxu0 %v4338
      %6189 = vmatprep.subr.bf16.mxu0 %v4343
      %6190 = vmatpush1.bf16.msra.mxu0 %v4342
      %6191 = vmatprep.subr.bf16.mxu0 %v4347
      %6192 = vmatpush1.bf16.msra.mxu0 %v4346
      %6193 = vmatprep.subr.bf16.mxu0 %v4351
      %6194 = vmatpush1.bf16.msra.mxu0 %v4350
      %6195 = vmatprep.mubr.bf16.mxu0 %v486
      %6196 = vmatmul.mubr.bf16.gmra.mrb[0].mxu0 %v485
      %v6197 = vpop.f32.mrb[0].mxu0
      %v6198 = vadd.f32 %v6157, %v6197
      %v6199 = vpop.f32.mrb[0].mxu0
      %v6200 = vadd.f32 %v6159, %v6199
      %v6201 = vpop.f32.mrb[0].mxu0
      %v6202 = vpop.f32.mrb[0].mxu0
      %6203 = vdwg.mxu0
      %6204 = vmatprep.subr.bf16.mxu0 %v4355
      %6205 = vmatpush1.bf16.msra.mxu0 %v4354
      %6206 = vmatprep.subr.bf16.mxu0 %v4359
      %6207 = vmatpush1.bf16.msra.mxu0 %v4358
      %6208 = vmatprep.subr.bf16.mxu0 %v4363
      %6209 = vmatpush1.bf16.msra.mxu0 %v4362
      %6210 = vmatprep.subr.bf16.mxu0 %v4367
      %6211 = vmatpush1.bf16.msra.mxu0 %v4366
      %6212 = vmatprep.subr.bf16.mxu0 %v4371
      %6213 = vmatpush1.bf16.msra.mxu0 %v4370
      %6214 = vmatprep.subr.bf16.mxu0 %v4375
      %6215 = vmatpush1.bf16.msra.mxu0 %v4374
      %6216 = vmatprep.subr.bf16.mxu0 %v4379
      %6217 = vmatpush1.bf16.msra.mxu0 %v4378
      %6218 = vmatprep.subr.bf16.mxu0 %v4383
      %6219 = vmatpush1.bf16.msra.mxu0 %v4382
      %6220 = vmatprep.subr.bf16.mxu0 %v4387
      %6221 = vmatpush1.bf16.msra.mxu0 %v4386
      %6222 = vmatprep.subr.bf16.mxu0 %v4391
      %6223 = vmatpush1.bf16.msra.mxu0 %v4390
      %6224 = vmatprep.subr.bf16.mxu0 %v4395
      %6225 = vmatpush1.bf16.msra.mxu0 %v4394
      %6226 = vmatprep.subr.bf16.mxu0 %v4399
      %6227 = vmatpush1.bf16.msra.mxu0 %v4398
      %6228 = vmatprep.subr.bf16.mxu0 %v4403
      %6229 = vmatpush1.bf16.msra.mxu0 %v4402
      %6230 = vmatprep.subr.bf16.mxu0 %v4407
      %6231 = vmatpush1.bf16.msra.mxu0 %v4406
      %6232 = vmatprep.subr.bf16.mxu0 %v4411
      %6233 = vmatpush1.bf16.msra.mxu0 %v4410
      %6234 = vmatprep.subr.bf16.mxu0 %v4415
      %6235 = vmatpush1.bf16.msra.mxu0 %v4414
      %6236 = vmatprep.mubr.bf16.mxu0 %v488
      %6237 = vmatmul.mubr.bf16.gmra.mrb[0].mxu0 %v487
      %v6238 = vpop.f32.mrb[0].mxu0
      %v6239 = vadd.f32 %v6198, %v6238
      %v6240 = vpop.f32.mrb[0].mxu0
      %v6241 = vadd.f32 %v6200, %v6240
      %v6242 = vpop.f32.mrb[0].mxu0
      %v6243 = vpop.f32.mrb[0].mxu0
      %6244 = vdwg.mxu0
      %6245 = vmatprep.subr.bf16.mxu0 %v4419
      %6246 = vmatpush1.bf16.msra.mxu0 %v4418
      %6247 = vmatprep.subr.bf16.mxu0 %v4423
      %6248 = vmatpush1.bf16.msra.mxu0 %v4422
      %6249 = vmatprep.subr.bf16.mxu0 %v4427
      %6250 = vmatpush1.bf16.msra.mxu0 %v4426
      %6251 = vmatprep.subr.bf16.mxu0 %v4431
      %6252 = vmatpush1.bf16.msra.mxu0 %v4430
      %6253 = vmatprep.subr.bf16.mxu0 0
      %6254 = vmatpush1.bf16.msra.mxu0 0
      %6255 = vmatprep.subr.bf16.mxu0 0
      %6256 = vmatpush1.bf16.msra.mxu0 0
      %6257 = vmatprep.subr.bf16.mxu0 0
      %6258 = vmatpush1.bf16.msra.mxu0 0
      %6259 = vmatprep.subr.bf16.mxu0 0
      %6260 = vmatpush1.bf16.msra.mxu0 0
      %6261 = vmatprep.subr.bf16.mxu0 0
      %6262 = vmatpush1.bf16.msra.mxu0 0
      %6263 = vmatprep.subr.bf16.mxu0 0
      %6264 = vmatpush1.bf16.msra.mxu0 0
      %6265 = vmatprep.subr.bf16.mxu0 0
      %6266 = vmatpush1.bf16.msra.mxu0 0
      %6267 = vmatprep.subr.bf16.mxu0 0
      %6268 = vmatpush1.bf16.msra.mxu0 0
      %6269 = vmatprep.subr.bf16.mxu0 0
      %6270 = vmatpush1.bf16.msra.mxu0 0
      %6271 = vmatprep.subr.bf16.mxu0 0
      %6272 = vmatpush1.bf16.msra.mxu0 0
      %6273 = vmatprep.subr.bf16.mxu0 0
      %6274 = vmatpush1.bf16.msra.mxu0 0
      %6275 = vmatprep.subr.bf16.mxu0 0
      %6276 = vmatpush1.bf16.msra.mxu0 0
      %6277 = vmatprep.mubr.bf16.mxu0 0
      %6278 = vmatmul.mubr.bf16.gmra.mrb[0].mxu0 %v5218
      %v6279 = vpop.f32.mrb[0].mxu0
      %v6280 = vadd.f32 %v6239, %v6279
      %v6281 = vpop.f32.mrb[0].mxu0
      %v6282 = vadd.f32 %v6241, %v6281
      %v6283 = vpop.f32.mrb[0].mxu0
      %v6284 = vpop.f32.mrb[0].mxu0
      %6285 = vdwg.mxu0
      %p6286 = scmp.eq.s32.totalorder %s18, 0
      // Predicated region
      $region49: #{rnd_forward.7} parent=47 // pred_check
        %p6287 = pneg %p6286
      $region50: #{rnd_forward.7} parent=47 // pred_check_branch
        %6289 = sbr.rel (%p6287) target = $region52
      $region51: #{rnd_forward.7} parent=47 // pred_region
        %v6290 = vmax.f32 %v5747, 0.0
        %v6291 = vmax.f32 %v5749, 0.0
        %v6292 = vmax.f32 %v6280, 0.0
        %v6293 = vmax.f32 %v6282, 0.0
        %v6294 = vpack.c.bf16 %v6290, %v6290
        %v6295 = vpack.c.bf16 %v6291, %v6291
        %v6296 = vpack.c.bf16 %v6292, %v6292
        %v6297 = vpack.c.bf16 %v6293, %v6293
        %v6298 = vld [vmem:[%s3] sm:$0xff]
        %v6299 = vld [vmem:[%s3 + $0x8] sm:$0xff]
        %v6300 = vld [vmem:[%s3 + $0x10] sm:$0xff]
        %v6301 = vld [vmem:[%s3 + $0x18] sm:$0xff]
        %v6302 = vld [vmem:[%s3 + $0x20] sm:$0xff]
        %v6303 = vld [vmem:[%s3 + $0x28] sm:$0xff]
        %v6304 = vld [vmem:[%s3 + $0x30] sm:$0xff]
        %v6305 = vld [vmem:[%s3 + $0x38] sm:$0xff]
        %v6306 = vld [vmem:[%s3 + $0x40] sm:$0xff]
        %v6307 = vld [vmem:[%s3 + $0x48] sm:$0xff]
        %v6308 = vld [vmem:[%s3 + $0x50] sm:$0xff]
        %v6309 = vld [vmem:[%s3 + $0x58] sm:$0xff]
        %v6310 = vld [vmem:[%s3 + $0x60] sm:$0xff]
        %v6311 = vld [vmem:[%s3 + $0x68] sm:$0xff]
        %v6312 = vld [vmem:[%s3 + $0x70] sm:$0xff]
        %v6313 = vld [vmem:[%s3 + $0x78] sm:$0xff]
        %v6314 = vld [vmem:[%s3 + $0x80] sm:$0xff]
        %v6315 = vld [vmem:[%s3 + $0x88] sm:$0xff]
        %v6316 = vld [vmem:[%s3 + $0x90] sm:$0xff]
        %v6317 = vld [vmem:[%s3 + $0x98] sm:$0xff]
        %v6318 = vld [vmem:[%s3 + $0xa0] sm:$0xff]
        %v6319 = vld [vmem:[%s3 + $0xa8] sm:$0xff]
        %v6320 = vld [vmem:[%s3 + $0xb0] sm:$0xff]
        %v6321 = vld [vmem:[%s3 + $0xb8] sm:$0xff]
        %v6322 = vld [vmem:[%s3 + $0xc0] sm:$0xff]
        %v6323 = vld [vmem:[%s3 + $0xc8] sm:$0xff]
        %v6324 = vld [vmem:[%s3 + $0xd0] sm:$0xff]
        %v6325 = vld [vmem:[%s3 + $0xd8] sm:$0xff]
        %v6326 = vld [vmem:[%s3 + $0xe0] sm:$0xff]
        %v6327 = vld [vmem:[%s3 + $0xe8] sm:$0xff]
        %v6328 = vld [vmem:[%s3 + $0xf0] sm:$0xff]
        %v6329 = vld [vmem:[%s3 + $0xf8] sm:$0xff]
        %v6330 = vld [vmem:[%s3 + $0x100] sm:$0xff]
        %v6331 = vld [vmem:[%s3 + $0x108] sm:$0xff]
        %v6332 = vld [vmem:[%s3 + $0x110] sm:$0xff]
        %v6333 = vld [vmem:[%s3 + $0x118] sm:$0xff]
        %v6334 = vld [vmem:[%s3 + $0x120] sm:$0xff]
        %v6335 = vld [vmem:[%s3 + $0x128] sm:$0xff]
        %v6336 = vld [vmem:[%s3 + $0x130] sm:$0xff]
        %v6337 = vld [vmem:[%s3 + $0x138] sm:$0xff]
        %v6338 = vld [vmem:[%s3 + $0x140] sm:$0xff]
        %v6339 = vld [vmem:[%s3 + $0x148] sm:$0xff]
        %v6340 = vld [vmem:[%s3 + $0x150] sm:$0xff]
        %v6341 = vld [vmem:[%s3 + $0x158] sm:$0xff]
        %v6342 = vld [vmem:[%s3 + $0x160] sm:$0xff]
        %v6343 = vld [vmem:[%s3 + $0x168] sm:$0xff]
        %v6344 = vld [vmem:[%s3 + $0x170] sm:$0xff]
        %v6345 = vld [vmem:[%s3 + $0x178] sm:$0xff]
        %v6346 = vld [vmem:[%s3 + $0x180] sm:$0xff]
        %v6347 = vld [vmem:[%s3 + $0x188] sm:$0xff]
        %v6348 = vld [vmem:[%s3 + $0x190] sm:$0xff]
        %v6349 = vld [vmem:[%s3 + $0x198] sm:$0xff]
        %v6350 = vld [vmem:[%s3 + $0x1a0] sm:$0xff]
        %v6351 = vld [vmem:[%s3 + $0x1a8] sm:$0xff]
        %v6352 = vld [vmem:[%s3 + $0x1b0] sm:$0xff]
        %v6353 = vld [vmem:[%s3 + $0x1b8] sm:$0xff]
        %v6354 = vld [vmem:[%s3 + $0x1c0] sm:$0xff]
        %v6355 = vld [vmem:[%s3 + $0x1c8] sm:$0xff]
        %v6356 = vld [vmem:[%s3 + $0x1d0] sm:$0xff]
        %v6357 = vld [vmem:[%s3 + $0x1d8] sm:$0xff]
        %v6358 = vld [vmem:[%s3 + $0x1e0] sm:$0xff]
        %v6359 = vld [vmem:[%s3 + $0x1e8] sm:$0xff]
        %v6360 = vld [vmem:[%s3 + $0x1f0] sm:$0xff]
        %v6361 = vld [vmem:[%s3 + $0x1f8] sm:$0xff]
        %v6362 = vld [vmem:[%s3 + $0x200] sm:$0xff]
        %v6363 = vld [vmem:[%s3 + $0x208] sm:$0xff]
        %v6364 = vld [vmem:[%s3 + $0x210] sm:$0xff]
        %v6365 = vld [vmem:[%s3 + $0x218] sm:$0xff]
        %v6366 = vld [vmem:[%s3 + $0x220] sm:$0xff]
        %v6367 = vld [vmem:[%s3 + $0x228] sm:$0xff]
        %v6368 = vld [vmem:[%s3 + $0x230] sm:$0xff]
        %v6369 = vld [vmem:[%s3 + $0x238] sm:$0xff]
        %v6370 = vld [vmem:[%s3 + $0x240] sm:$0xff]
        %v6371 = vld [vmem:[%s3 + $0x248] sm:$0xff]
        %v6372 = vld [vmem:[%s3 + $0x250] sm:$0xff]
        %v6373 = vld [vmem:[%s3 + $0x258] sm:$0xff]
        %v6374 = vld [vmem:[%s3 + $0x260] sm:$0xff]
        %v6375 = vld [vmem:[%s3 + $0x268] sm:$0xff]
        %v6376 = vld [vmem:[%s3 + $0x270] sm:$0xff]
        %v6377 = vld [vmem:[%s3 + $0x278] sm:$0xff]
        %v6378 = vld [vmem:[%s3 + $0x280] sm:$0xff]
        %v6379 = vld [vmem:[%s3 + $0x288] sm:$0xff]
        %v6380 = vld [vmem:[%s3 + $0x290] sm:$0xff]
        %v6381 = vld [vmem:[%s3 + $0x298] sm:$0xff]
        %v6382 = vld [vmem:[%s3 + $0x2a0] sm:$0xff]
        %v6383 = vld [vmem:[%s3 + $0x2a8] sm:$0xff]
        %v6384 = vld [vmem:[%s3 + $0x2b0] sm:$0xff]
        %v6385 = vld [vmem:[%s3 + $0x2b8] sm:$0xff]
        %v6386 = vld [vmem:[%s3 + $0x2c0] sm:$0xff]
        %v6387 = vld [vmem:[%s3 + $0x2c8] sm:$0xff]
        %v6388 = vld [vmem:[%s3 + $0x2d0] sm:$0xff]
        %v6389 = vld [vmem:[%s3 + $0x2d8] sm:$0xff]
        %v6390 = vld [vmem:[%s3 + $0x2e0] sm:$0xff]
        %v6391 = vld [vmem:[%s3 + $0x2e8] sm:$0xff]
        %v6392 = vld [vmem:[%s3 + $0x2f0] sm:$0xff]
        %v6393 = vld [vmem:[%s3 + $0x2f8] sm:$0xff]
        %v6394 = vld [vmem:[%s3 + $0x300] sm:$0xff]
        %v6395 = vld [vmem:[%s3 + $0x308] sm:$0xff]
        %v6396 = vld [vmem:[%s3 + $0x310] sm:$0xff]
        %v6397 = vld [vmem:[%s3 + $0x318] sm:$0xff]
        %v6398 = vld [vmem:[%s3 + $0x320] sm:$0xff]
        %v6399 = vld [vmem:[%s3 + $0x328] sm:$0xff]
        %v6400 = vld [vmem:[%s3 + $0x330] sm:$0xff]
        %v6401 = vld [vmem:[%s3 + $0x338] sm:$0xff]
        %v6402 = vld [vmem:[%s3 + $0x340] sm:$0xff]
        %v6403 = vld [vmem:[%s3 + $0x348] sm:$0xff]
        %v6404 = vld [vmem:[%s3 + $0x350] sm:$0xff]
        %v6405 = vld [vmem:[%s3 + $0x358] sm:$0xff]
        %v6406 = vld [vmem:[%s3 + $0x360] sm:$0xff]
        %v6407 = vld [vmem:[%s3 + $0x368] sm:$0xff]
        %v6408 = vld [vmem:[%s3 + $0x370] sm:$0xff]
        %v6409 = vld [vmem:[%s3 + $0x378] sm:$0xff]
        %v6410 = vld [vmem:[%s3 + $0x380] sm:$0xff]
        %v6411 = vld [vmem:[%s3 + $0x388] sm:$0xff]
        %v6412 = vld [vmem:[%s3 + $0x390] sm:$0xff]
        %v6413 = vld [vmem:[%s3 + $0x398] sm:$0xff]
        %v6414 = vld [vmem:[%s3 + $0x3a0] sm:$0xff]
        %v6415 = vld [vmem:[%s3 + $0x3a8] sm:$0xff]
        %v6416 = vld [vmem:[%s3 + $0x3b0] sm:$0xff]
        %v6417 = vld [vmem:[%s3 + $0x3b8] sm:$0xff]
        %v6418 = vld [vmem:[%s3 + $0x3c0] sm:$0xff]
        %v6419 = vld [vmem:[%s3 + $0x3c8] sm:$0xff]
        %v6420 = vld [vmem:[%s3 + $0x3d0] sm:$0xff]
        %v6421 = vld [vmem:[%s3 + $0x3d8] sm:$0xff]
        %v6422 = vld [vmem:[%s3 + $0x3e0] sm:$0xff]
        %v6423 = vld [vmem:[%s3 + $0x3e8] sm:$0xff]
        %v6424 = vld [vmem:[%s3 + $0x3f0] sm:$0xff]
        %v6425 = vld [vmem:[%s3 + $0x3f8] sm:$0xff]
        %v6426 = vld [vmem:[%s4] sm:$0xf]
        %v6428 = vlaneseq
        %v6429 = vshrl.u32 %v6428, 7
        %v6430 = vsub.s32 0, %v6429
        %v6431 = vrot.slane %v6426, %v6430
        %v6432 = vlaneseq
        %v6433 = vshrl.u32 %v6432, 7
        %v6434 = vsub.s32 1, %v6433
        %v6435 = vrot.slane %v6426, %v6434
        %v6436 = vlaneseq
        %v6437 = vshrl.u32 %v6436, 7
        %v6438 = vsub.s32 2, %v6437
        %v6439 = vrot.slane %v6426, %v6438
        %v6440 = vlaneseq
        %v6441 = vshrl.u32 %v6440, 7
        %v6442 = vsub.s32 3, %v6441
        %v6443 = vrot.slane %v6426, %v6442
        %v6576 = vunpack.c.l.b16 %v6298
        %v6577 = vunpack.c.h.b16 %v6298
        %v6578 = vunpack.c.l.b16 %v6299
        %v6579 = vunpack.c.h.b16 %v6299
        %v6580 = vunpack.c.l.b16 %v6300
        %v6581 = vunpack.c.h.b16 %v6300
        %v6582 = vunpack.c.l.b16 %v6301
        %v6583 = vunpack.c.h.b16 %v6301
        %v6584 = vunpack.c.l.b16 %v6302
        %v6585 = vunpack.c.h.b16 %v6302
        %v6586 = vunpack.c.l.b16 %v6303
        %v6587 = vunpack.c.h.b16 %v6303
        %v6588 = vunpack.c.l.b16 %v6304
        %v6589 = vunpack.c.h.b16 %v6304
        %v6590 = vunpack.c.l.b16 %v6305
        %v6591 = vunpack.c.h.b16 %v6305
        %v6592 = vunpack.c.l.b16 %v6306
        %v6593 = vunpack.c.h.b16 %v6306
        %v6594 = vunpack.c.l.b16 %v6307
        %v6595 = vunpack.c.h.b16 %v6307
        %v6596 = vunpack.c.l.b16 %v6308
        %v6597 = vunpack.c.h.b16 %v6308
        %v6598 = vunpack.c.l.b16 %v6309
        %v6599 = vunpack.c.h.b16 %v6309
        %v6600 = vunpack.c.l.b16 %v6310
        %v6601 = vunpack.c.h.b16 %v6310
        %v6602 = vunpack.c.l.b16 %v6311
        %v6603 = vunpack.c.h.b16 %v6311
        %v6604 = vunpack.c.l.b16 %v6312
        %v6605 = vunpack.c.h.b16 %v6312
        %v6606 = vunpack.c.l.b16 %v6313
        %v6607 = vunpack.c.h.b16 %v6313
        %v6608 = vunpack.c.l.b16 %v6314
        %v6609 = vunpack.c.h.b16 %v6314
        %v6610 = vunpack.c.l.b16 %v6315
        %v6611 = vunpack.c.h.b16 %v6315
        %v6612 = vunpack.c.l.b16 %v6316
        %v6613 = vunpack.c.h.b16 %v6316
        %v6614 = vunpack.c.l.b16 %v6317
        %v6615 = vunpack.c.h.b16 %v6317
        %v6616 = vunpack.c.l.b16 %v6318
        %v6617 = vunpack.c.h.b16 %v6318
        %v6618 = vunpack.c.l.b16 %v6319
        %v6619 = vunpack.c.h.b16 %v6319
        %v6620 = vunpack.c.l.b16 %v6320
        %v6621 = vunpack.c.h.b16 %v6320
        %v6622 = vunpack.c.l.b16 %v6321
        %v6623 = vunpack.c.h.b16 %v6321
        %v6624 = vunpack.c.l.b16 %v6322
        %v6625 = vunpack.c.h.b16 %v6322
        %v6626 = vunpack.c.l.b16 %v6323
        %v6627 = vunpack.c.h.b16 %v6323
        %v6628 = vunpack.c.l.b16 %v6324
        %v6629 = vunpack.c.h.b16 %v6324
        %v6630 = vunpack.c.l.b16 %v6325
        %v6631 = vunpack.c.h.b16 %v6325
        %v6632 = vunpack.c.l.b16 %v6326
        %v6633 = vunpack.c.h.b16 %v6326
        %v6634 = vunpack.c.l.b16 %v6327
        %v6635 = vunpack.c.h.b16 %v6327
        %v6636 = vunpack.c.l.b16 %v6328
        %v6637 = vunpack.c.h.b16 %v6328
        %v6638 = vunpack.c.l.b16 %v6329
        %v6639 = vunpack.c.h.b16 %v6329
        %v6640 = vunpack.c.l.b16 %v6330
        %v6641 = vunpack.c.h.b16 %v6330
        %v6642 = vunpack.c.l.b16 %v6331
        %v6643 = vunpack.c.h.b16 %v6331
        %v6644 = vunpack.c.l.b16 %v6332
        %v6645 = vunpack.c.h.b16 %v6332
        %v6646 = vunpack.c.l.b16 %v6333
        %v6647 = vunpack.c.h.b16 %v6333
        %v6648 = vunpack.c.l.b16 %v6334
        %v6649 = vunpack.c.h.b16 %v6334
        %v6650 = vunpack.c.l.b16 %v6335
        %v6651 = vunpack.c.h.b16 %v6335
        %v6652 = vunpack.c.l.b16 %v6336
        %v6653 = vunpack.c.h.b16 %v6336
        %v6654 = vunpack.c.l.b16 %v6337
        %v6655 = vunpack.c.h.b16 %v6337
        %v6656 = vunpack.c.l.b16 %v6338
        %v6657 = vunpack.c.h.b16 %v6338
        %v6658 = vunpack.c.l.b16 %v6339
        %v6659 = vunpack.c.h.b16 %v6339
        %v6660 = vunpack.c.l.b16 %v6340
        %v6661 = vunpack.c.h.b16 %v6340
        %v6662 = vunpack.c.l.b16 %v6341
        %v6663 = vunpack.c.h.b16 %v6341
        %v6664 = vunpack.c.l.b16 %v6342
        %v6665 = vunpack.c.h.b16 %v6342
        %v6666 = vunpack.c.l.b16 %v6343
        %v6667 = vunpack.c.h.b16 %v6343
        %v6668 = vunpack.c.l.b16 %v6344
        %v6669 = vunpack.c.h.b16 %v6344
        %v6670 = vunpack.c.l.b16 %v6345
        %v6671 = vunpack.c.h.b16 %v6345
        %v6672 = vunpack.c.l.b16 %v6346
        %v6673 = vunpack.c.h.b16 %v6346
        %v6674 = vunpack.c.l.b16 %v6347
        %v6675 = vunpack.c.h.b16 %v6347
        %v6676 = vunpack.c.l.b16 %v6348
        %v6677 = vunpack.c.h.b16 %v6348
        %v6678 = vunpack.c.l.b16 %v6349
        %v6679 = vunpack.c.h.b16 %v6349
        %v6680 = vunpack.c.l.b16 %v6350
        %v6681 = vunpack.c.h.b16 %v6350
        %v6682 = vunpack.c.l.b16 %v6351
        %v6683 = vunpack.c.h.b16 %v6351
        %v6684 = vunpack.c.l.b16 %v6352
        %v6685 = vunpack.c.h.b16 %v6352
        %v6686 = vunpack.c.l.b16 %v6353
        %v6687 = vunpack.c.h.b16 %v6353
        %v6688 = vunpack.c.l.b16 %v6354
        %v6689 = vunpack.c.h.b16 %v6354
        %v6690 = vunpack.c.l.b16 %v6355
        %v6691 = vunpack.c.h.b16 %v6355
        %v6692 = vunpack.c.l.b16 %v6356
        %v6693 = vunpack.c.h.b16 %v6356
        %v6694 = vunpack.c.l.b16 %v6357
        %v6695 = vunpack.c.h.b16 %v6357
        %v6696 = vunpack.c.l.b16 %v6358
        %v6697 = vunpack.c.h.b16 %v6358
        %v6698 = vunpack.c.l.b16 %v6359
        %v6699 = vunpack.c.h.b16 %v6359
        %v6700 = vunpack.c.l.b16 %v6360
        %v6701 = vunpack.c.h.b16 %v6360
        %v6702 = vunpack.c.l.b16 %v6361
        %v6703 = vunpack.c.h.b16 %v6361
        %v6704 = vunpack.c.l.b16 %v6362
        %v6705 = vunpack.c.h.b16 %v6362
        %v6706 = vunpack.c.l.b16 %v6363
        %v6707 = vunpack.c.h.b16 %v6363
        %v6708 = vunpack.c.l.b16 %v6364
        %v6709 = vunpack.c.h.b16 %v6364
        %v6710 = vunpack.c.l.b16 %v6365
        %v6711 = vunpack.c.h.b16 %v6365
        %v6712 = vunpack.c.l.b16 %v6366
        %v6713 = vunpack.c.h.b16 %v6366
        %v6714 = vunpack.c.l.b16 %v6367
        %v6715 = vunpack.c.h.b16 %v6367
        %v6716 = vunpack.c.l.b16 %v6368
        %v6717 = vunpack.c.h.b16 %v6368
        %v6718 = vunpack.c.l.b16 %v6369
        %v6719 = vunpack.c.h.b16 %v6369
        %v6720 = vunpack.c.l.b16 %v6370
        %v6721 = vunpack.c.h.b16 %v6370
        %v6722 = vunpack.c.l.b16 %v6371
        %v6723 = vunpack.c.h.b16 %v6371
        %v6724 = vunpack.c.l.b16 %v6372
        %v6725 = vunpack.c.h.b16 %v6372
        %v6726 = vunpack.c.l.b16 %v6373
        %v6727 = vunpack.c.h.b16 %v6373
        %v6728 = vunpack.c.l.b16 %v6374
        %v6729 = vunpack.c.h.b16 %v6374
        %v6730 = vunpack.c.l.b16 %v6375
        %v6731 = vunpack.c.h.b16 %v6375
        %v6732 = vunpack.c.l.b16 %v6376
        %v6733 = vunpack.c.h.b16 %v6376
        %v6734 = vunpack.c.l.b16 %v6377
        %v6735 = vunpack.c.h.b16 %v6377
        %v6736 = vunpack.c.l.b16 %v6378
        %v6737 = vunpack.c.h.b16 %v6378
        %v6738 = vunpack.c.l.b16 %v6379
        %v6739 = vunpack.c.h.b16 %v6379
        %v6740 = vunpack.c.l.b16 %v6380
        %v6741 = vunpack.c.h.b16 %v6380
        %v6742 = vunpack.c.l.b16 %v6381
        %v6743 = vunpack.c.h.b16 %v6381
        %v6744 = vunpack.c.l.b16 %v6382
        %v6745 = vunpack.c.h.b16 %v6382
        %v6746 = vunpack.c.l.b16 %v6383
        %v6747 = vunpack.c.h.b16 %v6383
        %v6748 = vunpack.c.l.b16 %v6384
        %v6749 = vunpack.c.h.b16 %v6384
        %v6750 = vunpack.c.l.b16 %v6385
        %v6751 = vunpack.c.h.b16 %v6385
        %v6752 = vunpack.c.l.b16 %v6386
        %v6753 = vunpack.c.h.b16 %v6386
        %v6754 = vunpack.c.l.b16 %v6387
        %v6755 = vunpack.c.h.b16 %v6387
        %v6756 = vunpack.c.l.b16 %v6388
        %v6757 = vunpack.c.h.b16 %v6388
        %v6758 = vunpack.c.l.b16 %v6389
        %v6759 = vunpack.c.h.b16 %v6389
        %v6760 = vunpack.c.l.b16 %v6390
        %v6761 = vunpack.c.h.b16 %v6390
        %v6762 = vunpack.c.l.b16 %v6391
        %v6763 = vunpack.c.h.b16 %v6391
        %v6764 = vunpack.c.l.b16 %v6392
        %v6765 = vunpack.c.h.b16 %v6392
        %v6766 = vunpack.c.l.b16 %v6393
        %v6767 = vunpack.c.h.b16 %v6393
        %v6768 = vunpack.c.l.b16 %v6394
        %v6769 = vunpack.c.h.b16 %v6394
        %v6770 = vunpack.c.l.b16 %v6395
        %v6771 = vunpack.c.h.b16 %v6395
        %v6772 = vunpack.c.l.b16 %v6396
        %v6773 = vunpack.c.h.b16 %v6396
        %v6774 = vunpack.c.l.b16 %v6397
        %v6775 = vunpack.c.h.b16 %v6397
        %v6776 = vunpack.c.l.b16 %v6398
        %v6777 = vunpack.c.h.b16 %v6398
        %v6778 = vunpack.c.l.b16 %v6399
        %v6779 = vunpack.c.h.b16 %v6399
        %v6780 = vunpack.c.l.b16 %v6400
        %v6781 = vunpack.c.h.b16 %v6400
        %v6782 = vunpack.c.l.b16 %v6401
        %v6783 = vunpack.c.h.b16 %v6401
        %v6784 = vunpack.c.l.b16 %v6402
        %v6785 = vunpack.c.h.b16 %v6402
        %v6786 = vunpack.c.l.b16 %v6403
        %v6787 = vunpack.c.h.b16 %v6403
        %v6788 = vunpack.c.l.b16 %v6404
        %v6789 = vunpack.c.h.b16 %v6404
        %v6790 = vunpack.c.l.b16 %v6405
        %v6791 = vunpack.c.h.b16 %v6405
        %v6792 = vunpack.c.l.b16 %v6406
        %v6793 = vunpack.c.h.b16 %v6406
        %v6794 = vunpack.c.l.b16 %v6407
        %v6795 = vunpack.c.h.b16 %v6407
        %v6796 = vunpack.c.l.b16 %v6408
        %v6797 = vunpack.c.h.b16 %v6408
        %v6798 = vunpack.c.l.b16 %v6409
        %v6799 = vunpack.c.h.b16 %v6409
        %v6800 = vunpack.c.l.b16 %v6410
        %v6801 = vunpack.c.h.b16 %v6410
        %v6802 = vunpack.c.l.b16 %v6411
        %v6803 = vunpack.c.h.b16 %v6411
        %v6804 = vunpack.c.l.b16 %v6412
        %v6805 = vunpack.c.h.b16 %v6412
        %v6806 = vunpack.c.l.b16 %v6413
        %v6807 = vunpack.c.h.b16 %v6413
        %v6808 = vunpack.c.l.b16 %v6414
        %v6809 = vunpack.c.h.b16 %v6414
        %v6810 = vunpack.c.l.b16 %v6415
        %v6811 = vunpack.c.h.b16 %v6415
        %v6812 = vunpack.c.l.b16 %v6416
        %v6813 = vunpack.c.h.b16 %v6416
        %v6814 = vunpack.c.l.b16 %v6417
        %v6815 = vunpack.c.h.b16 %v6417
        %v6816 = vunpack.c.l.b16 %v6418
        %v6817 = vunpack.c.h.b16 %v6418
        %v6818 = vunpack.c.l.b16 %v6419
        %v6819 = vunpack.c.h.b16 %v6419
        %v6820 = vunpack.c.l.b16 %v6420
        %v6821 = vunpack.c.h.b16 %v6420
        %v6822 = vunpack.c.l.b16 %v6421
        %v6823 = vunpack.c.h.b16 %v6421
        %v6824 = vunpack.c.l.b16 %v6422
        %v6825 = vunpack.c.h.b16 %v6422
        %v6826 = vunpack.c.l.b16 %v6423
        %v6827 = vunpack.c.h.b16 %v6423
        %v6828 = vunpack.c.l.b16 %v6424
        %v6829 = vunpack.c.h.b16 %v6424
        %v6830 = vunpack.c.l.b16 %v6425
        %v6831 = vunpack.c.h.b16 %v6425
        %v6832 = vpack.c.b16 %v6580, %v6576
        %v6833 = vpack.c.b16 %v6581, %v6577
        %v6834 = vpack.c.b16 %v6582, %v6578
        %v6835 = vpack.c.b16 %v6583, %v6579
        %v6836 = vpack.c.b16 %v6588, %v6584
        %v6837 = vpack.c.b16 %v6589, %v6585
        %v6838 = vpack.c.b16 %v6590, %v6586
        %v6839 = vpack.c.b16 %v6591, %v6587
        %v6840 = vpack.c.b16 %v6596, %v6592
        %v6841 = vpack.c.b16 %v6597, %v6593
        %v6842 = vpack.c.b16 %v6598, %v6594
        %v6843 = vpack.c.b16 %v6599, %v6595
        %v6844 = vpack.c.b16 %v6604, %v6600
        %v6845 = vpack.c.b16 %v6605, %v6601
        %v6846 = vpack.c.b16 %v6606, %v6602
        %v6847 = vpack.c.b16 %v6607, %v6603
        %v6848 = vpack.c.b16 %v6612, %v6608
        %v6849 = vpack.c.b16 %v6613, %v6609
        %v6850 = vpack.c.b16 %v6614, %v6610
        %v6851 = vpack.c.b16 %v6615, %v6611
        %v6852 = vpack.c.b16 %v6620, %v6616
        %v6853 = vpack.c.b16 %v6621, %v6617
        %v6854 = vpack.c.b16 %v6622, %v6618
        %v6855 = vpack.c.b16 %v6623, %v6619
        %v6856 = vpack.c.b16 %v6628, %v6624
        %v6857 = vpack.c.b16 %v6629, %v6625
        %v6858 = vpack.c.b16 %v6630, %v6626
        %v6859 = vpack.c.b16 %v6631, %v6627
        %v6860 = vpack.c.b16 %v6636, %v6632
        %v6861 = vpack.c.b16 %v6637, %v6633
        %v6862 = vpack.c.b16 %v6638, %v6634
        %v6863 = vpack.c.b16 %v6639, %v6635
        %v6864 = vpack.c.b16 %v6644, %v6640
        %v6865 = vpack.c.b16 %v6645, %v6641
        %v6866 = vpack.c.b16 %v6646, %v6642
        %v6867 = vpack.c.b16 %v6647, %v6643
        %v6868 = vpack.c.b16 %v6652, %v6648
        %v6869 = vpack.c.b16 %v6653, %v6649
        %v6870 = vpack.c.b16 %v6654, %v6650
        %v6871 = vpack.c.b16 %v6655, %v6651
        %v6872 = vpack.c.b16 %v6660, %v6656
        %v6873 = vpack.c.b16 %v6661, %v6657
        %v6874 = vpack.c.b16 %v6662, %v6658
        %v6875 = vpack.c.b16 %v6663, %v6659
        %v6876 = vpack.c.b16 %v6668, %v6664
        %v6877 = vpack.c.b16 %v6669, %v6665
        %v6878 = vpack.c.b16 %v6670, %v6666
        %v6879 = vpack.c.b16 %v6671, %v6667
        %v6880 = vpack.c.b16 %v6676, %v6672
        %v6881 = vpack.c.b16 %v6677, %v6673
        %v6882 = vpack.c.b16 %v6678, %v6674
        %v6883 = vpack.c.b16 %v6679, %v6675
        %v6884 = vpack.c.b16 %v6684, %v6680
        %v6885 = vpack.c.b16 %v6685, %v6681
        %v6886 = vpack.c.b16 %v6686, %v6682
        %v6887 = vpack.c.b16 %v6687, %v6683
        %v6888 = vpack.c.b16 %v6692, %v6688
        %v6889 = vpack.c.b16 %v6693, %v6689
        %v6890 = vpack.c.b16 %v6694, %v6690
        %v6891 = vpack.c.b16 %v6695, %v6691
        %v6892 = vpack.c.b16 %v6700, %v6696
        %v6893 = vpack.c.b16 %v6701, %v6697
        %v6894 = vpack.c.b16 %v6702, %v6698
        %v6895 = vpack.c.b16 %v6703, %v6699
        %v6896 = vpack.c.b16 %v6708, %v6704
        %v6897 = vpack.c.b16 %v6709, %v6705
        %v6898 = vpack.c.b16 %v6710, %v6706
        %v6899 = vpack.c.b16 %v6711, %v6707
        %v6900 = vpack.c.b16 %v6716, %v6712
        %v6901 = vpack.c.b16 %v6717, %v6713
        %v6902 = vpack.c.b16 %v6718, %v6714
        %v6903 = vpack.c.b16 %v6719, %v6715
        %v6904 = vpack.c.b16 %v6724, %v6720
        %v6905 = vpack.c.b16 %v6725, %v6721
        %v6906 = vpack.c.b16 %v6726, %v6722
        %v6907 = vpack.c.b16 %v6727, %v6723
        %v6908 = vpack.c.b16 %v6732, %v6728
        %v6909 = vpack.c.b16 %v6733, %v6729
        %v6910 = vpack.c.b16 %v6734, %v6730
        %v6911 = vpack.c.b16 %v6735, %v6731
        %v6912 = vpack.c.b16 %v6740, %v6736
        %v6913 = vpack.c.b16 %v6741, %v6737
        %v6914 = vpack.c.b16 %v6742, %v6738
        %v6915 = vpack.c.b16 %v6743, %v6739
        %v6916 = vpack.c.b16 %v6748, %v6744
        %v6917 = vpack.c.b16 %v6749, %v6745
        %v6918 = vpack.c.b16 %v6750, %v6746
        %v6919 = vpack.c.b16 %v6751, %v6747
        %v6920 = vpack.c.b16 %v6756, %v6752
        %v6921 = vpack.c.b16 %v6757, %v6753
        %v6922 = vpack.c.b16 %v6758, %v6754
        %v6923 = vpack.c.b16 %v6759, %v6755
        %v6924 = vpack.c.b16 %v6764, %v6760
        %v6925 = vpack.c.b16 %v6765, %v6761
        %v6926 = vpack.c.b16 %v6766, %v6762
        %v6927 = vpack.c.b16 %v6767, %v6763
        %v6928 = vpack.c.b16 %v6772, %v6768
        %v6929 = vpack.c.b16 %v6773, %v6769
        %v6930 = vpack.c.b16 %v6774, %v6770
        %v6931 = vpack.c.b16 %v6775, %v6771
        %v6932 = vpack.c.b16 %v6780, %v6776
        %v6933 = vpack.c.b16 %v6781, %v6777
        %v6934 = vpack.c.b16 %v6782, %v6778
        %v6935 = vpack.c.b16 %v6783, %v6779
        %v6936 = vpack.c.b16 %v6788, %v6784
        %v6937 = vpack.c.b16 %v6789, %v6785
        %v6938 = vpack.c.b16 %v6790, %v6786
        %v6939 = vpack.c.b16 %v6791, %v6787
        %v6940 = vpack.c.b16 %v6796, %v6792
        %v6941 = vpack.c.b16 %v6797, %v6793
        %v6942 = vpack.c.b16 %v6798, %v6794
        %v6943 = vpack.c.b16 %v6799, %v6795
        %v6944 = vpack.c.b16 %v6804, %v6800
        %v6945 = vpack.c.b16 %v6805, %v6801
        %v6946 = vpack.c.b16 %v6806, %v6802
        %v6947 = vpack.c.b16 %v6807, %v6803
        %v6948 = vpack.c.b16 %v6812, %v6808
        %v6949 = vpack.c.b16 %v6813, %v6809
        %v6950 = vpack.c.b16 %v6814, %v6810
        %v6951 = vpack.c.b16 %v6815, %v6811
        %v6952 = vpack.c.b16 %v6820, %v6816
        %v6953 = vpack.c.b16 %v6821, %v6817
        %v6954 = vpack.c.b16 %v6822, %v6818
        %v6955 = vpack.c.b16 %v6823, %v6819
        %v6956 = vpack.c.b16 %v6828, %v6824
        %v6957 = vpack.c.b16 %v6829, %v6825
        %v6958 = vpack.c.b16 %v6830, %v6826
        %v6959 = vpack.c.b16 %v6831, %v6827
        %7088 = vmatprep.subr.bf16.mxu0 %v6833
        %7089 = vmatpush1.bf16.msra.mxu0 %v6832
        %7090 = vmatprep.subr.bf16.mxu0 %v6837
        %7091 = vmatpush1.bf16.msra.mxu0 %v6836
        %7092 = vmatprep.subr.bf16.mxu0 %v6841
        %7093 = vmatpush1.bf16.msra.mxu0 %v6840
        %7094 = vmatprep.subr.bf16.mxu0 %v6845
        %7095 = vmatpush1.bf16.msra.mxu0 %v6844
        %7096 = vmatprep.subr.bf16.mxu0 %v6849
        %7097 = vmatpush1.bf16.msra.mxu0 %v6848
        %7098 = vmatprep.subr.bf16.mxu0 %v6853
        %7099 = vmatpush1.bf16.msra.mxu0 %v6852
        %7100 = vmatprep.subr.bf16.mxu0 %v6857
        %7101 = vmatpush1.bf16.msra.mxu0 %v6856
        %7102 = vmatprep.subr.bf16.mxu0 %v6861
        %7103 = vmatpush1.bf16.msra.mxu0 %v6860
        %7104 = vmatprep.subr.bf16.mxu0 %v6865
        %7105 = vmatpush1.bf16.msra.mxu0 %v6864
        %7106 = vmatprep.subr.bf16.mxu0 %v6869
        %7107 = vmatpush1.bf16.msra.mxu0 %v6868
        %7108 = vmatprep.subr.bf16.mxu0 %v6873
        %7109 = vmatpush1.bf16.msra.mxu0 %v6872
        %7110 = vmatprep.subr.bf16.mxu0 %v6877
        %7111 = vmatpush1.bf16.msra.mxu0 %v6876
        %7112 = vmatprep.subr.bf16.mxu0 %v6881
        %7113 = vmatpush1.bf16.msra.mxu0 %v6880
        %7114 = vmatprep.subr.bf16.mxu0 %v6885
        %7115 = vmatpush1.bf16.msra.mxu0 %v6884
        %7116 = vmatprep.subr.bf16.mxu0 %v6889
        %7117 = vmatpush1.bf16.msra.mxu0 %v6888
        %7118 = vmatprep.subr.bf16.mxu0 %v6893
        %7119 = vmatpush1.bf16.msra.mxu0 %v6892
        %7120 = vmatprep.mubr.bf16.mxu0 %v6295
        %7121 = vmatmul.mubr.bf16.gmra.mrb[0].mxu0 %v6294
        %v7122 = vpop.f32.mrb[0].mxu0
        %v7123 = vadd.f32 %v6431, %v7122
        %v7124 = vpop.f32.mrb[0].mxu0
        %v7125 = vadd.f32 %v6435, %v7124
        %v7126 = vpop.f32.mrb[0].mxu0
        %v7127 = vpop.f32.mrb[0].mxu0
        %7128 = vdwg.mxu0
        %7129 = vmatprep.subr.bf16.mxu0 %v6897
        %7130 = vmatpush1.bf16.msra.mxu0 %v6896
        %7131 = vmatprep.subr.bf16.mxu0 %v6901
        %7132 = vmatpush1.bf16.msra.mxu0 %v6900
        %7133 = vmatprep.subr.bf16.mxu0 %v6905
        %7134 = vmatpush1.bf16.msra.mxu0 %v6904
        %7135 = vmatprep.subr.bf16.mxu0 %v6909
        %7136 = vmatpush1.bf16.msra.mxu0 %v6908
        %7137 = vmatprep.subr.bf16.mxu0 %v6913
        %7138 = vmatpush1.bf16.msra.mxu0 %v6912
        %7139 = vmatprep.subr.bf16.mxu0 %v6917
        %7140 = vmatpush1.bf16.msra.mxu0 %v6916
        %7141 = vmatprep.subr.bf16.mxu0 %v6921
        %7142 = vmatpush1.bf16.msra.mxu0 %v6920
        %7143 = vmatprep.subr.bf16.mxu0 %v6925
        %7144 = vmatpush1.bf16.msra.mxu0 %v6924
        %7145 = vmatprep.subr.bf16.mxu0 %v6929
        %7146 = vmatpush1.bf16.msra.mxu0 %v6928
        %7147 = vmatprep.subr.bf16.mxu0 %v6933
        %7148 = vmatpush1.bf16.msra.mxu0 %v6932
        %7149 = vmatprep.subr.bf16.mxu0 %v6937
        %7150 = vmatpush1.bf16.msra.mxu0 %v6936
        %7151 = vmatprep.subr.bf16.mxu0 %v6941
        %7152 = vmatpush1.bf16.msra.mxu0 %v6940
        %7153 = vmatprep.subr.bf16.mxu0 %v6945
        %7154 = vmatpush1.bf16.msra.mxu0 %v6944
        %7155 = vmatprep.subr.bf16.mxu0 %v6949
        %7156 = vmatpush1.bf16.msra.mxu0 %v6948
        %7157 = vmatprep.subr.bf16.mxu0 %v6953
        %7158 = vmatpush1.bf16.msra.mxu0 %v6952
        %7159 = vmatprep.subr.bf16.mxu0 %v6957
        %7160 = vmatpush1.bf16.msra.mxu0 %v6956
        %7161 = vmatprep.mubr.bf16.mxu0 %v6297
        %7162 = vmatmul.mubr.bf16.gmra.mrb[0].mxu0 %v6296
        %v7163 = vpop.f32.mrb[0].mxu0
        %v7164 = vadd.f32 %v7123, %v7163
        %v7165 = vpop.f32.mrb[0].mxu0
        %v7166 = vadd.f32 %v7125, %v7165
        %v7167 = vpop.f32.mrb[0].mxu0
        %v7168 = vpop.f32.mrb[0].mxu0
        %7169 = vdwg.mxu0
        %7170 = vmatprep.subr.bf16.mxu0 %v6835
        %7171 = vmatpush1.bf16.msra.mxu0 %v6834
        %7172 = vmatprep.subr.bf16.mxu0 %v6839
        %7173 = vmatpush1.bf16.msra.mxu0 %v6838
        %7174 = vmatprep.subr.bf16.mxu0 %v6843
        %7175 = vmatpush1.bf16.msra.mxu0 %v6842
        %7176 = vmatprep.subr.bf16.mxu0 %v6847
        %7177 = vmatpush1.bf16.msra.mxu0 %v6846
        %7178 = vmatprep.subr.bf16.mxu0 %v6851
        %7179 = vmatpush1.bf16.msra.mxu0 %v6850
        %7180 = vmatprep.subr.bf16.mxu0 %v6855
        %7181 = vmatpush1.bf16.msra.mxu0 %v6854
        %7182 = vmatprep.subr.bf16.mxu0 %v6859
        %7183 = vmatpush1.bf16.msra.mxu0 %v6858
        %7184 = vmatprep.subr.bf16.mxu0 %v6863
        %7185 = vmatpush1.bf16.msra.mxu0 %v6862
        %7186 = vmatprep.subr.bf16.mxu0 %v6867
        %7187 = vmatpush1.bf16.msra.mxu0 %v6866
        %7188 = vmatprep.subr.bf16.mxu0 %v6871
        %7189 = vmatpush1.bf16.msra.mxu0 %v6870
        %7190 = vmatprep.subr.bf16.mxu0 %v6875
        %7191 = vmatpush1.bf16.msra.mxu0 %v6874
        %7192 = vmatprep.subr.bf16.mxu0 %v6879
        %7193 = vmatpush1.bf16.msra.mxu0 %v6878
        %7194 = vmatprep.subr.bf16.mxu0 %v6883
        %7195 = vmatpush1.bf16.msra.mxu0 %v6882
        %7196 = vmatprep.subr.bf16.mxu0 %v6887
        %7197 = vmatpush1.bf16.msra.mxu0 %v6886
        %7198 = vmatprep.subr.bf16.mxu0 %v6891
        %7199 = vmatpush1.bf16.msra.mxu0 %v6890
        %7200 = vmatprep.subr.bf16.mxu0 %v6895
        %7201 = vmatpush1.bf16.msra.mxu0 %v6894
        %7202 = vmatprep.mubr.bf16.mxu0 %v6295
        %7203 = vmatmul.mubr.bf16.gmra.mrb[0].mxu0 %v6294
        %v7204 = vpop.f32.mrb[0].mxu0
        %v7205 = vadd.f32 %v6439, %v7204
        %v7206 = vpop.f32.mrb[0].mxu0
        %v7207 = vadd.f32 %v6443, %v7206
        %v7208 = vpop.f32.mrb[0].mxu0
        %v7209 = vpop.f32.mrb[0].mxu0
        %7210 = vdwg.mxu0
        %7211 = vmatprep.subr.bf16.mxu0 %v6899
        %7212 = vmatpush1.bf16.msra.mxu0 %v6898
        %7213 = vmatprep.subr.bf16.mxu0 %v6903
        %7214 = vmatpush1.bf16.msra.mxu0 %v6902
        %7215 = vmatprep.subr.bf16.mxu0 %v6907
        %7216 = vmatpush1.bf16.msra.mxu0 %v6906
        %7217 = vmatprep.subr.bf16.mxu0 %v6911
        %7218 = vmatpush1.bf16.msra.mxu0 %v6910
        %7219 = vmatprep.subr.bf16.mxu0 %v6915
        %7220 = vmatpush1.bf16.msra.mxu0 %v6914
        %7221 = vmatprep.subr.bf16.mxu0 %v6919
        %7222 = vmatpush1.bf16.msra.mxu0 %v6918
        %7223 = vmatprep.subr.bf16.mxu0 %v6923
        %7224 = vmatpush1.bf16.msra.mxu0 %v6922
        %7225 = vmatprep.subr.bf16.mxu0 %v6927
        %7226 = vmatpush1.bf16.msra.mxu0 %v6926
        %7227 = vmatprep.subr.bf16.mxu0 %v6931
        %7228 = vmatpush1.bf16.msra.mxu0 %v6930
        %7229 = vmatprep.subr.bf16.mxu0 %v6935
        %7230 = vmatpush1.bf16.msra.mxu0 %v6934
        %7231 = vmatprep.subr.bf16.mxu0 %v6939
        %7232 = vmatpush1.bf16.msra.mxu0 %v6938
        %7233 = vmatprep.subr.bf16.mxu0 %v6943
        %7234 = vmatpush1.bf16.msra.mxu0 %v6942
        %7235 = vmatprep.subr.bf16.mxu0 %v6947
        %7236 = vmatpush1.bf16.msra.mxu0 %v6946
        %7237 = vmatprep.subr.bf16.mxu0 %v6951
        %7238 = vmatpush1.bf16.msra.mxu0 %v6950
        %7239 = vmatprep.subr.bf16.mxu0 %v6955
        %7240 = vmatpush1.bf16.msra.mxu0 %v6954
        %7241 = vmatprep.subr.bf16.mxu0 %v6959
        %7242 = vmatpush1.bf16.msra.mxu0 %v6958
        %7243 = vmatprep.mubr.bf16.mxu0 %v6297
        %7244 = vmatmul.mubr.bf16.gmra.mrb[0].mxu0 %v6296
        %v7245 = vpop.f32.mrb[0].mxu0
        %v7246 = vadd.f32 %v7205, %v7245
        %v7247 = vpop.f32.mrb[0].mxu0
        %v7248 = vadd.f32 %v7207, %v7247
        %v7249 = vpop.f32.mrb[0].mxu0
        %v7250 = vpop.f32.mrb[0].mxu0
        %7251 = vdwg.mxu0
        %v7252 = vmax.f32 %v7164, 0.0
        %v7253 = vmax.f32 %v7166, 0.0
        %v7254 = vmax.f32 %v7246, 0.0
        %v7255 = vmax.f32 %v7248, 0.0
        %v7256 = vpack.c.bf16 %v7252, %v7252
        %v7257 = vpack.c.bf16 %v7253, %v7253
        %v7258 = vpack.c.bf16 %v7254, %v7254
        %v7259 = vpack.c.bf16 %v7255, %v7255
        %v7260 = vld [vmem:[%s5] sm:$0xff]
        %v7261 = vld [vmem:[%s5 + $0x8] sm:$0xff]
        %v7262 = vld [vmem:[%s5 + $0x10] sm:$0xff]
        %v7263 = vld [vmem:[%s5 + $0x18] sm:$0xff]
        %v7264 = vld [vmem:[%s5 + $0x20] sm:$0xff]
        %v7265 = vld [vmem:[%s5 + $0x28] sm:$0xff]
        %v7266 = vld [vmem:[%s5 + $0x30] sm:$0xff]
        %v7267 = vld [vmem:[%s5 + $0x38] sm:$0xff]
        %v7268 = vld [vmem:[%s5 + $0x40] sm:$0xff]
        %v7269 = vld [vmem:[%s5 + $0x48] sm:$0xff]
        %v7270 = vld [vmem:[%s5 + $0x50] sm:$0xff]
        %v7271 = vld [vmem:[%s5 + $0x58] sm:$0xff]
        %v7272 = vld [vmem:[%s5 + $0x60] sm:$0xff]
        %v7273 = vld [vmem:[%s5 + $0x68] sm:$0xff]
        %v7274 = vld [vmem:[%s5 + $0x70] sm:$0xff]
        %v7275 = vld [vmem:[%s5 + $0x78] sm:$0xff]
        %v7276 = vld [vmem:[%s5 + $0x80] sm:$0xff]
        %v7277 = vld [vmem:[%s5 + $0x88] sm:$0xff]
        %v7278 = vld [vmem:[%s5 + $0x90] sm:$0xff]
        %v7279 = vld [vmem:[%s5 + $0x98] sm:$0xff]
        %v7280 = vld [vmem:[%s5 + $0xa0] sm:$0xff]
        %v7281 = vld [vmem:[%s5 + $0xa8] sm:$0xff]
        %v7282 = vld [vmem:[%s5 + $0xb0] sm:$0xff]
        %v7283 = vld [vmem:[%s5 + $0xb8] sm:$0xff]
        %v7284 = vld [vmem:[%s5 + $0xc0] sm:$0xff]
        %v7285 = vld [vmem:[%s5 + $0xc8] sm:$0xff]
        %v7286 = vld [vmem:[%s5 + $0xd0] sm:$0xff]
        %v7287 = vld [vmem:[%s5 + $0xd8] sm:$0xff]
        %v7288 = vld [vmem:[%s5 + $0xe0] sm:$0xff]
        %v7289 = vld [vmem:[%s5 + $0xe8] sm:$0xff]
        %v7290 = vld [vmem:[%s5 + $0xf0] sm:$0xff]
        %v7291 = vld [vmem:[%s5 + $0xf8] sm:$0xff]
        %v7292 = vld [vmem:[%s5 + $0x100] sm:$0xff]
        %v7293 = vld [vmem:[%s5 + $0x108] sm:$0xff]
        %v7294 = vld [vmem:[%s5 + $0x110] sm:$0xff]
        %v7295 = vld [vmem:[%s5 + $0x118] sm:$0xff]
        %v7296 = vld [vmem:[%s5 + $0x120] sm:$0xff]
        %v7297 = vld [vmem:[%s5 + $0x128] sm:$0xff]
        %v7298 = vld [vmem:[%s5 + $0x130] sm:$0xff]
        %v7299 = vld [vmem:[%s5 + $0x138] sm:$0xff]
        %v7300 = vld [vmem:[%s5 + $0x140] sm:$0xff]
        %v7301 = vld [vmem:[%s5 + $0x148] sm:$0xff]
        %v7302 = vld [vmem:[%s5 + $0x150] sm:$0xff]
        %v7303 = vld [vmem:[%s5 + $0x158] sm:$0xff]
        %v7304 = vld [vmem:[%s5 + $0x160] sm:$0xff]
        %v7305 = vld [vmem:[%s5 + $0x168] sm:$0xff]
        %v7306 = vld [vmem:[%s5 + $0x170] sm:$0xff]
        %v7307 = vld [vmem:[%s5 + $0x178] sm:$0xff]
        %v7308 = vld [vmem:[%s5 + $0x180] sm:$0xff]
        %v7309 = vld [vmem:[%s5 + $0x188] sm:$0xff]
        %v7310 = vld [vmem:[%s5 + $0x190] sm:$0xff]
        %v7311 = vld [vmem:[%s5 + $0x198] sm:$0xff]
        %v7312 = vld [vmem:[%s5 + $0x1a0] sm:$0xff]
        %v7313 = vld [vmem:[%s5 + $0x1a8] sm:$0xff]
        %v7314 = vld [vmem:[%s5 + $0x1b0] sm:$0xff]
        %v7315 = vld [vmem:[%s5 + $0x1b8] sm:$0xff]
        %v7316 = vld [vmem:[%s5 + $0x1c0] sm:$0xff]
        %v7317 = vld [vmem:[%s5 + $0x1c8] sm:$0xff]
        %v7318 = vld [vmem:[%s5 + $0x1d0] sm:$0xff]
        %v7319 = vld [vmem:[%s5 + $0x1d8] sm:$0xff]
        %v7320 = vld [vmem:[%s5 + $0x1e0] sm:$0xff]
        %v7321 = vld [vmem:[%s5 + $0x1e8] sm:$0xff]
        %v7322 = vld [vmem:[%s5 + $0x1f0] sm:$0xff]
        %v7323 = vld [vmem:[%s5 + $0x1f8] sm:$0xff]
        %v7324 = vld [vmem:[%s5 + $0x200] sm:$0xff]
        %v7325 = vld [vmem:[%s5 + $0x208] sm:$0xff]
        %v7326 = vld [vmem:[%s5 + $0x210] sm:$0xff]
        %v7327 = vld [vmem:[%s5 + $0x218] sm:$0xff]
        %v7328 = vld [vmem:[%s5 + $0x220] sm:$0xff]
        %v7329 = vld [vmem:[%s5 + $0x228] sm:$0xff]
        %v7330 = vld [vmem:[%s5 + $0x230] sm:$0xff]
        %v7331 = vld [vmem:[%s5 + $0x238] sm:$0xff]
        %v7332 = vld [vmem:[%s5 + $0x240] sm:$0xff]
        %v7333 = vld [vmem:[%s5 + $0x248] sm:$0xff]
        %v7334 = vld [vmem:[%s5 + $0x250] sm:$0xff]
        %v7335 = vld [vmem:[%s5 + $0x258] sm:$0xff]
        %v7336 = vld [vmem:[%s5 + $0x260] sm:$0xff]
        %v7337 = vld [vmem:[%s5 + $0x268] sm:$0xff]
        %v7338 = vld [vmem:[%s5 + $0x270] sm:$0xff]
        %v7339 = vld [vmem:[%s5 + $0x278] sm:$0xff]
        %v7340 = vld [vmem:[%s5 + $0x280] sm:$0xff]
        %v7341 = vld [vmem:[%s5 + $0x288] sm:$0xff]
        %v7342 = vld [vmem:[%s5 + $0x290] sm:$0xff]
        %v7343 = vld [vmem:[%s5 + $0x298] sm:$0xff]
        %v7344 = vld [vmem:[%s5 + $0x2a0] sm:$0xff]
        %v7345 = vld [vmem:[%s5 + $0x2a8] sm:$0xff]
        %v7346 = vld [vmem:[%s5 + $0x2b0] sm:$0xff]
        %v7347 = vld [vmem:[%s5 + $0x2b8] sm:$0xff]
        %v7348 = vld [vmem:[%s5 + $0x2c0] sm:$0xff]
        %v7349 = vld [vmem:[%s5 + $0x2c8] sm:$0xff]
        %v7350 = vld [vmem:[%s5 + $0x2d0] sm:$0xff]
        %v7351 = vld [vmem:[%s5 + $0x2d8] sm:$0xff]
        %v7352 = vld [vmem:[%s5 + $0x2e0] sm:$0xff]
        %v7353 = vld [vmem:[%s5 + $0x2e8] sm:$0xff]
        %v7354 = vld [vmem:[%s5 + $0x2f0] sm:$0xff]
        %v7355 = vld [vmem:[%s5 + $0x2f8] sm:$0xff]
        %v7356 = vld [vmem:[%s5 + $0x300] sm:$0xff]
        %v7357 = vld [vmem:[%s5 + $0x308] sm:$0xff]
        %v7358 = vld [vmem:[%s5 + $0x310] sm:$0xff]
        %v7359 = vld [vmem:[%s5 + $0x318] sm:$0xff]
        %v7360 = vld [vmem:[%s5 + $0x320] sm:$0xff]
        %v7361 = vld [vmem:[%s5 + $0x328] sm:$0xff]
        %v7362 = vld [vmem:[%s5 + $0x330] sm:$0xff]
        %v7363 = vld [vmem:[%s5 + $0x338] sm:$0xff]
        %v7364 = vld [vmem:[%s5 + $0x340] sm:$0xff]
        %v7365 = vld [vmem:[%s5 + $0x348] sm:$0xff]
        %v7366 = vld [vmem:[%s5 + $0x350] sm:$0xff]
        %v7367 = vld [vmem:[%s5 + $0x358] sm:$0xff]
        %v7368 = vld [vmem:[%s5 + $0x360] sm:$0xff]
        %v7369 = vld [vmem:[%s5 + $0x368] sm:$0xff]
        %v7370 = vld [vmem:[%s5 + $0x370] sm:$0xff]
        %v7371 = vld [vmem:[%s5 + $0x378] sm:$0xff]
        %v7372 = vld [vmem:[%s5 + $0x380] sm:$0xff]
        %v7373 = vld [vmem:[%s5 + $0x388] sm:$0xff]
        %v7374 = vld [vmem:[%s5 + $0x390] sm:$0xff]
        %v7375 = vld [vmem:[%s5 + $0x398] sm:$0xff]
        %v7376 = vld [vmem:[%s5 + $0x3a0] sm:$0xff]
        %v7377 = vld [vmem:[%s5 + $0x3a8] sm:$0xff]
        %v7378 = vld [vmem:[%s5 + $0x3b0] sm:$0xff]
        %v7379 = vld [vmem:[%s5 + $0x3b8] sm:$0xff]
        %v7380 = vld [vmem:[%s5 + $0x3c0] sm:$0xff]
        %v7381 = vld [vmem:[%s5 + $0x3c8] sm:$0xff]
        %v7382 = vld [vmem:[%s5 + $0x3d0] sm:$0xff]
        %v7383 = vld [vmem:[%s5 + $0x3d8] sm:$0xff]
        %v7384 = vld [vmem:[%s5 + $0x3e0] sm:$0xff]
        %v7385 = vld [vmem:[%s5 + $0x3e8] sm:$0xff]
        %v7386 = vld [vmem:[%s5 + $0x3f0] sm:$0xff]
        %v7387 = vld [vmem:[%s5 + $0x3f8] sm:$0xff]
        %v7388 = vld [vmem:[%s6] sm:$0xf]
        %v7390 = vlaneseq
        %v7391 = vshrl.u32 %v7390, 7
        %v7392 = vsub.s32 0, %v7391
        %v7393 = vrot.slane %v7388, %v7392
        %v7394 = vlaneseq
        %v7395 = vshrl.u32 %v7394, 7
        %v7396 = vsub.s32 1, %v7395
        %v7397 = vrot.slane %v7388, %v7396
        %v7398 = vlaneseq
        %v7399 = vshrl.u32 %v7398, 7
        %v7400 = vsub.s32 2, %v7399
        %v7401 = vrot.slane %v7388, %v7400
        %v7402 = vlaneseq
        %v7403 = vshrl.u32 %v7402, 7
        %v7404 = vsub.s32 3, %v7403
        %v7405 = vrot.slane %v7388, %v7404
        %v7538 = vunpack.c.l.b16 %v7260
        %v7539 = vunpack.c.h.b16 %v7260
        %v7540 = vunpack.c.l.b16 %v7261
        %v7541 = vunpack.c.h.b16 %v7261
        %v7542 = vunpack.c.l.b16 %v7262
        %v7543 = vunpack.c.h.b16 %v7262
        %v7544 = vunpack.c.l.b16 %v7263
        %v7545 = vunpack.c.h.b16 %v7263
        %v7546 = vunpack.c.l.b16 %v7264
        %v7547 = vunpack.c.h.b16 %v7264
        %v7548 = vunpack.c.l.b16 %v7265
        %v7549 = vunpack.c.h.b16 %v7265
        %v7550 = vunpack.c.l.b16 %v7266
        %v7551 = vunpack.c.h.b16 %v7266
        %v7552 = vunpack.c.l.b16 %v7267
        %v7553 = vunpack.c.h.b16 %v7267
        %v7554 = vunpack.c.l.b16 %v7268
        %v7555 = vunpack.c.h.b16 %v7268
        %v7556 = vunpack.c.l.b16 %v7269
        %v7557 = vunpack.c.h.b16 %v7269
        %v7558 = vunpack.c.l.b16 %v7270
        %v7559 = vunpack.c.h.b16 %v7270
        %v7560 = vunpack.c.l.b16 %v7271
        %v7561 = vunpack.c.h.b16 %v7271
        %v7562 = vunpack.c.l.b16 %v7272
        %v7563 = vunpack.c.h.b16 %v7272
        %v7564 = vunpack.c.l.b16 %v7273
        %v7565 = vunpack.c.h.b16 %v7273
        %v7566 = vunpack.c.l.b16 %v7274
        %v7567 = vunpack.c.h.b16 %v7274
        %v7568 = vunpack.c.l.b16 %v7275
        %v7569 = vunpack.c.h.b16 %v7275
        %v7570 = vunpack.c.l.b16 %v7276
        %v7571 = vunpack.c.h.b16 %v7276
        %v7572 = vunpack.c.l.b16 %v7277
        %v7573 = vunpack.c.h.b16 %v7277
        %v7574 = vunpack.c.l.b16 %v7278
        %v7575 = vunpack.c.h.b16 %v7278
        %v7576 = vunpack.c.l.b16 %v7279
        %v7577 = vunpack.c.h.b16 %v7279
        %v7578 = vunpack.c.l.b16 %v7280
        %v7579 = vunpack.c.h.b16 %v7280
        %v7580 = vunpack.c.l.b16 %v7281
        %v7581 = vunpack.c.h.b16 %v7281
        %v7582 = vunpack.c.l.b16 %v7282
        %v7583 = vunpack.c.h.b16 %v7282
        %v7584 = vunpack.c.l.b16 %v7283
        %v7585 = vunpack.c.h.b16 %v7283
        %v7586 = vunpack.c.l.b16 %v7284
        %v7587 = vunpack.c.h.b16 %v7284
        %v7588 = vunpack.c.l.b16 %v7285
        %v7589 = vunpack.c.h.b16 %v7285
        %v7590 = vunpack.c.l.b16 %v7286
        %v7591 = vunpack.c.h.b16 %v7286
        %v7592 = vunpack.c.l.b16 %v7287
        %v7593 = vunpack.c.h.b16 %v7287
        %v7594 = vunpack.c.l.b16 %v7288
        %v7595 = vunpack.c.h.b16 %v7288
        %v7596 = vunpack.c.l.b16 %v7289
        %v7597 = vunpack.c.h.b16 %v7289
        %v7598 = vunpack.c.l.b16 %v7290
        %v7599 = vunpack.c.h.b16 %v7290
        %v7600 = vunpack.c.l.b16 %v7291
        %v7601 = vunpack.c.h.b16 %v7291
        %v7602 = vunpack.c.l.b16 %v7292
        %v7603 = vunpack.c.h.b16 %v7292
        %v7604 = vunpack.c.l.b16 %v7293
        %v7605 = vunpack.c.h.b16 %v7293
        %v7606 = vunpack.c.l.b16 %v7294
        %v7607 = vunpack.c.h.b16 %v7294
        %v7608 = vunpack.c.l.b16 %v7295
        %v7609 = vunpack.c.h.b16 %v7295
        %v7610 = vunpack.c.l.b16 %v7296
        %v7611 = vunpack.c.h.b16 %v7296
        %v7612 = vunpack.c.l.b16 %v7297
        %v7613 = vunpack.c.h.b16 %v7297
        %v7614 = vunpack.c.l.b16 %v7298
        %v7615 = vunpack.c.h.b16 %v7298
        %v7616 = vunpack.c.l.b16 %v7299
        %v7617 = vunpack.c.h.b16 %v7299
        %v7618 = vunpack.c.l.b16 %v7300
        %v7619 = vunpack.c.h.b16 %v7300
        %v7620 = vunpack.c.l.b16 %v7301
        %v7621 = vunpack.c.h.b16 %v7301
        %v7622 = vunpack.c.l.b16 %v7302
        %v7623 = vunpack.c.h.b16 %v7302
        %v7624 = vunpack.c.l.b16 %v7303
        %v7625 = vunpack.c.h.b16 %v7303
        %v7626 = vunpack.c.l.b16 %v7304
        %v7627 = vunpack.c.h.b16 %v7304
        %v7628 = vunpack.c.l.b16 %v7305
        %v7629 = vunpack.c.h.b16 %v7305
        %v7630 = vunpack.c.l.b16 %v7306
        %v7631 = vunpack.c.h.b16 %v7306
        %v7632 = vunpack.c.l.b16 %v7307
        %v7633 = vunpack.c.h.b16 %v7307
        %v7634 = vunpack.c.l.b16 %v7308
        %v7635 = vunpack.c.h.b16 %v7308
        %v7636 = vunpack.c.l.b16 %v7309
        %v7637 = vunpack.c.h.b16 %v7309
        %v7638 = vunpack.c.l.b16 %v7310
        %v7639 = vunpack.c.h.b16 %v7310
        %v7640 = vunpack.c.l.b16 %v7311
        %v7641 = vunpack.c.h.b16 %v7311
        %v7642 = vunpack.c.l.b16 %v7312
        %v7643 = vunpack.c.h.b16 %v7312
        %v7644 = vunpack.c.l.b16 %v7313
        %v7645 = vunpack.c.h.b16 %v7313
        %v7646 = vunpack.c.l.b16 %v7314
        %v7647 = vunpack.c.h.b16 %v7314
        %v7648 = vunpack.c.l.b16 %v7315
        %v7649 = vunpack.c.h.b16 %v7315
        %v7650 = vunpack.c.l.b16 %v7316
        %v7651 = vunpack.c.h.b16 %v7316
        %v7652 = vunpack.c.l.b16 %v7317
        %v7653 = vunpack.c.h.b16 %v7317
        %v7654 = vunpack.c.l.b16 %v7318
        %v7655 = vunpack.c.h.b16 %v7318
        %v7656 = vunpack.c.l.b16 %v7319
        %v7657 = vunpack.c.h.b16 %v7319
        %v7658 = vunpack.c.l.b16 %v7320
        %v7659 = vunpack.c.h.b16 %v7320
        %v7660 = vunpack.c.l.b16 %v7321
        %v7661 = vunpack.c.h.b16 %v7321
        %v7662 = vunpack.c.l.b16 %v7322
        %v7663 = vunpack.c.h.b16 %v7322
        %v7664 = vunpack.c.l.b16 %v7323
        %v7665 = vunpack.c.h.b16 %v7323
        %v7666 = vunpack.c.l.b16 %v7324
        %v7667 = vunpack.c.h.b16 %v7324
        %v7668 = vunpack.c.l.b16 %v7325
        %v7669 = vunpack.c.h.b16 %v7325
        %v7670 = vunpack.c.l.b16 %v7326
        %v7671 = vunpack.c.h.b16 %v7326
        %v7672 = vunpack.c.l.b16 %v7327
        %v7673 = vunpack.c.h.b16 %v7327
        %v7674 = vunpack.c.l.b16 %v7328
        %v7675 = vunpack.c.h.b16 %v7328
        %v7676 = vunpack.c.l.b16 %v7329
        %v7677 = vunpack.c.h.b16 %v7329
        %v7678 = vunpack.c.l.b16 %v7330
        %v7679 = vunpack.c.h.b16 %v7330
        %v7680 = vunpack.c.l.b16 %v7331
        %v7681 = vunpack.c.h.b16 %v7331
        %v7682 = vunpack.c.l.b16 %v7332
        %v7683 = vunpack.c.h.b16 %v7332
        %v7684 = vunpack.c.l.b16 %v7333
        %v7685 = vunpack.c.h.b16 %v7333
        %v7686 = vunpack.c.l.b16 %v7334
        %v7687 = vunpack.c.h.b16 %v7334
        %v7688 = vunpack.c.l.b16 %v7335
        %v7689 = vunpack.c.h.b16 %v7335
        %v7690 = vunpack.c.l.b16 %v7336
        %v7691 = vunpack.c.h.b16 %v7336
        %v7692 = vunpack.c.l.b16 %v7337
        %v7693 = vunpack.c.h.b16 %v7337
        %v7694 = vunpack.c.l.b16 %v7338
        %v7695 = vunpack.c.h.b16 %v7338
        %v7696 = vunpack.c.l.b16 %v7339
        %v7697 = vunpack.c.h.b16 %v7339
        %v7698 = vunpack.c.l.b16 %v7340
        %v7699 = vunpack.c.h.b16 %v7340
        %v7700 = vunpack.c.l.b16 %v7341
        %v7701 = vunpack.c.h.b16 %v7341
        %v7702 = vunpack.c.l.b16 %v7342
        %v7703 = vunpack.c.h.b16 %v7342
        %v7704 = vunpack.c.l.b16 %v7343
        %v7705 = vunpack.c.h.b16 %v7343
        %v7706 = vunpack.c.l.b16 %v7344
        %v7707 = vunpack.c.h.b16 %v7344
        %v7708 = vunpack.c.l.b16 %v7345
        %v7709 = vunpack.c.h.b16 %v7345
        %v7710 = vunpack.c.l.b16 %v7346
        %v7711 = vunpack.c.h.b16 %v7346
        %v7712 = vunpack.c.l.b16 %v7347
        %v7713 = vunpack.c.h.b16 %v7347
        %v7714 = vunpack.c.l.b16 %v7348
        %v7715 = vunpack.c.h.b16 %v7348
        %v7716 = vunpack.c.l.b16 %v7349
        %v7717 = vunpack.c.h.b16 %v7349
        %v7718 = vunpack.c.l.b16 %v7350
        %v7719 = vunpack.c.h.b16 %v7350
        %v7720 = vunpack.c.l.b16 %v7351
        %v7721 = vunpack.c.h.b16 %v7351
        %v7722 = vunpack.c.l.b16 %v7352
        %v7723 = vunpack.c.h.b16 %v7352
        %v7724 = vunpack.c.l.b16 %v7353
        %v7725 = vunpack.c.h.b16 %v7353
        %v7726 = vunpack.c.l.b16 %v7354
        %v7727 = vunpack.c.h.b16 %v7354
        %v7728 = vunpack.c.l.b16 %v7355
        %v7729 = vunpack.c.h.b16 %v7355
        %v7730 = vunpack.c.l.b16 %v7356
        %v7731 = vunpack.c.h.b16 %v7356
        %v7732 = vunpack.c.l.b16 %v7357
        %v7733 = vunpack.c.h.b16 %v7357
        %v7734 = vunpack.c.l.b16 %v7358
        %v7735 = vunpack.c.h.b16 %v7358
        %v7736 = vunpack.c.l.b16 %v7359
        %v7737 = vunpack.c.h.b16 %v7359
        %v7738 = vunpack.c.l.b16 %v7360
        %v7739 = vunpack.c.h.b16 %v7360
        %v7740 = vunpack.c.l.b16 %v7361
        %v7741 = vunpack.c.h.b16 %v7361
        %v7742 = vunpack.c.l.b16 %v7362
        %v7743 = vunpack.c.h.b16 %v7362
        %v7744 = vunpack.c.l.b16 %v7363
        %v7745 = vunpack.c.h.b16 %v7363
        %v7746 = vunpack.c.l.b16 %v7364
        %v7747 = vunpack.c.h.b16 %v7364
        %v7748 = vunpack.c.l.b16 %v7365
        %v7749 = vunpack.c.h.b16 %v7365
        %v7750 = vunpack.c.l.b16 %v7366
        %v7751 = vunpack.c.h.b16 %v7366
        %v7752 = vunpack.c.l.b16 %v7367
        %v7753 = vunpack.c.h.b16 %v7367
        %v7754 = vunpack.c.l.b16 %v7368
        %v7755 = vunpack.c.h.b16 %v7368
        %v7756 = vunpack.c.l.b16 %v7369
        %v7757 = vunpack.c.h.b16 %v7369
        %v7758 = vunpack.c.l.b16 %v7370
        %v7759 = vunpack.c.h.b16 %v7370
        %v7760 = vunpack.c.l.b16 %v7371
        %v7761 = vunpack.c.h.b16 %v7371
        %v7762 = vunpack.c.l.b16 %v7372
        %v7763 = vunpack.c.h.b16 %v7372
        %v7764 = vunpack.c.l.b16 %v7373
        %v7765 = vunpack.c.h.b16 %v7373
        %v7766 = vunpack.c.l.b16 %v7374
        %v7767 = vunpack.c.h.b16 %v7374
        %v7768 = vunpack.c.l.b16 %v7375
        %v7769 = vunpack.c.h.b16 %v7375
        %v7770 = vunpack.c.l.b16 %v7376
        %v7771 = vunpack.c.h.b16 %v7376
        %v7772 = vunpack.c.l.b16 %v7377
        %v7773 = vunpack.c.h.b16 %v7377
        %v7774 = vunpack.c.l.b16 %v7378
        %v7775 = vunpack.c.h.b16 %v7378
        %v7776 = vunpack.c.l.b16 %v7379
        %v7777 = vunpack.c.h.b16 %v7379
        %v7778 = vunpack.c.l.b16 %v7380
        %v7779 = vunpack.c.h.b16 %v7380
        %v7780 = vunpack.c.l.b16 %v7381
        %v7781 = vunpack.c.h.b16 %v7381
        %v7782 = vunpack.c.l.b16 %v7382
        %v7783 = vunpack.c.h.b16 %v7382
        %v7784 = vunpack.c.l.b16 %v7383
        %v7785 = vunpack.c.h.b16 %v7383
        %v7786 = vunpack.c.l.b16 %v7384
        %v7787 = vunpack.c.h.b16 %v7384
        %v7788 = vunpack.c.l.b16 %v7385
        %v7789 = vunpack.c.h.b16 %v7385
        %v7790 = vunpack.c.l.b16 %v7386
        %v7791 = vunpack.c.h.b16 %v7386
        %v7792 = vunpack.c.l.b16 %v7387
        %v7793 = vunpack.c.h.b16 %v7387
        %v7794 = vpack.c.b16 %v7542, %v7538
        %v7795 = vpack.c.b16 %v7543, %v7539
        %v7796 = vpack.c.b16 %v7544, %v7540
        %v7797 = vpack.c.b16 %v7545, %v7541
        %v7798 = vpack.c.b16 %v7550, %v7546
        %v7799 = vpack.c.b16 %v7551, %v7547
        %v7800 = vpack.c.b16 %v7552, %v7548
        %v7801 = vpack.c.b16 %v7553, %v7549
        %v7802 = vpack.c.b16 %v7558, %v7554
        %v7803 = vpack.c.b16 %v7559, %v7555
        %v7804 = vpack.c.b16 %v7560, %v7556
        %v7805 = vpack.c.b16 %v7561, %v7557
        %v7806 = vpack.c.b16 %v7566, %v7562
        %v7807 = vpack.c.b16 %v7567, %v7563
        %v7808 = vpack.c.b16 %v7568, %v7564
        %v7809 = vpack.c.b16 %v7569, %v7565
        %v7810 = vpack.c.b16 %v7574, %v7570
        %v7811 = vpack.c.b16 %v7575, %v7571
        %v7812 = vpack.c.b16 %v7576, %v7572
        %v7813 = vpack.c.b16 %v7577, %v7573
        %v7814 = vpack.c.b16 %v7582, %v7578
        %v7815 = vpack.c.b16 %v7583, %v7579
        %v7816 = vpack.c.b16 %v7584, %v7580
        %v7817 = vpack.c.b16 %v7585, %v7581
        %v7818 = vpack.c.b16 %v7590, %v7586
        %v7819 = vpack.c.b16 %v7591, %v7587
        %v7820 = vpack.c.b16 %v7592, %v7588
        %v7821 = vpack.c.b16 %v7593, %v7589
        %v7822 = vpack.c.b16 %v7598, %v7594
        %v7823 = vpack.c.b16 %v7599, %v7595
        %v7824 = vpack.c.b16 %v7600, %v7596
        %v7825 = vpack.c.b16 %v7601, %v7597
        %v7826 = vpack.c.b16 %v7606, %v7602
        %v7827 = vpack.c.b16 %v7607, %v7603
        %v7828 = vpack.c.b16 %v7608, %v7604
        %v7829 = vpack.c.b16 %v7609, %v7605
        %v7830 = vpack.c.b16 %v7614, %v7610
        %v7831 = vpack.c.b16 %v7615, %v7611
        %v7832 = vpack.c.b16 %v7616, %v7612
        %v7833 = vpack.c.b16 %v7617, %v7613
        %v7834 = vpack.c.b16 %v7622, %v7618
        %v7835 = vpack.c.b16 %v7623, %v7619
        %v7836 = vpack.c.b16 %v7624, %v7620
        %v7837 = vpack.c.b16 %v7625, %v7621
        %v7838 = vpack.c.b16 %v7630, %v7626
        %v7839 = vpack.c.b16 %v7631, %v7627
        %v7840 = vpack.c.b16 %v7632, %v7628
        %v7841 = vpack.c.b16 %v7633, %v7629
        %v7842 = vpack.c.b16 %v7638, %v7634
        %v7843 = vpack.c.b16 %v7639, %v7635
        %v7844 = vpack.c.b16 %v7640, %v7636
        %v7845 = vpack.c.b16 %v7641, %v7637
        %v7846 = vpack.c.b16 %v7646, %v7642
        %v7847 = vpack.c.b16 %v7647, %v7643
        %v7848 = vpack.c.b16 %v7648, %v7644
        %v7849 = vpack.c.b16 %v7649, %v7645
        %v7850 = vpack.c.b16 %v7654, %v7650
        %v7851 = vpack.c.b16 %v7655, %v7651
        %v7852 = vpack.c.b16 %v7656, %v7652
        %v7853 = vpack.c.b16 %v7657, %v7653
        %v7854 = vpack.c.b16 %v7662, %v7658
        %v7855 = vpack.c.b16 %v7663, %v7659
        %v7856 = vpack.c.b16 %v7664, %v7660
        %v7857 = vpack.c.b16 %v7665, %v7661
        %v7858 = vpack.c.b16 %v7670, %v7666
        %v7859 = vpack.c.b16 %v7671, %v7667
        %v7860 = vpack.c.b16 %v7672, %v7668
        %v7861 = vpack.c.b16 %v7673, %v7669
        %v7862 = vpack.c.b16 %v7678, %v7674
        %v7863 = vpack.c.b16 %v7679, %v7675
        %v7864 = vpack.c.b16 %v7680, %v7676
        %v7865 = vpack.c.b16 %v7681, %v7677
        %v7866 = vpack.c.b16 %v7686, %v7682
        %v7867 = vpack.c.b16 %v7687, %v7683
        %v7868 = vpack.c.b16 %v7688, %v7684
        %v7869 = vpack.c.b16 %v7689, %v7685
        %v7870 = vpack.c.b16 %v7694, %v7690
        %v7871 = vpack.c.b16 %v7695, %v7691
        %v7872 = vpack.c.b16 %v7696, %v7692
        %v7873 = vpack.c.b16 %v7697, %v7693
        %v7874 = vpack.c.b16 %v7702, %v7698
        %v7875 = vpack.c.b16 %v7703, %v7699
        %v7876 = vpack.c.b16 %v7704, %v7700
        %v7877 = vpack.c.b16 %v7705, %v7701
        %v7878 = vpack.c.b16 %v7710, %v7706
        %v7879 = vpack.c.b16 %v7711, %v7707
        %v7880 = vpack.c.b16 %v7712, %v7708
        %v7881 = vpack.c.b16 %v7713, %v7709
        %v7882 = vpack.c.b16 %v7718, %v7714
        %v7883 = vpack.c.b16 %v7719, %v7715
        %v7884 = vpack.c.b16 %v7720, %v7716
        %v7885 = vpack.c.b16 %v7721, %v7717
        %v7886 = vpack.c.b16 %v7726, %v7722
        %v7887 = vpack.c.b16 %v7727, %v7723
        %v7888 = vpack.c.b16 %v7728, %v7724
        %v7889 = vpack.c.b16 %v7729, %v7725
        %v7890 = vpack.c.b16 %v7734, %v7730
        %v7891 = vpack.c.b16 %v7735, %v7731
        %v7892 = vpack.c.b16 %v7736, %v7732
        %v7893 = vpack.c.b16 %v7737, %v7733
        %v7894 = vpack.c.b16 %v7742, %v7738
        %v7895 = vpack.c.b16 %v7743, %v7739
        %v7896 = vpack.c.b16 %v7744, %v7740
        %v7897 = vpack.c.b16 %v7745, %v7741
        %v7898 = vpack.c.b16 %v7750, %v7746
        %v7899 = vpack.c.b16 %v7751, %v7747
        %v7900 = vpack.c.b16 %v7752, %v7748
        %v7901 = vpack.c.b16 %v7753, %v7749
        %v7902 = vpack.c.b16 %v7758, %v7754
        %v7903 = vpack.c.b16 %v7759, %v7755
        %v7904 = vpack.c.b16 %v7760, %v7756
        %v7905 = vpack.c.b16 %v7761, %v7757
        %v7906 = vpack.c.b16 %v7766, %v7762
        %v7907 = vpack.c.b16 %v7767, %v7763
        %v7908 = vpack.c.b16 %v7768, %v7764
        %v7909 = vpack.c.b16 %v7769, %v7765
        %v7910 = vpack.c.b16 %v7774, %v7770
        %v7911 = vpack.c.b16 %v7775, %v7771
        %v7912 = vpack.c.b16 %v7776, %v7772
        %v7913 = vpack.c.b16 %v7777, %v7773
        %v7914 = vpack.c.b16 %v7782, %v7778
        %v7915 = vpack.c.b16 %v7783, %v7779
        %v7916 = vpack.c.b16 %v7784, %v7780
        %v7917 = vpack.c.b16 %v7785, %v7781
        %v7918 = vpack.c.b16 %v7790, %v7786
        %v7919 = vpack.c.b16 %v7791, %v7787
        %v7920 = vpack.c.b16 %v7792, %v7788
        %v7921 = vpack.c.b16 %v7793, %v7789
        %8050 = vmatprep.subr.bf16.mxu0 %v7795
        %8051 = vmatpush1.bf16.msra.mxu0 %v7794
        %8052 = vmatprep.subr.bf16.mxu0 %v7799
        %8053 = vmatpush1.bf16.msra.mxu0 %v7798
        %8054 = vmatprep.subr.bf16.mxu0 %v7803
        %8055 = vmatpush1.bf16.msra.mxu0 %v7802
        %8056 = vmatprep.subr.bf16.mxu0 %v7807
        %8057 = vmatpush1.bf16.msra.mxu0 %v7806
        %8058 = vmatprep.subr.bf16.mxu0 %v7811
        %8059 = vmatpush1.bf16.msra.mxu0 %v7810
        %8060 = vmatprep.subr.bf16.mxu0 %v7815
        %8061 = vmatpush1.bf16.msra.mxu0 %v7814
        %8062 = vmatprep.subr.bf16.mxu0 %v7819
        %8063 = vmatpush1.bf16.msra.mxu0 %v7818
        %8064 = vmatprep.subr.bf16.mxu0 %v7823
        %8065 = vmatpush1.bf16.msra.mxu0 %v7822
        %8066 = vmatprep.subr.bf16.mxu0 %v7827
        %8067 = vmatpush1.bf16.msra.mxu0 %v7826
        %8068 = vmatprep.subr.bf16.mxu0 %v7831
        %8069 = vmatpush1.bf16.msra.mxu0 %v7830
        %8070 = vmatprep.subr.bf16.mxu0 %v7835
        %8071 = vmatpush1.bf16.msra.mxu0 %v7834
        %8072 = vmatprep.subr.bf16.mxu0 %v7839
        %8073 = vmatpush1.bf16.msra.mxu0 %v7838
        %8074 = vmatprep.subr.bf16.mxu0 %v7843
        %8075 = vmatpush1.bf16.msra.mxu0 %v7842
        %8076 = vmatprep.subr.bf16.mxu0 %v7847
        %8077 = vmatpush1.bf16.msra.mxu0 %v7846
        %8078 = vmatprep.subr.bf16.mxu0 %v7851
        %8079 = vmatpush1.bf16.msra.mxu0 %v7850
        %8080 = vmatprep.subr.bf16.mxu0 %v7855
        %8081 = vmatpush1.bf16.msra.mxu0 %v7854
        %8082 = vmatprep.mubr.bf16.mxu0 %v7257
        %8083 = vmatmul.mubr.bf16.gmra.mrb[0].mxu0 %v7256
        %v8084 = vpop.f32.mrb[0].mxu0
        %v8085 = vadd.f32 %v7393, %v8084
        %v8086 = vpop.f32.mrb[0].mxu0
        %v8087 = vadd.f32 %v7397, %v8086
        %v8088 = vpop.f32.mrb[0].mxu0
        %v8089 = vpop.f32.mrb[0].mxu0
        %8090 = vdwg.mxu0
        %8091 = vmatprep.subr.bf16.mxu0 %v7859
        %8092 = vmatpush1.bf16.msra.mxu0 %v7858
        %8093 = vmatprep.subr.bf16.mxu0 %v7863
        %8094 = vmatpush1.bf16.msra.mxu0 %v7862
        %8095 = vmatprep.subr.bf16.mxu0 %v7867
        %8096 = vmatpush1.bf16.msra.mxu0 %v7866
        %8097 = vmatprep.subr.bf16.mxu0 %v7871
        %8098 = vmatpush1.bf16.msra.mxu0 %v7870
        %8099 = vmatprep.subr.bf16.mxu0 %v7875
        %8100 = vmatpush1.bf16.msra.mxu0 %v7874
        %8101 = vmatprep.subr.bf16.mxu0 %v7879
        %8102 = vmatpush1.bf16.msra.mxu0 %v7878
        %8103 = vmatprep.subr.bf16.mxu0 %v7883
        %8104 = vmatpush1.bf16.msra.mxu0 %v7882
        %8105 = vmatprep.subr.bf16.mxu0 %v7887
        %8106 = vmatpush1.bf16.msra.mxu0 %v7886
        %8107 = vmatprep.subr.bf16.mxu0 %v7891
        %8108 = vmatpush1.bf16.msra.mxu0 %v7890
        %8109 = vmatprep.subr.bf16.mxu0 %v7895
        %8110 = vmatpush1.bf16.msra.mxu0 %v7894
        %8111 = vmatprep.subr.bf16.mxu0 %v7899
        %8112 = vmatpush1.bf16.msra.mxu0 %v7898
        %8113 = vmatprep.subr.bf16.mxu0 %v7903
        %8114 = vmatpush1.bf16.msra.mxu0 %v7902
        %8115 = vmatprep.subr.bf16.mxu0 %v7907
        %8116 = vmatpush1.bf16.msra.mxu0 %v7906
        %8117 = vmatprep.subr.bf16.mxu0 %v7911
        %8118 = vmatpush1.bf16.msra.mxu0 %v7910
        %8119 = vmatprep.subr.bf16.mxu0 %v7915
        %8120 = vmatpush1.bf16.msra.mxu0 %v7914
        %8121 = vmatprep.subr.bf16.mxu0 %v7919
        %8122 = vmatpush1.bf16.msra.mxu0 %v7918
        %8123 = vmatprep.mubr.bf16.mxu0 %v7259
        %8124 = vmatmul.mubr.bf16.gmra.mrb[0].mxu0 %v7258
        %v8125 = vpop.f32.mrb[0].mxu0
        %v8126 = vadd.f32 %v8085, %v8125
        %v8127 = vpop.f32.mrb[0].mxu0
        %v8128 = vadd.f32 %v8087, %v8127
        %v8129 = vpop.f32.mrb[0].mxu0
        %v8130 = vpop.f32.mrb[0].mxu0
        %8131 = vdwg.mxu0
        %8132 = vmatprep.subr.bf16.mxu0 %v7797
        %8133 = vmatpush1.bf16.msra.mxu0 %v7796
        %8134 = vmatprep.subr.bf16.mxu0 %v7801
        %8135 = vmatpush1.bf16.msra.mxu0 %v7800
        %8136 = vmatprep.subr.bf16.mxu0 %v7805
        %8137 = vmatpush1.bf16.msra.mxu0 %v7804
        %8138 = vmatprep.subr.bf16.mxu0 %v7809
        %8139 = vmatpush1.bf16.msra.mxu0 %v7808
        %8140 = vmatprep.subr.bf16.mxu0 %v7813
        %8141 = vmatpush1.bf16.msra.mxu0 %v7812
        %8142 = vmatprep.subr.bf16.mxu0 %v7817
        %8143 = vmatpush1.bf16.msra.mxu0 %v7816
        %8144 = vmatprep.subr.bf16.mxu0 %v7821
        %8145 = vmatpush1.bf16.msra.mxu0 %v7820
        %8146 = vmatprep.subr.bf16.mxu0 %v7825
        %8147 = vmatpush1.bf16.msra.mxu0 %v7824
        %8148 = vmatprep.subr.bf16.mxu0 %v7829
        %8149 = vmatpush1.bf16.msra.mxu0 %v7828
        %8150 = vmatprep.subr.bf16.mxu0 %v7833
        %8151 = vmatpush1.bf16.msra.mxu0 %v7832
        %8152 = vmatprep.subr.bf16.mxu0 %v7837
        %8153 = vmatpush1.bf16.msra.mxu0 %v7836
        %8154 = vmatprep.subr.bf16.mxu0 %v7841
        %8155 = vmatpush1.bf16.msra.mxu0 %v7840
        %8156 = vmatprep.subr.bf16.mxu0 %v7845
        %8157 = vmatpush1.bf16.msra.mxu0 %v7844
        %8158 = vmatprep.subr.bf16.mxu0 %v7849
        %8159 = vmatpush1.bf16.msra.mxu0 %v7848
        %8160 = vmatprep.subr.bf16.mxu0 %v7853
        %8161 = vmatpush1.bf16.msra.mxu0 %v7852
        %8162 = vmatprep.subr.bf16.mxu0 %v7857
        %8163 = vmatpush1.bf16.msra.mxu0 %v7856
        %8164 = vmatprep.mubr.bf16.mxu0 %v7257
        %8165 = vmatmul.mubr.bf16.gmra.mrb[0].mxu0 %v7256
        %v8166 = vpop.f32.mrb[0].mxu0
        %v8167 = vadd.f32 %v7401, %v8166
        %v8168 = vpop.f32.mrb[0].mxu0
        %v8169 = vadd.f32 %v7405, %v8168
        %v8170 = vpop.f32.mrb[0].mxu0
        %v8171 = vpop.f32.mrb[0].mxu0
        %8172 = vdwg.mxu0
        %8173 = vmatprep.subr.bf16.mxu0 %v7861
        %8174 = vmatpush1.bf16.msra.mxu0 %v7860
        %8175 = vmatprep.subr.bf16.mxu0 %v7865
        %8176 = vmatpush1.bf16.msra.mxu0 %v7864
        %8177 = vmatprep.subr.bf16.mxu0 %v7869
        %8178 = vmatpush1.bf16.msra.mxu0 %v7868
        %8179 = vmatprep.subr.bf16.mxu0 %v7873
        %8180 = vmatpush1.bf16.msra.mxu0 %v7872
        %8181 = vmatprep.subr.bf16.mxu0 %v7877
        %8182 = vmatpush1.bf16.msra.mxu0 %v7876
        %8183 = vmatprep.subr.bf16.mxu0 %v7881
        %8184 = vmatpush1.bf16.msra.mxu0 %v7880
        %8185 = vmatprep.subr.bf16.mxu0 %v7885
        %8186 = vmatpush1.bf16.msra.mxu0 %v7884
        %8187 = vmatprep.subr.bf16.mxu0 %v7889
        %8188 = vmatpush1.bf16.msra.mxu0 %v7888
        %8189 = vmatprep.subr.bf16.mxu0 %v7893
        %8190 = vmatpush1.bf16.msra.mxu0 %v7892
        %8191 = vmatprep.subr.bf16.mxu0 %v7897
        %8192 = vmatpush1.bf16.msra.mxu0 %v7896
        %8193 = vmatprep.subr.bf16.mxu0 %v7901
        %8194 = vmatpush1.bf16.msra.mxu0 %v7900
        %8195 = vmatprep.subr.bf16.mxu0 %v7905
        %8196 = vmatpush1.bf16.msra.mxu0 %v7904
        %8197 = vmatprep.subr.bf16.mxu0 %v7909
        %8198 = vmatpush1.bf16.msra.mxu0 %v7908
        %8199 = vmatprep.subr.bf16.mxu0 %v7913
        %8200 = vmatpush1.bf16.msra.mxu0 %v7912
        %8201 = vmatprep.subr.bf16.mxu0 %v7917
        %8202 = vmatpush1.bf16.msra.mxu0 %v7916
        %8203 = vmatprep.subr.bf16.mxu0 %v7921
        %8204 = vmatpush1.bf16.msra.mxu0 %v7920
        %8205 = vmatprep.mubr.bf16.mxu0 %v7259
        %8206 = vmatmul.mubr.bf16.gmra.mrb[0].mxu0 %v7258
        %v8207 = vpop.f32.mrb[0].mxu0
        %v8208 = vadd.f32 %v8167, %v8207
        %v8209 = vpop.f32.mrb[0].mxu0
        %v8210 = vadd.f32 %v8169, %v8209
        %v8211 = vpop.f32.mrb[0].mxu0
        %v8212 = vpop.f32.mrb[0].mxu0
        %8213 = vdwg.mxu0
        %v8218 = vcombine.low %v8126, %v8128
        %v8219 = vcombine.low %v8208, %v8210
        %v8221 = vunpack.c.l.s4 1983009808
        %v8222 = vunpack.c.0.s8 %v8221
        %v8223 = vlaneseq
        %v8224 = vshrl.u32 %v8223, 7
        %v8225 = vsub.s32 %v8222, %v8224
        %v8226 = vrot.slane %v8218, %v8225
        %v8228 = vunpack.c.l.s4 1983009808
        %v8229 = vunpack.c.0.s8 %v8228
        %v8230 = vlaneseq
        %v8231 = vshrl.u32 %v8230, 7
        %v8232 = vsub.s32 %v8229, %v8231
        %v8233 = vrot.slane %v8219, %v8232
        %v8234 = vcombine.low %v8226, %v8233
        %8236 = vst [vmem:[%s315] sm:$0xff] %v8234
      $region52: #{rnd_forward.7} parent=47 // pred_fallthru
        _
      %p8237 = scmp.eq.s32.totalorder %s18, 1
      // Predicated region
      $region53: #{rnd_forward.7} parent=47 // pred_check
        %p8238 = pneg %p8237
      $region54: #{rnd_forward.7} parent=47 // pred_check_branch
        %8240 = sbr.rel (%p8238) target = $region56
      $region55: #{rnd_forward.7} parent=47 // pred_region
        %v8245 = vcombine.low %v5747, %v5749
        %v8246 = vcombine.low %v6280, %v6282
        %v8248 = vunpack.c.l.s4 1983009808
        %v8249 = vunpack.c.0.s8 %v8248
        %v8250 = vlaneseq
        %v8251 = vshrl.u32 %v8250, 7
        %v8252 = vsub.s32 %v8249, %v8251
        %v8253 = vrot.slane %v8245, %v8252
        %v8255 = vunpack.c.l.s4 1983009808
        %v8256 = vunpack.c.0.s8 %v8255
        %v8257 = vlaneseq
        %v8258 = vshrl.u32 %v8257, 7
        %v8259 = vsub.s32 %v8256, %v8258
        %v8260 = vrot.slane %v8246, %v8259
        %v8261 = vcombine.low %v8253, %v8260
        %8263 = vst [vmem:[%s315] sm:$0xff] %v8261
      $region56: #{rnd_forward.7} parent=47 // pred_fallthru
        _
      %p8264 = scmp.lt.s32.totalorder %s18, 1
      %s8265 = scalar_select %p8264, %s18, 1
      %s8266 = smul.addr %s8265, 4
      %s8267 = smul.addr %s8266, 2
      %s8268 = scalar_lea.vmem %s7, %s8267
      // Predicated region
      $region57: #{rnd_forward.7} parent=47 // pred_check
        %p8269 = pneg %p198
      $region58: #{rnd_forward.7} parent=47 // pred_check_branch
        %8271 = sbr.rel (%p8269) target = $region60
      $region59: #{rnd_forward.7} parent=47 // pred_region
        _
      $region60: #{rnd_forward.7} parent=47 // pred_fallthru
        _
    $region48: #{rnd_forward.7} parent=5 // pred_fallthru
      _
    %p8272 = scmp.le.s32.totalorder 2, %s13
    // Predicated region
    $region61: #{rnd_forward.7} parent=5 // pred_check
      %p8273 = pneg %p8272
    $region62: #{rnd_forward.7} parent=5 // pred_check_branch
      %8275 = sbr.rel (%p8273) target = $region64
    $region63: #{rnd_forward.7} parent=5 // pred_region
      %s8276 = ssub.s32 %s13, 2
      // Predicated region
      $region65: #{rnd_forward.7} parent=63 // pred_check
        %p8277 = pneg %p204
      $region66: #{rnd_forward.7} parent=63 // pred_check_branch
        %8279 = sbr.rel (%p8277) target = $region68
      $region67: #{rnd_forward.7} parent=63 // pred_region
        %p8280 = scmp.lt.s32.totalorder %s19, 1
        %s8281 = scalar_select %p8280, %s19, 1
        %s8282 = smul.addr %s8281, 4
        %s8283 = smul.addr %s8282, 2
        %s8284 = scalar_lea.vmem %s7, %s8283
      $region68: #{rnd_forward.7} parent=63 // pred_fallthru
        _
    $region64: #{rnd_forward.7} parent=5 // pred_fallthru
      _
  $region6: #{rnd_forward.7} parent=0 // loop_footer
    %s17 = sadd.s32 1, %s13
  $region7: #{rnd_forward.7} parent=0 // loop_footer_branch
    %12 = sbr.rel target = $region3
  $region8: #{rnd_forward.7} parent=0 // loop_exit
    _

</llo_original>
